<compile_context>
chip_gen: v7x
topology: tpu7x:2x2x1
jax: 0.10.0
libtpu: 0.0.40
codegen_flags: <defaults>
</compile_context>

<pallas_src>
import functools

import jax
import jax.numpy as jnp
from jax.experimental import pallas as pl
from jax.experimental.pallas import tpu as pltpu


LANE = 128
TILE_N = 4480            # 35 * 128 lanes; 8960 = 2 * 4480 -> grid of 2 steps


def _round_up(x, m):
    return (x + m - 1) // m * m


# ----------------------------------------------------------------------------
# Fused kernel: grid step j produces one lane-aligned output tile of
#   sigmoid( LeakyReLU(z @ W1 + b1) @ W2[tile j] + b2[tile j] )
# z / W1 / b1 / b2 are VMEM-resident (constant index_map); W2 streams one
# contiguous (H, TILE_N) tile per step, double-buffered by the pipeline.
# ----------------------------------------------------------------------------
def _decoder_kernel(z_ref, w1_ref, b1_ref, w2_ref, b2_ref, o_ref, *,
                    negative_slope, tile_n):
    j = pl.program_id(0)

    # Tiny hidden layer (latent -> hidden), recomputed per tile.  Negligible
    # cost, hidden under the W2-tile DMA; keeps grid steps fully independent.
    z = z_ref[...].astype(w1_ref.dtype)
    h = jnp.dot(z, w1_ref[...], preferred_element_type=jnp.float32)
    h = h + b1_ref[...]
    h = jnp.where(h >= 0.0, h, negative_slope * h)          # LeakyReLU(0.2)

    # Big output layer, tiled over its N (output-feature) dim by the grid.
    y = jnp.dot(h.astype(w2_ref.dtype), w2_ref[...],
                preferred_element_type=jnp.float32)

    # b2 is resident; slice the current lane-aligned column window.
    col0 = pl.multiple_of(j * tile_n, LANE)
    y = jax.nn.sigmoid(y + b2_ref[:, pl.ds(col0, tile_n)])
    o_ref[...] = y.astype(o_ref.dtype)                      # lane-dense store


# ----------------------------------------------------------------------------
# Parameter init (deterministic, PyTorch nn.Linear-style uniform(-1/sqrt(k))).
# Weights in bf16 (bandwidth), biases in f32.  FC_output is zero-padded along
# its output dim to a multiple of TILE_N and pre-tiled to (n_tiles, H, TILE_N)
# so every streamed tile is a single contiguous HBM block.
# ----------------------------------------------------------------------------
def _init_linear(key, in_dim, out_dim, weight_dtype):
    kw, kb = jax.random.split(key)
    bound = 1.0 / float(in_dim) ** 0.5
    w = jax.random.uniform(kw, (in_dim, out_dim), jnp.float32, -bound, bound)
    b = jax.random.uniform(kb, (out_dim,), jnp.float32, -bound, bound)
    return w.astype(weight_dtype), b


def init_ann_decoder_vae(key, latent_dim, hidden_dim, output_dim,
                         weight_dtype=jnp.bfloat16, tile_n=TILE_N):
    k1, k2 = jax.random.split(key)
    w1, b1 = _init_linear(k1, latent_dim, hidden_dim, weight_dtype)
    w2, b2 = _init_linear(k2, hidden_dim, output_dim, weight_dtype)

    n_pad = _round_up(output_dim, tile_n)                   # 8800 -> 8960
    n_tiles = n_pad // tile_n
    w2 = jnp.pad(w2, ((0, 0), (0, n_pad - output_dim)))
    b2 = jnp.pad(b2, (0, n_pad - output_dim))
    # (H, n_pad) -> (n_tiles, H, tile_n): tile j holds columns
    # [j*tile_n, (j+1)*tile_n), stored contiguously for one-shot DMA.
    w2_tiled = jnp.transpose(
        w2.reshape(hidden_dim, n_tiles, tile_n), (1, 0, 2))

    return {
        "fc_hidden": (w1, b1),
        "fc_output": (w2_tiled, b2),   # pre-tiled weight, padded bias
        "output_dim": output_dim,
        "tile_n": tile_n,
    }


# ----------------------------------------------------------------------------
# Forward pass (matches ANN_Decoder_vae.forward)
# ----------------------------------------------------------------------------
def ann_decoder_vae_forward(params, z):
    w1, b1 = params["fc_hidden"]
    w2_tiled, b2 = params["fc_output"]
    out_dim = params["output_dim"]
    tile_n = params["tile_n"]

    B, L = z.shape
    H = w1.shape[1]
    n_tiles = w2_tiled.shape[0]
    n_pad = n_tiles * tile_n

    b1_r = b1.reshape(1, H)
    b2_r = b2.reshape(1, n_pad)

    in_bytes = sum(int(a.size) * a.dtype.itemsize
                   for a in (z, w1, b1_r, w2_tiled, b2_r))
    out_bytes = B * n_pad * 4
    cost = pl.CostEstimate(
        flops=2 * B * L * H + 2 * B * H * n_pad,
        transcendentals=B * n_pad,                 # sigmoid exp
        bytes_accessed=in_bytes + out_bytes,
    )

    kernel = functools.partial(_decoder_kernel,
                               negative_slope=0.2, tile_n=tile_n)
    out = pl.pallas_call(
        kernel,
        out_shape=jax.ShapeDtypeStruct((B, n_pad), jnp.float32),
        grid=(n_tiles,),
        in_specs=[
            # z, W1, b1, b2: full-extent blocks, constant index_map -> resident
            # in VMEM across all grid steps (no per-step DMA).
            pl.BlockSpec((B, L), lambda j: (0, 0)),
            pl.BlockSpec((L, H), lambda j: (0, 0)),
            pl.BlockSpec((1, H), lambda j: (0, 0)),
            # W2: one contiguous pre-tiled (H, tile_n) block per grid step,
            # double-buffered by the Pallas pipeline (~9.2 MB peak bf16).
            pl.BlockSpec((None, H, tile_n), lambda j: (j, 0, 0)),
            pl.BlockSpec((1, n_pad), lambda j: (0, 0)),
        ],
        out_specs=pl.BlockSpec((B, tile_n), lambda j: (0, j)),
        compiler_params=pltpu.CompilerParams(
            # Independent output tiles; grid=2 splits evenly across v7x's
            # two TensorCores.  Default scoped-VMEM limit is enough.
            dimension_semantics=("parallel",),
        ),
        cost_estimate=cost,
    )(z, w1, b1_r, w2_tiled, b2_r)

    return out[:, :out_dim].reshape(-1, 1100, 8)


# ----------------------------------------------------------------------------
# Pure-JAX reference (mirrors the kernel's bf16-weight casts) for sanity check.
# ----------------------------------------------------------------------------
def _reference_forward(params, z):
    w1, b1 = params["fc_hidden"]
    w2_tiled, b2 = params["fc_output"]
    out_dim = params["output_dim"]
    hp = jax.lax.Precision.HIGHEST

    H = w1.shape[1]
    n_tiles, _, tile_n = w2_tiled.shape
    w2 = jnp.transpose(w2_tiled, (1, 0, 2)).reshape(H, n_tiles * tile_n)

    zc = z.astype(w1.dtype).astype(jnp.float32)
    h = jnp.dot(zc, w1.astype(jnp.float32), precision=hp) + b1
    h = jnp.where(h >= 0.0, h, 0.2 * h)
    hc = h.astype(w2.dtype).astype(jnp.float32)
    y = jnp.dot(hc, w2.astype(jnp.float32), precision=hp) + b2
    y = jax.nn.sigmoid(y)
    return y[:, :out_dim].reshape(-1, 1100, 8)


if __name__ == "__main__":
    LATENT_DIM, HIDDEN_DIM, OUTPUT_DIM = 32, 512, 8800      # 8800 = 1100 * 8
    B = 2

    key = jax.random.PRNGKey(0)
    k_params, k_z = jax.random.split(key)

    params = init_ann_decoder_vae(k_params, LATENT_DIM, HIDDEN_DIM, OUTPUT_DIM)
    z = jax.random.normal(k_z, (B, LATENT_DIM), dtype=jnp.float32)

    out = jax.block_until_ready(ann_decoder_vae_forward(params, z))
    assert out.shape == (B, 1100, 8), out.shape
    assert out.dtype == jnp.float32, out.dtype

    ref = jax.block_until_ready(_reference_forward(params, z))
    assert jnp.allclose(out, ref, atol=1e-3, rtol=1e-3), \
        float(jnp.max(jnp.abs(out - ref)))

    print("KERNEL_OK")
</pallas_src>

<mosaic_0001>
module attributes {stable_mosaic.version = 11 : i64} {
  func.func @_decoder_kernel(%arg0: i32, %arg1: memref<2x32xf32, #tpu.memory_space<vmem>>, %arg2: memref<32x512xbf16, #tpu.memory_space<vmem>>, %arg3: memref<1x512xf32, #tpu.memory_space<vmem>>, %arg4: memref<1x512x4480xbf16, #tpu.memory_space<vmem>>, %arg5: memref<1x8960xf32, #tpu.memory_space<vmem>>, %arg6: memref<2x4480xf32, #tpu.memory_space<vmem>>) attributes {dimension_semantics = [#tpu.dimension_semantics<parallel>], iteration_bounds = array<i64: 2>, scalar_prefetch = 0 : i64, scratch_operands = 0 : i64, tpu.core_type = #tpu.core_type<tc>, window_params = [{pipeline_mode = #tpu.pipeline_mode<synchronous>, transform_indices = @transform_0, window_bounds = array<i64: 2, 32>}, {pipeline_mode = #tpu.pipeline_mode<synchronous>, transform_indices = @transform_1, window_bounds = array<i64: 32, 512>}, {pipeline_mode = #tpu.pipeline_mode<synchronous>, transform_indices = @transform_2, window_bounds = array<i64: 1, 512>}, {transform_indices = @transform_3, window_bounds = array<i64: 1, 512, 4480>}, {pipeline_mode = #tpu.pipeline_mode<synchronous>, transform_indices = @transform_4, window_bounds = array<i64: 1, 8960>}, {transform_indices = @transform_5, window_bounds = array<i64: 2, 4480>}]} {
    %c0 = arith.constant 0 : index
    %c0_0 = arith.constant 0 : index
    %0 = vector.load %arg1[%c0, %c0_0] : memref<2x32xf32, #tpu.memory_space<vmem>>, vector<2x32xf32>
    %1 = arith.truncf %0 : vector<2x32xf32> to vector<2x32xbf16>
    %c0_1 = arith.constant 0 : index
    %c0_2 = arith.constant 0 : index
    %2 = vector.load %arg2[%c0_1, %c0_2] : memref<32x512xbf16, #tpu.memory_space<vmem>>, vector<32x512xbf16>
    %cst = arith.constant dense<0.000000e+00> : vector<2x512xf32>
    %3 = tpu.matmul %1, %2, %cst {dimension_numbers = #tpu.dot_dimension_numbers<[1], [0], [0], [1], [0, 0, 1, 1], [], []>} : vector<2x32xbf16>, vector<32x512xbf16>, vector<2x512xf32> -> vector<2x512xf32>
    %c0_3 = arith.constant 0 : index
    %c0_4 = arith.constant 0 : index
    %4 = vector.load %arg3[%c0_3, %c0_4] : memref<1x512xf32, #tpu.memory_space<vmem>>, vector<1x512xf32>
    %5 = vector.broadcast %4 : vector<1x512xf32> to vector<2x512xf32>
    %6 = arith.addf %3, %5 : vector<2x512xf32>
    %cst_5 = arith.constant 0.000000e+00 : f32
    %7 = vector.broadcast %cst_5 : f32 to vector<2x512xf32>
    %8 = arith.cmpf oge, %6, %7 : vector<2x512xf32>
    %cst_6 = arith.constant 2.000000e-01 : f32
    %9 = vector.broadcast %cst_6 : f32 to vector<2x512xf32>
    %10 = arith.mulf %9, %6 : vector<2x512xf32>
    %11 = arith.select %8, %6, %10 : vector<2x512xi1>, vector<2x512xf32>
    %12 = arith.truncf %11 : vector<2x512xf32> to vector<2x512xbf16>
    %c0_7 = arith.constant 0 : index
    %c0_8 = arith.constant 0 : index
    %c0_9 = arith.constant 0 : index
    %13 = vector.load %arg4[%c0_7, %c0_8, %c0_9] : memref<1x512x4480xbf16, #tpu.memory_space<vmem>>, vector<1x512x4480xbf16>
    %14 = vector.shape_cast %13 : vector<1x512x4480xbf16> to vector<512x4480xbf16>
    %cst_10 = arith.constant dense<0.000000e+00> : vector<2x4480xf32>
    %15 = tpu.matmul %12, %14, %cst_10 {dimension_numbers = #tpu.dot_dimension_numbers<[1], [0], [0], [1], [0, 0, 1, 1], [], []>} : vector<2x512xbf16>, vector<512x4480xbf16>, vector<2x4480xf32> -> vector<2x4480xf32>
    %c4480_i32 = arith.constant 4480 : i32
    %16 = arith.muli %arg0, %c4480_i32 : i32
    %17 = tpu.assume_multiple %16, 128 : i32
    %c0_11 = arith.constant 0 : index
    %18 = arith.index_cast %17 : i32 to index
    %19 = vector.load %arg5[%c0_11, %18] : memref<1x8960xf32, #tpu.memory_space<vmem>>, vector<1x4480xf32>
    %20 = vector.broadcast %19 : vector<1x4480xf32> to vector<2x4480xf32>
    %21 = arith.addf %15, %20 : vector<2x4480xf32>
    %22 = arith.negf %21 : vector<2x4480xf32>
    %23 = math.exp %22 : vector<2x4480xf32>
    %cst_12 = arith.constant 1.000000e+00 : f32
    %24 = vector.broadcast %cst_12 : f32 to vector<2x4480xf32>
    %25 = arith.addf %24, %23 : vector<2x4480xf32>
    %26 = arith.divf %24, %25 : vector<2x4480xf32>
    %c0_13 = arith.constant 0 : index
    %c0_14 = arith.constant 0 : index
    %27 = vector.load %arg6[%c0_13, %c0_14] : memref<2x4480xf32, #tpu.memory_space<vmem>>, vector<2x4480xf32>
    tpu.vector_store %arg6[%c0_13, %c0_14], %26 {strides = array<i32>} : memref<2x4480xf32, #tpu.memory_space<vmem>>, vector<2x4480xf32>,
    return
  }
  func.func @transform_0(%arg0: i32) -> (i32, i32) {
    %c0_i32 = arith.constant 0 : i32
    %c0_i32_0 = arith.constant 0 : i32
    %c0_i32_1 = arith.constant 0 : i32
    return %c0_i32, %c0_i32_0 : i32, i32
  }
  func.func @transform_1(%arg0: i32) -> (i32, i32) {
    %c0_i32 = arith.constant 0 : i32
    %c0_i32_0 = arith.constant 0 : i32
    %c0_i32_1 = arith.constant 0 : i32
    return %c0_i32, %c0_i32_0 : i32, i32
  }
  func.func @transform_2(%arg0: i32) -> (i32, i32) {
    %c0_i32 = arith.constant 0 : i32
    %c0_i32_0 = arith.constant 0 : i32
    %c0_i32_1 = arith.constant 0 : i32
    return %c0_i32, %c0_i32_0 : i32, i32
  }
  func.func @transform_3(%arg0: i32) -> (i32, i32, i32) {
    %c0_i32 = arith.constant 0 : i32
    %c0_i32_0 = arith.constant 0 : i32
    %c0_i32_1 = arith.constant 0 : i32
    return %arg0, %c0_i32, %c0_i32_0 : i32, i32, i32
  }
  func.func @transform_4(%arg0: i32) -> (i32, i32) {
    %c0_i32 = arith.constant 0 : i32
    %c0_i32_0 = arith.constant 0 : i32
    %c0_i32_1 = arith.constant 0 : i32
    return %c0_i32, %c0_i32_0 : i32, i32
  }
  func.func @transform_5(%arg0: i32) -> (i32, i32) {
    %c0_i32 = arith.constant 0 : i32
    %c0_i32_0 = arith.constant 0 : i32
    return %c0_i32, %arg0 : i32, i32
  }
}

</mosaic_0001>

<llo_original>
// kernel: tpu_custom_call.1
$region0: #{tpu_custom_call.1}
  #allocation0 [shape = 'u32[]', space=smem, size = 0x4, offset = 0x4, fixed_abs, tag = 'smem constant byte address 0x4 - core index']
  #allocation1 [shape = 'u32[144,128]{1,0:T(1,128)}', space=vmem, size = 0x12000, scoped, tag = 'internal scratch']
  %s0 = inlined_call_operand.hbm [shape: f32[2,32], index: 0, kind: input, shape index: {}]
  %s1 = inlined_call_operand.hbm [shape: bf16[32,512], index: 1, kind: input, shape index: {}]
  %s2 = inlined_call_operand.hbm [shape: f32[1,512], index: 2, kind: input, shape index: {}]
  %s3 = inlined_call_operand.hbm [shape: bf16[2,512,4480], index: 3, kind: input, shape index: {}]
  %s4 = inlined_call_operand.hbm [shape: f32[1,8960], index: 4, kind: input, shape index: {}]
  %s5 = inlined_call_operand.hbm [shape: f32[2,8960], index: 5, kind: output, shape index: {}]
  %s6 = sld [smem:[#allocation0]]
  $region73: #{tpu_custom_call.1} parent=0
    _
  %s8 = ssub.s32 1, %s6
  %s9 = scalar_select 0, %s8, %s6
  $region1: #{tpu_custom_call.1} parent=0
    #allocation2 [shape = 'u8[1024]{0}', space=vmem, size = 0x400, scoped, tag = 'input window, operand 0, single buffered']
    #allocation3 [shape = 's32[2]{0}', space=sflag, size = 0x8, scoped, tag = 'scoped memory for tpu_custom_call.1']
    #allocation4 [shape = 's32[2]{0}', space=sflag, size = 0x8, scoped, tag = 'scoped memory for tpu_custom_call.1']
    #allocation5 [shape = 'u8[32768]{0}', space=vmem, size = 0x8000, scoped, tag = 'input window, operand 1, single buffered']
    #allocation6 [shape = 's32[1]{0}', space=sflag, size = 0x4, scoped, tag = 'scoped memory for tpu_custom_call.1']
    #allocation7 [shape = 'u8[2048]{0}', space=vmem, size = 0x800, scoped, tag = 'input window, operand 2, single buffered']
    #allocation8 [shape = 'u8[9175040]{0}', space=vmem, size = 0x8c0000, scoped, tag = 'input window, operand 3']
    #allocation9 [shape = 's32[2]{0}', space=sflag, size = 0x8, scoped, tag = 'scoped memory for tpu_custom_call.1']
    #allocation10 [shape = 'u8[35840]{0}', space=vmem, size = 0x8c00, scoped, tag = 'input window, operand 4, single buffered']
    #allocation11 [shape = 'u8[71680]{0}', space=vmem, size = 0x11800, scoped, tag = 'output window, operand 0']
    %10 = vsyncpa [#allocation3], 0
    %11 = vsyncpa [#allocation6], 0
    %12 = vsyncpa [#allocation9], 0
    %s13 = scalar_lea.sflag [#allocation9], 1
    %14 = vsyncpa %s13, 0
    %15 = vsyncpa [#allocation4], 0
    %s16 = scalar_lea.sflag [#allocation4], 1
    %17 = vsyncpa %s16, 0
    loop: start=0, step=1, limit=4
    $region2: #{tpu_custom_call.1} parent=1 // loop_pre_header
      _
    $region3: #{tpu_custom_call.1} parent=1 // loop_header
      %s19 = sphi 0, %s23
      %p20 = scmp.ge.s32.totalorder %s19, 4
      %s27 = sphi 0, %s27
      %s29 = sphi 0, %s27
      %s30 = sphi 0, %s29
      %s44 = sphi 0, %s30
      %s48 = sphi 0, %s48
      %s50 = sphi 0, %s48
      %s51 = sphi 0, %s50
      %s65 = sphi 0, %s51
      %s69 = sphi 0, %s69
      %s71 = sphi 0, %s69
      %s72 = sphi 0, %s71
      %s86 = sphi 0, %s72
      %s92 = sphi 0, %s94
      %s95 = sphi 0, %s92
      %s96 = sphi 0, %s95
      %s112 = sphi 0, %s96
      %s116 = sphi 0, %s116
      %s118 = sphi 0, %s116
      %s119 = sphi 0, %s118
      %s133 = sphi 0, %s119
      %s139 = sphi 0, %s141
      %s142 = sphi 0, %s139
      %s143 = sphi 0, %s142
      %s159 = sphi 0, %s143
    $region4: #{tpu_custom_call.1} parent=1 // loop_header_branch
      %22 = sbr.rel (%p20) target = $region8
    $region5: #{tpu_custom_call.1} parent=1 // loop_body
      %s24 = ssub.s32 %s19, 1
      %s25 = ssub.s32 %s19, 2
      %s26 = sadd.s32 %s19, 1
      %s28 = sadd.s32 %s27, 1
      %p31 = scmp.eq.s32.totalorder %s19, 1
      %p32 = scmp.ne.s32.totalorder %s27, %s29
      %p33 = scmp.eq.s32.totalorder %s19, 0
      %p34 = por %p32, %p33
      %p35 = scmp.ne.s32.totalorder %s27, %s29
      %p36 = scmp.eq.s32.totalorder %s24, 1
      %p37 = por %p35, %p36
      %p38 = scmp.ne.s32.totalorder %s29, %s30
      %p39 = scmp.eq.s32.totalorder %s24, 0
      %p40 = por %p38, %p39
      %p41 = scmp.ne.s32.totalorder %s29, %s30
      %p42 = scmp.eq.s32.totalorder %s25, 1
      %p43 = por %p41, %p42
      %p45 = scmp.ne.s32.totalorder %s30, %s44
      %p46 = scmp.eq.s32.totalorder %s25, 0
      %p47 = por %p45, %p46
      %s49 = sadd.s32 %s48, 1
      %p52 = scmp.eq.s32.totalorder %s19, 1
      %p53 = scmp.ne.s32.totalorder %s48, %s50
      %p54 = scmp.eq.s32.totalorder %s19, 0
      %p55 = por %p53, %p54
      %p56 = scmp.ne.s32.totalorder %s48, %s50
      %p57 = scmp.eq.s32.totalorder %s24, 1
      %p58 = por %p56, %p57
      %p59 = scmp.ne.s32.totalorder %s50, %s51
      %p60 = scmp.eq.s32.totalorder %s24, 0
      %p61 = por %p59, %p60
      %p62 = scmp.ne.s32.totalorder %s50, %s51
      %p63 = scmp.eq.s32.totalorder %s25, 1
      %p64 = por %p62, %p63
      %p66 = scmp.ne.s32.totalorder %s51, %s65
      %p67 = scmp.eq.s32.totalorder %s25, 0
      %p68 = por %p66, %p67
      %s70 = sadd.s32 %s69, 1
      %p73 = scmp.eq.s32.totalorder %s19, 1
      %p74 = scmp.ne.s32.totalorder %s69, %s71
      %p75 = scmp.eq.s32.totalorder %s19, 0
      %p76 = por %p74, %p75
      %p77 = scmp.ne.s32.totalorder %s69, %s71
      %p78 = scmp.eq.s32.totalorder %s24, 1
      %p79 = por %p77, %p78
      %p80 = scmp.ne.s32.totalorder %s71, %s72
      %p81 = scmp.eq.s32.totalorder %s24, 0
      %p82 = por %p80, %p81
      %p83 = scmp.ne.s32.totalorder %s71, %s72
      %p84 = scmp.eq.s32.totalorder %s25, 1
      %p85 = por %p83, %p84
      %p87 = scmp.ne.s32.totalorder %s72, %s86
      %p88 = scmp.eq.s32.totalorder %s25, 0
      %p89 = por %p87, %p88
      %s90 = ssub.s32 %s19, %s26
      %p91 = scmp.eq.s32.totalorder %s90, 0
      %s93 = sadd.s32 %s92, 1
      %s94 = scalar_select %p91, %s92, %s93
      %p97 = pneg %p91
      %p98 = scmp.eq.s32.totalorder %s19, 1
      %p99 = por %p97, %p98
      %p100 = scmp.ne.s32.totalorder %s92, %s95
      %p101 = scmp.eq.s32.totalorder %s19, 0
      %p102 = por %p100, %p101
      %p103 = scmp.ne.s32.totalorder %s92, %s95
      %p104 = scmp.eq.s32.totalorder %s24, 1
      %p105 = por %p103, %p104
      %p106 = scmp.ne.s32.totalorder %s95, %s96
      %p107 = scmp.eq.s32.totalorder %s24, 0
      %p108 = por %p106, %p107
      %p109 = scmp.ne.s32.totalorder %s95, %s96
      %p110 = scmp.eq.s32.totalorder %s25, 1
      %p111 = por %p109, %p110
      %p113 = scmp.ne.s32.totalorder %s96, %s112
      %p114 = scmp.eq.s32.totalorder %s25, 0
      %p115 = por %p113, %p114
      %s117 = sadd.s32 %s116, 1
      %p120 = scmp.eq.s32.totalorder %s19, 1
      %p121 = scmp.ne.s32.totalorder %s116, %s118
      %p122 = scmp.eq.s32.totalorder %s19, 0
      %p123 = por %p121, %p122
      %p124 = scmp.ne.s32.totalorder %s116, %s118
      %p125 = scmp.eq.s32.totalorder %s24, 1
      %p126 = por %p124, %p125
      %p127 = scmp.ne.s32.totalorder %s118, %s119
      %p128 = scmp.eq.s32.totalorder %s24, 0
      %p129 = por %p127, %p128
      %p130 = scmp.ne.s32.totalorder %s118, %s119
      %p131 = scmp.eq.s32.totalorder %s25, 1
      %p132 = por %p130, %p131
      %p134 = scmp.ne.s32.totalorder %s119, %s133
      %p135 = scmp.eq.s32.totalorder %s25, 0
      %p136 = por %p134, %p135
      %s137 = ssub.s32 %s19, %s26
      %p138 = scmp.eq.s32.totalorder %s137, 0
      %s140 = sadd.s32 %s139, 1
      %s141 = scalar_select %p138, %s139, %s140
      %p144 = pneg %p138
      %p145 = scmp.eq.s32.totalorder %s19, 1
      %p146 = por %p144, %p145
      %p147 = scmp.ne.s32.totalorder %s139, %s142
      %p148 = scmp.eq.s32.totalorder %s19, 0
      %p149 = por %p147, %p148
      %p150 = scmp.ne.s32.totalorder %s139, %s142
      %p151 = scmp.eq.s32.totalorder %s24, 1
      %p152 = por %p150, %p151
      %p153 = scmp.ne.s32.totalorder %s142, %s143
      %p154 = scmp.eq.s32.totalorder %s24, 0
      %p155 = por %p153, %p154
      %p156 = scmp.ne.s32.totalorder %s142, %s143
      %p157 = scmp.eq.s32.totalorder %s25, 1
      %p158 = por %p156, %p157
      %p160 = scmp.ne.s32.totalorder %s143, %s159
      %p161 = scmp.eq.s32.totalorder %s25, 0
      %p162 = por %p160, %p161
      %p163 = scmp.le.s32.totalorder 1, %s19
      %p164 = scmp.lt.s32.totalorder %s19, 3
      %p165 = pnand %p163, %p164
      %p166 = pneg %p165
      // Predicated region
      $region9: #{tpu_custom_call.1} parent=5 // pred_check
        _
      $region10: #{tpu_custom_call.1} parent=5 // pred_check_branch
        %168 = sbr.rel (%p165) target = $region12
      $region11: #{tpu_custom_call.1} parent=5 // pred_region
        %s169 = ssub.s32 %s19, 1
        // Predicated region
        $region13: #{tpu_custom_call.1} parent=11 // pred_check
          %p170 = pneg %p40
        $region14: #{tpu_custom_call.1} parent=11 // pred_check_branch
          %172 = sbr.rel (%p170) target = $region16
        $region15: #{tpu_custom_call.1} parent=11 // pred_region
          %s174 = ssub.s32 32, 32
          %175 = vsyncadd [#allocation3], %s174
          %s177 = sshll.u32 [#allocation2], 4
          %s178 = int_to_ptr.vmem [resolvable:$true] %s177
          %180 = dma.hbm_to_vmem [thread:$0]  %s0, 32, %s178, [#allocation3]
        $region16: #{tpu_custom_call.1} parent=11 // pred_fallthru
          _
        // Predicated region
        $region17: #{tpu_custom_call.1} parent=11 // pred_check
          %p181 = pneg %p61
        $region18: #{tpu_custom_call.1} parent=11 // pred_check_branch
          %183 = sbr.rel (%p181) target = $region20
        $region19: #{tpu_custom_call.1} parent=11 // pred_region
          %s185 = ssub.s32 1024, 1024
          %186 = vsyncadd [#allocation6], %s185
          %s187 = sshll.u32 [#allocation5], 4
          %s188 = int_to_ptr.vmem [resolvable:$true] %s187
          %193 = dma.hbm_to_vmem [thread:$0]  %s1, 1024, %s188, [#allocation6], 256, 256, 16
        $region20: #{tpu_custom_call.1} parent=11 // pred_fallthru
          _
        // Predicated region
        $region21: #{tpu_custom_call.1} parent=11 // pred_check
          %p194 = pneg %p82
        $region22: #{tpu_custom_call.1} parent=11 // pred_check_branch
          %196 = sbr.rel (%p194) target = $region24
        $region23: #{tpu_custom_call.1} parent=11 // pred_region
          %s198 = ssub.s32 64, 64
          %199 = vsyncadd [#allocation6], %s198
          %s201 = sshll.u32 [#allocation7], 4
          %s202 = int_to_ptr.vmem [resolvable:$true] %s201
          %204 = dma.hbm_to_vmem [thread:$0]  %s2, 64, %s202, [#allocation6]
        $region24: #{tpu_custom_call.1} parent=11 // pred_fallthru
          _
        // Predicated region
        $region25: #{tpu_custom_call.1} parent=11 // pred_check
          %p205 = pneg %p129
        $region26: #{tpu_custom_call.1} parent=11 // pred_check_branch
          %207 = sbr.rel (%p205) target = $region28
        $region27: #{tpu_custom_call.1} parent=11 // pred_region
          %s209 = ssub.s32 1120, 1120
          %210 = vsyncadd [#allocation9], %s209
          %s212 = sshll.u32 [#allocation10], 4
          %s213 = int_to_ptr.vmem [resolvable:$true] %s212
          %215 = dma.hbm_to_vmem [thread:$0]  %s4, 1120, %s213, [#allocation9]
        $region28: #{tpu_custom_call.1} parent=11 // pred_fallthru
          _
      $region12: #{tpu_custom_call.1} parent=5 // pred_fallthru
        _
      %p216 = scmp.lt.s32.totalorder %s19, 2
      // Predicated region
      $region29: #{tpu_custom_call.1} parent=5 // pred_check
        %p217 = pneg %p216
      $region30: #{tpu_custom_call.1} parent=5 // pred_check_branch
        %219 = sbr.rel (%p217) target = $region32
      $region31: #{tpu_custom_call.1} parent=5 // pred_region
        // Predicated region
        $region33: #{tpu_custom_call.1} parent=31 // pred_check
          %p220 = pneg %p102
        $region34: #{tpu_custom_call.1} parent=31 // pred_check_branch
          %222 = sbr.rel (%p220) target = $region36
        $region35: #{tpu_custom_call.1} parent=31 // pred_region
          %s223 = sand.u32 %s19, 1
          %s224 = scalar_lea.sflag [#allocation9], %s223
          %s225 = sand.u32 %s92, 1
          %s226 = smul.addr %s225, 8960
          %s227 = scalar_lea.vmem [#allocation8], %s226
          %s229 = ssub.s32 143360, 143360
          %230 = vsyncadd %s224, %s229
          %s231 = smul.addr %s19, 2240
          %s232 = smul.addr %s231, 64
          %s233 = scalar_lea.hbm %s3, %s232
          %s234 = sshll.u32 %s227, 4
          %s235 = int_to_ptr.vmem [resolvable:$true] %s234
          %240 = dma.hbm_to_vmem [thread:$0]  %s233, 143360, %s235, %s224, 2240, 2240, 140
        $region36: #{tpu_custom_call.1} parent=31 // pred_fallthru
          _
      $region32: #{tpu_custom_call.1} parent=5 // pred_fallthru
        _
      %p241 = scmp.le.s32.totalorder 1, %s19
      %p242 = scmp.lt.s32.totalorder %s19, 3
      %p243 = pnand %p241, %p242
      %p244 = pneg %p243
      // Predicated region
      $region37: #{tpu_custom_call.1} parent=5 // pred_check
        _
      $region38: #{tpu_custom_call.1} parent=5 // pred_check_branch
        %246 = sbr.rel (%p243) target = $region40
      $region39: #{tpu_custom_call.1} parent=5 // pred_region
        %s247 = ssub.s32 %s19, 1
        // Predicated region
        $region41: #{tpu_custom_call.1} parent=39 // pred_check
          %p248 = pneg %p40
        $region42: #{tpu_custom_call.1} parent=39 // pred_check_branch
          %250 = sbr.rel (%p248) target = $region44
        $region43: #{tpu_custom_call.1} parent=39 // pred_region
          %251 = dma.done [#allocation3], 32
        $region44: #{tpu_custom_call.1} parent=39 // pred_fallthru
          _
        // Predicated region
        $region45: #{tpu_custom_call.1} parent=39 // pred_check
          %p252 = pneg %p61
        $region46: #{tpu_custom_call.1} parent=39 // pred_check_branch
          %254 = sbr.rel (%p252) target = $region48
        $region47: #{tpu_custom_call.1} parent=39 // pred_region
          %255 = dma.done [#allocation6], 1024
        $region48: #{tpu_custom_call.1} parent=39 // pred_fallthru
          _
        // Predicated region
        $region49: #{tpu_custom_call.1} parent=39 // pred_check
          %p256 = pneg %p82
        $region50: #{tpu_custom_call.1} parent=39 // pred_check_branch
          %258 = sbr.rel (%p256) target = $region52
        $region51: #{tpu_custom_call.1} parent=39 // pred_region
          %259 = dma.done [#allocation6], 64
        $region52: #{tpu_custom_call.1} parent=39 // pred_fallthru
          _
        %s260 = sand.u32 %s24, 1
        %s261 = scalar_lea.sflag [#allocation9], %s260
        %s262 = sand.u32 %s95, 1
        %s263 = smul.addr %s262, 8960
        %s264 = scalar_lea.vmem [#allocation8], %s263
        // Predicated region
        $region53: #{tpu_custom_call.1} parent=39 // pred_check
          %p265 = pneg %p108
        $region54: #{tpu_custom_call.1} parent=39 // pred_check_branch
          %267 = sbr.rel (%p265) target = $region56
        $region55: #{tpu_custom_call.1} parent=39 // pred_region
          %268 = dma.done %s261, 143360
        $region56: #{tpu_custom_call.1} parent=39 // pred_fallthru
          _
        // Predicated region
        $region57: #{tpu_custom_call.1} parent=39 // pred_check
          %p269 = pneg %p129
        $region58: #{tpu_custom_call.1} parent=39 // pred_check_branch
          %271 = sbr.rel (%p269) target = $region60
        $region59: #{tpu_custom_call.1} parent=39 // pred_region
          %272 = dma.done [#allocation9], 1120
        $region60: #{tpu_custom_call.1} parent=39 // pred_fallthru
          _
        %p273 = pneg %p40
        %p274 = pneg %p37
        %p275 = pneg %p61
        %p276 = pneg %p58
        %p277 = pneg %p82
        %p278 = pneg %p79
        %s279 = sand.u32 %s24, 1
        %s280 = scalar_lea.sflag [#allocation9], %s279
        %s281 = sand.u32 %s95, 1
        %s282 = smul.addr %s281, 8960
        %s283 = scalar_lea.vmem [#allocation8], %s282
        %p284 = pneg %p108
        %p285 = pneg %p105
        %p286 = pneg %p129
        %p287 = pneg %p126
        %p288 = pneg %p155
        %p289 = pneg %p152
        %s290 = sand.u32 %s142, 1
        %s291 = scalar_lea.sflag [#allocation4], %s290
        %s292 = sand.u32 %s142, 1
        %s293 = smul.addr %s292, 70
        %s294 = scalar_lea.vmem [#allocation11], %s293
        %s295 = smul.u32 35, %s24
        %v297 = vld [vmem:[#allocation2] sm:$0x3]
        %v298 = vpack.c.bf16 %v297, %v297
        %v299 = vld [vmem:[#allocation5] sm:$0xff]
        %v300 = vld [vmem:[#allocation5 + $0x8] sm:$0xff]
        %v301 = vld [vmem:[#allocation5 + $0x10] sm:$0xff]
        %v302 = vld [vmem:[#allocation5 + $0x18] sm:$0xff]
        %v303 = vld [vmem:[#allocation5 + $0x20] sm:$0xff]
        %v304 = vld [vmem:[#allocation5 + $0x28] sm:$0xff]
        %v305 = vld [vmem:[#allocation5 + $0x30] sm:$0xff]
        %v306 = vld [vmem:[#allocation5 + $0x38] sm:$0xff]
        %v307 = vld [vmem:[#allocation7] sm:$0xf]
        %v309 = vlaneseq
        %v310 = vshrl.u32 %v309, 7
        %v311 = vsub.s32 0, %v310
        %v312 = vrot.slane %v307, %v311
        %v313 = vlaneseq
        %v314 = vshrl.u32 %v313, 7
        %v315 = vsub.s32 1, %v314
        %v316 = vrot.slane %v307, %v315
        %v317 = vlaneseq
        %v318 = vshrl.u32 %v317, 7
        %v319 = vsub.s32 2, %v318
        %v320 = vrot.slane %v307, %v319
        %v321 = vlaneseq
        %v322 = vshrl.u32 %v321, 7
        %v323 = vsub.s32 3, %v322
        %v324 = vrot.slane %v307, %v323
        %v337 = vunpack.c.l.b16 %v299
        %v338 = vunpack.c.h.b16 %v299
        %v339 = vunpack.c.l.b16 %v300
        %v340 = vunpack.c.h.b16 %v300
        %v341 = vunpack.c.l.b16 %v301
        %v342 = vunpack.c.h.b16 %v301
        %v343 = vunpack.c.l.b16 %v302
        %v344 = vunpack.c.h.b16 %v302
        %v345 = vunpack.c.l.b16 %v303
        %v346 = vunpack.c.h.b16 %v303
        %v347 = vunpack.c.l.b16 %v304
        %v348 = vunpack.c.h.b16 %v304
        %v349 = vunpack.c.l.b16 %v305
        %v350 = vunpack.c.h.b16 %v305
        %v351 = vunpack.c.l.b16 %v306
        %v352 = vunpack.c.h.b16 %v306
        %v353 = vpack.c.b16 %v341, %v337
        %v354 = vpack.c.b16 %v342, %v338
        %v355 = vpack.c.b16 %v343, %v339
        %v356 = vpack.c.b16 %v344, %v340
        %v357 = vpack.c.b16 %v349, %v345
        %v358 = vpack.c.b16 %v350, %v346
        %v359 = vpack.c.b16 %v351, %v347
        %v360 = vpack.c.b16 %v352, %v348
        %vm369 = vcmask 261120
        %v371 = vsel %vm369, %v298, 0
        %373 = vmatprep.subr.bf16.mxu0 %v354
        %374 = vmatpush1.bf16.msra.mxu0 %v353
        %375 = vmatprep.subr.bf16.mxu0 %v358
        %376 = vmatpush1.bf16.msra.mxu0 %v357
        %377 = vmatprep.subr.bf16.mxu0 0
        %378 = vmatpush1.bf16.msra.mxu0 0
        %379 = vmatprep.subr.bf16.mxu0 0
        %380 = vmatpush1.bf16.msra.mxu0 0
        %381 = vmatprep.subr.bf16.mxu0 0
        %382 = vmatpush1.bf16.msra.mxu0 0
        %383 = vmatprep.subr.bf16.mxu0 0
        %384 = vmatpush1.bf16.msra.mxu0 0
        %385 = vmatprep.subr.bf16.mxu0 0
        %386 = vmatpush1.bf16.msra.mxu0 0
        %387 = vmatprep.subr.bf16.mxu0 0
        %388 = vmatpush1.bf16.msra.mxu0 0
        %389 = vmatprep.subr.bf16.mxu0 0
        %390 = vmatpush1.bf16.msra.mxu0 0
        %391 = vmatprep.subr.bf16.mxu0 0
        %392 = vmatpush1.bf16.msra.mxu0 0
        %393 = vmatprep.subr.bf16.mxu0 0
        %394 = vmatpush1.bf16.msra.mxu0 0
        %395 = vmatprep.subr.bf16.mxu0 0
        %396 = vmatpush1.bf16.msra.mxu0 0
        %397 = vmatprep.subr.bf16.mxu0 0
        %398 = vmatpush1.bf16.msra.mxu0 0
        %399 = vmatprep.subr.bf16.mxu0 0
        %400 = vmatpush1.bf16.msra.mxu0 0
        %401 = vmatprep.subr.bf16.mxu0 0
        %402 = vmatpush1.bf16.msra.mxu0 0
        %403 = vmatprep.subr.bf16.mxu0 0
        %404 = vmatpush1.bf16.msra.mxu0 0
        %405 = vmatprep.mubr.bf16.mxu0 0
        %406 = vmatmul.mubr.bf16.gmra.mrb[0].mxu0 %v371
        %v407 = vpop.f32.mrb[0].mxu0
        %v408 = vadd.f32 %v312, %v407
        %v409 = vpop.f32.mrb[0].mxu0
        %v410 = vadd.f32 %v316, %v409
        %v411 = vpop.f32.mrb[0].mxu0
        %v412 = vpop.f32.mrb[0].mxu0
        %413 = vdwg.mxu0
        %414 = vmatprep.subr.bf16.mxu0 %v356
        %415 = vmatpush1.bf16.msra.mxu0 %v355
        %416 = vmatprep.subr.bf16.mxu0 %v360
        %417 = vmatpush1.bf16.msra.mxu0 %v359
        %418 = vmatprep.subr.bf16.mxu0 0
        %419 = vmatpush1.bf16.msra.mxu0 0
        %420 = vmatprep.subr.bf16.mxu0 0
        %421 = vmatpush1.bf16.msra.mxu0 0
        %422 = vmatprep.subr.bf16.mxu0 0
        %423 = vmatpush1.bf16.msra.mxu0 0
        %424 = vmatprep.subr.bf16.mxu0 0
        %425 = vmatpush1.bf16.msra.mxu0 0
        %426 = vmatprep.subr.bf16.mxu0 0
        %427 = vmatpush1.bf16.msra.mxu0 0
        %428 = vmatprep.subr.bf16.mxu0 0
        %429 = vmatpush1.bf16.msra.mxu0 0
        %430 = vmatprep.subr.bf16.mxu0 0
        %431 = vmatpush1.bf16.msra.mxu0 0
        %432 = vmatprep.subr.bf16.mxu0 0
        %433 = vmatpush1.bf16.msra.mxu0 0
        %434 = vmatprep.subr.bf16.mxu0 0
        %435 = vmatpush1.bf16.msra.mxu0 0
        %436 = vmatprep.subr.bf16.mxu0 0
        %437 = vmatpush1.bf16.msra.mxu0 0
        %438 = vmatprep.subr.bf16.mxu0 0
        %439 = vmatpush1.bf16.msra.mxu0 0
        %440 = vmatprep.subr.bf16.mxu0 0
        %441 = vmatpush1.bf16.msra.mxu0 0
        %442 = vmatprep.subr.bf16.mxu0 0
        %443 = vmatpush1.bf16.msra.mxu0 0
        %444 = vmatprep.subr.bf16.mxu0 0
        %445 = vmatpush1.bf16.msra.mxu0 0
        %446 = vmatprep.mubr.bf16.mxu0 0
        %447 = vmatmul.mubr.bf16.gmra.mrb[0].mxu0 %v371
        %v448 = vpop.f32.mrb[0].mxu0
        %v449 = vadd.f32 %v320, %v448
        %v450 = vpop.f32.mrb[0].mxu0
        %v451 = vadd.f32 %v324, %v450
        %v452 = vpop.f32.mrb[0].mxu0
        %v453 = vpop.f32.mrb[0].mxu0
        %454 = vdwg.mxu0
        %vm455 = vcmp.ge.f32.partialorder %v408, 0.0
        %vm456 = vcmp.ge.f32.partialorder %v410, 0.0
        %vm457 = vcmp.ge.f32.partialorder %v449, 0.0
        %vm458 = vcmp.ge.f32.partialorder %v451, 0.0
        %v459 = vmul.f32 %v408, 0.2
        %v460 = vmul.f32 %v410, 0.2
        %v461 = vmul.f32 %v449, 0.2
        %v462 = vmul.f32 %v451, 0.2
        %v463 = vsel %vm455, %v408, %v459
        %v464 = vsel %vm456, %v410, %v460
        %v465 = vsel %vm457, %v449, %v461
        %v466 = vsel %vm458, %v451, %v462
        %v467 = vpack.c.bf16 %v463, %v463
        %v468 = vpack.c.bf16 %v464, %v464
        %v469 = vpack.c.bf16 %v465, %v465
        %v470 = vpack.c.bf16 %v466, %v466
        %v471 = vld [vmem:[%s264] sm:$0xff]
        %v472 = vld [vmem:[%s264 + $0x8] sm:$0xff]
        %v473 = vld [vmem:[%s264 + $0x10] sm:$0xff]
        %v474 = vld [vmem:[%s264 + $0x18] sm:$0xff]
        %v475 = vld [vmem:[%s264 + $0x20] sm:$0xff]
        %v476 = vld [vmem:[%s264 + $0x28] sm:$0xff]
        %v477 = vld [vmem:[%s264 + $0x30] sm:$0xff]
        %v478 = vld [vmem:[%s264 + $0x38] sm:$0xff]
        %v479 = vld [vmem:[%s264 + $0x40] sm:$0xff]
        %v480 = vld [vmem:[%s264 + $0x48] sm:$0xff]
        %v481 = vld [vmem:[%s264 + $0x50] sm:$0xff]
        %v482 = vld [vmem:[%s264 + $0x58] sm:$0xff]
        %v483 = vld [vmem:[%s264 + $0x60] sm:$0xff]
        %v484 = vld [vmem:[%s264 + $0x68] sm:$0xff]
        %v485 = vld [vmem:[%s264 + $0x70] sm:$0xff]
        %v486 = vld [vmem:[%s264 + $0x78] sm:$0xff]
        %v487 = vld [vmem:[%s264 + $0x80] sm:$0xff]
        %v488 = vld [vmem:[%s264 + $0x88] sm:$0xf]
        %v489 = vld [vmem:[%s264 + $0x8c] sm:$0xff]
        %v490 = vld [vmem:[%s264 + $0x94] sm:$0xff]
        %v491 = vld [vmem:[%s264 + $0x9c] sm:$0xff]
        %v492 = vld [vmem:[%s264 + $0xa4] sm:$0xff]
        %v493 = vld [vmem:[%s264 + $0xac] sm:$0xff]
        %v494 = vld [vmem:[%s264 + $0xb4] sm:$0xff]
        %v495 = vld [vmem:[%s264 + $0xbc] sm:$0xff]
        %v496 = vld [vmem:[%s264 + $0xc4] sm:$0xff]
        %v497 = vld [vmem:[%s264 + $0xcc] sm:$0xff]
        %v498 = vld [vmem:[%s264 + $0xd4] sm:$0xff]
        %v499 = vld [vmem:[%s264 + $0xdc] sm:$0xff]
        %v500 = vld [vmem:[%s264 + $0xe4] sm:$0xff]
        %v501 = vld [vmem:[%s264 + $0xec] sm:$0xff]
        %v502 = vld [vmem:[%s264 + $0xf4] sm:$0xff]
        %v503 = vld [vmem:[%s264 + $0xfc] sm:$0xff]
        %v504 = vld [vmem:[%s264 + $0x104] sm:$0xff]
        %v505 = vld [vmem:[%s264 + $0x10c] sm:$0xff]
        %v506 = vld [vmem:[%s264 + $0x114] sm:$0xf]
        %v507 = vld [vmem:[%s264 + $0x118] sm:$0xff]
        %v508 = vld [vmem:[%s264 + $0x120] sm:$0xff]
        %v509 = vld [vmem:[%s264 + $0x128] sm:$0xff]
        %v510 = vld [vmem:[%s264 + $0x130] sm:$0xff]
        %v511 = vld [vmem:[%s264 + $0x138] sm:$0xff]
        %v512 = vld [vmem:[%s264 + $0x140] sm:$0xff]
        %v513 = vld [vmem:[%s264 + $0x148] sm:$0xff]
        %v514 = vld [vmem:[%s264 + $0x150] sm:$0xff]
        %v515 = vld [vmem:[%s264 + $0x158] sm:$0xff]
        %v516 = vld [vmem:[%s264 + $0x160] sm:$0xff]
        %v517 = vld [vmem:[%s264 + $0x168] sm:$0xff]
        %v518 = vld [vmem:[%s264 + $0x170] sm:$0xff]
        %v519 = vld [vmem:[%s264 + $0x178] sm:$0xff]
        %v520 = vld [vmem:[%s264 + $0x180] sm:$0xff]
        %v521 = vld [vmem:[%s264 + $0x188] sm:$0xff]
        %v522 = vld [vmem:[%s264 + $0x190] sm:$0xff]
        %v523 = vld [vmem:[%s264 + $0x198] sm:$0xff]
        %v524 = vld [vmem:[%s264 + $0x1a0] sm:$0xf]
        %v525 = vld [vmem:[%s264 + $0x1a4] sm:$0xff]
        %v526 = vld [vmem:[%s264 + $0x1ac] sm:$0xff]
        %v527 = vld [vmem:[%s264 + $0x1b4] sm:$0xff]
        %v528 = vld [vmem:[%s264 + $0x1bc] sm:$0xff]
        %v529 = vld [vmem:[%s264 + $0x1c4] sm:$0xff]
        %v530 = vld [vmem:[%s264 + $0x1cc] sm:$0xff]
        %v531 = vld [vmem:[%s264 + $0x1d4] sm:$0xff]
        %v532 = vld [vmem:[%s264 + $0x1dc] sm:$0xff]
        %v533 = vld [vmem:[%s264 + $0x1e4] sm:$0xff]
        %v534 = vld [vmem:[%s264 + $0x1ec] sm:$0xff]
        %v535 = vld [vmem:[%s264 + $0x1f4] sm:$0xff]
        %v536 = vld [vmem:[%s264 + $0x1fc] sm:$0xff]
        %v537 = vld [vmem:[%s264 + $0x204] sm:$0xff]
        %v538 = vld [vmem:[%s264 + $0x20c] sm:$0xff]
        %v539 = vld [vmem:[%s264 + $0x214] sm:$0xff]
        %v540 = vld [vmem:[%s264 + $0x21c] sm:$0xff]
        %v541 = vld [vmem:[%s264 + $0x224] sm:$0xff]
        %v542 = vld [vmem:[%s264 + $0x22c] sm:$0xf]
        %v543 = vld [vmem:[%s264 + $0x230] sm:$0xff]
        %v544 = vld [vmem:[%s264 + $0x238] sm:$0xff]
        %v545 = vld [vmem:[%s264 + $0x240] sm:$0xff]
        %v546 = vld [vmem:[%s264 + $0x248] sm:$0xff]
        %v547 = vld [vmem:[%s264 + $0x250] sm:$0xff]
        %v548 = vld [vmem:[%s264 + $0x258] sm:$0xff]
        %v549 = vld [vmem:[%s264 + $0x260] sm:$0xff]
        %v550 = vld [vmem:[%s264 + $0x268] sm:$0xff]
        %v551 = vld [vmem:[%s264 + $0x270] sm:$0xff]
        %v552 = vld [vmem:[%s264 + $0x278] sm:$0xff]
        %v553 = vld [vmem:[%s264 + $0x280] sm:$0xff]
        %v554 = vld [vmem:[%s264 + $0x288] sm:$0xff]
        %v555 = vld [vmem:[%s264 + $0x290] sm:$0xff]
        %v556 = vld [vmem:[%s264 + $0x298] sm:$0xff]
        %v557 = vld [vmem:[%s264 + $0x2a0] sm:$0xff]
        %v558 = vld [vmem:[%s264 + $0x2a8] sm:$0xff]
        %v559 = vld [vmem:[%s264 + $0x2b0] sm:$0xff]
        %v560 = vld [vmem:[%s264 + $0x2b8] sm:$0xf]
        %v561 = vld [vmem:[%s264 + $0x2bc] sm:$0xff]
        %v562 = vld [vmem:[%s264 + $0x2c4] sm:$0xff]
        %v563 = vld [vmem:[%s264 + $0x2cc] sm:$0xff]
        %v564 = vld [vmem:[%s264 + $0x2d4] sm:$0xff]
        %v565 = vld [vmem:[%s264 + $0x2dc] sm:$0xff]
        %v566 = vld [vmem:[%s264 + $0x2e4] sm:$0xff]
        %v567 = vld [vmem:[%s264 + $0x2ec] sm:$0xff]
        %v568 = vld [vmem:[%s264 + $0x2f4] sm:$0xff]
        %v569 = vld [vmem:[%s264 + $0x2fc] sm:$0xff]
        %v570 = vld [vmem:[%s264 + $0x304] sm:$0xff]
        %v571 = vld [vmem:[%s264 + $0x30c] sm:$0xff]
        %v572 = vld [vmem:[%s264 + $0x314] sm:$0xff]
        %v573 = vld [vmem:[%s264 + $0x31c] sm:$0xff]
        %v574 = vld [vmem:[%s264 + $0x324] sm:$0xff]
        %v575 = vld [vmem:[%s264 + $0x32c] sm:$0xff]
        %v576 = vld [vmem:[%s264 + $0x334] sm:$0xff]
        %v577 = vld [vmem:[%s264 + $0x33c] sm:$0xff]
        %v578 = vld [vmem:[%s264 + $0x344] sm:$0xf]
        %v579 = vld [vmem:[%s264 + $0x348] sm:$0xff]
        %v580 = vld [vmem:[%s264 + $0x350] sm:$0xff]
        %v581 = vld [vmem:[%s264 + $0x358] sm:$0xff]
        %v582 = vld [vmem:[%s264 + $0x360] sm:$0xff]
        %v583 = vld [vmem:[%s264 + $0x368] sm:$0xff]
        %v584 = vld [vmem:[%s264 + $0x370] sm:$0xff]
        %v585 = vld [vmem:[%s264 + $0x378] sm:$0xff]
        %v586 = vld [vmem:[%s264 + $0x380] sm:$0xff]
        %v587 = vld [vmem:[%s264 + $0x388] sm:$0xff]
        %v588 = vld [vmem:[%s264 + $0x390] sm:$0xff]
        %v589 = vld [vmem:[%s264 + $0x398] sm:$0xff]
        %v590 = vld [vmem:[%s264 + $0x3a0] sm:$0xff]
        %v591 = vld [vmem:[%s264 + $0x3a8] sm:$0xff]
        %v592 = vld [vmem:[%s264 + $0x3b0] sm:$0xff]
        %v593 = vld [vmem:[%s264 + $0x3b8] sm:$0xff]
        %v594 = vld [vmem:[%s264 + $0x3c0] sm:$0xff]
        %v595 = vld [vmem:[%s264 + $0x3c8] sm:$0xff]
        %v596 = vld [vmem:[%s264 + $0x3d0] sm:$0xf]
        %v597 = vld [vmem:[%s264 + $0x3d4] sm:$0xff]
        %v598 = vld [vmem:[%s264 + $0x3dc] sm:$0xff]
        %v599 = vld [vmem:[%s264 + $0x3e4] sm:$0xff]
        %v600 = vld [vmem:[%s264 + $0x3ec] sm:$0xff]
        %v601 = vld [vmem:[%s264 + $0x3f4] sm:$0xff]
        %v602 = vld [vmem:[%s264 + $0x3fc] sm:$0xff]
        %v603 = vld [vmem:[%s264 + $0x404] sm:$0xff]
        %v604 = vld [vmem:[%s264 + $0x40c] sm:$0xff]
        %v605 = vld [vmem:[%s264 + $0x414] sm:$0xff]
        %v606 = vld [vmem:[%s264 + $0x41c] sm:$0xff]
        %v607 = vld [vmem:[%s264 + $0x424] sm:$0xff]
        %v608 = vld [vmem:[%s264 + $0x42c] sm:$0xff]
        %v609 = vld [vmem:[%s264 + $0x434] sm:$0xff]
        %v610 = vld [vmem:[%s264 + $0x43c] sm:$0xff]
        %v611 = vld [vmem:[%s264 + $0x444] sm:$0xff]
        %v612 = vld [vmem:[%s264 + $0x44c] sm:$0xff]
        %v613 = vld [vmem:[%s264 + $0x454] sm:$0xff]
        %v614 = vld [vmem:[%s264 + $0x45c] sm:$0xf]
        %v615 = vld [vmem:[%s264 + $0x460] sm:$0xff]
        %v616 = vld [vmem:[%s264 + $0x468] sm:$0xff]
        %v617 = vld [vmem:[%s264 + $0x470] sm:$0xff]
        %v618 = vld [vmem:[%s264 + $0x478] sm:$0xff]
        %v619 = vld [vmem:[%s264 + $0x480] sm:$0xff]
        %v620 = vld [vmem:[%s264 + $0x488] sm:$0xff]
        %v621 = vld [vmem:[%s264 + $0x490] sm:$0xff]
        %v622 = vld [vmem:[%s264 + $0x498] sm:$0xff]
        %v623 = vld [vmem:[%s264 + $0x4a0] sm:$0xff]
        %v624 = vld [vmem:[%s264 + $0x4a8] sm:$0xff]
        %v625 = vld [vmem:[%s264 + $0x4b0] sm:$0xff]
        %v626 = vld [vmem:[%s264 + $0x4b8] sm:$0xff]
        %v627 = vld [vmem:[%s264 + $0x4c0] sm:$0xff]
        %v628 = vld [vmem:[%s264 + $0x4c8] sm:$0xff]
        %v629 = vld [vmem:[%s264 + $0x4d0] sm:$0xff]
        %v630 = vld [vmem:[%s264 + $0x4d8] sm:$0xff]
        %v631 = vld [vmem:[%s264 + $0x4e0] sm:$0xff]
        %v632 = vld [vmem:[%s264 + $0x4e8] sm:$0xf]
        %v633 = vld [vmem:[%s264 + $0x4ec] sm:$0xff]
        %v634 = vld [vmem:[%s264 + $0x4f4] sm:$0xff]
        %v635 = vld [vmem:[%s264 + $0x4fc] sm:$0xff]
        %v636 = vld [vmem:[%s264 + $0x504] sm:$0xff]
        %v637 = vld [vmem:[%s264 + $0x50c] sm:$0xff]
        %v638 = vld [vmem:[%s264 + $0x514] sm:$0xff]
        %v639 = vld [vmem:[%s264 + $0x51c] sm:$0xff]
        %v640 = vld [vmem:[%s264 + $0x524] sm:$0xff]
        %v641 = vld [vmem:[%s264 + $0x52c] sm:$0xff]
        %v642 = vld [vmem:[%s264 + $0x534] sm:$0xff]
        %v643 = vld [vmem:[%s264 + $0x53c] sm:$0xff]
        %v644 = vld [vmem:[%s264 + $0x544] sm:$0xff]
        %v645 = vld [vmem:[%s264 + $0x54c] sm:$0xff]
        %v646 = vld [vmem:[%s264 + $0x554] sm:$0xff]
        %v647 = vld [vmem:[%s264 + $0x55c] sm:$0xff]
        %v648 = vld [vmem:[%s264 + $0x564] sm:$0xff]
        %v649 = vld [vmem:[%s264 + $0x56c] sm:$0xff]
        %v650 = vld [vmem:[%s264 + $0x574] sm:$0xf]
        %v651 = vld [vmem:[%s264 + $0x578] sm:$0xff]
        %v652 = vld [vmem:[%s264 + $0x580] sm:$0xff]
        %v653 = vld [vmem:[%s264 + $0x588] sm:$0xff]
        %v654 = vld [vmem:[%s264 + $0x590] sm:$0xff]
        %v655 = vld [vmem:[%s264 + $0x598] sm:$0xff]
        %v656 = vld [vmem:[%s264 + $0x5a0] sm:$0xff]
        %v657 = vld [vmem:[%s264 + $0x5a8] sm:$0xff]
        %v658 = vld [vmem:[%s264 + $0x5b0] sm:$0xff]
        %v659 = vld [vmem:[%s264 + $0x5b8] sm:$0xff]
        %v660 = vld [vmem:[%s264 + $0x5c0] sm:$0xff]
        %v661 = vld [vmem:[%s264 + $0x5c8] sm:$0xff]
        %v662 = vld [vmem:[%s264 + $0x5d0] sm:$0xff]
        %v663 = vld [vmem:[%s264 + $0x5d8] sm:$0xff]
        %v664 = vld [vmem:[%s264 + $0x5e0] sm:$0xff]
        %v665 = vld [vmem:[%s264 + $0x5e8] sm:$0xff]
        %v666 = vld [vmem:[%s264 + $0x5f0] sm:$0xff]
        %v667 = vld [vmem:[%s264 + $0x5f8] sm:$0xff]
        %v668 = vld [vmem:[%s264 + $0x600] sm:$0xf]
        %v669 = vld [vmem:[%s264 + $0x604] sm:$0xff]
        %v670 = vld [vmem:[%s264 + $0x60c] sm:$0xff]
        %v671 = vld [vmem:[%s264 + $0x614] sm:$0xff]
        %v672 = vld [vmem:[%s264 + $0x61c] sm:$0xff]
        %v673 = vld [vmem:[%s264 + $0x624] sm:$0xff]
        %v674 = vld [vmem:[%s264 + $0x62c] sm:$0xff]
        %v675 = vld [vmem:[%s264 + $0x634] sm:$0xff]
        %v676 = vld [vmem:[%s264 + $0x63c] sm:$0xff]
        %v677 = vld [vmem:[%s264 + $0x644] sm:$0xff]
        %v678 = vld [vmem:[%s264 + $0x64c] sm:$0xff]
        %v679 = vld [vmem:[%s264 + $0x654] sm:$0xff]
        %v680 = vld [vmem:[%s264 + $0x65c] sm:$0xff]
        %v681 = vld [vmem:[%s264 + $0x664] sm:$0xff]
        %v682 = vld [vmem:[%s264 + $0x66c] sm:$0xff]
        %v683 = vld [vmem:[%s264 + $0x674] sm:$0xff]
        %v684 = vld [vmem:[%s264 + $0x67c] sm:$0xff]
        %v685 = vld [vmem:[%s264 + $0x684] sm:$0xff]
        %v686 = vld [vmem:[%s264 + $0x68c] sm:$0xf]
        %v687 = vld [vmem:[%s264 + $0x690] sm:$0xff]
        %v688 = vld [vmem:[%s264 + $0x698] sm:$0xff]
        %v689 = vld [vmem:[%s264 + $0x6a0] sm:$0xff]
        %v690 = vld [vmem:[%s264 + $0x6a8] sm:$0xff]
        %v691 = vld [vmem:[%s264 + $0x6b0] sm:$0xff]
        %v692 = vld [vmem:[%s264 + $0x6b8] sm:$0xff]
        %v693 = vld [vmem:[%s264 + $0x6c0] sm:$0xff]
        %v694 = vld [vmem:[%s264 + $0x6c8] sm:$0xff]
        %v695 = vld [vmem:[%s264 + $0x6d0] sm:$0xff]
        %v696 = vld [vmem:[%s264 + $0x6d8] sm:$0xff]
        %v697 = vld [vmem:[%s264 + $0x6e0] sm:$0xff]
        %v698 = vld [vmem:[%s264 + $0x6e8] sm:$0xff]
        %v699 = vld [vmem:[%s264 + $0x6f0] sm:$0xff]
        %v700 = vld [vmem:[%s264 + $0x6f8] sm:$0xff]
        %v701 = vld [vmem:[%s264 + $0x700] sm:$0xff]
        %v702 = vld [vmem:[%s264 + $0x708] sm:$0xff]
        %v703 = vld [vmem:[%s264 + $0x710] sm:$0xff]
        %v704 = vld [vmem:[%s264 + $0x718] sm:$0xf]
        %v705 = vld [vmem:[%s264 + $0x71c] sm:$0xff]
        %v706 = vld [vmem:[%s264 + $0x724] sm:$0xff]
        %v707 = vld [vmem:[%s264 + $0x72c] sm:$0xff]
        %v708 = vld [vmem:[%s264 + $0x734] sm:$0xff]
        %v709 = vld [vmem:[%s264 + $0x73c] sm:$0xff]
        %v710 = vld [vmem:[%s264 + $0x744] sm:$0xff]
        %v711 = vld [vmem:[%s264 + $0x74c] sm:$0xff]
        %v712 = vld [vmem:[%s264 + $0x754] sm:$0xff]
        %v713 = vld [vmem:[%s264 + $0x75c] sm:$0xff]
        %v714 = vld [vmem:[%s264 + $0x764] sm:$0xff]
        %v715 = vld [vmem:[%s264 + $0x76c] sm:$0xff]
        %v716 = vld [vmem:[%s264 + $0x774] sm:$0xff]
        %v717 = vld [vmem:[%s264 + $0x77c] sm:$0xff]
        %v718 = vld [vmem:[%s264 + $0x784] sm:$0xff]
        %v719 = vld [vmem:[%s264 + $0x78c] sm:$0xff]
        %v720 = vld [vmem:[%s264 + $0x794] sm:$0xff]
        %v721 = vld [vmem:[%s264 + $0x79c] sm:$0xff]
        %v722 = vld [vmem:[%s264 + $0x7a4] sm:$0xf]
        %v723 = vld [vmem:[%s264 + $0x7a8] sm:$0xff]
        %v724 = vld [vmem:[%s264 + $0x7b0] sm:$0xff]
        %v725 = vld [vmem:[%s264 + $0x7b8] sm:$0xff]
        %v726 = vld [vmem:[%s264 + $0x7c0] sm:$0xff]
        %v727 = vld [vmem:[%s264 + $0x7c8] sm:$0xff]
        %v728 = vld [vmem:[%s264 + $0x7d0] sm:$0xff]
        %v729 = vld [vmem:[%s264 + $0x7d8] sm:$0xff]
        %v730 = vld [vmem:[%s264 + $0x7e0] sm:$0xff]
        %v731 = vld [vmem:[%s264 + $0x7e8] sm:$0xff]
        %v732 = vld [vmem:[%s264 + $0x7f0] sm:$0xff]
        %v733 = vld [vmem:[%s264 + $0x7f8] sm:$0xff]
        %v734 = vld [vmem:[%s264 + $0x800] sm:$0xff]
        %v735 = vld [vmem:[%s264 + $0x808] sm:$0xff]
        %v736 = vld [vmem:[%s264 + $0x810] sm:$0xff]
        %v737 = vld [vmem:[%s264 + $0x818] sm:$0xff]
        %v738 = vld [vmem:[%s264 + $0x820] sm:$0xff]
        %v739 = vld [vmem:[%s264 + $0x828] sm:$0xff]
        %v740 = vld [vmem:[%s264 + $0x830] sm:$0xf]
        %v741 = vld [vmem:[%s264 + $0x834] sm:$0xff]
        %v742 = vld [vmem:[%s264 + $0x83c] sm:$0xff]
        %v743 = vld [vmem:[%s264 + $0x844] sm:$0xff]
        %v744 = vld [vmem:[%s264 + $0x84c] sm:$0xff]
        %v745 = vld [vmem:[%s264 + $0x854] sm:$0xff]
        %v746 = vld [vmem:[%s264 + $0x85c] sm:$0xff]
        %v747 = vld [vmem:[%s264 + $0x864] sm:$0xff]
        %v748 = vld [vmem:[%s264 + $0x86c] sm:$0xff]
        %v749 = vld [vmem:[%s264 + $0x874] sm:$0xff]
        %v750 = vld [vmem:[%s264 + $0x87c] sm:$0xff]
        %v751 = vld [vmem:[%s264 + $0x884] sm:$0xff]
        %v752 = vld [vmem:[%s264 + $0x88c] sm:$0xff]
        %v753 = vld [vmem:[%s264 + $0x894] sm:$0xff]
        %v754 = vld [vmem:[%s264 + $0x89c] sm:$0xff]
        %v755 = vld [vmem:[%s264 + $0x8a4] sm:$0xff]
        %v756 = vld [vmem:[%s264 + $0x8ac] sm:$0xff]
        %v757 = vld [vmem:[%s264 + $0x8b4] sm:$0xff]
        %v758 = vld [vmem:[%s264 + $0x8bc] sm:$0xf]
        %v759 = vld [vmem:[%s264 + $0x8c0] sm:$0xff]
        %v760 = vld [vmem:[%s264 + $0x8c8] sm:$0xff]
        %v761 = vld [vmem:[%s264 + $0x8d0] sm:$0xff]
        %v762 = vld [vmem:[%s264 + $0x8d8] sm:$0xff]
        %v763 = vld [vmem:[%s264 + $0x8e0] sm:$0xff]
        %v764 = vld [vmem:[%s264 + $0x8e8] sm:$0xff]
        %v765 = vld [vmem:[%s264 + $0x8f0] sm:$0xff]
        %v766 = vld [vmem:[%s264 + $0x8f8] sm:$0xff]
        %v767 = vld [vmem:[%s264 + $0x900] sm:$0xff]
        %v768 = vld [vmem:[%s264 + $0x908] sm:$0xff]
        %v769 = vld [vmem:[%s264 + $0x910] sm:$0xff]
        %v770 = vld [vmem:[%s264 + $0x918] sm:$0xff]
        %v771 = vld [vmem:[%s264 + $0x920] sm:$0xff]
        %v772 = vld [vmem:[%s264 + $0x928] sm:$0xff]
        %v773 = vld [vmem:[%s264 + $0x930] sm:$0xff]
        %v774 = vld [vmem:[%s264 + $0x938] sm:$0xff]
        %v775 = vld [vmem:[%s264 + $0x940] sm:$0xff]
        %v776 = vld [vmem:[%s264 + $0x948] sm:$0xf]
        %v777 = vld [vmem:[%s264 + $0x94c] sm:$0xff]
        %v778 = vld [vmem:[%s264 + $0x954] sm:$0xff]
        %v779 = vld [vmem:[%s264 + $0x95c] sm:$0xff]
        %v780 = vld [vmem:[%s264 + $0x964] sm:$0xff]
        %v781 = vld [vmem:[%s264 + $0x96c] sm:$0xff]
        %v782 = vld [vmem:[%s264 + $0x974] sm:$0xff]
        %v783 = vld [vmem:[%s264 + $0x97c] sm:$0xff]
        %v784 = vld [vmem:[%s264 + $0x984] sm:$0xff]
        %v785 = vld [vmem:[%s264 + $0x98c] sm:$0xff]
        %v786 = vld [vmem:[%s264 + $0x994] sm:$0xff]
        %v787 = vld [vmem:[%s264 + $0x99c] sm:$0xff]
        %v788 = vld [vmem:[%s264 + $0x9a4] sm:$0xff]
        %v789 = vld [vmem:[%s264 + $0x9ac] sm:$0xff]
        %v790 = vld [vmem:[%s264 + $0x9b4] sm:$0xff]
        %v791 = vld [vmem:[%s264 + $0x9bc] sm:$0xff]
        %v792 = vld [vmem:[%s264 + $0x9c4] sm:$0xff]
        %v793 = vld [vmem:[%s264 + $0x9cc] sm:$0xff]
        %v794 = vld [vmem:[%s264 + $0x9d4] sm:$0xf]
        %v795 = vld [vmem:[%s264 + $0x9d8] sm:$0xff]
        %v796 = vld [vmem:[%s264 + $0x9e0] sm:$0xff]
        %v797 = vld [vmem:[%s264 + $0x9e8] sm:$0xff]
        %v798 = vld [vmem:[%s264 + $0x9f0] sm:$0xff]
        %v799 = vld [vmem:[%s264 + $0x9f8] sm:$0xff]
        %v800 = vld [vmem:[%s264 + $0xa00] sm:$0xff]
        %v801 = vld [vmem:[%s264 + $0xa08] sm:$0xff]
        %v802 = vld [vmem:[%s264 + $0xa10] sm:$0xff]
        %v803 = vld [vmem:[%s264 + $0xa18] sm:$0xff]
        %v804 = vld [vmem:[%s264 + $0xa20] sm:$0xff]
        %v805 = vld [vmem:[%s264 + $0xa28] sm:$0xff]
        %v806 = vld [vmem:[%s264 + $0xa30] sm:$0xff]
        %v807 = vld [vmem:[%s264 + $0xa38] sm:$0xff]
        %v808 = vld [vmem:[%s264 + $0xa40] sm:$0xff]
        %v809 = vld [vmem:[%s264 + $0xa48] sm:$0xff]
        %v810 = vld [vmem:[%s264 + $0xa50] sm:$0xff]
        %v811 = vld [vmem:[%s264 + $0xa58] sm:$0xff]
        %v812 = vld [vmem:[%s264 + $0xa60] sm:$0xf]
        %v813 = vld [vmem:[%s264 + $0xa64] sm:$0xff]
        %v814 = vld [vmem:[%s264 + $0xa6c] sm:$0xff]
        %v815 = vld [vmem:[%s264 + $0xa74] sm:$0xff]
        %v816 = vld [vmem:[%s264 + $0xa7c] sm:$0xff]
        %v817 = vld [vmem:[%s264 + $0xa84] sm:$0xff]
        %v818 = vld [vmem:[%s264 + $0xa8c] sm:$0xff]
        %v819 = vld [vmem:[%s264 + $0xa94] sm:$0xff]
        %v820 = vld [vmem:[%s264 + $0xa9c] sm:$0xff]
        %v821 = vld [vmem:[%s264 + $0xaa4] sm:$0xff]
        %v822 = vld [vmem:[%s264 + $0xaac] sm:$0xff]
        %v823 = vld [vmem:[%s264 + $0xab4] sm:$0xff]
        %v824 = vld [vmem:[%s264 + $0xabc] sm:$0xff]
        %v825 = vld [vmem:[%s264 + $0xac4] sm:$0xff]
        %v826 = vld [vmem:[%s264 + $0xacc] sm:$0xff]
        %v827 = vld [vmem:[%s264 + $0xad4] sm:$0xff]
        %v828 = vld [vmem:[%s264 + $0xadc] sm:$0xff]
        %v829 = vld [vmem:[%s264 + $0xae4] sm:$0xff]
        %v830 = vld [vmem:[%s264 + $0xaec] sm:$0xf]
        %v831 = vld [vmem:[%s264 + $0xaf0] sm:$0xff]
        %v832 = vld [vmem:[%s264 + $0xaf8] sm:$0xff]
        %v833 = vld [vmem:[%s264 + $0xb00] sm:$0xff]
        %v834 = vld [vmem:[%s264 + $0xb08] sm:$0xff]
        %v835 = vld [vmem:[%s264 + $0xb10] sm:$0xff]
        %v836 = vld [vmem:[%s264 + $0xb18] sm:$0xff]
        %v837 = vld [vmem:[%s264 + $0xb20] sm:$0xff]
        %v838 = vld [vmem:[%s264 + $0xb28] sm:$0xff]
        %v839 = vld [vmem:[%s264 + $0xb30] sm:$0xff]
        %v840 = vld [vmem:[%s264 + $0xb38] sm:$0xff]
        %v841 = vld [vmem:[%s264 + $0xb40] sm:$0xff]
        %v842 = vld [vmem:[%s264 + $0xb48] sm:$0xff]
        %v843 = vld [vmem:[%s264 + $0xb50] sm:$0xff]
        %v844 = vld [vmem:[%s264 + $0xb58] sm:$0xff]
        %v845 = vld [vmem:[%s264 + $0xb60] sm:$0xff]
        %v846 = vld [vmem:[%s264 + $0xb68] sm:$0xff]
        %v847 = vld [vmem:[%s264 + $0xb70] sm:$0xff]
        %v848 = vld [vmem:[%s264 + $0xb78] sm:$0xf]
        %v849 = vld [vmem:[%s264 + $0xb7c] sm:$0xff]
        %v850 = vld [vmem:[%s264 + $0xb84] sm:$0xff]
        %v851 = vld [vmem:[%s264 + $0xb8c] sm:$0xff]
        %v852 = vld [vmem:[%s264 + $0xb94] sm:$0xff]
        %v853 = vld [vmem:[%s264 + $0xb9c] sm:$0xff]
        %v854 = vld [vmem:[%s264 + $0xba4] sm:$0xff]
        %v855 = vld [vmem:[%s264 + $0xbac] sm:$0xff]
        %v856 = vld [vmem:[%s264 + $0xbb4] sm:$0xff]
        %v857 = vld [vmem:[%s264 + $0xbbc] sm:$0xff]
        %v858 = vld [vmem:[%s264 + $0xbc4] sm:$0xff]
        %v859 = vld [vmem:[%s264 + $0xbcc] sm:$0xff]
        %v860 = vld [vmem:[%s264 + $0xbd4] sm:$0xff]
        %v861 = vld [vmem:[%s264 + $0xbdc] sm:$0xff]
        %v862 = vld [vmem:[%s264 + $0xbe4] sm:$0xff]
        %v863 = vld [vmem:[%s264 + $0xbec] sm:$0xff]
        %v864 = vld [vmem:[%s264 + $0xbf4] sm:$0xff]
        %v865 = vld [vmem:[%s264 + $0xbfc] sm:$0xff]
        %v866 = vld [vmem:[%s264 + $0xc04] sm:$0xf]
        %v867 = vld [vmem:[%s264 + $0xc08] sm:$0xff]
        %v868 = vld [vmem:[%s264 + $0xc10] sm:$0xff]
        %v869 = vld [vmem:[%s264 + $0xc18] sm:$0xff]
        %v870 = vld [vmem:[%s264 + $0xc20] sm:$0xff]
        %v871 = vld [vmem:[%s264 + $0xc28] sm:$0xff]
        %v872 = vld [vmem:[%s264 + $0xc30] sm:$0xff]
        %v873 = vld [vmem:[%s264 + $0xc38] sm:$0xff]
        %v874 = vld [vmem:[%s264 + $0xc40] sm:$0xff]
        %v875 = vld [vmem:[%s264 + $0xc48] sm:$0xff]
        %v876 = vld [vmem:[%s264 + $0xc50] sm:$0xff]
        %v877 = vld [vmem:[%s264 + $0xc58] sm:$0xff]
        %v878 = vld [vmem:[%s264 + $0xc60] sm:$0xff]
        %v879 = vld [vmem:[%s264 + $0xc68] sm:$0xff]
        %v880 = vld [vmem:[%s264 + $0xc70] sm:$0xff]
        %v881 = vld [vmem:[%s264 + $0xc78] sm:$0xff]
        %v882 = vld [vmem:[%s264 + $0xc80] sm:$0xff]
        %v883 = vld [vmem:[%s264 + $0xc88] sm:$0xff]
        %v884 = vld [vmem:[%s264 + $0xc90] sm:$0xf]
        %v885 = vld [vmem:[%s264 + $0xc94] sm:$0xff]
        %v886 = vld [vmem:[%s264 + $0xc9c] sm:$0xff]
        %v887 = vld [vmem:[%s264 + $0xca4] sm:$0xff]
        %v888 = vld [vmem:[%s264 + $0xcac] sm:$0xff]
        %v889 = vld [vmem:[%s264 + $0xcb4] sm:$0xff]
        %v890 = vld [vmem:[%s264 + $0xcbc] sm:$0xff]
        %v891 = vld [vmem:[%s264 + $0xcc4] sm:$0xff]
        %v892 = vld [vmem:[%s264 + $0xccc] sm:$0xff]
        %v893 = vld [vmem:[%s264 + $0xcd4] sm:$0xff]
        %v894 = vld [vmem:[%s264 + $0xcdc] sm:$0xff]
        %v895 = vld [vmem:[%s264 + $0xce4] sm:$0xff]
        %v896 = vld [vmem:[%s264 + $0xcec] sm:$0xff]
        %v897 = vld [vmem:[%s264 + $0xcf4] sm:$0xff]
        %v898 = vld [vmem:[%s264 + $0xcfc] sm:$0xff]
        %v899 = vld [vmem:[%s264 + $0xd04] sm:$0xff]
        %v900 = vld [vmem:[%s264 + $0xd0c] sm:$0xff]
        %v901 = vld [vmem:[%s264 + $0xd14] sm:$0xff]
        %v902 = vld [vmem:[%s264 + $0xd1c] sm:$0xf]
        %v903 = vld [vmem:[%s264 + $0xd20] sm:$0xff]
        %v904 = vld [vmem:[%s264 + $0xd28] sm:$0xff]
        %v905 = vld [vmem:[%s264 + $0xd30] sm:$0xff]
        %v906 = vld [vmem:[%s264 + $0xd38] sm:$0xff]
        %v907 = vld [vmem:[%s264 + $0xd40] sm:$0xff]
        %v908 = vld [vmem:[%s264 + $0xd48] sm:$0xff]
        %v909 = vld [vmem:[%s264 + $0xd50] sm:$0xff]
        %v910 = vld [vmem:[%s264 + $0xd58] sm:$0xff]
        %v911 = vld [vmem:[%s264 + $0xd60] sm:$0xff]
        %v912 = vld [vmem:[%s264 + $0xd68] sm:$0xff]
        %v913 = vld [vmem:[%s264 + $0xd70] sm:$0xff]
        %v914 = vld [vmem:[%s264 + $0xd78] sm:$0xff]
        %v915 = vld [vmem:[%s264 + $0xd80] sm:$0xff]
        %v916 = vld [vmem:[%s264 + $0xd88] sm:$0xff]
        %v917 = vld [vmem:[%s264 + $0xd90] sm:$0xff]
        %v918 = vld [vmem:[%s264 + $0xd98] sm:$0xff]
        %v919 = vld [vmem:[%s264 + $0xda0] sm:$0xff]
        %v920 = vld [vmem:[%s264 + $0xda8] sm:$0xf]
        %v921 = vld [vmem:[%s264 + $0xdac] sm:$0xff]
        %v922 = vld [vmem:[%s264 + $0xdb4] sm:$0xff]
        %v923 = vld [vmem:[%s264 + $0xdbc] sm:$0xff]
        %v924 = vld [vmem:[%s264 + $0xdc4] sm:$0xff]
        %v925 = vld [vmem:[%s264 + $0xdcc] sm:$0xff]
        %v926 = vld [vmem:[%s264 + $0xdd4] sm:$0xff]
        %v927 = vld [vmem:[%s264 + $0xddc] sm:$0xff]
        %v928 = vld [vmem:[%s264 + $0xde4] sm:$0xff]
        %v929 = vld [vmem:[%s264 + $0xdec] sm:$0xff]
        %v930 = vld [vmem:[%s264 + $0xdf4] sm:$0xff]
        %v931 = vld [vmem:[%s264 + $0xdfc] sm:$0xff]
        %v932 = vld [vmem:[%s264 + $0xe04] sm:$0xff]
        %v933 = vld [vmem:[%s264 + $0xe0c] sm:$0xff]
        %v934 = vld [vmem:[%s264 + $0xe14] sm:$0xff]
        %v935 = vld [vmem:[%s264 + $0xe1c] sm:$0xff]
        %v936 = vld [vmem:[%s264 + $0xe24] sm:$0xff]
        %v937 = vld [vmem:[%s264 + $0xe2c] sm:$0xff]
        %v938 = vld [vmem:[%s264 + $0xe34] sm:$0xf]
        %v939 = vld [vmem:[%s264 + $0xe38] sm:$0xff]
        %v940 = vld [vmem:[%s264 + $0xe40] sm:$0xff]
        %v941 = vld [vmem:[%s264 + $0xe48] sm:$0xff]
        %v942 = vld [vmem:[%s264 + $0xe50] sm:$0xff]
        %v943 = vld [vmem:[%s264 + $0xe58] sm:$0xff]
        %v944 = vld [vmem:[%s264 + $0xe60] sm:$0xff]
        %v945 = vld [vmem:[%s264 + $0xe68] sm:$0xff]
        %v946 = vld [vmem:[%s264 + $0xe70] sm:$0xff]
        %v947 = vld [vmem:[%s264 + $0xe78] sm:$0xff]
        %v948 = vld [vmem:[%s264 + $0xe80] sm:$0xff]
        %v949 = vld [vmem:[%s264 + $0xe88] sm:$0xff]
        %v950 = vld [vmem:[%s264 + $0xe90] sm:$0xff]
        %v951 = vld [vmem:[%s264 + $0xe98] sm:$0xff]
        %v952 = vld [vmem:[%s264 + $0xea0] sm:$0xff]
        %v953 = vld [vmem:[%s264 + $0xea8] sm:$0xff]
        %v954 = vld [vmem:[%s264 + $0xeb0] sm:$0xff]
        %v955 = vld [vmem:[%s264 + $0xeb8] sm:$0xff]
        %v956 = vld [vmem:[%s264 + $0xec0] sm:$0xf]
        %v957 = vld [vmem:[%s264 + $0xec4] sm:$0xff]
        %v958 = vld [vmem:[%s264 + $0xecc] sm:$0xff]
        %v959 = vld [vmem:[%s264 + $0xed4] sm:$0xff]
        %v960 = vld [vmem:[%s264 + $0xedc] sm:$0xff]
        %v961 = vld [vmem:[%s264 + $0xee4] sm:$0xff]
        %v962 = vld [vmem:[%s264 + $0xeec] sm:$0xff]
        %v963 = vld [vmem:[%s264 + $0xef4] sm:$0xff]
        %v964 = vld [vmem:[%s264 + $0xefc] sm:$0xff]
        %v965 = vld [vmem:[%s264 + $0xf04] sm:$0xff]
        %v966 = vld [vmem:[%s264 + $0xf0c] sm:$0xff]
        %v967 = vld [vmem:[%s264 + $0xf14] sm:$0xff]
        %v968 = vld [vmem:[%s264 + $0xf1c] sm:$0xff]
        %v969 = vld [vmem:[%s264 + $0xf24] sm:$0xff]
        %v970 = vld [vmem:[%s264 + $0xf2c] sm:$0xff]
        %v971 = vld [vmem:[%s264 + $0xf34] sm:$0xff]
        %v972 = vld [vmem:[%s264 + $0xf3c] sm:$0xff]
        %v973 = vld [vmem:[%s264 + $0xf44] sm:$0xff]
        %v974 = vld [vmem:[%s264 + $0xf4c] sm:$0xf]
        %v975 = vld [vmem:[%s264 + $0xf50] sm:$0xff]
        %v976 = vld [vmem:[%s264 + $0xf58] sm:$0xff]
        %v977 = vld [vmem:[%s264 + $0xf60] sm:$0xff]
        %v978 = vld [vmem:[%s264 + $0xf68] sm:$0xff]
        %v979 = vld [vmem:[%s264 + $0xf70] sm:$0xff]
        %v980 = vld [vmem:[%s264 + $0xf78] sm:$0xff]
        %v981 = vld [vmem:[%s264 + $0xf80] sm:$0xff]
        %v982 = vld [vmem:[%s264 + $0xf88] sm:$0xff]
        %v983 = vld [vmem:[%s264 + $0xf90] sm:$0xff]
        %v984 = vld [vmem:[%s264 + $0xf98] sm:$0xff]
        %v985 = vld [vmem:[%s264 + $0xfa0] sm:$0xff]
        %v986 = vld [vmem:[%s264 + $0xfa8] sm:$0xff]
        %v987 = vld [vmem:[%s264 + $0xfb0] sm:$0xff]
        %v988 = vld [vmem:[%s264 + $0xfb8] sm:$0xff]
        %v989 = vld [vmem:[%s264 + $0xfc0] sm:$0xff]
        %v990 = vld [vmem:[%s264 + $0xfc8] sm:$0xff]
        %v991 = vld [vmem:[%s264 + $0xfd0] sm:$0xff]
        %v992 = vld [vmem:[%s264 + $0xfd8] sm:$0xf]
        %v993 = vld [vmem:[%s264 + $0xfdc] sm:$0xff]
        %v994 = vld [vmem:[%s264 + $0xfe4] sm:$0xff]
        %v995 = vld [vmem:[%s264 + $0xfec] sm:$0xff]
        %v996 = vld [vmem:[%s264 + $0xff4] sm:$0xff]
        %v997 = vld [vmem:[%s264 + $0xffc] sm:$0xff]
        %v998 = vld [vmem:[%s264 + $0x1004] sm:$0xff]
        %v999 = vld [vmem:[%s264 + $0x100c] sm:$0xff]
        %v1000 = vld [vmem:[%s264 + $0x1014] sm:$0xff]
        %v1001 = vld [vmem:[%s264 + $0x101c] sm:$0xff]
        %v1002 = vld [vmem:[%s264 + $0x1024] sm:$0xff]
        %v1003 = vld [vmem:[%s264 + $0x102c] sm:$0xff]
        %v1004 = vld [vmem:[%s264 + $0x1034] sm:$0xff]
        %v1005 = vld [vmem:[%s264 + $0x103c] sm:$0xff]
        %v1006 = vld [vmem:[%s264 + $0x1044] sm:$0xff]
        %v1007 = vld [vmem:[%s264 + $0x104c] sm:$0xff]
        %v1008 = vld [vmem:[%s264 + $0x1054] sm:$0xff]
        %v1009 = vld [vmem:[%s264 + $0x105c] sm:$0xff]
        %v1010 = vld [vmem:[%s264 + $0x1064] sm:$0xf]
        %v1011 = vld [vmem:[%s264 + $0x1068] sm:$0xff]
        %v1012 = vld [vmem:[%s264 + $0x1070] sm:$0xff]
        %v1013 = vld [vmem:[%s264 + $0x1078] sm:$0xff]
        %v1014 = vld [vmem:[%s264 + $0x1080] sm:$0xff]
        %v1015 = vld [vmem:[%s264 + $0x1088] sm:$0xff]
        %v1016 = vld [vmem:[%s264 + $0x1090] sm:$0xff]
        %v1017 = vld [vmem:[%s264 + $0x1098] sm:$0xff]
        %v1018 = vld [vmem:[%s264 + $0x10a0] sm:$0xff]
        %v1019 = vld [vmem:[%s264 + $0x10a8] sm:$0xff]
        %v1020 = vld [vmem:[%s264 + $0x10b0] sm:$0xff]
        %v1021 = vld [vmem:[%s264 + $0x10b8] sm:$0xff]
        %v1022 = vld [vmem:[%s264 + $0x10c0] sm:$0xff]
        %v1023 = vld [vmem:[%s264 + $0x10c8] sm:$0xff]
        %v1024 = vld [vmem:[%s264 + $0x10d0] sm:$0xff]
        %v1025 = vld [vmem:[%s264 + $0x10d8] sm:$0xff]
        %v1026 = vld [vmem:[%s264 + $0x10e0] sm:$0xff]
        %v1027 = vld [vmem:[%s264 + $0x10e8] sm:$0xff]
        %v1028 = vld [vmem:[%s264 + $0x10f0] sm:$0xf]
        %v1029 = vld [vmem:[%s264 + $0x10f4] sm:$0xff]
        %v1030 = vld [vmem:[%s264 + $0x10fc] sm:$0xff]
        %v1031 = vld [vmem:[%s264 + $0x1104] sm:$0xff]
        %v1032 = vld [vmem:[%s264 + $0x110c] sm:$0xff]
        %v1033 = vld [vmem:[%s264 + $0x1114] sm:$0xff]
        %v1034 = vld [vmem:[%s264 + $0x111c] sm:$0xff]
        %v1035 = vld [vmem:[%s264 + $0x1124] sm:$0xff]
        %v1036 = vld [vmem:[%s264 + $0x112c] sm:$0xff]
        %v1037 = vld [vmem:[%s264 + $0x1134] sm:$0xff]
        %v1038 = vld [vmem:[%s264 + $0x113c] sm:$0xff]
        %v1039 = vld [vmem:[%s264 + $0x1144] sm:$0xff]
        %v1040 = vld [vmem:[%s264 + $0x114c] sm:$0xff]
        %v1041 = vld [vmem:[%s264 + $0x1154] sm:$0xff]
        %v1042 = vld [vmem:[%s264 + $0x115c] sm:$0xff]
        %v1043 = vld [vmem:[%s264 + $0x1164] sm:$0xff]
        %v1044 = vld [vmem:[%s264 + $0x116c] sm:$0xff]
        %v1045 = vld [vmem:[%s264 + $0x1174] sm:$0xff]
        %v1046 = vld [vmem:[%s264 + $0x117c] sm:$0xf]
        %v1047 = vld [vmem:[%s264 + $0x1180] sm:$0xff]
        %v1048 = vld [vmem:[%s264 + $0x1188] sm:$0xff]
        %v1049 = vld [vmem:[%s264 + $0x1190] sm:$0xff]
        %v1050 = vld [vmem:[%s264 + $0x1198] sm:$0xff]
        %v1051 = vld [vmem:[%s264 + $0x11a0] sm:$0xff]
        %v1052 = vld [vmem:[%s264 + $0x11a8] sm:$0xff]
        %v1053 = vld [vmem:[%s264 + $0x11b0] sm:$0xff]
        %v1054 = vld [vmem:[%s264 + $0x11b8] sm:$0xff]
        %v1055 = vld [vmem:[%s264 + $0x11c0] sm:$0xff]
        %v1056 = vld [vmem:[%s264 + $0x11c8] sm:$0xff]
        %v1057 = vld [vmem:[%s264 + $0x11d0] sm:$0xff]
        %v1058 = vld [vmem:[%s264 + $0x11d8] sm:$0xff]
        %v1059 = vld [vmem:[%s264 + $0x11e0] sm:$0xff]
        %v1060 = vld [vmem:[%s264 + $0x11e8] sm:$0xff]
        %v1061 = vld [vmem:[%s264 + $0x11f0] sm:$0xff]
        %v1062 = vld [vmem:[%s264 + $0x11f8] sm:$0xff]
        %v1063 = vld [vmem:[%s264 + $0x1200] sm:$0xff]
        %v1064 = vld [vmem:[%s264 + $0x1208] sm:$0xf]
        %v1065 = vld [vmem:[%s264 + $0x120c] sm:$0xff]
        %v1066 = vld [vmem:[%s264 + $0x1214] sm:$0xff]
        %v1067 = vld [vmem:[%s264 + $0x121c] sm:$0xff]
        %v1068 = vld [vmem:[%s264 + $0x1224] sm:$0xff]
        %v1069 = vld [vmem:[%s264 + $0x122c] sm:$0xff]
        %v1070 = vld [vmem:[%s264 + $0x1234] sm:$0xff]
        %v1071 = vld [vmem:[%s264 + $0x123c] sm:$0xff]
        %v1072 = vld [vmem:[%s264 + $0x1244] sm:$0xff]
        %v1073 = vld [vmem:[%s264 + $0x124c] sm:$0xff]
        %v1074 = vld [vmem:[%s264 + $0x1254] sm:$0xff]
        %v1075 = vld [vmem:[%s264 + $0x125c] sm:$0xff]
        %v1076 = vld [vmem:[%s264 + $0x1264] sm:$0xff]
        %v1077 = vld [vmem:[%s264 + $0x126c] sm:$0xff]
        %v1078 = vld [vmem:[%s264 + $0x1274] sm:$0xff]
        %v1079 = vld [vmem:[%s264 + $0x127c] sm:$0xff]
        %v1080 = vld [vmem:[%s264 + $0x1284] sm:$0xff]
        %v1081 = vld [vmem:[%s264 + $0x128c] sm:$0xff]
        %v1082 = vld [vmem:[%s264 + $0x1294] sm:$0xf]
        %v1083 = vld [vmem:[%s264 + $0x1298] sm:$0xff]
        %v1084 = vld [vmem:[%s264 + $0x12a0] sm:$0xff]
        %v1085 = vld [vmem:[%s264 + $0x12a8] sm:$0xff]
        %v1086 = vld [vmem:[%s264 + $0x12b0] sm:$0xff]
        %v1087 = vld [vmem:[%s264 + $0x12b8] sm:$0xff]
        %v1088 = vld [vmem:[%s264 + $0x12c0] sm:$0xff]
        %v1089 = vld [vmem:[%s264 + $0x12c8] sm:$0xff]
        %v1090 = vld [vmem:[%s264 + $0x12d0] sm:$0xff]
        %v1091 = vld [vmem:[%s264 + $0x12d8] sm:$0xff]
        %v1092 = vld [vmem:[%s264 + $0x12e0] sm:$0xff]
        %v1093 = vld [vmem:[%s264 + $0x12e8] sm:$0xff]
        %v1094 = vld [vmem:[%s264 + $0x12f0] sm:$0xff]
        %v1095 = vld [vmem:[%s264 + $0x12f8] sm:$0xff]
        %v1096 = vld [vmem:[%s264 + $0x1300] sm:$0xff]
        %v1097 = vld [vmem:[%s264 + $0x1308] sm:$0xff]
        %v1098 = vld [vmem:[%s264 + $0x1310] sm:$0xff]
        %v1099 = vld [vmem:[%s264 + $0x1318] sm:$0xff]
        %v1100 = vld [vmem:[%s264 + $0x1320] sm:$0xf]
        %v1101 = vld [vmem:[%s264 + $0x1324] sm:$0xff]
        %v1102 = vld [vmem:[%s264 + $0x132c] sm:$0xff]
        %v1103 = vld [vmem:[%s264 + $0x1334] sm:$0xff]
        %v1104 = vld [vmem:[%s264 + $0x133c] sm:$0xff]
        %v1105 = vld [vmem:[%s264 + $0x1344] sm:$0xff]
        %v1106 = vld [vmem:[%s264 + $0x134c] sm:$0xff]
        %v1107 = vld [vmem:[%s264 + $0x1354] sm:$0xff]
        %v1108 = vld [vmem:[%s264 + $0x135c] sm:$0xff]
        %v1109 = vld [vmem:[%s264 + $0x1364] sm:$0xff]
        %v1110 = vld [vmem:[%s264 + $0x136c] sm:$0xff]
        %v1111 = vld [vmem:[%s264 + $0x1374] sm:$0xff]
        %v1112 = vld [vmem:[%s264 + $0x137c] sm:$0xff]
        %v1113 = vld [vmem:[%s264 + $0x1384] sm:$0xff]
        %v1114 = vld [vmem:[%s264 + $0x138c] sm:$0xff]
        %v1115 = vld [vmem:[%s264 + $0x1394] sm:$0xff]
        %v1116 = vld [vmem:[%s264 + $0x139c] sm:$0xff]
        %v1117 = vld [vmem:[%s264 + $0x13a4] sm:$0xff]
        %v1118 = vld [vmem:[%s264 + $0x13ac] sm:$0xf]
        %v1119 = vld [vmem:[%s264 + $0x13b0] sm:$0xff]
        %v1120 = vld [vmem:[%s264 + $0x13b8] sm:$0xff]
        %v1121 = vld [vmem:[%s264 + $0x13c0] sm:$0xff]
        %v1122 = vld [vmem:[%s264 + $0x13c8] sm:$0xff]
        %v1123 = vld [vmem:[%s264 + $0x13d0] sm:$0xff]
        %v1124 = vld [vmem:[%s264 + $0x13d8] sm:$0xff]
        %v1125 = vld [vmem:[%s264 + $0x13e0] sm:$0xff]
        %v1126 = vld [vmem:[%s264 + $0x13e8] sm:$0xff]
        %v1127 = vld [vmem:[%s264 + $0x13f0] sm:$0xff]
        %v1128 = vld [vmem:[%s264 + $0x13f8] sm:$0xff]
        %v1129 = vld [vmem:[%s264 + $0x1400] sm:$0xff]
        %v1130 = vld [vmem:[%s264 + $0x1408] sm:$0xff]
        %v1131 = vld [vmem:[%s264 + $0x1410] sm:$0xff]
        %v1132 = vld [vmem:[%s264 + $0x1418] sm:$0xff]
        %v1133 = vld [vmem:[%s264 + $0x1420] sm:$0xff]
        %v1134 = vld [vmem:[%s264 + $0x1428] sm:$0xff]
        %v1135 = vld [vmem:[%s264 + $0x1430] sm:$0xff]
        %v1136 = vld [vmem:[%s264 + $0x1438] sm:$0xf]
        %v1137 = vld [vmem:[%s264 + $0x143c] sm:$0xff]
        %v1138 = vld [vmem:[%s264 + $0x1444] sm:$0xff]
        %v1139 = vld [vmem:[%s264 + $0x144c] sm:$0xff]
        %v1140 = vld [vmem:[%s264 + $0x1454] sm:$0xff]
        %v1141 = vld [vmem:[%s264 + $0x145c] sm:$0xff]
        %v1142 = vld [vmem:[%s264 + $0x1464] sm:$0xff]
        %v1143 = vld [vmem:[%s264 + $0x146c] sm:$0xff]
        %v1144 = vld [vmem:[%s264 + $0x1474] sm:$0xff]
        %v1145 = vld [vmem:[%s264 + $0x147c] sm:$0xff]
        %v1146 = vld [vmem:[%s264 + $0x1484] sm:$0xff]
        %v1147 = vld [vmem:[%s264 + $0x148c] sm:$0xff]
        %v1148 = vld [vmem:[%s264 + $0x1494] sm:$0xff]
        %v1149 = vld [vmem:[%s264 + $0x149c] sm:$0xff]
        %v1150 = vld [vmem:[%s264 + $0x14a4] sm:$0xff]
        %v1151 = vld [vmem:[%s264 + $0x14ac] sm:$0xff]
        %v1152 = vld [vmem:[%s264 + $0x14b4] sm:$0xff]
        %v1153 = vld [vmem:[%s264 + $0x14bc] sm:$0xff]
        %v1154 = vld [vmem:[%s264 + $0x14c4] sm:$0xf]
        %v1155 = vld [vmem:[%s264 + $0x14c8] sm:$0xff]
        %v1156 = vld [vmem:[%s264 + $0x14d0] sm:$0xff]
        %v1157 = vld [vmem:[%s264 + $0x14d8] sm:$0xff]
        %v1158 = vld [vmem:[%s264 + $0x14e0] sm:$0xff]
        %v1159 = vld [vmem:[%s264 + $0x14e8] sm:$0xff]
        %v1160 = vld [vmem:[%s264 + $0x14f0] sm:$0xff]
        %v1161 = vld [vmem:[%s264 + $0x14f8] sm:$0xff]
        %v1162 = vld [vmem:[%s264 + $0x1500] sm:$0xff]
        %v1163 = vld [vmem:[%s264 + $0x1508] sm:$0xff]
        %v1164 = vld [vmem:[%s264 + $0x1510] sm:$0xff]
        %v1165 = vld [vmem:[%s264 + $0x1518] sm:$0xff]
        %v1166 = vld [vmem:[%s264 + $0x1520] sm:$0xff]
        %v1167 = vld [vmem:[%s264 + $0x1528] sm:$0xff]
        %v1168 = vld [vmem:[%s264 + $0x1530] sm:$0xff]
        %v1169 = vld [vmem:[%s264 + $0x1538] sm:$0xff]
        %v1170 = vld [vmem:[%s264 + $0x1540] sm:$0xff]
        %v1171 = vld [vmem:[%s264 + $0x1548] sm:$0xff]
        %v1172 = vld [vmem:[%s264 + $0x1550] sm:$0xf]
        %v1173 = vld [vmem:[%s264 + $0x1554] sm:$0xff]
        %v1174 = vld [vmem:[%s264 + $0x155c] sm:$0xff]
        %v1175 = vld [vmem:[%s264 + $0x1564] sm:$0xff]
        %v1176 = vld [vmem:[%s264 + $0x156c] sm:$0xff]
        %v1177 = vld [vmem:[%s264 + $0x1574] sm:$0xff]
        %v1178 = vld [vmem:[%s264 + $0x157c] sm:$0xff]
        %v1179 = vld [vmem:[%s264 + $0x1584] sm:$0xff]
        %v1180 = vld [vmem:[%s264 + $0x158c] sm:$0xff]
        %v1181 = vld [vmem:[%s264 + $0x1594] sm:$0xff]
        %v1182 = vld [vmem:[%s264 + $0x159c] sm:$0xff]
        %v1183 = vld [vmem:[%s264 + $0x15a4] sm:$0xff]
        %v1184 = vld [vmem:[%s264 + $0x15ac] sm:$0xff]
        %v1185 = vld [vmem:[%s264 + $0x15b4] sm:$0xff]
        %v1186 = vld [vmem:[%s264 + $0x15bc] sm:$0xff]
        %v1187 = vld [vmem:[%s264 + $0x15c4] sm:$0xff]
        %v1188 = vld [vmem:[%s264 + $0x15cc] sm:$0xff]
        %v1189 = vld [vmem:[%s264 + $0x15d4] sm:$0xff]
        %v1190 = vld [vmem:[%s264 + $0x15dc] sm:$0xf]
        %v1191 = vld [vmem:[%s264 + $0x15e0] sm:$0xff]
        %v1192 = vld [vmem:[%s264 + $0x15e8] sm:$0xff]
        %v1193 = vld [vmem:[%s264 + $0x15f0] sm:$0xff]
        %v1194 = vld [vmem:[%s264 + $0x15f8] sm:$0xff]
        %v1195 = vld [vmem:[%s264 + $0x1600] sm:$0xff]
        %v1196 = vld [vmem:[%s264 + $0x1608] sm:$0xff]
        %v1197 = vld [vmem:[%s264 + $0x1610] sm:$0xff]
        %v1198 = vld [vmem:[%s264 + $0x1618] sm:$0xff]
        %v1199 = vld [vmem:[%s264 + $0x1620] sm:$0xff]
        %v1200 = vld [vmem:[%s264 + $0x1628] sm:$0xff]
        %v1201 = vld [vmem:[%s264 + $0x1630] sm:$0xff]
        %v1202 = vld [vmem:[%s264 + $0x1638] sm:$0xff]
        %v1203 = vld [vmem:[%s264 + $0x1640] sm:$0xff]
        %v1204 = vld [vmem:[%s264 + $0x1648] sm:$0xff]
        %v1205 = vld [vmem:[%s264 + $0x1650] sm:$0xff]
        %v1206 = vld [vmem:[%s264 + $0x1658] sm:$0xff]
        %v1207 = vld [vmem:[%s264 + $0x1660] sm:$0xff]
        %v1208 = vld [vmem:[%s264 + $0x1668] sm:$0xf]
        %v1209 = vld [vmem:[%s264 + $0x166c] sm:$0xff]
        %v1210 = vld [vmem:[%s264 + $0x1674] sm:$0xff]
        %v1211 = vld [vmem:[%s264 + $0x167c] sm:$0xff]
        %v1212 = vld [vmem:[%s264 + $0x1684] sm:$0xff]
        %v1213 = vld [vmem:[%s264 + $0x168c] sm:$0xff]
        %v1214 = vld [vmem:[%s264 + $0x1694] sm:$0xff]
        %v1215 = vld [vmem:[%s264 + $0x169c] sm:$0xff]
        %v1216 = vld [vmem:[%s264 + $0x16a4] sm:$0xff]
        %v1217 = vld [vmem:[%s264 + $0x16ac] sm:$0xff]
        %v1218 = vld [vmem:[%s264 + $0x16b4] sm:$0xff]
        %v1219 = vld [vmem:[%s264 + $0x16bc] sm:$0xff]
        %v1220 = vld [vmem:[%s264 + $0x16c4] sm:$0xff]
        %v1221 = vld [vmem:[%s264 + $0x16cc] sm:$0xff]
        %v1222 = vld [vmem:[%s264 + $0x16d4] sm:$0xff]
        %v1223 = vld [vmem:[%s264 + $0x16dc] sm:$0xff]
        %v1224 = vld [vmem:[%s264 + $0x16e4] sm:$0xff]
        %v1225 = vld [vmem:[%s264 + $0x16ec] sm:$0xff]
        %v1226 = vld [vmem:[%s264 + $0x16f4] sm:$0xf]
        %v1227 = vld [vmem:[%s264 + $0x16f8] sm:$0xff]
        %v1228 = vld [vmem:[%s264 + $0x1700] sm:$0xff]
        %v1229 = vld [vmem:[%s264 + $0x1708] sm:$0xff]
        %v1230 = vld [vmem:[%s264 + $0x1710] sm:$0xff]
        %v1231 = vld [vmem:[%s264 + $0x1718] sm:$0xff]
        %v1232 = vld [vmem:[%s264 + $0x1720] sm:$0xff]
        %v1233 = vld [vmem:[%s264 + $0x1728] sm:$0xff]
        %v1234 = vld [vmem:[%s264 + $0x1730] sm:$0xff]
        %v1235 = vld [vmem:[%s264 + $0x1738] sm:$0xff]
        %v1236 = vld [vmem:[%s264 + $0x1740] sm:$0xff]
        %v1237 = vld [vmem:[%s264 + $0x1748] sm:$0xff]
        %v1238 = vld [vmem:[%s264 + $0x1750] sm:$0xff]
        %v1239 = vld [vmem:[%s264 + $0x1758] sm:$0xff]
        %v1240 = vld [vmem:[%s264 + $0x1760] sm:$0xff]
        %v1241 = vld [vmem:[%s264 + $0x1768] sm:$0xff]
        %v1242 = vld [vmem:[%s264 + $0x1770] sm:$0xff]
        %v1243 = vld [vmem:[%s264 + $0x1778] sm:$0xff]
        %v1244 = vld [vmem:[%s264 + $0x1780] sm:$0xf]
        %v1245 = vld [vmem:[%s264 + $0x1784] sm:$0xff]
        %v1246 = vld [vmem:[%s264 + $0x178c] sm:$0xff]
        %v1247 = vld [vmem:[%s264 + $0x1794] sm:$0xff]
        %v1248 = vld [vmem:[%s264 + $0x179c] sm:$0xff]
        %v1249 = vld [vmem:[%s264 + $0x17a4] sm:$0xff]
        %v1250 = vld [vmem:[%s264 + $0x17ac] sm:$0xff]
        %v1251 = vld [vmem:[%s264 + $0x17b4] sm:$0xff]
        %v1252 = vld [vmem:[%s264 + $0x17bc] sm:$0xff]
        %v1253 = vld [vmem:[%s264 + $0x17c4] sm:$0xff]
        %v1254 = vld [vmem:[%s264 + $0x17cc] sm:$0xff]
        %v1255 = vld [vmem:[%s264 + $0x17d4] sm:$0xff]
        %v1256 = vld [vmem:[%s264 + $0x17dc] sm:$0xff]
        %v1257 = vld [vmem:[%s264 + $0x17e4] sm:$0xff]
        %v1258 = vld [vmem:[%s264 + $0x17ec] sm:$0xff]
        %v1259 = vld [vmem:[%s264 + $0x17f4] sm:$0xff]
        %v1260 = vld [vmem:[%s264 + $0x17fc] sm:$0xff]
        %v1261 = vld [vmem:[%s264 + $0x1804] sm:$0xff]
        %v1262 = vld [vmem:[%s264 + $0x180c] sm:$0xf]
        %v1263 = vld [vmem:[%s264 + $0x1810] sm:$0xff]
        %v1264 = vld [vmem:[%s264 + $0x1818] sm:$0xff]
        %v1265 = vld [vmem:[%s264 + $0x1820] sm:$0xff]
        %v1266 = vld [vmem:[%s264 + $0x1828] sm:$0xff]
        %v1267 = vld [vmem:[%s264 + $0x1830] sm:$0xff]
        %v1268 = vld [vmem:[%s264 + $0x1838] sm:$0xff]
        %v1269 = vld [vmem:[%s264 + $0x1840] sm:$0xff]
        %v1270 = vld [vmem:[%s264 + $0x1848] sm:$0xff]
        %v1271 = vld [vmem:[%s264 + $0x1850] sm:$0xff]
        %v1272 = vld [vmem:[%s264 + $0x1858] sm:$0xff]
        %v1273 = vld [vmem:[%s264 + $0x1860] sm:$0xff]
        %v1274 = vld [vmem:[%s264 + $0x1868] sm:$0xff]
        %v1275 = vld [vmem:[%s264 + $0x1870] sm:$0xff]
        %v1276 = vld [vmem:[%s264 + $0x1878] sm:$0xff]
        %v1277 = vld [vmem:[%s264 + $0x1880] sm:$0xff]
        %v1278 = vld [vmem:[%s264 + $0x1888] sm:$0xff]
        %v1279 = vld [vmem:[%s264 + $0x1890] sm:$0xff]
        %v1280 = vld [vmem:[%s264 + $0x1898] sm:$0xf]
        %v1281 = vld [vmem:[%s264 + $0x189c] sm:$0xff]
        %v1282 = vld [vmem:[%s264 + $0x18a4] sm:$0xff]
        %v1283 = vld [vmem:[%s264 + $0x18ac] sm:$0xff]
        %v1284 = vld [vmem:[%s264 + $0x18b4] sm:$0xff]
        %v1285 = vld [vmem:[%s264 + $0x18bc] sm:$0xff]
        %v1286 = vld [vmem:[%s264 + $0x18c4] sm:$0xff]
        %v1287 = vld [vmem:[%s264 + $0x18cc] sm:$0xff]
        %v1288 = vld [vmem:[%s264 + $0x18d4] sm:$0xff]
        %v1289 = vld [vmem:[%s264 + $0x18dc] sm:$0xff]
        %v1290 = vld [vmem:[%s264 + $0x18e4] sm:$0xff]
        %v1291 = vld [vmem:[%s264 + $0x18ec] sm:$0xff]
        %v1292 = vld [vmem:[%s264 + $0x18f4] sm:$0xff]
        %v1293 = vld [vmem:[%s264 + $0x18fc] sm:$0xff]
        %v1294 = vld [vmem:[%s264 + $0x1904] sm:$0xff]
        %v1295 = vld [vmem:[%s264 + $0x190c] sm:$0xff]
        %v1296 = vld [vmem:[%s264 + $0x1914] sm:$0xff]
        %v1297 = vld [vmem:[%s264 + $0x191c] sm:$0xff]
        %v1298 = vld [vmem:[%s264 + $0x1924] sm:$0xf]
        %v1299 = vld [vmem:[%s264 + $0x1928] sm:$0xff]
        %v1300 = vld [vmem:[%s264 + $0x1930] sm:$0xff]
        %v1301 = vld [vmem:[%s264 + $0x1938] sm:$0xff]
        %v1302 = vld [vmem:[%s264 + $0x1940] sm:$0xff]
        %v1303 = vld [vmem:[%s264 + $0x1948] sm:$0xff]
        %v1304 = vld [vmem:[%s264 + $0x1950] sm:$0xff]
        %v1305 = vld [vmem:[%s264 + $0x1958] sm:$0xff]
        %v1306 = vld [vmem:[%s264 + $0x1960] sm:$0xff]
        %v1307 = vld [vmem:[%s264 + $0x1968] sm:$0xff]
        %v1308 = vld [vmem:[%s264 + $0x1970] sm:$0xff]
        %v1309 = vld [vmem:[%s264 + $0x1978] sm:$0xff]
        %v1310 = vld [vmem:[%s264 + $0x1980] sm:$0xff]
        %v1311 = vld [vmem:[%s264 + $0x1988] sm:$0xff]
        %v1312 = vld [vmem:[%s264 + $0x1990] sm:$0xff]
        %v1313 = vld [vmem:[%s264 + $0x1998] sm:$0xff]
        %v1314 = vld [vmem:[%s264 + $0x19a0] sm:$0xff]
        %v1315 = vld [vmem:[%s264 + $0x19a8] sm:$0xff]
        %v1316 = vld [vmem:[%s264 + $0x19b0] sm:$0xf]
        %v1317 = vld [vmem:[%s264 + $0x19b4] sm:$0xff]
        %v1318 = vld [vmem:[%s264 + $0x19bc] sm:$0xff]
        %v1319 = vld [vmem:[%s264 + $0x19c4] sm:$0xff]
        %v1320 = vld [vmem:[%s264 + $0x19cc] sm:$0xff]
        %v1321 = vld [vmem:[%s264 + $0x19d4] sm:$0xff]
        %v1322 = vld [vmem:[%s264 + $0x19dc] sm:$0xff]
        %v1323 = vld [vmem:[%s264 + $0x19e4] sm:$0xff]
        %v1324 = vld [vmem:[%s264 + $0x19ec] sm:$0xff]
        %v1325 = vld [vmem:[%s264 + $0x19f4] sm:$0xff]
        %v1326 = vld [vmem:[%s264 + $0x19fc] sm:$0xff]
        %v1327 = vld [vmem:[%s264 + $0x1a04] sm:$0xff]
        %v1328 = vld [vmem:[%s264 + $0x1a0c] sm:$0xff]
        %v1329 = vld [vmem:[%s264 + $0x1a14] sm:$0xff]
        %v1330 = vld [vmem:[%s264 + $0x1a1c] sm:$0xff]
        %v1331 = vld [vmem:[%s264 + $0x1a24] sm:$0xff]
        %v1332 = vld [vmem:[%s264 + $0x1a2c] sm:$0xff]
        %v1333 = vld [vmem:[%s264 + $0x1a34] sm:$0xff]
        %v1334 = vld [vmem:[%s264 + $0x1a3c] sm:$0xf]
        %v1335 = vld [vmem:[%s264 + $0x1a40] sm:$0xff]
        %v1336 = vld [vmem:[%s264 + $0x1a48] sm:$0xff]
        %v1337 = vld [vmem:[%s264 + $0x1a50] sm:$0xff]
        %v1338 = vld [vmem:[%s264 + $0x1a58] sm:$0xff]
        %v1339 = vld [vmem:[%s264 + $0x1a60] sm:$0xff]
        %v1340 = vld [vmem:[%s264 + $0x1a68] sm:$0xff]
        %v1341 = vld [vmem:[%s264 + $0x1a70] sm:$0xff]
        %v1342 = vld [vmem:[%s264 + $0x1a78] sm:$0xff]
        %v1343 = vld [vmem:[%s264 + $0x1a80] sm:$0xff]
        %v1344 = vld [vmem:[%s264 + $0x1a88] sm:$0xff]
        %v1345 = vld [vmem:[%s264 + $0x1a90] sm:$0xff]
        %v1346 = vld [vmem:[%s264 + $0x1a98] sm:$0xff]
        %v1347 = vld [vmem:[%s264 + $0x1aa0] sm:$0xff]
        %v1348 = vld [vmem:[%s264 + $0x1aa8] sm:$0xff]
        %v1349 = vld [vmem:[%s264 + $0x1ab0] sm:$0xff]
        %v1350 = vld [vmem:[%s264 + $0x1ab8] sm:$0xff]
        %v1351 = vld [vmem:[%s264 + $0x1ac0] sm:$0xff]
        %v1352 = vld [vmem:[%s264 + $0x1ac8] sm:$0xf]
        %v1353 = vld [vmem:[%s264 + $0x1acc] sm:$0xff]
        %v1354 = vld [vmem:[%s264 + $0x1ad4] sm:$0xff]
        %v1355 = vld [vmem:[%s264 + $0x1adc] sm:$0xff]
        %v1356 = vld [vmem:[%s264 + $0x1ae4] sm:$0xff]
        %v1357 = vld [vmem:[%s264 + $0x1aec] sm:$0xff]
        %v1358 = vld [vmem:[%s264 + $0x1af4] sm:$0xff]
        %v1359 = vld [vmem:[%s264 + $0x1afc] sm:$0xff]
        %v1360 = vld [vmem:[%s264 + $0x1b04] sm:$0xff]
        %v1361 = vld [vmem:[%s264 + $0x1b0c] sm:$0xff]
        %v1362 = vld [vmem:[%s264 + $0x1b14] sm:$0xff]
        %v1363 = vld [vmem:[%s264 + $0x1b1c] sm:$0xff]
        %v1364 = vld [vmem:[%s264 + $0x1b24] sm:$0xff]
        %v1365 = vld [vmem:[%s264 + $0x1b2c] sm:$0xff]
        %v1366 = vld [vmem:[%s264 + $0x1b34] sm:$0xff]
        %v1367 = vld [vmem:[%s264 + $0x1b3c] sm:$0xff]
        %v1368 = vld [vmem:[%s264 + $0x1b44] sm:$0xff]
        %v1369 = vld [vmem:[%s264 + $0x1b4c] sm:$0xff]
        %v1370 = vld [vmem:[%s264 + $0x1b54] sm:$0xf]
        %v1371 = vld [vmem:[%s264 + $0x1b58] sm:$0xff]
        %v1372 = vld [vmem:[%s264 + $0x1b60] sm:$0xff]
        %v1373 = vld [vmem:[%s264 + $0x1b68] sm:$0xff]
        %v1374 = vld [vmem:[%s264 + $0x1b70] sm:$0xff]
        %v1375 = vld [vmem:[%s264 + $0x1b78] sm:$0xff]
        %v1376 = vld [vmem:[%s264 + $0x1b80] sm:$0xff]
        %v1377 = vld [vmem:[%s264 + $0x1b88] sm:$0xff]
        %v1378 = vld [vmem:[%s264 + $0x1b90] sm:$0xff]
        %v1379 = vld [vmem:[%s264 + $0x1b98] sm:$0xff]
        %v1380 = vld [vmem:[%s264 + $0x1ba0] sm:$0xff]
        %v1381 = vld [vmem:[%s264 + $0x1ba8] sm:$0xff]
        %v1382 = vld [vmem:[%s264 + $0x1bb0] sm:$0xff]
        %v1383 = vld [vmem:[%s264 + $0x1bb8] sm:$0xff]
        %v1384 = vld [vmem:[%s264 + $0x1bc0] sm:$0xff]
        %v1385 = vld [vmem:[%s264 + $0x1bc8] sm:$0xff]
        %v1386 = vld [vmem:[%s264 + $0x1bd0] sm:$0xff]
        %v1387 = vld [vmem:[%s264 + $0x1bd8] sm:$0xff]
        %v1388 = vld [vmem:[%s264 + $0x1be0] sm:$0xf]
        %v1389 = vld [vmem:[%s264 + $0x1be4] sm:$0xff]
        %v1390 = vld [vmem:[%s264 + $0x1bec] sm:$0xff]
        %v1391 = vld [vmem:[%s264 + $0x1bf4] sm:$0xff]
        %v1392 = vld [vmem:[%s264 + $0x1bfc] sm:$0xff]
        %v1393 = vld [vmem:[%s264 + $0x1c04] sm:$0xff]
        %v1394 = vld [vmem:[%s264 + $0x1c0c] sm:$0xff]
        %v1395 = vld [vmem:[%s264 + $0x1c14] sm:$0xff]
        %v1396 = vld [vmem:[%s264 + $0x1c1c] sm:$0xff]
        %v1397 = vld [vmem:[%s264 + $0x1c24] sm:$0xff]
        %v1398 = vld [vmem:[%s264 + $0x1c2c] sm:$0xff]
        %v1399 = vld [vmem:[%s264 + $0x1c34] sm:$0xff]
        %v1400 = vld [vmem:[%s264 + $0x1c3c] sm:$0xff]
        %v1401 = vld [vmem:[%s264 + $0x1c44] sm:$0xff]
        %v1402 = vld [vmem:[%s264 + $0x1c4c] sm:$0xff]
        %v1403 = vld [vmem:[%s264 + $0x1c54] sm:$0xff]
        %v1404 = vld [vmem:[%s264 + $0x1c5c] sm:$0xff]
        %v1405 = vld [vmem:[%s264 + $0x1c64] sm:$0xff]
        %v1406 = vld [vmem:[%s264 + $0x1c6c] sm:$0xf]
        %v1407 = vld [vmem:[%s264 + $0x1c70] sm:$0xff]
        %v1408 = vld [vmem:[%s264 + $0x1c78] sm:$0xff]
        %v1409 = vld [vmem:[%s264 + $0x1c80] sm:$0xff]
        %v1410 = vld [vmem:[%s264 + $0x1c88] sm:$0xff]
        %v1411 = vld [vmem:[%s264 + $0x1c90] sm:$0xff]
        %v1412 = vld [vmem:[%s264 + $0x1c98] sm:$0xff]
        %v1413 = vld [vmem:[%s264 + $0x1ca0] sm:$0xff]
        %v1414 = vld [vmem:[%s264 + $0x1ca8] sm:$0xff]
        %v1415 = vld [vmem:[%s264 + $0x1cb0] sm:$0xff]
        %v1416 = vld [vmem:[%s264 + $0x1cb8] sm:$0xff]
        %v1417 = vld [vmem:[%s264 + $0x1cc0] sm:$0xff]
        %v1418 = vld [vmem:[%s264 + $0x1cc8] sm:$0xff]
        %v1419 = vld [vmem:[%s264 + $0x1cd0] sm:$0xff]
        %v1420 = vld [vmem:[%s264 + $0x1cd8] sm:$0xff]
        %v1421 = vld [vmem:[%s264 + $0x1ce0] sm:$0xff]
        %v1422 = vld [vmem:[%s264 + $0x1ce8] sm:$0xff]
        %v1423 = vld [vmem:[%s264 + $0x1cf0] sm:$0xff]
        %v1424 = vld [vmem:[%s264 + $0x1cf8] sm:$0xf]
        %v1425 = vld [vmem:[%s264 + $0x1cfc] sm:$0xff]
        %v1426 = vld [vmem:[%s264 + $0x1d04] sm:$0xff]
        %v1427 = vld [vmem:[%s264 + $0x1d0c] sm:$0xff]
        %v1428 = vld [vmem:[%s264 + $0x1d14] sm:$0xff]
        %v1429 = vld [vmem:[%s264 + $0x1d1c] sm:$0xff]
        %v1430 = vld [vmem:[%s264 + $0x1d24] sm:$0xff]
        %v1431 = vld [vmem:[%s264 + $0x1d2c] sm:$0xff]
        %v1432 = vld [vmem:[%s264 + $0x1d34] sm:$0xff]
        %v1433 = vld [vmem:[%s264 + $0x1d3c] sm:$0xff]
        %v1434 = vld [vmem:[%s264 + $0x1d44] sm:$0xff]
        %v1435 = vld [vmem:[%s264 + $0x1d4c] sm:$0xff]
        %v1436 = vld [vmem:[%s264 + $0x1d54] sm:$0xff]
        %v1437 = vld [vmem:[%s264 + $0x1d5c] sm:$0xff]
        %v1438 = vld [vmem:[%s264 + $0x1d64] sm:$0xff]
        %v1439 = vld [vmem:[%s264 + $0x1d6c] sm:$0xff]
        %v1440 = vld [vmem:[%s264 + $0x1d74] sm:$0xff]
        %v1441 = vld [vmem:[%s264 + $0x1d7c] sm:$0xff]
        %v1442 = vld [vmem:[%s264 + $0x1d84] sm:$0xf]
        %v1443 = vld [vmem:[%s264 + $0x1d88] sm:$0xff]
        %v1444 = vld [vmem:[%s264 + $0x1d90] sm:$0xff]
        %v1445 = vld [vmem:[%s264 + $0x1d98] sm:$0xff]
        %v1446 = vld [vmem:[%s264 + $0x1da0] sm:$0xff]
        %v1447 = vld [vmem:[%s264 + $0x1da8] sm:$0xff]
        %v1448 = vld [vmem:[%s264 + $0x1db0] sm:$0xff]
        %v1449 = vld [vmem:[%s264 + $0x1db8] sm:$0xff]
        %v1450 = vld [vmem:[%s264 + $0x1dc0] sm:$0xff]
        %v1451 = vld [vmem:[%s264 + $0x1dc8] sm:$0xff]
        %v1452 = vld [vmem:[%s264 + $0x1dd0] sm:$0xff]
        %v1453 = vld [vmem:[%s264 + $0x1dd8] sm:$0xff]
        %v1454 = vld [vmem:[%s264 + $0x1de0] sm:$0xff]
        %v1455 = vld [vmem:[%s264 + $0x1de8] sm:$0xff]
        %v1456 = vld [vmem:[%s264 + $0x1df0] sm:$0xff]
        %v1457 = vld [vmem:[%s264 + $0x1df8] sm:$0xff]
        %v1458 = vld [vmem:[%s264 + $0x1e00] sm:$0xff]
        %v1459 = vld [vmem:[%s264 + $0x1e08] sm:$0xff]
        %v1460 = vld [vmem:[%s264 + $0x1e10] sm:$0xf]
        %v1461 = vld [vmem:[%s264 + $0x1e14] sm:$0xff]
        %v1462 = vld [vmem:[%s264 + $0x1e1c] sm:$0xff]
        %v1463 = vld [vmem:[%s264 + $0x1e24] sm:$0xff]
        %v1464 = vld [vmem:[%s264 + $0x1e2c] sm:$0xff]
        %v1465 = vld [vmem:[%s264 + $0x1e34] sm:$0xff]
        %v1466 = vld [vmem:[%s264 + $0x1e3c] sm:$0xff]
        %v1467 = vld [vmem:[%s264 + $0x1e44] sm:$0xff]
        %v1468 = vld [vmem:[%s264 + $0x1e4c] sm:$0xff]
        %v1469 = vld [vmem:[%s264 + $0x1e54] sm:$0xff]
        %v1470 = vld [vmem:[%s264 + $0x1e5c] sm:$0xff]
        %v1471 = vld [vmem:[%s264 + $0x1e64] sm:$0xff]
        %v1472 = vld [vmem:[%s264 + $0x1e6c] sm:$0xff]
        %v1473 = vld [vmem:[%s264 + $0x1e74] sm:$0xff]
        %v1474 = vld [vmem:[%s264 + $0x1e7c] sm:$0xff]
        %v1475 = vld [vmem:[%s264 + $0x1e84] sm:$0xff]
        %v1476 = vld [vmem:[%s264 + $0x1e8c] sm:$0xff]
        %v1477 = vld [vmem:[%s264 + $0x1e94] sm:$0xff]
        %v1478 = vld [vmem:[%s264 + $0x1e9c] sm:$0xf]
        %v1479 = vld [vmem:[%s264 + $0x1ea0] sm:$0xff]
        %v1480 = vld [vmem:[%s264 + $0x1ea8] sm:$0xff]
        %v1481 = vld [vmem:[%s264 + $0x1eb0] sm:$0xff]
        %v1482 = vld [vmem:[%s264 + $0x1eb8] sm:$0xff]
        %v1483 = vld [vmem:[%s264 + $0x1ec0] sm:$0xff]
        %v1484 = vld [vmem:[%s264 + $0x1ec8] sm:$0xff]
        %v1485 = vld [vmem:[%s264 + $0x1ed0] sm:$0xff]
        %v1486 = vld [vmem:[%s264 + $0x1ed8] sm:$0xff]
        %v1487 = vld [vmem:[%s264 + $0x1ee0] sm:$0xff]
        %v1488 = vld [vmem:[%s264 + $0x1ee8] sm:$0xff]
        %v1489 = vld [vmem:[%s264 + $0x1ef0] sm:$0xff]
        %v1490 = vld [vmem:[%s264 + $0x1ef8] sm:$0xff]
        %v1491 = vld [vmem:[%s264 + $0x1f00] sm:$0xff]
        %v1492 = vld [vmem:[%s264 + $0x1f08] sm:$0xff]
        %v1493 = vld [vmem:[%s264 + $0x1f10] sm:$0xff]
        %v1494 = vld [vmem:[%s264 + $0x1f18] sm:$0xff]
        %v1495 = vld [vmem:[%s264 + $0x1f20] sm:$0xff]
        %v1496 = vld [vmem:[%s264 + $0x1f28] sm:$0xf]
        %v1497 = vld [vmem:[%s264 + $0x1f2c] sm:$0xff]
        %v1498 = vld [vmem:[%s264 + $0x1f34] sm:$0xff]
        %v1499 = vld [vmem:[%s264 + $0x1f3c] sm:$0xff]
        %v1500 = vld [vmem:[%s264 + $0x1f44] sm:$0xff]
        %v1501 = vld [vmem:[%s264 + $0x1f4c] sm:$0xff]
        %v1502 = vld [vmem:[%s264 + $0x1f54] sm:$0xff]
        %v1503 = vld [vmem:[%s264 + $0x1f5c] sm:$0xff]
        %v1504 = vld [vmem:[%s264 + $0x1f64] sm:$0xff]
        %v1505 = vld [vmem:[%s264 + $0x1f6c] sm:$0xff]
        %v1506 = vld [vmem:[%s264 + $0x1f74] sm:$0xff]
        %v1507 = vld [vmem:[%s264 + $0x1f7c] sm:$0xff]
        %v1508 = vld [vmem:[%s264 + $0x1f84] sm:$0xff]
        %v1509 = vld [vmem:[%s264 + $0x1f8c] sm:$0xff]
        %v1510 = vld [vmem:[%s264 + $0x1f94] sm:$0xff]
        %v1511 = vld [vmem:[%s264 + $0x1f9c] sm:$0xff]
        %v1512 = vld [vmem:[%s264 + $0x1fa4] sm:$0xff]
        %v1513 = vld [vmem:[%s264 + $0x1fac] sm:$0xff]
        %v1514 = vld [vmem:[%s264 + $0x1fb4] sm:$0xf]
        %v1515 = vld [vmem:[%s264 + $0x1fb8] sm:$0xff]
        %v1516 = vld [vmem:[%s264 + $0x1fc0] sm:$0xff]
        %v1517 = vld [vmem:[%s264 + $0x1fc8] sm:$0xff]
        %v1518 = vld [vmem:[%s264 + $0x1fd0] sm:$0xff]
        %v1519 = vld [vmem:[%s264 + $0x1fd8] sm:$0xff]
        %v1520 = vld [vmem:[%s264 + $0x1fe0] sm:$0xff]
        %v1521 = vld [vmem:[%s264 + $0x1fe8] sm:$0xff]
        %v1522 = vld [vmem:[%s264 + $0x1ff0] sm:$0xff]
        %v1523 = vld [vmem:[%s264 + $0x1ff8] sm:$0xff]
        %v1524 = vld [vmem:[%s264 + $0x2000] sm:$0xff]
        %v1525 = vld [vmem:[%s264 + $0x2008] sm:$0xff]
        %v1526 = vld [vmem:[%s264 + $0x2010] sm:$0xff]
        %v1527 = vld [vmem:[%s264 + $0x2018] sm:$0xff]
        %v1528 = vld [vmem:[%s264 + $0x2020] sm:$0xff]
        %v1529 = vld [vmem:[%s264 + $0x2028] sm:$0xff]
        %v1530 = vld [vmem:[%s264 + $0x2030] sm:$0xff]
        %v1531 = vld [vmem:[%s264 + $0x2038] sm:$0xff]
        %v1532 = vld [vmem:[%s264 + $0x2040] sm:$0xf]
        %v1533 = vld [vmem:[%s264 + $0x2044] sm:$0xff]
        %v1534 = vld [vmem:[%s264 + $0x204c] sm:$0xff]
        %v1535 = vld [vmem:[%s264 + $0x2054] sm:$0xff]
        %v1536 = vld [vmem:[%s264 + $0x205c] sm:$0xff]
        %v1537 = vld [vmem:[%s264 + $0x2064] sm:$0xff]
        %v1538 = vld [vmem:[%s264 + $0x206c] sm:$0xff]
        %v1539 = vld [vmem:[%s264 + $0x2074] sm:$0xff]
        %v1540 = vld [vmem:[%s264 + $0x207c] sm:$0xff]
        %v1541 = vld [vmem:[%s264 + $0x2084] sm:$0xff]
        %v1542 = vld [vmem:[%s264 + $0x208c] sm:$0xff]
        %v1543 = vld [vmem:[%s264 + $0x2094] sm:$0xff]
        %v1544 = vld [vmem:[%s264 + $0x209c] sm:$0xff]
        %v1545 = vld [vmem:[%s264 + $0x20a4] sm:$0xff]
        %v1546 = vld [vmem:[%s264 + $0x20ac] sm:$0xff]
        %v1547 = vld [vmem:[%s264 + $0x20b4] sm:$0xff]
        %v1548 = vld [vmem:[%s264 + $0x20bc] sm:$0xff]
        %v1549 = vld [vmem:[%s264 + $0x20c4] sm:$0xff]
        %v1550 = vld [vmem:[%s264 + $0x20cc] sm:$0xf]
        %v1551 = vld [vmem:[%s264 + $0x20d0] sm:$0xff]
        %v1552 = vld [vmem:[%s264 + $0x20d8] sm:$0xff]
        %v1553 = vld [vmem:[%s264 + $0x20e0] sm:$0xff]
        %v1554 = vld [vmem:[%s264 + $0x20e8] sm:$0xff]
        %v1555 = vld [vmem:[%s264 + $0x20f0] sm:$0xff]
        %v1556 = vld [vmem:[%s264 + $0x20f8] sm:$0xff]
        %v1557 = vld [vmem:[%s264 + $0x2100] sm:$0xff]
        %v1558 = vld [vmem:[%s264 + $0x2108] sm:$0xff]
        %v1559 = vld [vmem:[%s264 + $0x2110] sm:$0xff]
        %v1560 = vld [vmem:[%s264 + $0x2118] sm:$0xff]
        %v1561 = vld [vmem:[%s264 + $0x2120] sm:$0xff]
        %v1562 = vld [vmem:[%s264 + $0x2128] sm:$0xff]
        %v1563 = vld [vmem:[%s264 + $0x2130] sm:$0xff]
        %v1564 = vld [vmem:[%s264 + $0x2138] sm:$0xff]
        %v1565 = vld [vmem:[%s264 + $0x2140] sm:$0xff]
        %v1566 = vld [vmem:[%s264 + $0x2148] sm:$0xff]
        %v1567 = vld [vmem:[%s264 + $0x2150] sm:$0xff]
        %v1568 = vld [vmem:[%s264 + $0x2158] sm:$0xf]
        %v1569 = vld [vmem:[%s264 + $0x215c] sm:$0xff]
        %v1570 = vld [vmem:[%s264 + $0x2164] sm:$0xff]
        %v1571 = vld [vmem:[%s264 + $0x216c] sm:$0xff]
        %v1572 = vld [vmem:[%s264 + $0x2174] sm:$0xff]
        %v1573 = vld [vmem:[%s264 + $0x217c] sm:$0xff]
        %v1574 = vld [vmem:[%s264 + $0x2184] sm:$0xff]
        %v1575 = vld [vmem:[%s264 + $0x218c] sm:$0xff]
        %v1576 = vld [vmem:[%s264 + $0x2194] sm:$0xff]
        %v1577 = vld [vmem:[%s264 + $0x219c] sm:$0xff]
        %v1578 = vld [vmem:[%s264 + $0x21a4] sm:$0xff]
        %v1579 = vld [vmem:[%s264 + $0x21ac] sm:$0xff]
        %v1580 = vld [vmem:[%s264 + $0x21b4] sm:$0xff]
        %v1581 = vld [vmem:[%s264 + $0x21bc] sm:$0xff]
        %v1582 = vld [vmem:[%s264 + $0x21c4] sm:$0xff]
        %v1583 = vld [vmem:[%s264 + $0x21cc] sm:$0xff]
        %v1584 = vld [vmem:[%s264 + $0x21d4] sm:$0xff]
        %v1585 = vld [vmem:[%s264 + $0x21dc] sm:$0xff]
        %v1586 = vld [vmem:[%s264 + $0x21e4] sm:$0xf]
        %v1587 = vld [vmem:[%s264 + $0x21e8] sm:$0xff]
        %v1588 = vld [vmem:[%s264 + $0x21f0] sm:$0xff]
        %v1589 = vld [vmem:[%s264 + $0x21f8] sm:$0xff]
        %v1590 = vld [vmem:[%s264 + $0x2200] sm:$0xff]
        %v1591 = vld [vmem:[%s264 + $0x2208] sm:$0xff]
        %v1592 = vld [vmem:[%s264 + $0x2210] sm:$0xff]
        %v1593 = vld [vmem:[%s264 + $0x2218] sm:$0xff]
        %v1594 = vld [vmem:[%s264 + $0x2220] sm:$0xff]
        %v1595 = vld [vmem:[%s264 + $0x2228] sm:$0xff]
        %v1596 = vld [vmem:[%s264 + $0x2230] sm:$0xff]
        %v1597 = vld [vmem:[%s264 + $0x2238] sm:$0xff]
        %v1598 = vld [vmem:[%s264 + $0x2240] sm:$0xff]
        %v1599 = vld [vmem:[%s264 + $0x2248] sm:$0xff]
        %v1600 = vld [vmem:[%s264 + $0x2250] sm:$0xff]
        %v1601 = vld [vmem:[%s264 + $0x2258] sm:$0xff]
        %v1602 = vld [vmem:[%s264 + $0x2260] sm:$0xff]
        %v1603 = vld [vmem:[%s264 + $0x2268] sm:$0xff]
        %v1604 = vld [vmem:[%s264 + $0x2270] sm:$0xf]
        %v1605 = vld [vmem:[%s264 + $0x2274] sm:$0xff]
        %v1606 = vld [vmem:[%s264 + $0x227c] sm:$0xff]
        %v1607 = vld [vmem:[%s264 + $0x2284] sm:$0xff]
        %v1608 = vld [vmem:[%s264 + $0x228c] sm:$0xff]
        %v1609 = vld [vmem:[%s264 + $0x2294] sm:$0xff]
        %v1610 = vld [vmem:[%s264 + $0x229c] sm:$0xff]
        %v1611 = vld [vmem:[%s264 + $0x22a4] sm:$0xff]
        %v1612 = vld [vmem:[%s264 + $0x22ac] sm:$0xff]
        %v1613 = vld [vmem:[%s264 + $0x22b4] sm:$0xff]
        %v1614 = vld [vmem:[%s264 + $0x22bc] sm:$0xff]
        %v1615 = vld [vmem:[%s264 + $0x22c4] sm:$0xff]
        %v1616 = vld [vmem:[%s264 + $0x22cc] sm:$0xff]
        %v1617 = vld [vmem:[%s264 + $0x22d4] sm:$0xff]
        %v1618 = vld [vmem:[%s264 + $0x22dc] sm:$0xff]
        %v1619 = vld [vmem:[%s264 + $0x22e4] sm:$0xff]
        %v1620 = vld [vmem:[%s264 + $0x22ec] sm:$0xff]
        %v1621 = vld [vmem:[%s264 + $0x22f4] sm:$0xff]
        %v1622 = vld [vmem:[%s264 + $0x22fc] sm:$0xf]
        %s1623 = smul.u32 %s24, 4480
        %s1624 = sshra.s32 %s1623, 7
        %s1625 = sand.u32 %s1623, 127
        %s1626 = scalar_lea.vmem [#allocation10], %s1624
        %v1627 = vld [vmem:[%s1626] sm:$0xff]
        %v1628 = vld [vmem:[%s1626 + $0x8] sm:$0xff]
        %v1629 = vld [vmem:[%s1626 + $0x10] sm:$0xff]
        %v1630 = vld [vmem:[%s1626 + $0x18] sm:$0xff]
        %v1631 = vld [vmem:[%s1626 + $0x20] sm:$0x7]
        %v1637 = vlaneseq
        %v1638 = vshrl.u32 %v1637, 7
        %v1639 = vsub.s32 0, %v1638
        %v1640 = vrot.slane %v1627, %v1639
        %v1641 = vlaneseq
        %v1642 = vshrl.u32 %v1641, 7
        %v1643 = vsub.s32 1, %v1642
        %v1644 = vrot.slane %v1627, %v1643
        %v1645 = vlaneseq
        %v1646 = vshrl.u32 %v1645, 7
        %v1647 = vsub.s32 2, %v1646
        %v1648 = vrot.slane %v1627, %v1647
        %v1649 = vlaneseq
        %v1650 = vshrl.u32 %v1649, 7
        %v1651 = vsub.s32 3, %v1650
        %v1652 = vrot.slane %v1627, %v1651
        %v1653 = vlaneseq
        %v1654 = vshrl.u32 %v1653, 7
        %v1655 = vsub.s32 4, %v1654
        %v1656 = vrot.slane %v1627, %v1655
        %v1657 = vlaneseq
        %v1658 = vshrl.u32 %v1657, 7
        %v1659 = vsub.s32 5, %v1658
        %v1660 = vrot.slane %v1627, %v1659
        %v1661 = vlaneseq
        %v1662 = vshrl.u32 %v1661, 7
        %v1663 = vsub.s32 6, %v1662
        %v1664 = vrot.slane %v1627, %v1663
        %v1665 = vlaneseq
        %v1666 = vshrl.u32 %v1665, 7
        %v1667 = vsub.s32 7, %v1666
        %v1668 = vrot.slane %v1627, %v1667
        %v1669 = vlaneseq
        %v1670 = vshrl.u32 %v1669, 7
        %v1671 = vsub.s32 0, %v1670
        %v1672 = vrot.slane %v1628, %v1671
        %v1673 = vlaneseq
        %v1674 = vshrl.u32 %v1673, 7
        %v1675 = vsub.s32 1, %v1674
        %v1676 = vrot.slane %v1628, %v1675
        %v1677 = vlaneseq
        %v1678 = vshrl.u32 %v1677, 7
        %v1679 = vsub.s32 2, %v1678
        %v1680 = vrot.slane %v1628, %v1679
        %v1681 = vlaneseq
        %v1682 = vshrl.u32 %v1681, 7
        %v1683 = vsub.s32 3, %v1682
        %v1684 = vrot.slane %v1628, %v1683
        %v1685 = vlaneseq
        %v1686 = vshrl.u32 %v1685, 7
        %v1687 = vsub.s32 4, %v1686
        %v1688 = vrot.slane %v1628, %v1687
        %v1689 = vlaneseq
        %v1690 = vshrl.u32 %v1689, 7
        %v1691 = vsub.s32 5, %v1690
        %v1692 = vrot.slane %v1628, %v1691
        %v1693 = vlaneseq
        %v1694 = vshrl.u32 %v1693, 7
        %v1695 = vsub.s32 6, %v1694
        %v1696 = vrot.slane %v1628, %v1695
        %v1697 = vlaneseq
        %v1698 = vshrl.u32 %v1697, 7
        %v1699 = vsub.s32 7, %v1698
        %v1700 = vrot.slane %v1628, %v1699
        %v1701 = vlaneseq
        %v1702 = vshrl.u32 %v1701, 7
        %v1703 = vsub.s32 0, %v1702
        %v1704 = vrot.slane %v1629, %v1703
        %v1705 = vlaneseq
        %v1706 = vshrl.u32 %v1705, 7
        %v1707 = vsub.s32 1, %v1706
        %v1708 = vrot.slane %v1629, %v1707
        %v1709 = vlaneseq
        %v1710 = vshrl.u32 %v1709, 7
        %v1711 = vsub.s32 2, %v1710
        %v1712 = vrot.slane %v1629, %v1711
        %v1713 = vlaneseq
        %v1714 = vshrl.u32 %v1713, 7
        %v1715 = vsub.s32 3, %v1714
        %v1716 = vrot.slane %v1629, %v1715
        %v1717 = vlaneseq
        %v1718 = vshrl.u32 %v1717, 7
        %v1719 = vsub.s32 4, %v1718
        %v1720 = vrot.slane %v1629, %v1719
        %v1721 = vlaneseq
        %v1722 = vshrl.u32 %v1721, 7
        %v1723 = vsub.s32 5, %v1722
        %v1724 = vrot.slane %v1629, %v1723
        %v1725 = vlaneseq
        %v1726 = vshrl.u32 %v1725, 7
        %v1727 = vsub.s32 6, %v1726
        %v1728 = vrot.slane %v1629, %v1727
        %v1729 = vlaneseq
        %v1730 = vshrl.u32 %v1729, 7
        %v1731 = vsub.s32 7, %v1730
        %v1732 = vrot.slane %v1629, %v1731
        %v1733 = vlaneseq
        %v1734 = vshrl.u32 %v1733, 7
        %v1735 = vsub.s32 0, %v1734
        %v1736 = vrot.slane %v1630, %v1735
        %v1737 = vlaneseq
        %v1738 = vshrl.u32 %v1737, 7
        %v1739 = vsub.s32 1, %v1738
        %v1740 = vrot.slane %v1630, %v1739
        %v1741 = vlaneseq
        %v1742 = vshrl.u32 %v1741, 7
        %v1743 = vsub.s32 2, %v1742
        %v1744 = vrot.slane %v1630, %v1743
        %v1745 = vlaneseq
        %v1746 = vshrl.u32 %v1745, 7
        %v1747 = vsub.s32 3, %v1746
        %v1748 = vrot.slane %v1630, %v1747
        %v1749 = vlaneseq
        %v1750 = vshrl.u32 %v1749, 7
        %v1751 = vsub.s32 4, %v1750
        %v1752 = vrot.slane %v1630, %v1751
        %v1753 = vlaneseq
        %v1754 = vshrl.u32 %v1753, 7
        %v1755 = vsub.s32 5, %v1754
        %v1756 = vrot.slane %v1630, %v1755
        %v1757 = vlaneseq
        %v1758 = vshrl.u32 %v1757, 7
        %v1759 = vsub.s32 6, %v1758
        %v1760 = vrot.slane %v1630, %v1759
        %v1761 = vlaneseq
        %v1762 = vshrl.u32 %v1761, 7
        %v1763 = vsub.s32 7, %v1762
        %v1764 = vrot.slane %v1630, %v1763
        %v1765 = vlaneseq
        %v1766 = vshrl.u32 %v1765, 7
        %v1767 = vsub.s32 0, %v1766
        %v1768 = vrot.slane %v1631, %v1767
        %v1769 = vlaneseq
        %v1770 = vshrl.u32 %v1769, 7
        %v1771 = vsub.s32 1, %v1770
        %v1772 = vrot.slane %v1631, %v1771
        %v1773 = vlaneseq
        %v1774 = vshrl.u32 %v1773, 7
        %v1775 = vsub.s32 2, %v1774
        %v1776 = vrot.slane %v1631, %v1775
        %v2964 = vunpack.c.l.b16 %v471
        %v2965 = vunpack.c.h.b16 %v471
        %v2966 = vunpack.c.l.b16 %v472
        %v2967 = vunpack.c.h.b16 %v472
        %v2968 = vunpack.c.l.b16 %v473
        %v2969 = vunpack.c.h.b16 %v473
        %v2970 = vunpack.c.l.b16 %v474
        %v2971 = vunpack.c.h.b16 %v474
        %v2972 = vunpack.c.l.b16 %v475
        %v2973 = vunpack.c.h.b16 %v475
        %v2974 = vunpack.c.l.b16 %v476
        %v2975 = vunpack.c.h.b16 %v476
        %v2976 = vunpack.c.l.b16 %v477
        %v2977 = vunpack.c.h.b16 %v477
        %v2978 = vunpack.c.l.b16 %v478
        %v2979 = vunpack.c.h.b16 %v478
        %v2980 = vunpack.c.l.b16 %v479
        %v2981 = vunpack.c.h.b16 %v479
        %v2982 = vunpack.c.l.b16 %v480
        %v2983 = vunpack.c.h.b16 %v480
        %v2984 = vunpack.c.l.b16 %v481
        %v2985 = vunpack.c.h.b16 %v481
        %v2986 = vunpack.c.l.b16 %v482
        %v2987 = vunpack.c.h.b16 %v482
        %v2988 = vunpack.c.l.b16 %v483
        %v2989 = vunpack.c.h.b16 %v483
        %v2990 = vunpack.c.l.b16 %v484
        %v2991 = vunpack.c.h.b16 %v484
        %v2992 = vunpack.c.l.b16 %v485
        %v2993 = vunpack.c.h.b16 %v485
        %v2994 = vunpack.c.l.b16 %v486
        %v2995 = vunpack.c.h.b16 %v486
        %v2996 = vunpack.c.l.b16 %v487
        %v2997 = vunpack.c.h.b16 %v487
        %v2998 = vunpack.c.l.b16 %v488
        %v2999 = vunpack.c.l.b16 %v489
        %v3000 = vunpack.c.h.b16 %v489
        %v3001 = vunpack.c.l.b16 %v490
        %v3002 = vunpack.c.h.b16 %v490
        %v3003 = vunpack.c.l.b16 %v491
        %v3004 = vunpack.c.h.b16 %v491
        %v3005 = vunpack.c.l.b16 %v492
        %v3006 = vunpack.c.h.b16 %v492
        %v3007 = vunpack.c.l.b16 %v493
        %v3008 = vunpack.c.h.b16 %v493
        %v3009 = vunpack.c.l.b16 %v494
        %v3010 = vunpack.c.h.b16 %v494
        %v3011 = vunpack.c.l.b16 %v495
        %v3012 = vunpack.c.h.b16 %v495
        %v3013 = vunpack.c.l.b16 %v496
        %v3014 = vunpack.c.h.b16 %v496
        %v3015 = vunpack.c.l.b16 %v497
        %v3016 = vunpack.c.h.b16 %v497
        %v3017 = vunpack.c.l.b16 %v498
        %v3018 = vunpack.c.h.b16 %v498
        %v3019 = vunpack.c.l.b16 %v499
        %v3020 = vunpack.c.h.b16 %v499
        %v3021 = vunpack.c.l.b16 %v500
        %v3022 = vunpack.c.h.b16 %v500
        %v3023 = vunpack.c.l.b16 %v501
        %v3024 = vunpack.c.h.b16 %v501
        %v3025 = vunpack.c.l.b16 %v502
        %v3026 = vunpack.c.h.b16 %v502
        %v3027 = vunpack.c.l.b16 %v503
        %v3028 = vunpack.c.h.b16 %v503
        %v3029 = vunpack.c.l.b16 %v504
        %v3030 = vunpack.c.h.b16 %v504
        %v3031 = vunpack.c.l.b16 %v505
        %v3032 = vunpack.c.h.b16 %v505
        %v3033 = vunpack.c.l.b16 %v506
        %v3034 = vunpack.c.l.b16 %v507
        %v3035 = vunpack.c.h.b16 %v507
        %v3036 = vunpack.c.l.b16 %v508
        %v3037 = vunpack.c.h.b16 %v508
        %v3038 = vunpack.c.l.b16 %v509
        %v3039 = vunpack.c.h.b16 %v509
        %v3040 = vunpack.c.l.b16 %v510
        %v3041 = vunpack.c.h.b16 %v510
        %v3042 = vunpack.c.l.b16 %v511
        %v3043 = vunpack.c.h.b16 %v511
        %v3044 = vunpack.c.l.b16 %v512
        %v3045 = vunpack.c.h.b16 %v512
        %v3046 = vunpack.c.l.b16 %v513
        %v3047 = vunpack.c.h.b16 %v513
        %v3048 = vunpack.c.l.b16 %v514
        %v3049 = vunpack.c.h.b16 %v514
        %v3050 = vunpack.c.l.b16 %v515
        %v3051 = vunpack.c.h.b16 %v515
        %v3052 = vunpack.c.l.b16 %v516
        %v3053 = vunpack.c.h.b16 %v516
        %v3054 = vunpack.c.l.b16 %v517
        %v3055 = vunpack.c.h.b16 %v517
        %v3056 = vunpack.c.l.b16 %v518
        %v3057 = vunpack.c.h.b16 %v518
        %v3058 = vunpack.c.l.b16 %v519
        %v3059 = vunpack.c.h.b16 %v519
        %v3060 = vunpack.c.l.b16 %v520
        %v3061 = vunpack.c.h.b16 %v520
        %v3062 = vunpack.c.l.b16 %v521
        %v3063 = vunpack.c.h.b16 %v521
        %v3064 = vunpack.c.l.b16 %v522
        %v3065 = vunpack.c.h.b16 %v522
        %v3066 = vunpack.c.l.b16 %v523
        %v3067 = vunpack.c.h.b16 %v523
        %v3068 = vunpack.c.l.b16 %v524
        %v3069 = vunpack.c.l.b16 %v525
        %v3070 = vunpack.c.h.b16 %v525
        %v3071 = vunpack.c.l.b16 %v526
        %v3072 = vunpack.c.h.b16 %v526
        %v3073 = vunpack.c.l.b16 %v527
        %v3074 = vunpack.c.h.b16 %v527
        %v3075 = vunpack.c.l.b16 %v528
        %v3076 = vunpack.c.h.b16 %v528
        %v3077 = vunpack.c.l.b16 %v529
        %v3078 = vunpack.c.h.b16 %v529
        %v3079 = vunpack.c.l.b16 %v530
        %v3080 = vunpack.c.h.b16 %v530
        %v3081 = vunpack.c.l.b16 %v531
        %v3082 = vunpack.c.h.b16 %v531
        %v3083 = vunpack.c.l.b16 %v532
        %v3084 = vunpack.c.h.b16 %v532
        %v3085 = vunpack.c.l.b16 %v533
        %v3086 = vunpack.c.h.b16 %v533
        %v3087 = vunpack.c.l.b16 %v534
        %v3088 = vunpack.c.h.b16 %v534
        %v3089 = vunpack.c.l.b16 %v535
        %v3090 = vunpack.c.h.b16 %v535
        %v3091 = vunpack.c.l.b16 %v536
        %v3092 = vunpack.c.h.b16 %v536
        %v3093 = vunpack.c.l.b16 %v537
        %v3094 = vunpack.c.h.b16 %v537
        %v3095 = vunpack.c.l.b16 %v538
        %v3096 = vunpack.c.h.b16 %v538
        %v3097 = vunpack.c.l.b16 %v539
        %v3098 = vunpack.c.h.b16 %v539
        %v3099 = vunpack.c.l.b16 %v540
        %v3100 = vunpack.c.h.b16 %v540
        %v3101 = vunpack.c.l.b16 %v541
        %v3102 = vunpack.c.h.b16 %v541
        %v3103 = vunpack.c.l.b16 %v542
        %v3104 = vunpack.c.l.b16 %v543
        %v3105 = vunpack.c.h.b16 %v543
        %v3106 = vunpack.c.l.b16 %v544
        %v3107 = vunpack.c.h.b16 %v544
        %v3108 = vunpack.c.l.b16 %v545
        %v3109 = vunpack.c.h.b16 %v545
        %v3110 = vunpack.c.l.b16 %v546
        %v3111 = vunpack.c.h.b16 %v546
        %v3112 = vunpack.c.l.b16 %v547
        %v3113 = vunpack.c.h.b16 %v547
        %v3114 = vunpack.c.l.b16 %v548
        %v3115 = vunpack.c.h.b16 %v548
        %v3116 = vunpack.c.l.b16 %v549
        %v3117 = vunpack.c.h.b16 %v549
        %v3118 = vunpack.c.l.b16 %v550
        %v3119 = vunpack.c.h.b16 %v550
        %v3120 = vunpack.c.l.b16 %v551
        %v3121 = vunpack.c.h.b16 %v551
        %v3122 = vunpack.c.l.b16 %v552
        %v3123 = vunpack.c.h.b16 %v552
        %v3124 = vunpack.c.l.b16 %v553
        %v3125 = vunpack.c.h.b16 %v553
        %v3126 = vunpack.c.l.b16 %v554
        %v3127 = vunpack.c.h.b16 %v554
        %v3128 = vunpack.c.l.b16 %v555
        %v3129 = vunpack.c.h.b16 %v555
        %v3130 = vunpack.c.l.b16 %v556
        %v3131 = vunpack.c.h.b16 %v556
        %v3132 = vunpack.c.l.b16 %v557
        %v3133 = vunpack.c.h.b16 %v557
        %v3134 = vunpack.c.l.b16 %v558
        %v3135 = vunpack.c.h.b16 %v558
        %v3136 = vunpack.c.l.b16 %v559
        %v3137 = vunpack.c.h.b16 %v559
        %v3138 = vunpack.c.l.b16 %v560
        %v3139 = vunpack.c.l.b16 %v561
        %v3140 = vunpack.c.h.b16 %v561
        %v3141 = vunpack.c.l.b16 %v562
        %v3142 = vunpack.c.h.b16 %v562
        %v3143 = vunpack.c.l.b16 %v563
        %v3144 = vunpack.c.h.b16 %v563
        %v3145 = vunpack.c.l.b16 %v564
        %v3146 = vunpack.c.h.b16 %v564
        %v3147 = vunpack.c.l.b16 %v565
        %v3148 = vunpack.c.h.b16 %v565
        %v3149 = vunpack.c.l.b16 %v566
        %v3150 = vunpack.c.h.b16 %v566
        %v3151 = vunpack.c.l.b16 %v567
        %v3152 = vunpack.c.h.b16 %v567
        %v3153 = vunpack.c.l.b16 %v568
        %v3154 = vunpack.c.h.b16 %v568
        %v3155 = vunpack.c.l.b16 %v569
        %v3156 = vunpack.c.h.b16 %v569
        %v3157 = vunpack.c.l.b16 %v570
        %v3158 = vunpack.c.h.b16 %v570
        %v3159 = vunpack.c.l.b16 %v571
        %v3160 = vunpack.c.h.b16 %v571
        %v3161 = vunpack.c.l.b16 %v572
        %v3162 = vunpack.c.h.b16 %v572
        %v3163 = vunpack.c.l.b16 %v573
        %v3164 = vunpack.c.h.b16 %v573
        %v3165 = vunpack.c.l.b16 %v574
        %v3166 = vunpack.c.h.b16 %v574
        %v3167 = vunpack.c.l.b16 %v575
        %v3168 = vunpack.c.h.b16 %v575
        %v3169 = vunpack.c.l.b16 %v576
        %v3170 = vunpack.c.h.b16 %v576
        %v3171 = vunpack.c.l.b16 %v577
        %v3172 = vunpack.c.h.b16 %v577
        %v3173 = vunpack.c.l.b16 %v578
        %v3174 = vunpack.c.l.b16 %v579
        %v3175 = vunpack.c.h.b16 %v579
        %v3176 = vunpack.c.l.b16 %v580
        %v3177 = vunpack.c.h.b16 %v580
        %v3178 = vunpack.c.l.b16 %v581
        %v3179 = vunpack.c.h.b16 %v581
        %v3180 = vunpack.c.l.b16 %v582
        %v3181 = vunpack.c.h.b16 %v582
        %v3182 = vunpack.c.l.b16 %v583
        %v3183 = vunpack.c.h.b16 %v583
        %v3184 = vunpack.c.l.b16 %v584
        %v3185 = vunpack.c.h.b16 %v584
        %v3186 = vunpack.c.l.b16 %v585
        %v3187 = vunpack.c.h.b16 %v585
        %v3188 = vunpack.c.l.b16 %v586
        %v3189 = vunpack.c.h.b16 %v586
        %v3190 = vunpack.c.l.b16 %v587
        %v3191 = vunpack.c.h.b16 %v587
        %v3192 = vunpack.c.l.b16 %v588
        %v3193 = vunpack.c.h.b16 %v588
        %v3194 = vunpack.c.l.b16 %v589
        %v3195 = vunpack.c.h.b16 %v589
        %v3196 = vunpack.c.l.b16 %v590
        %v3197 = vunpack.c.h.b16 %v590
        %v3198 = vunpack.c.l.b16 %v591
        %v3199 = vunpack.c.h.b16 %v591
        %v3200 = vunpack.c.l.b16 %v592
        %v3201 = vunpack.c.h.b16 %v592
        %v3202 = vunpack.c.l.b16 %v593
        %v3203 = vunpack.c.h.b16 %v593
        %v3204 = vunpack.c.l.b16 %v594
        %v3205 = vunpack.c.h.b16 %v594
        %v3206 = vunpack.c.l.b16 %v595
        %v3207 = vunpack.c.h.b16 %v595
        %v3208 = vunpack.c.l.b16 %v596
        %v3209 = vunpack.c.l.b16 %v597
        %v3210 = vunpack.c.h.b16 %v597
        %v3211 = vunpack.c.l.b16 %v598
        %v3212 = vunpack.c.h.b16 %v598
        %v3213 = vunpack.c.l.b16 %v599
        %v3214 = vunpack.c.h.b16 %v599
        %v3215 = vunpack.c.l.b16 %v600
        %v3216 = vunpack.c.h.b16 %v600
        %v3217 = vunpack.c.l.b16 %v601
        %v3218 = vunpack.c.h.b16 %v601
        %v3219 = vunpack.c.l.b16 %v602
        %v3220 = vunpack.c.h.b16 %v602
        %v3221 = vunpack.c.l.b16 %v603
        %v3222 = vunpack.c.h.b16 %v603
        %v3223 = vunpack.c.l.b16 %v604
        %v3224 = vunpack.c.h.b16 %v604
        %v3225 = vunpack.c.l.b16 %v605
        %v3226 = vunpack.c.h.b16 %v605
        %v3227 = vunpack.c.l.b16 %v606
        %v3228 = vunpack.c.h.b16 %v606
        %v3229 = vunpack.c.l.b16 %v607
        %v3230 = vunpack.c.h.b16 %v607
        %v3231 = vunpack.c.l.b16 %v608
        %v3232 = vunpack.c.h.b16 %v608
        %v3233 = vunpack.c.l.b16 %v609
        %v3234 = vunpack.c.h.b16 %v609
        %v3235 = vunpack.c.l.b16 %v610
        %v3236 = vunpack.c.h.b16 %v610
        %v3237 = vunpack.c.l.b16 %v611
        %v3238 = vunpack.c.h.b16 %v611
        %v3239 = vunpack.c.l.b16 %v612
        %v3240 = vunpack.c.h.b16 %v612
        %v3241 = vunpack.c.l.b16 %v613
        %v3242 = vunpack.c.h.b16 %v613
        %v3243 = vunpack.c.l.b16 %v614
        %v3244 = vunpack.c.l.b16 %v615
        %v3245 = vunpack.c.h.b16 %v615
        %v3246 = vunpack.c.l.b16 %v616
        %v3247 = vunpack.c.h.b16 %v616
        %v3248 = vunpack.c.l.b16 %v617
        %v3249 = vunpack.c.h.b16 %v617
        %v3250 = vunpack.c.l.b16 %v618
        %v3251 = vunpack.c.h.b16 %v618
        %v3252 = vunpack.c.l.b16 %v619
        %v3253 = vunpack.c.h.b16 %v619
        %v3254 = vunpack.c.l.b16 %v620
        %v3255 = vunpack.c.h.b16 %v620
        %v3256 = vunpack.c.l.b16 %v621
        %v3257 = vunpack.c.h.b16 %v621
        %v3258 = vunpack.c.l.b16 %v622
        %v3259 = vunpack.c.h.b16 %v622
        %v3260 = vunpack.c.l.b16 %v623
        %v3261 = vunpack.c.h.b16 %v623
        %v3262 = vunpack.c.l.b16 %v624
        %v3263 = vunpack.c.h.b16 %v624
        %v3264 = vunpack.c.l.b16 %v625
        %v3265 = vunpack.c.h.b16 %v625
        %v3266 = vunpack.c.l.b16 %v626
        %v3267 = vunpack.c.h.b16 %v626
        %v3268 = vunpack.c.l.b16 %v627
        %v3269 = vunpack.c.h.b16 %v627
        %v3270 = vunpack.c.l.b16 %v628
        %v3271 = vunpack.c.h.b16 %v628
        %v3272 = vunpack.c.l.b16 %v629
        %v3273 = vunpack.c.h.b16 %v629
        %v3274 = vunpack.c.l.b16 %v630
        %v3275 = vunpack.c.h.b16 %v630
        %v3276 = vunpack.c.l.b16 %v631
        %v3277 = vunpack.c.h.b16 %v631
        %v3278 = vunpack.c.l.b16 %v632
        %v3279 = vunpack.c.l.b16 %v633
        %v3280 = vunpack.c.h.b16 %v633
        %v3281 = vunpack.c.l.b16 %v634
        %v3282 = vunpack.c.h.b16 %v634
        %v3283 = vunpack.c.l.b16 %v635
        %v3284 = vunpack.c.h.b16 %v635
        %v3285 = vunpack.c.l.b16 %v636
        %v3286 = vunpack.c.h.b16 %v636
        %v3287 = vunpack.c.l.b16 %v637
        %v3288 = vunpack.c.h.b16 %v637
        %v3289 = vunpack.c.l.b16 %v638
        %v3290 = vunpack.c.h.b16 %v638
        %v3291 = vunpack.c.l.b16 %v639
        %v3292 = vunpack.c.h.b16 %v639
        %v3293 = vunpack.c.l.b16 %v640
        %v3294 = vunpack.c.h.b16 %v640
        %v3295 = vunpack.c.l.b16 %v641
        %v3296 = vunpack.c.h.b16 %v641
        %v3297 = vunpack.c.l.b16 %v642
        %v3298 = vunpack.c.h.b16 %v642
        %v3299 = vunpack.c.l.b16 %v643
        %v3300 = vunpack.c.h.b16 %v643
        %v3301 = vunpack.c.l.b16 %v644
        %v3302 = vunpack.c.h.b16 %v644
        %v3303 = vunpack.c.l.b16 %v645
        %v3304 = vunpack.c.h.b16 %v645
        %v3305 = vunpack.c.l.b16 %v646
        %v3306 = vunpack.c.h.b16 %v646
        %v3307 = vunpack.c.l.b16 %v647
        %v3308 = vunpack.c.h.b16 %v647
        %v3309 = vunpack.c.l.b16 %v648
        %v3310 = vunpack.c.h.b16 %v648
        %v3311 = vunpack.c.l.b16 %v649
        %v3312 = vunpack.c.h.b16 %v649
        %v3313 = vunpack.c.l.b16 %v650
        %v3314 = vunpack.c.l.b16 %v651
        %v3315 = vunpack.c.h.b16 %v651
        %v3316 = vunpack.c.l.b16 %v652
        %v3317 = vunpack.c.h.b16 %v652
        %v3318 = vunpack.c.l.b16 %v653
        %v3319 = vunpack.c.h.b16 %v653
        %v3320 = vunpack.c.l.b16 %v654
        %v3321 = vunpack.c.h.b16 %v654
        %v3322 = vunpack.c.l.b16 %v655
        %v3323 = vunpack.c.h.b16 %v655
        %v3324 = vunpack.c.l.b16 %v656
        %v3325 = vunpack.c.h.b16 %v656
        %v3326 = vunpack.c.l.b16 %v657
        %v3327 = vunpack.c.h.b16 %v657
        %v3328 = vunpack.c.l.b16 %v658
        %v3329 = vunpack.c.h.b16 %v658
        %v3330 = vunpack.c.l.b16 %v659
        %v3331 = vunpack.c.h.b16 %v659
        %v3332 = vunpack.c.l.b16 %v660
        %v3333 = vunpack.c.h.b16 %v660
        %v3334 = vunpack.c.l.b16 %v661
        %v3335 = vunpack.c.h.b16 %v661
        %v3336 = vunpack.c.l.b16 %v662
        %v3337 = vunpack.c.h.b16 %v662
        %v3338 = vunpack.c.l.b16 %v663
        %v3339 = vunpack.c.h.b16 %v663
        %v3340 = vunpack.c.l.b16 %v664
        %v3341 = vunpack.c.h.b16 %v664
        %v3342 = vunpack.c.l.b16 %v665
        %v3343 = vunpack.c.h.b16 %v665
        %v3344 = vunpack.c.l.b16 %v666
        %v3345 = vunpack.c.h.b16 %v666
        %v3346 = vunpack.c.l.b16 %v667
        %v3347 = vunpack.c.h.b16 %v667
        %v3348 = vunpack.c.l.b16 %v668
        %v3349 = vunpack.c.l.b16 %v669
        %v3350 = vunpack.c.h.b16 %v669
        %v3351 = vunpack.c.l.b16 %v670
        %v3352 = vunpack.c.h.b16 %v670
        %v3353 = vunpack.c.l.b16 %v671
        %v3354 = vunpack.c.h.b16 %v671
        %v3355 = vunpack.c.l.b16 %v672
        %v3356 = vunpack.c.h.b16 %v672
        %v3357 = vunpack.c.l.b16 %v673
        %v3358 = vunpack.c.h.b16 %v673
        %v3359 = vunpack.c.l.b16 %v674
        %v3360 = vunpack.c.h.b16 %v674
        %v3361 = vunpack.c.l.b16 %v675
        %v3362 = vunpack.c.h.b16 %v675
        %v3363 = vunpack.c.l.b16 %v676
        %v3364 = vunpack.c.h.b16 %v676
        %v3365 = vunpack.c.l.b16 %v677
        %v3366 = vunpack.c.h.b16 %v677
        %v3367 = vunpack.c.l.b16 %v678
        %v3368 = vunpack.c.h.b16 %v678
        %v3369 = vunpack.c.l.b16 %v679
        %v3370 = vunpack.c.h.b16 %v679
        %v3371 = vunpack.c.l.b16 %v680
        %v3372 = vunpack.c.h.b16 %v680
        %v3373 = vunpack.c.l.b16 %v681
        %v3374 = vunpack.c.h.b16 %v681
        %v3375 = vunpack.c.l.b16 %v682
        %v3376 = vunpack.c.h.b16 %v682
        %v3377 = vunpack.c.l.b16 %v683
        %v3378 = vunpack.c.h.b16 %v683
        %v3379 = vunpack.c.l.b16 %v684
        %v3380 = vunpack.c.h.b16 %v684
        %v3381 = vunpack.c.l.b16 %v685
        %v3382 = vunpack.c.h.b16 %v685
        %v3383 = vunpack.c.l.b16 %v686
        %v3384 = vunpack.c.l.b16 %v687
        %v3385 = vunpack.c.h.b16 %v687
        %v3386 = vunpack.c.l.b16 %v688
        %v3387 = vunpack.c.h.b16 %v688
        %v3388 = vunpack.c.l.b16 %v689
        %v3389 = vunpack.c.h.b16 %v689
        %v3390 = vunpack.c.l.b16 %v690
        %v3391 = vunpack.c.h.b16 %v690
        %v3392 = vunpack.c.l.b16 %v691
        %v3393 = vunpack.c.h.b16 %v691
        %v3394 = vunpack.c.l.b16 %v692
        %v3395 = vunpack.c.h.b16 %v692
        %v3396 = vunpack.c.l.b16 %v693
        %v3397 = vunpack.c.h.b16 %v693
        %v3398 = vunpack.c.l.b16 %v694
        %v3399 = vunpack.c.h.b16 %v694
        %v3400 = vunpack.c.l.b16 %v695
        %v3401 = vunpack.c.h.b16 %v695
        %v3402 = vunpack.c.l.b16 %v696
        %v3403 = vunpack.c.h.b16 %v696
        %v3404 = vunpack.c.l.b16 %v697
        %v3405 = vunpack.c.h.b16 %v697
        %v3406 = vunpack.c.l.b16 %v698
        %v3407 = vunpack.c.h.b16 %v698
        %v3408 = vunpack.c.l.b16 %v699
        %v3409 = vunpack.c.h.b16 %v699
        %v3410 = vunpack.c.l.b16 %v700
        %v3411 = vunpack.c.h.b16 %v700
        %v3412 = vunpack.c.l.b16 %v701
        %v3413 = vunpack.c.h.b16 %v701
        %v3414 = vunpack.c.l.b16 %v702
        %v3415 = vunpack.c.h.b16 %v702
        %v3416 = vunpack.c.l.b16 %v703
        %v3417 = vunpack.c.h.b16 %v703
        %v3418 = vunpack.c.l.b16 %v704
        %v3419 = vunpack.c.l.b16 %v705
        %v3420 = vunpack.c.h.b16 %v705
        %v3421 = vunpack.c.l.b16 %v706
        %v3422 = vunpack.c.h.b16 %v706
        %v3423 = vunpack.c.l.b16 %v707
        %v3424 = vunpack.c.h.b16 %v707
        %v3425 = vunpack.c.l.b16 %v708
        %v3426 = vunpack.c.h.b16 %v708
        %v3427 = vunpack.c.l.b16 %v709
        %v3428 = vunpack.c.h.b16 %v709
        %v3429 = vunpack.c.l.b16 %v710
        %v3430 = vunpack.c.h.b16 %v710
        %v3431 = vunpack.c.l.b16 %v711
        %v3432 = vunpack.c.h.b16 %v711
        %v3433 = vunpack.c.l.b16 %v712
        %v3434 = vunpack.c.h.b16 %v712
        %v3435 = vunpack.c.l.b16 %v713
        %v3436 = vunpack.c.h.b16 %v713
        %v3437 = vunpack.c.l.b16 %v714
        %v3438 = vunpack.c.h.b16 %v714
        %v3439 = vunpack.c.l.b16 %v715
        %v3440 = vunpack.c.h.b16 %v715
        %v3441 = vunpack.c.l.b16 %v716
        %v3442 = vunpack.c.h.b16 %v716
        %v3443 = vunpack.c.l.b16 %v717
        %v3444 = vunpack.c.h.b16 %v717
        %v3445 = vunpack.c.l.b16 %v718
        %v3446 = vunpack.c.h.b16 %v718
        %v3447 = vunpack.c.l.b16 %v719
        %v3448 = vunpack.c.h.b16 %v719
        %v3449 = vunpack.c.l.b16 %v720
        %v3450 = vunpack.c.h.b16 %v720
        %v3451 = vunpack.c.l.b16 %v721
        %v3452 = vunpack.c.h.b16 %v721
        %v3453 = vunpack.c.l.b16 %v722
        %v3454 = vunpack.c.l.b16 %v723
        %v3455 = vunpack.c.h.b16 %v723
        %v3456 = vunpack.c.l.b16 %v724
        %v3457 = vunpack.c.h.b16 %v724
        %v3458 = vunpack.c.l.b16 %v725
        %v3459 = vunpack.c.h.b16 %v725
        %v3460 = vunpack.c.l.b16 %v726
        %v3461 = vunpack.c.h.b16 %v726
        %v3462 = vunpack.c.l.b16 %v727
        %v3463 = vunpack.c.h.b16 %v727
        %v3464 = vunpack.c.l.b16 %v728
        %v3465 = vunpack.c.h.b16 %v728
        %v3466 = vunpack.c.l.b16 %v729
        %v3467 = vunpack.c.h.b16 %v729
        %v3468 = vunpack.c.l.b16 %v730
        %v3469 = vunpack.c.h.b16 %v730
        %v3470 = vunpack.c.l.b16 %v731
        %v3471 = vunpack.c.h.b16 %v731
        %v3472 = vunpack.c.l.b16 %v732
        %v3473 = vunpack.c.h.b16 %v732
        %v3474 = vunpack.c.l.b16 %v733
        %v3475 = vunpack.c.h.b16 %v733
        %v3476 = vunpack.c.l.b16 %v734
        %v3477 = vunpack.c.h.b16 %v734
        %v3478 = vunpack.c.l.b16 %v735
        %v3479 = vunpack.c.h.b16 %v735
        %v3480 = vunpack.c.l.b16 %v736
        %v3481 = vunpack.c.h.b16 %v736
        %v3482 = vunpack.c.l.b16 %v737
        %v3483 = vunpack.c.h.b16 %v737
        %v3484 = vunpack.c.l.b16 %v738
        %v3485 = vunpack.c.h.b16 %v738
        %v3486 = vunpack.c.l.b16 %v739
        %v3487 = vunpack.c.h.b16 %v739
        %v3488 = vunpack.c.l.b16 %v740
        %v3489 = vunpack.c.l.b16 %v741
        %v3490 = vunpack.c.h.b16 %v741
        %v3491 = vunpack.c.l.b16 %v742
        %v3492 = vunpack.c.h.b16 %v742
        %v3493 = vunpack.c.l.b16 %v743
        %v3494 = vunpack.c.h.b16 %v743
        %v3495 = vunpack.c.l.b16 %v744
        %v3496 = vunpack.c.h.b16 %v744
        %v3497 = vunpack.c.l.b16 %v745
        %v3498 = vunpack.c.h.b16 %v745
        %v3499 = vunpack.c.l.b16 %v746
        %v3500 = vunpack.c.h.b16 %v746
        %v3501 = vunpack.c.l.b16 %v747
        %v3502 = vunpack.c.h.b16 %v747
        %v3503 = vunpack.c.l.b16 %v748
        %v3504 = vunpack.c.h.b16 %v748
        %v3505 = vunpack.c.l.b16 %v749
        %v3506 = vunpack.c.h.b16 %v749
        %v3507 = vunpack.c.l.b16 %v750
        %v3508 = vunpack.c.h.b16 %v750
        %v3509 = vunpack.c.l.b16 %v751
        %v3510 = vunpack.c.h.b16 %v751
        %v3511 = vunpack.c.l.b16 %v752
        %v3512 = vunpack.c.h.b16 %v752
        %v3513 = vunpack.c.l.b16 %v753
        %v3514 = vunpack.c.h.b16 %v753
        %v3515 = vunpack.c.l.b16 %v754
        %v3516 = vunpack.c.h.b16 %v754
        %v3517 = vunpack.c.l.b16 %v755
        %v3518 = vunpack.c.h.b16 %v755
        %v3519 = vunpack.c.l.b16 %v756
        %v3520 = vunpack.c.h.b16 %v756
        %v3521 = vunpack.c.l.b16 %v757
        %v3522 = vunpack.c.h.b16 %v757
        %v3523 = vunpack.c.l.b16 %v758
        %v3524 = vunpack.c.l.b16 %v759
        %v3525 = vunpack.c.h.b16 %v759
        %v3526 = vunpack.c.l.b16 %v760
        %v3527 = vunpack.c.h.b16 %v760
        %v3528 = vunpack.c.l.b16 %v761
        %v3529 = vunpack.c.h.b16 %v761
        %v3530 = vunpack.c.l.b16 %v762
        %v3531 = vunpack.c.h.b16 %v762
        %v3532 = vunpack.c.l.b16 %v763
        %v3533 = vunpack.c.h.b16 %v763
        %v3534 = vunpack.c.l.b16 %v764
        %v3535 = vunpack.c.h.b16 %v764
        %v3536 = vunpack.c.l.b16 %v765
        %v3537 = vunpack.c.h.b16 %v765
        %v3538 = vunpack.c.l.b16 %v766
        %v3539 = vunpack.c.h.b16 %v766
        %v3540 = vunpack.c.l.b16 %v767
        %v3541 = vunpack.c.h.b16 %v767
        %v3542 = vunpack.c.l.b16 %v768
        %v3543 = vunpack.c.h.b16 %v768
        %v3544 = vunpack.c.l.b16 %v769
        %v3545 = vunpack.c.h.b16 %v769
        %v3546 = vunpack.c.l.b16 %v770
        %v3547 = vunpack.c.h.b16 %v770
        %v3548 = vunpack.c.l.b16 %v771
        %v3549 = vunpack.c.h.b16 %v771
        %v3550 = vunpack.c.l.b16 %v772
        %v3551 = vunpack.c.h.b16 %v772
        %v3552 = vunpack.c.l.b16 %v773
        %v3553 = vunpack.c.h.b16 %v773
        %v3554 = vunpack.c.l.b16 %v774
        %v3555 = vunpack.c.h.b16 %v774
        %v3556 = vunpack.c.l.b16 %v775
        %v3557 = vunpack.c.h.b16 %v775
        %v3558 = vunpack.c.l.b16 %v776
        %v3559 = vunpack.c.l.b16 %v777
        %v3560 = vunpack.c.h.b16 %v777
        %v3561 = vunpack.c.l.b16 %v778
        %v3562 = vunpack.c.h.b16 %v778
        %v3563 = vunpack.c.l.b16 %v779
        %v3564 = vunpack.c.h.b16 %v779
        %v3565 = vunpack.c.l.b16 %v780
        %v3566 = vunpack.c.h.b16 %v780
        %v3567 = vunpack.c.l.b16 %v781
        %v3568 = vunpack.c.h.b16 %v781
        %v3569 = vunpack.c.l.b16 %v782
        %v3570 = vunpack.c.h.b16 %v782
        %v3571 = vunpack.c.l.b16 %v783
        %v3572 = vunpack.c.h.b16 %v783
        %v3573 = vunpack.c.l.b16 %v784
        %v3574 = vunpack.c.h.b16 %v784
        %v3575 = vunpack.c.l.b16 %v785
        %v3576 = vunpack.c.h.b16 %v785
        %v3577 = vunpack.c.l.b16 %v786
        %v3578 = vunpack.c.h.b16 %v786
        %v3579 = vunpack.c.l.b16 %v787
        %v3580 = vunpack.c.h.b16 %v787
        %v3581 = vunpack.c.l.b16 %v788
        %v3582 = vunpack.c.h.b16 %v788
        %v3583 = vunpack.c.l.b16 %v789
        %v3584 = vunpack.c.h.b16 %v789
        %v3585 = vunpack.c.l.b16 %v790
        %v3586 = vunpack.c.h.b16 %v790
        %v3587 = vunpack.c.l.b16 %v791
        %v3588 = vunpack.c.h.b16 %v791
        %v3589 = vunpack.c.l.b16 %v792
        %v3590 = vunpack.c.h.b16 %v792
        %v3591 = vunpack.c.l.b16 %v793
        %v3592 = vunpack.c.h.b16 %v793
        %v3593 = vunpack.c.l.b16 %v794
        %v3594 = vunpack.c.l.b16 %v795
        %v3595 = vunpack.c.h.b16 %v795
        %v3596 = vunpack.c.l.b16 %v796
        %v3597 = vunpack.c.h.b16 %v796
        %v3598 = vunpack.c.l.b16 %v797
        %v3599 = vunpack.c.h.b16 %v797
        %v3600 = vunpack.c.l.b16 %v798
        %v3601 = vunpack.c.h.b16 %v798
        %v3602 = vunpack.c.l.b16 %v799
        %v3603 = vunpack.c.h.b16 %v799
        %v3604 = vunpack.c.l.b16 %v800
        %v3605 = vunpack.c.h.b16 %v800
        %v3606 = vunpack.c.l.b16 %v801
        %v3607 = vunpack.c.h.b16 %v801
        %v3608 = vunpack.c.l.b16 %v802
        %v3609 = vunpack.c.h.b16 %v802
        %v3610 = vunpack.c.l.b16 %v803
        %v3611 = vunpack.c.h.b16 %v803
        %v3612 = vunpack.c.l.b16 %v804
        %v3613 = vunpack.c.h.b16 %v804
        %v3614 = vunpack.c.l.b16 %v805
        %v3615 = vunpack.c.h.b16 %v805
        %v3616 = vunpack.c.l.b16 %v806
        %v3617 = vunpack.c.h.b16 %v806
        %v3618 = vunpack.c.l.b16 %v807
        %v3619 = vunpack.c.h.b16 %v807
        %v3620 = vunpack.c.l.b16 %v808
        %v3621 = vunpack.c.h.b16 %v808
        %v3622 = vunpack.c.l.b16 %v809
        %v3623 = vunpack.c.h.b16 %v809
        %v3624 = vunpack.c.l.b16 %v810
        %v3625 = vunpack.c.h.b16 %v810
        %v3626 = vunpack.c.l.b16 %v811
        %v3627 = vunpack.c.h.b16 %v811
        %v3628 = vunpack.c.l.b16 %v812
        %v3629 = vunpack.c.l.b16 %v813
        %v3630 = vunpack.c.h.b16 %v813
        %v3631 = vunpack.c.l.b16 %v814
        %v3632 = vunpack.c.h.b16 %v814
        %v3633 = vunpack.c.l.b16 %v815
        %v3634 = vunpack.c.h.b16 %v815
        %v3635 = vunpack.c.l.b16 %v816
        %v3636 = vunpack.c.h.b16 %v816
        %v3637 = vunpack.c.l.b16 %v817
        %v3638 = vunpack.c.h.b16 %v817
        %v3639 = vunpack.c.l.b16 %v818
        %v3640 = vunpack.c.h.b16 %v818
        %v3641 = vunpack.c.l.b16 %v819
        %v3642 = vunpack.c.h.b16 %v819
        %v3643 = vunpack.c.l.b16 %v820
        %v3644 = vunpack.c.h.b16 %v820
        %v3645 = vunpack.c.l.b16 %v821
        %v3646 = vunpack.c.h.b16 %v821
        %v3647 = vunpack.c.l.b16 %v822
        %v3648 = vunpack.c.h.b16 %v822
        %v3649 = vunpack.c.l.b16 %v823
        %v3650 = vunpack.c.h.b16 %v823
        %v3651 = vunpack.c.l.b16 %v824
        %v3652 = vunpack.c.h.b16 %v824
        %v3653 = vunpack.c.l.b16 %v825
        %v3654 = vunpack.c.h.b16 %v825
        %v3655 = vunpack.c.l.b16 %v826
        %v3656 = vunpack.c.h.b16 %v826
        %v3657 = vunpack.c.l.b16 %v827
        %v3658 = vunpack.c.h.b16 %v827
        %v3659 = vunpack.c.l.b16 %v828
        %v3660 = vunpack.c.h.b16 %v828
        %v3661 = vunpack.c.l.b16 %v829
        %v3662 = vunpack.c.h.b16 %v829
        %v3663 = vunpack.c.l.b16 %v830
        %v3664 = vunpack.c.l.b16 %v831
        %v3665 = vunpack.c.h.b16 %v831
        %v3666 = vunpack.c.l.b16 %v832
        %v3667 = vunpack.c.h.b16 %v832
        %v3668 = vunpack.c.l.b16 %v833
        %v3669 = vunpack.c.h.b16 %v833
        %v3670 = vunpack.c.l.b16 %v834
        %v3671 = vunpack.c.h.b16 %v834
        %v3672 = vunpack.c.l.b16 %v835
        %v3673 = vunpack.c.h.b16 %v835
        %v3674 = vunpack.c.l.b16 %v836
        %v3675 = vunpack.c.h.b16 %v836
        %v3676 = vunpack.c.l.b16 %v837
        %v3677 = vunpack.c.h.b16 %v837
        %v3678 = vunpack.c.l.b16 %v838
        %v3679 = vunpack.c.h.b16 %v838
        %v3680 = vunpack.c.l.b16 %v839
        %v3681 = vunpack.c.h.b16 %v839
        %v3682 = vunpack.c.l.b16 %v840
        %v3683 = vunpack.c.h.b16 %v840
        %v3684 = vunpack.c.l.b16 %v841
        %v3685 = vunpack.c.h.b16 %v841
        %v3686 = vunpack.c.l.b16 %v842
        %v3687 = vunpack.c.h.b16 %v842
        %v3688 = vunpack.c.l.b16 %v843
        %v3689 = vunpack.c.h.b16 %v843
        %v3690 = vunpack.c.l.b16 %v844
        %v3691 = vunpack.c.h.b16 %v844
        %v3692 = vunpack.c.l.b16 %v845
        %v3693 = vunpack.c.h.b16 %v845
        %v3694 = vunpack.c.l.b16 %v846
        %v3695 = vunpack.c.h.b16 %v846
        %v3696 = vunpack.c.l.b16 %v847
        %v3697 = vunpack.c.h.b16 %v847
        %v3698 = vunpack.c.l.b16 %v848
        %v3699 = vunpack.c.l.b16 %v849
        %v3700 = vunpack.c.h.b16 %v849
        %v3701 = vunpack.c.l.b16 %v850
        %v3702 = vunpack.c.h.b16 %v850
        %v3703 = vunpack.c.l.b16 %v851
        %v3704 = vunpack.c.h.b16 %v851
        %v3705 = vunpack.c.l.b16 %v852
        %v3706 = vunpack.c.h.b16 %v852
        %v3707 = vunpack.c.l.b16 %v853
        %v3708 = vunpack.c.h.b16 %v853
        %v3709 = vunpack.c.l.b16 %v854
        %v3710 = vunpack.c.h.b16 %v854
        %v3711 = vunpack.c.l.b16 %v855
        %v3712 = vunpack.c.h.b16 %v855
        %v3713 = vunpack.c.l.b16 %v856
        %v3714 = vunpack.c.h.b16 %v856
        %v3715 = vunpack.c.l.b16 %v857
        %v3716 = vunpack.c.h.b16 %v857
        %v3717 = vunpack.c.l.b16 %v858
        %v3718 = vunpack.c.h.b16 %v858
        %v3719 = vunpack.c.l.b16 %v859
        %v3720 = vunpack.c.h.b16 %v859
        %v3721 = vunpack.c.l.b16 %v860
        %v3722 = vunpack.c.h.b16 %v860
        %v3723 = vunpack.c.l.b16 %v861
        %v3724 = vunpack.c.h.b16 %v861
        %v3725 = vunpack.c.l.b16 %v862
        %v3726 = vunpack.c.h.b16 %v862
        %v3727 = vunpack.c.l.b16 %v863
        %v3728 = vunpack.c.h.b16 %v863
        %v3729 = vunpack.c.l.b16 %v864
        %v3730 = vunpack.c.h.b16 %v864
        %v3731 = vunpack.c.l.b16 %v865
        %v3732 = vunpack.c.h.b16 %v865
        %v3733 = vunpack.c.l.b16 %v866
        %v3734 = vunpack.c.l.b16 %v867
        %v3735 = vunpack.c.h.b16 %v867
        %v3736 = vunpack.c.l.b16 %v868
        %v3737 = vunpack.c.h.b16 %v868
        %v3738 = vunpack.c.l.b16 %v869
        %v3739 = vunpack.c.h.b16 %v869
        %v3740 = vunpack.c.l.b16 %v870
        %v3741 = vunpack.c.h.b16 %v870
        %v3742 = vunpack.c.l.b16 %v871
        %v3743 = vunpack.c.h.b16 %v871
        %v3744 = vunpack.c.l.b16 %v872
        %v3745 = vunpack.c.h.b16 %v872
        %v3746 = vunpack.c.l.b16 %v873
        %v3747 = vunpack.c.h.b16 %v873
        %v3748 = vunpack.c.l.b16 %v874
        %v3749 = vunpack.c.h.b16 %v874
        %v3750 = vunpack.c.l.b16 %v875
        %v3751 = vunpack.c.h.b16 %v875
        %v3752 = vunpack.c.l.b16 %v876
        %v3753 = vunpack.c.h.b16 %v876
        %v3754 = vunpack.c.l.b16 %v877
        %v3755 = vunpack.c.h.b16 %v877
        %v3756 = vunpack.c.l.b16 %v878
        %v3757 = vunpack.c.h.b16 %v878
        %v3758 = vunpack.c.l.b16 %v879
        %v3759 = vunpack.c.h.b16 %v879
        %v3760 = vunpack.c.l.b16 %v880
        %v3761 = vunpack.c.h.b16 %v880
        %v3762 = vunpack.c.l.b16 %v881
        %v3763 = vunpack.c.h.b16 %v881
        %v3764 = vunpack.c.l.b16 %v882
        %v3765 = vunpack.c.h.b16 %v882
        %v3766 = vunpack.c.l.b16 %v883
        %v3767 = vunpack.c.h.b16 %v883
        %v3768 = vunpack.c.l.b16 %v884
        %v3769 = vunpack.c.l.b16 %v885
        %v3770 = vunpack.c.h.b16 %v885
        %v3771 = vunpack.c.l.b16 %v886
        %v3772 = vunpack.c.h.b16 %v886
        %v3773 = vunpack.c.l.b16 %v887
        %v3774 = vunpack.c.h.b16 %v887
        %v3775 = vunpack.c.l.b16 %v888
        %v3776 = vunpack.c.h.b16 %v888
        %v3777 = vunpack.c.l.b16 %v889
        %v3778 = vunpack.c.h.b16 %v889
        %v3779 = vunpack.c.l.b16 %v890
        %v3780 = vunpack.c.h.b16 %v890
        %v3781 = vunpack.c.l.b16 %v891
        %v3782 = vunpack.c.h.b16 %v891
        %v3783 = vunpack.c.l.b16 %v892
        %v3784 = vunpack.c.h.b16 %v892
        %v3785 = vunpack.c.l.b16 %v893
        %v3786 = vunpack.c.h.b16 %v893
        %v3787 = vunpack.c.l.b16 %v894
        %v3788 = vunpack.c.h.b16 %v894
        %v3789 = vunpack.c.l.b16 %v895
        %v3790 = vunpack.c.h.b16 %v895
        %v3791 = vunpack.c.l.b16 %v896
        %v3792 = vunpack.c.h.b16 %v896
        %v3793 = vunpack.c.l.b16 %v897
        %v3794 = vunpack.c.h.b16 %v897
        %v3795 = vunpack.c.l.b16 %v898
        %v3796 = vunpack.c.h.b16 %v898
        %v3797 = vunpack.c.l.b16 %v899
        %v3798 = vunpack.c.h.b16 %v899
        %v3799 = vunpack.c.l.b16 %v900
        %v3800 = vunpack.c.h.b16 %v900
        %v3801 = vunpack.c.l.b16 %v901
        %v3802 = vunpack.c.h.b16 %v901
        %v3803 = vunpack.c.l.b16 %v902
        %v3804 = vunpack.c.l.b16 %v903
        %v3805 = vunpack.c.h.b16 %v903
        %v3806 = vunpack.c.l.b16 %v904
        %v3807 = vunpack.c.h.b16 %v904
        %v3808 = vunpack.c.l.b16 %v905
        %v3809 = vunpack.c.h.b16 %v905
        %v3810 = vunpack.c.l.b16 %v906
        %v3811 = vunpack.c.h.b16 %v906
        %v3812 = vunpack.c.l.b16 %v907
        %v3813 = vunpack.c.h.b16 %v907
        %v3814 = vunpack.c.l.b16 %v908
        %v3815 = vunpack.c.h.b16 %v908
        %v3816 = vunpack.c.l.b16 %v909
        %v3817 = vunpack.c.h.b16 %v909
        %v3818 = vunpack.c.l.b16 %v910
        %v3819 = vunpack.c.h.b16 %v910
        %v3820 = vunpack.c.l.b16 %v911
        %v3821 = vunpack.c.h.b16 %v911
        %v3822 = vunpack.c.l.b16 %v912
        %v3823 = vunpack.c.h.b16 %v912
        %v3824 = vunpack.c.l.b16 %v913
        %v3825 = vunpack.c.h.b16 %v913
        %v3826 = vunpack.c.l.b16 %v914
        %v3827 = vunpack.c.h.b16 %v914
        %v3828 = vunpack.c.l.b16 %v915
        %v3829 = vunpack.c.h.b16 %v915
        %v3830 = vunpack.c.l.b16 %v916
        %v3831 = vunpack.c.h.b16 %v916
        %v3832 = vunpack.c.l.b16 %v917
        %v3833 = vunpack.c.h.b16 %v917
        %v3834 = vunpack.c.l.b16 %v918
        %v3835 = vunpack.c.h.b16 %v918
        %v3836 = vunpack.c.l.b16 %v919
        %v3837 = vunpack.c.h.b16 %v919
        %v3838 = vunpack.c.l.b16 %v920
        %v3839 = vunpack.c.l.b16 %v921
        %v3840 = vunpack.c.h.b16 %v921
        %v3841 = vunpack.c.l.b16 %v922
        %v3842 = vunpack.c.h.b16 %v922
        %v3843 = vunpack.c.l.b16 %v923
        %v3844 = vunpack.c.h.b16 %v923
        %v3845 = vunpack.c.l.b16 %v924
        %v3846 = vunpack.c.h.b16 %v924
        %v3847 = vunpack.c.l.b16 %v925
        %v3848 = vunpack.c.h.b16 %v925
        %v3849 = vunpack.c.l.b16 %v926
        %v3850 = vunpack.c.h.b16 %v926
        %v3851 = vunpack.c.l.b16 %v927
        %v3852 = vunpack.c.h.b16 %v927
        %v3853 = vunpack.c.l.b16 %v928
        %v3854 = vunpack.c.h.b16 %v928
        %v3855 = vunpack.c.l.b16 %v929
        %v3856 = vunpack.c.h.b16 %v929
        %v3857 = vunpack.c.l.b16 %v930
        %v3858 = vunpack.c.h.b16 %v930
        %v3859 = vunpack.c.l.b16 %v931
        %v3860 = vunpack.c.h.b16 %v931
        %v3861 = vunpack.c.l.b16 %v932
        %v3862 = vunpack.c.h.b16 %v932
        %v3863 = vunpack.c.l.b16 %v933
        %v3864 = vunpack.c.h.b16 %v933
        %v3865 = vunpack.c.l.b16 %v934
        %v3866 = vunpack.c.h.b16 %v934
        %v3867 = vunpack.c.l.b16 %v935
        %v3868 = vunpack.c.h.b16 %v935
        %v3869 = vunpack.c.l.b16 %v936
        %v3870 = vunpack.c.h.b16 %v936
        %v3871 = vunpack.c.l.b16 %v937
        %v3872 = vunpack.c.h.b16 %v937
        %v3873 = vunpack.c.l.b16 %v938
        %v3874 = vunpack.c.l.b16 %v939
        %v3875 = vunpack.c.h.b16 %v939
        %v3876 = vunpack.c.l.b16 %v940
        %v3877 = vunpack.c.h.b16 %v940
        %v3878 = vunpack.c.l.b16 %v941
        %v3879 = vunpack.c.h.b16 %v941
        %v3880 = vunpack.c.l.b16 %v942
        %v3881 = vunpack.c.h.b16 %v942
        %v3882 = vunpack.c.l.b16 %v943
        %v3883 = vunpack.c.h.b16 %v943
        %v3884 = vunpack.c.l.b16 %v944
        %v3885 = vunpack.c.h.b16 %v944
        %v3886 = vunpack.c.l.b16 %v945
        %v3887 = vunpack.c.h.b16 %v945
        %v3888 = vunpack.c.l.b16 %v946
        %v3889 = vunpack.c.h.b16 %v946
        %v3890 = vunpack.c.l.b16 %v947
        %v3891 = vunpack.c.h.b16 %v947
        %v3892 = vunpack.c.l.b16 %v948
        %v3893 = vunpack.c.h.b16 %v948
        %v3894 = vunpack.c.l.b16 %v949
        %v3895 = vunpack.c.h.b16 %v949
        %v3896 = vunpack.c.l.b16 %v950
        %v3897 = vunpack.c.h.b16 %v950
        %v3898 = vunpack.c.l.b16 %v951
        %v3899 = vunpack.c.h.b16 %v951
        %v3900 = vunpack.c.l.b16 %v952
        %v3901 = vunpack.c.h.b16 %v952
        %v3902 = vunpack.c.l.b16 %v953
        %v3903 = vunpack.c.h.b16 %v953
        %v3904 = vunpack.c.l.b16 %v954
        %v3905 = vunpack.c.h.b16 %v954
        %v3906 = vunpack.c.l.b16 %v955
        %v3907 = vunpack.c.h.b16 %v955
        %v3908 = vunpack.c.l.b16 %v956
        %v3909 = vunpack.c.l.b16 %v957
        %v3910 = vunpack.c.h.b16 %v957
        %v3911 = vunpack.c.l.b16 %v958
        %v3912 = vunpack.c.h.b16 %v958
        %v3913 = vunpack.c.l.b16 %v959
        %v3914 = vunpack.c.h.b16 %v959
        %v3915 = vunpack.c.l.b16 %v960
        %v3916 = vunpack.c.h.b16 %v960
        %v3917 = vunpack.c.l.b16 %v961
        %v3918 = vunpack.c.h.b16 %v961
        %v3919 = vunpack.c.l.b16 %v962
        %v3920 = vunpack.c.h.b16 %v962
        %v3921 = vunpack.c.l.b16 %v963
        %v3922 = vunpack.c.h.b16 %v963
        %v3923 = vunpack.c.l.b16 %v964
        %v3924 = vunpack.c.h.b16 %v964
        %v3925 = vunpack.c.l.b16 %v965
        %v3926 = vunpack.c.h.b16 %v965
        %v3927 = vunpack.c.l.b16 %v966
        %v3928 = vunpack.c.h.b16 %v966
        %v3929 = vunpack.c.l.b16 %v967
        %v3930 = vunpack.c.h.b16 %v967
        %v3931 = vunpack.c.l.b16 %v968
        %v3932 = vunpack.c.h.b16 %v968
        %v3933 = vunpack.c.l.b16 %v969
        %v3934 = vunpack.c.h.b16 %v969
        %v3935 = vunpack.c.l.b16 %v970
        %v3936 = vunpack.c.h.b16 %v970
        %v3937 = vunpack.c.l.b16 %v971
        %v3938 = vunpack.c.h.b16 %v971
        %v3939 = vunpack.c.l.b16 %v972
        %v3940 = vunpack.c.h.b16 %v972
        %v3941 = vunpack.c.l.b16 %v973
        %v3942 = vunpack.c.h.b16 %v973
        %v3943 = vunpack.c.l.b16 %v974
        %v3944 = vunpack.c.l.b16 %v975
        %v3945 = vunpack.c.h.b16 %v975
        %v3946 = vunpack.c.l.b16 %v976
        %v3947 = vunpack.c.h.b16 %v976
        %v3948 = vunpack.c.l.b16 %v977
        %v3949 = vunpack.c.h.b16 %v977
        %v3950 = vunpack.c.l.b16 %v978
        %v3951 = vunpack.c.h.b16 %v978
        %v3952 = vunpack.c.l.b16 %v979
        %v3953 = vunpack.c.h.b16 %v979
        %v3954 = vunpack.c.l.b16 %v980
        %v3955 = vunpack.c.h.b16 %v980
        %v3956 = vunpack.c.l.b16 %v981
        %v3957 = vunpack.c.h.b16 %v981
        %v3958 = vunpack.c.l.b16 %v982
        %v3959 = vunpack.c.h.b16 %v982
        %v3960 = vunpack.c.l.b16 %v983
        %v3961 = vunpack.c.h.b16 %v983
        %v3962 = vunpack.c.l.b16 %v984
        %v3963 = vunpack.c.h.b16 %v984
        %v3964 = vunpack.c.l.b16 %v985
        %v3965 = vunpack.c.h.b16 %v985
        %v3966 = vunpack.c.l.b16 %v986
        %v3967 = vunpack.c.h.b16 %v986
        %v3968 = vunpack.c.l.b16 %v987
        %v3969 = vunpack.c.h.b16 %v987
        %v3970 = vunpack.c.l.b16 %v988
        %v3971 = vunpack.c.h.b16 %v988
        %v3972 = vunpack.c.l.b16 %v989
        %v3973 = vunpack.c.h.b16 %v989
        %v3974 = vunpack.c.l.b16 %v990
        %v3975 = vunpack.c.h.b16 %v990
        %v3976 = vunpack.c.l.b16 %v991
        %v3977 = vunpack.c.h.b16 %v991
        %v3978 = vunpack.c.l.b16 %v992
        %v3979 = vunpack.c.l.b16 %v993
        %v3980 = vunpack.c.h.b16 %v993
        %v3981 = vunpack.c.l.b16 %v994
        %v3982 = vunpack.c.h.b16 %v994
        %v3983 = vunpack.c.l.b16 %v995
        %v3984 = vunpack.c.h.b16 %v995
        %v3985 = vunpack.c.l.b16 %v996
        %v3986 = vunpack.c.h.b16 %v996
        %v3987 = vunpack.c.l.b16 %v997
        %v3988 = vunpack.c.h.b16 %v997
        %v3989 = vunpack.c.l.b16 %v998
        %v3990 = vunpack.c.h.b16 %v998
        %v3991 = vunpack.c.l.b16 %v999
        %v3992 = vunpack.c.h.b16 %v999
        %v3993 = vunpack.c.l.b16 %v1000
        %v3994 = vunpack.c.h.b16 %v1000
        %v3995 = vunpack.c.l.b16 %v1001
        %v3996 = vunpack.c.h.b16 %v1001
        %v3997 = vunpack.c.l.b16 %v1002
        %v3998 = vunpack.c.h.b16 %v1002
        %v3999 = vunpack.c.l.b16 %v1003
        %v4000 = vunpack.c.h.b16 %v1003
        %v4001 = vunpack.c.l.b16 %v1004
        %v4002 = vunpack.c.h.b16 %v1004
        %v4003 = vunpack.c.l.b16 %v1005
        %v4004 = vunpack.c.h.b16 %v1005
        %v4005 = vunpack.c.l.b16 %v1006
        %v4006 = vunpack.c.h.b16 %v1006
        %v4007 = vunpack.c.l.b16 %v1007
        %v4008 = vunpack.c.h.b16 %v1007
        %v4009 = vunpack.c.l.b16 %v1008
        %v4010 = vunpack.c.h.b16 %v1008
        %v4011 = vunpack.c.l.b16 %v1009
        %v4012 = vunpack.c.h.b16 %v1009
        %v4013 = vunpack.c.l.b16 %v1010
        %v4014 = vunpack.c.l.b16 %v1011
        %v4015 = vunpack.c.h.b16 %v1011
        %v4016 = vunpack.c.l.b16 %v1012
        %v4017 = vunpack.c.h.b16 %v1012
        %v4018 = vunpack.c.l.b16 %v1013
        %v4019 = vunpack.c.h.b16 %v1013
        %v4020 = vunpack.c.l.b16 %v1014
        %v4021 = vunpack.c.h.b16 %v1014
        %v4022 = vunpack.c.l.b16 %v1015
        %v4023 = vunpack.c.h.b16 %v1015
        %v4024 = vunpack.c.l.b16 %v1016
        %v4025 = vunpack.c.h.b16 %v1016
        %v4026 = vunpack.c.l.b16 %v1017
        %v4027 = vunpack.c.h.b16 %v1017
        %v4028 = vunpack.c.l.b16 %v1018
        %v4029 = vunpack.c.h.b16 %v1018
        %v4030 = vunpack.c.l.b16 %v1019
        %v4031 = vunpack.c.h.b16 %v1019
        %v4032 = vunpack.c.l.b16 %v1020
        %v4033 = vunpack.c.h.b16 %v1020
        %v4034 = vunpack.c.l.b16 %v1021
        %v4035 = vunpack.c.h.b16 %v1021
        %v4036 = vunpack.c.l.b16 %v1022
        %v4037 = vunpack.c.h.b16 %v1022
        %v4038 = vunpack.c.l.b16 %v1023
        %v4039 = vunpack.c.h.b16 %v1023
        %v4040 = vunpack.c.l.b16 %v1024
        %v4041 = vunpack.c.h.b16 %v1024
        %v4042 = vunpack.c.l.b16 %v1025
        %v4043 = vunpack.c.h.b16 %v1025
        %v4044 = vunpack.c.l.b16 %v1026
        %v4045 = vunpack.c.h.b16 %v1026
        %v4046 = vunpack.c.l.b16 %v1027
        %v4047 = vunpack.c.h.b16 %v1027
        %v4048 = vunpack.c.l.b16 %v1028
        %v4049 = vunpack.c.l.b16 %v1029
        %v4050 = vunpack.c.h.b16 %v1029
        %v4051 = vunpack.c.l.b16 %v1030
        %v4052 = vunpack.c.h.b16 %v1030
        %v4053 = vunpack.c.l.b16 %v1031
        %v4054 = vunpack.c.h.b16 %v1031
        %v4055 = vunpack.c.l.b16 %v1032
        %v4056 = vunpack.c.h.b16 %v1032
        %v4057 = vunpack.c.l.b16 %v1033
        %v4058 = vunpack.c.h.b16 %v1033
        %v4059 = vunpack.c.l.b16 %v1034
        %v4060 = vunpack.c.h.b16 %v1034
        %v4061 = vunpack.c.l.b16 %v1035
        %v4062 = vunpack.c.h.b16 %v1035
        %v4063 = vunpack.c.l.b16 %v1036
        %v4064 = vunpack.c.h.b16 %v1036
        %v4065 = vunpack.c.l.b16 %v1037
        %v4066 = vunpack.c.h.b16 %v1037
        %v4067 = vunpack.c.l.b16 %v1038
        %v4068 = vunpack.c.h.b16 %v1038
        %v4069 = vunpack.c.l.b16 %v1039
        %v4070 = vunpack.c.h.b16 %v1039
        %v4071 = vunpack.c.l.b16 %v1040
        %v4072 = vunpack.c.h.b16 %v1040
        %v4073 = vunpack.c.l.b16 %v1041
        %v4074 = vunpack.c.h.b16 %v1041
        %v4075 = vunpack.c.l.b16 %v1042
        %v4076 = vunpack.c.h.b16 %v1042
        %v4077 = vunpack.c.l.b16 %v1043
        %v4078 = vunpack.c.h.b16 %v1043
        %v4079 = vunpack.c.l.b16 %v1044
        %v4080 = vunpack.c.h.b16 %v1044
        %v4081 = vunpack.c.l.b16 %v1045
        %v4082 = vunpack.c.h.b16 %v1045
        %v4083 = vunpack.c.l.b16 %v1046
        %v4084 = vunpack.c.l.b16 %v1047
        %v4085 = vunpack.c.h.b16 %v1047
        %v4086 = vunpack.c.l.b16 %v1048
        %v4087 = vunpack.c.h.b16 %v1048
        %v4088 = vunpack.c.l.b16 %v1049
        %v4089 = vunpack.c.h.b16 %v1049
        %v4090 = vunpack.c.l.b16 %v1050
        %v4091 = vunpack.c.h.b16 %v1050
        %v4092 = vunpack.c.l.b16 %v1051
        %v4093 = vunpack.c.h.b16 %v1051
        %v4094 = vunpack.c.l.b16 %v1052
        %v4095 = vunpack.c.h.b16 %v1052
        %v4096 = vunpack.c.l.b16 %v1053
        %v4097 = vunpack.c.h.b16 %v1053
        %v4098 = vunpack.c.l.b16 %v1054
        %v4099 = vunpack.c.h.b16 %v1054
        %v4100 = vunpack.c.l.b16 %v1055
        %v4101 = vunpack.c.h.b16 %v1055
        %v4102 = vunpack.c.l.b16 %v1056
        %v4103 = vunpack.c.h.b16 %v1056
        %v4104 = vunpack.c.l.b16 %v1057
        %v4105 = vunpack.c.h.b16 %v1057
        %v4106 = vunpack.c.l.b16 %v1058
        %v4107 = vunpack.c.h.b16 %v1058
        %v4108 = vunpack.c.l.b16 %v1059
        %v4109 = vunpack.c.h.b16 %v1059
        %v4110 = vunpack.c.l.b16 %v1060
        %v4111 = vunpack.c.h.b16 %v1060
        %v4112 = vunpack.c.l.b16 %v1061
        %v4113 = vunpack.c.h.b16 %v1061
        %v4114 = vunpack.c.l.b16 %v1062
        %v4115 = vunpack.c.h.b16 %v1062
        %v4116 = vunpack.c.l.b16 %v1063
        %v4117 = vunpack.c.h.b16 %v1063
        %v4118 = vunpack.c.l.b16 %v1064
        %v4119 = vunpack.c.l.b16 %v1065
        %v4120 = vunpack.c.h.b16 %v1065
        %v4121 = vunpack.c.l.b16 %v1066
        %v4122 = vunpack.c.h.b16 %v1066
        %v4123 = vunpack.c.l.b16 %v1067
        %v4124 = vunpack.c.h.b16 %v1067
        %v4125 = vunpack.c.l.b16 %v1068
        %v4126 = vunpack.c.h.b16 %v1068
        %v4127 = vunpack.c.l.b16 %v1069
        %v4128 = vunpack.c.h.b16 %v1069
        %v4129 = vunpack.c.l.b16 %v1070
        %v4130 = vunpack.c.h.b16 %v1070
        %v4131 = vunpack.c.l.b16 %v1071
        %v4132 = vunpack.c.h.b16 %v1071
        %v4133 = vunpack.c.l.b16 %v1072
        %v4134 = vunpack.c.h.b16 %v1072
        %v4135 = vunpack.c.l.b16 %v1073
        %v4136 = vunpack.c.h.b16 %v1073
        %v4137 = vunpack.c.l.b16 %v1074
        %v4138 = vunpack.c.h.b16 %v1074
        %v4139 = vunpack.c.l.b16 %v1075
        %v4140 = vunpack.c.h.b16 %v1075
        %v4141 = vunpack.c.l.b16 %v1076
        %v4142 = vunpack.c.h.b16 %v1076
        %v4143 = vunpack.c.l.b16 %v1077
        %v4144 = vunpack.c.h.b16 %v1077
        %v4145 = vunpack.c.l.b16 %v1078
        %v4146 = vunpack.c.h.b16 %v1078
        %v4147 = vunpack.c.l.b16 %v1079
        %v4148 = vunpack.c.h.b16 %v1079
        %v4149 = vunpack.c.l.b16 %v1080
        %v4150 = vunpack.c.h.b16 %v1080
        %v4151 = vunpack.c.l.b16 %v1081
        %v4152 = vunpack.c.h.b16 %v1081
        %v4153 = vunpack.c.l.b16 %v1082
        %v4154 = vunpack.c.l.b16 %v1083
        %v4155 = vunpack.c.h.b16 %v1083
        %v4156 = vunpack.c.l.b16 %v1084
        %v4157 = vunpack.c.h.b16 %v1084
        %v4158 = vunpack.c.l.b16 %v1085
        %v4159 = vunpack.c.h.b16 %v1085
        %v4160 = vunpack.c.l.b16 %v1086
        %v4161 = vunpack.c.h.b16 %v1086
        %v4162 = vunpack.c.l.b16 %v1087
        %v4163 = vunpack.c.h.b16 %v1087
        %v4164 = vunpack.c.l.b16 %v1088
        %v4165 = vunpack.c.h.b16 %v1088
        %v4166 = vunpack.c.l.b16 %v1089
        %v4167 = vunpack.c.h.b16 %v1089
        %v4168 = vunpack.c.l.b16 %v1090
        %v4169 = vunpack.c.h.b16 %v1090
        %v4170 = vunpack.c.l.b16 %v1091
        %v4171 = vunpack.c.h.b16 %v1091
        %v4172 = vunpack.c.l.b16 %v1092
        %v4173 = vunpack.c.h.b16 %v1092
        %v4174 = vunpack.c.l.b16 %v1093
        %v4175 = vunpack.c.h.b16 %v1093
        %v4176 = vunpack.c.l.b16 %v1094
        %v4177 = vunpack.c.h.b16 %v1094
        %v4178 = vunpack.c.l.b16 %v1095
        %v4179 = vunpack.c.h.b16 %v1095
        %v4180 = vunpack.c.l.b16 %v1096
        %v4181 = vunpack.c.h.b16 %v1096
        %v4182 = vunpack.c.l.b16 %v1097
        %v4183 = vunpack.c.h.b16 %v1097
        %v4184 = vunpack.c.l.b16 %v1098
        %v4185 = vunpack.c.h.b16 %v1098
        %v4186 = vunpack.c.l.b16 %v1099
        %v4187 = vunpack.c.h.b16 %v1099
        %v4188 = vunpack.c.l.b16 %v1100
        %v4189 = vunpack.c.l.b16 %v1101
        %v4190 = vunpack.c.h.b16 %v1101
        %v4191 = vunpack.c.l.b16 %v1102
        %v4192 = vunpack.c.h.b16 %v1102
        %v4193 = vunpack.c.l.b16 %v1103
        %v4194 = vunpack.c.h.b16 %v1103
        %v4195 = vunpack.c.l.b16 %v1104
        %v4196 = vunpack.c.h.b16 %v1104
        %v4197 = vunpack.c.l.b16 %v1105
        %v4198 = vunpack.c.h.b16 %v1105
        %v4199 = vunpack.c.l.b16 %v1106
        %v4200 = vunpack.c.h.b16 %v1106
        %v4201 = vunpack.c.l.b16 %v1107
        %v4202 = vunpack.c.h.b16 %v1107
        %v4203 = vunpack.c.l.b16 %v1108
        %v4204 = vunpack.c.h.b16 %v1108
        %v4205 = vunpack.c.l.b16 %v1109
        %v4206 = vunpack.c.h.b16 %v1109
        %v4207 = vunpack.c.l.b16 %v1110
        %v4208 = vunpack.c.h.b16 %v1110
        %v4209 = vunpack.c.l.b16 %v1111
        %v4210 = vunpack.c.h.b16 %v1111
        %v4211 = vunpack.c.l.b16 %v1112
        %v4212 = vunpack.c.h.b16 %v1112
        %v4213 = vunpack.c.l.b16 %v1113
        %v4214 = vunpack.c.h.b16 %v1113
        %v4215 = vunpack.c.l.b16 %v1114
        %v4216 = vunpack.c.h.b16 %v1114
        %v4217 = vunpack.c.l.b16 %v1115
        %v4218 = vunpack.c.h.b16 %v1115
        %v4219 = vunpack.c.l.b16 %v1116
        %v4220 = vunpack.c.h.b16 %v1116
        %v4221 = vunpack.c.l.b16 %v1117
        %v4222 = vunpack.c.h.b16 %v1117
        %v4223 = vunpack.c.l.b16 %v1118
        %v4224 = vunpack.c.l.b16 %v1119
        %v4225 = vunpack.c.h.b16 %v1119
        %v4226 = vunpack.c.l.b16 %v1120
        %v4227 = vunpack.c.h.b16 %v1120
        %v4228 = vunpack.c.l.b16 %v1121
        %v4229 = vunpack.c.h.b16 %v1121
        %v4230 = vunpack.c.l.b16 %v1122
        %v4231 = vunpack.c.h.b16 %v1122
        %v4232 = vunpack.c.l.b16 %v1123
        %v4233 = vunpack.c.h.b16 %v1123
        %v4234 = vunpack.c.l.b16 %v1124
        %v4235 = vunpack.c.h.b16 %v1124
        %v4236 = vunpack.c.l.b16 %v1125
        %v4237 = vunpack.c.h.b16 %v1125
        %v4238 = vunpack.c.l.b16 %v1126
        %v4239 = vunpack.c.h.b16 %v1126
        %v4240 = vunpack.c.l.b16 %v1127
        %v4241 = vunpack.c.h.b16 %v1127
        %v4242 = vunpack.c.l.b16 %v1128
        %v4243 = vunpack.c.h.b16 %v1128
        %v4244 = vunpack.c.l.b16 %v1129
        %v4245 = vunpack.c.h.b16 %v1129
        %v4246 = vunpack.c.l.b16 %v1130
        %v4247 = vunpack.c.h.b16 %v1130
        %v4248 = vunpack.c.l.b16 %v1131
        %v4249 = vunpack.c.h.b16 %v1131
        %v4250 = vunpack.c.l.b16 %v1132
        %v4251 = vunpack.c.h.b16 %v1132
        %v4252 = vunpack.c.l.b16 %v1133
        %v4253 = vunpack.c.h.b16 %v1133
        %v4254 = vunpack.c.l.b16 %v1134
        %v4255 = vunpack.c.h.b16 %v1134
        %v4256 = vunpack.c.l.b16 %v1135
        %v4257 = vunpack.c.h.b16 %v1135
        %v4258 = vunpack.c.l.b16 %v1136
        %v4259 = vunpack.c.l.b16 %v1137
        %v4260 = vunpack.c.h.b16 %v1137
        %v4261 = vunpack.c.l.b16 %v1138
        %v4262 = vunpack.c.h.b16 %v1138
        %v4263 = vunpack.c.l.b16 %v1139
        %v4264 = vunpack.c.h.b16 %v1139
        %v4265 = vunpack.c.l.b16 %v1140
        %v4266 = vunpack.c.h.b16 %v1140
        %v4267 = vunpack.c.l.b16 %v1141
        %v4268 = vunpack.c.h.b16 %v1141
        %v4269 = vunpack.c.l.b16 %v1142
        %v4270 = vunpack.c.h.b16 %v1142
        %v4271 = vunpack.c.l.b16 %v1143
        %v4272 = vunpack.c.h.b16 %v1143
        %v4273 = vunpack.c.l.b16 %v1144
        %v4274 = vunpack.c.h.b16 %v1144
        %v4275 = vunpack.c.l.b16 %v1145
        %v4276 = vunpack.c.h.b16 %v1145
        %v4277 = vunpack.c.l.b16 %v1146
        %v4278 = vunpack.c.h.b16 %v1146
        %v4279 = vunpack.c.l.b16 %v1147
        %v4280 = vunpack.c.h.b16 %v1147
        %v4281 = vunpack.c.l.b16 %v1148
        %v4282 = vunpack.c.h.b16 %v1148
        %v4283 = vunpack.c.l.b16 %v1149
        %v4284 = vunpack.c.h.b16 %v1149
        %v4285 = vunpack.c.l.b16 %v1150
        %v4286 = vunpack.c.h.b16 %v1150
        %v4287 = vunpack.c.l.b16 %v1151
        %v4288 = vunpack.c.h.b16 %v1151
        %v4289 = vunpack.c.l.b16 %v1152
        %v4290 = vunpack.c.h.b16 %v1152
        %v4291 = vunpack.c.l.b16 %v1153
        %v4292 = vunpack.c.h.b16 %v1153
        %v4293 = vunpack.c.l.b16 %v1154
        %v4294 = vunpack.c.l.b16 %v1155
        %v4295 = vunpack.c.h.b16 %v1155
        %v4296 = vunpack.c.l.b16 %v1156
        %v4297 = vunpack.c.h.b16 %v1156
        %v4298 = vunpack.c.l.b16 %v1157
        %v4299 = vunpack.c.h.b16 %v1157
        %v4300 = vunpack.c.l.b16 %v1158
        %v4301 = vunpack.c.h.b16 %v1158
        %v4302 = vunpack.c.l.b16 %v1159
        %v4303 = vunpack.c.h.b16 %v1159
        %v4304 = vunpack.c.l.b16 %v1160
        %v4305 = vunpack.c.h.b16 %v1160
        %v4306 = vunpack.c.l.b16 %v1161
        %v4307 = vunpack.c.h.b16 %v1161
        %v4308 = vunpack.c.l.b16 %v1162
        %v4309 = vunpack.c.h.b16 %v1162
        %v4310 = vunpack.c.l.b16 %v1163
        %v4311 = vunpack.c.h.b16 %v1163
        %v4312 = vunpack.c.l.b16 %v1164
        %v4313 = vunpack.c.h.b16 %v1164
        %v4314 = vunpack.c.l.b16 %v1165
        %v4315 = vunpack.c.h.b16 %v1165
        %v4316 = vunpack.c.l.b16 %v1166
        %v4317 = vunpack.c.h.b16 %v1166
        %v4318 = vunpack.c.l.b16 %v1167
        %v4319 = vunpack.c.h.b16 %v1167
        %v4320 = vunpack.c.l.b16 %v1168
        %v4321 = vunpack.c.h.b16 %v1168
        %v4322 = vunpack.c.l.b16 %v1169
        %v4323 = vunpack.c.h.b16 %v1169
        %v4324 = vunpack.c.l.b16 %v1170
        %v4325 = vunpack.c.h.b16 %v1170
        %v4326 = vunpack.c.l.b16 %v1171
        %v4327 = vunpack.c.h.b16 %v1171
        %v4328 = vunpack.c.l.b16 %v1172
        %v4329 = vunpack.c.l.b16 %v1173
        %v4330 = vunpack.c.h.b16 %v1173
        %v4331 = vunpack.c.l.b16 %v1174
        %v4332 = vunpack.c.h.b16 %v1174
        %v4333 = vunpack.c.l.b16 %v1175
        %v4334 = vunpack.c.h.b16 %v1175
        %v4335 = vunpack.c.l.b16 %v1176
        %v4336 = vunpack.c.h.b16 %v1176
        %v4337 = vunpack.c.l.b16 %v1177
        %v4338 = vunpack.c.h.b16 %v1177
        %v4339 = vunpack.c.l.b16 %v1178
        %v4340 = vunpack.c.h.b16 %v1178
        %v4341 = vunpack.c.l.b16 %v1179
        %v4342 = vunpack.c.h.b16 %v1179
        %v4343 = vunpack.c.l.b16 %v1180
        %v4344 = vunpack.c.h.b16 %v1180
        %v4345 = vunpack.c.l.b16 %v1181
        %v4346 = vunpack.c.h.b16 %v1181
        %v4347 = vunpack.c.l.b16 %v1182
        %v4348 = vunpack.c.h.b16 %v1182
        %v4349 = vunpack.c.l.b16 %v1183
        %v4350 = vunpack.c.h.b16 %v1183
        %v4351 = vunpack.c.l.b16 %v1184
        %v4352 = vunpack.c.h.b16 %v1184
        %v4353 = vunpack.c.l.b16 %v1185
        %v4354 = vunpack.c.h.b16 %v1185
        %v4355 = vunpack.c.l.b16 %v1186
        %v4356 = vunpack.c.h.b16 %v1186
        %v4357 = vunpack.c.l.b16 %v1187
        %v4358 = vunpack.c.h.b16 %v1187
        %v4359 = vunpack.c.l.b16 %v1188
        %v4360 = vunpack.c.h.b16 %v1188
        %v4361 = vunpack.c.l.b16 %v1189
        %v4362 = vunpack.c.h.b16 %v1189
        %v4363 = vunpack.c.l.b16 %v1190
        %v4364 = vunpack.c.l.b16 %v1191
        %v4365 = vunpack.c.h.b16 %v1191
        %v4366 = vunpack.c.l.b16 %v1192
        %v4367 = vunpack.c.h.b16 %v1192
        %v4368 = vunpack.c.l.b16 %v1193
        %v4369 = vunpack.c.h.b16 %v1193
        %v4370 = vunpack.c.l.b16 %v1194
        %v4371 = vunpack.c.h.b16 %v1194
        %v4372 = vunpack.c.l.b16 %v1195
        %v4373 = vunpack.c.h.b16 %v1195
        %v4374 = vunpack.c.l.b16 %v1196
        %v4375 = vunpack.c.h.b16 %v1196
        %v4376 = vunpack.c.l.b16 %v1197
        %v4377 = vunpack.c.h.b16 %v1197
        %v4378 = vunpack.c.l.b16 %v1198
        %v4379 = vunpack.c.h.b16 %v1198
        %v4380 = vunpack.c.l.b16 %v1199
        %v4381 = vunpack.c.h.b16 %v1199
        %v4382 = vunpack.c.l.b16 %v1200
        %v4383 = vunpack.c.h.b16 %v1200
        %v4384 = vunpack.c.l.b16 %v1201
        %v4385 = vunpack.c.h.b16 %v1201
        %v4386 = vunpack.c.l.b16 %v1202
        %v4387 = vunpack.c.h.b16 %v1202
        %v4388 = vunpack.c.l.b16 %v1203
        %v4389 = vunpack.c.h.b16 %v1203
        %v4390 = vunpack.c.l.b16 %v1204
        %v4391 = vunpack.c.h.b16 %v1204
        %v4392 = vunpack.c.l.b16 %v1205
        %v4393 = vunpack.c.h.b16 %v1205
        %v4394 = vunpack.c.l.b16 %v1206
        %v4395 = vunpack.c.h.b16 %v1206
        %v4396 = vunpack.c.l.b16 %v1207
        %v4397 = vunpack.c.h.b16 %v1207
        %v4398 = vunpack.c.l.b16 %v1208
        %v4399 = vunpack.c.l.b16 %v1209
        %v4400 = vunpack.c.h.b16 %v1209
        %v4401 = vunpack.c.l.b16 %v1210
        %v4402 = vunpack.c.h.b16 %v1210
        %v4403 = vunpack.c.l.b16 %v1211
        %v4404 = vunpack.c.h.b16 %v1211
        %v4405 = vunpack.c.l.b16 %v1212
        %v4406 = vunpack.c.h.b16 %v1212
        %v4407 = vunpack.c.l.b16 %v1213
        %v4408 = vunpack.c.h.b16 %v1213
        %v4409 = vunpack.c.l.b16 %v1214
        %v4410 = vunpack.c.h.b16 %v1214
        %v4411 = vunpack.c.l.b16 %v1215
        %v4412 = vunpack.c.h.b16 %v1215
        %v4413 = vunpack.c.l.b16 %v1216
        %v4414 = vunpack.c.h.b16 %v1216
        %v4415 = vunpack.c.l.b16 %v1217
        %v4416 = vunpack.c.h.b16 %v1217
        %v4417 = vunpack.c.l.b16 %v1218
        %v4418 = vunpack.c.h.b16 %v1218
        %v4419 = vunpack.c.l.b16 %v1219
        %v4420 = vunpack.c.h.b16 %v1219
        %v4421 = vunpack.c.l.b16 %v1220
        %v4422 = vunpack.c.h.b16 %v1220
        %v4423 = vunpack.c.l.b16 %v1221
        %v4424 = vunpack.c.h.b16 %v1221
        %v4425 = vunpack.c.l.b16 %v1222
        %v4426 = vunpack.c.h.b16 %v1222
        %v4427 = vunpack.c.l.b16 %v1223
        %v4428 = vunpack.c.h.b16 %v1223
        %v4429 = vunpack.c.l.b16 %v1224
        %v4430 = vunpack.c.h.b16 %v1224
        %v4431 = vunpack.c.l.b16 %v1225
        %v4432 = vunpack.c.h.b16 %v1225
        %v4433 = vunpack.c.l.b16 %v1226
        %v4434 = vunpack.c.l.b16 %v1227
        %v4435 = vunpack.c.h.b16 %v1227
        %v4436 = vunpack.c.l.b16 %v1228
        %v4437 = vunpack.c.h.b16 %v1228
        %v4438 = vunpack.c.l.b16 %v1229
        %v4439 = vunpack.c.h.b16 %v1229
        %v4440 = vunpack.c.l.b16 %v1230
        %v4441 = vunpack.c.h.b16 %v1230
        %v4442 = vunpack.c.l.b16 %v1231
        %v4443 = vunpack.c.h.b16 %v1231
        %v4444 = vunpack.c.l.b16 %v1232
        %v4445 = vunpack.c.h.b16 %v1232
        %v4446 = vunpack.c.l.b16 %v1233
        %v4447 = vunpack.c.h.b16 %v1233
        %v4448 = vunpack.c.l.b16 %v1234
        %v4449 = vunpack.c.h.b16 %v1234
        %v4450 = vunpack.c.l.b16 %v1235
        %v4451 = vunpack.c.h.b16 %v1235
        %v4452 = vunpack.c.l.b16 %v1236
        %v4453 = vunpack.c.h.b16 %v1236
        %v4454 = vunpack.c.l.b16 %v1237
        %v4455 = vunpack.c.h.b16 %v1237
        %v4456 = vunpack.c.l.b16 %v1238
        %v4457 = vunpack.c.h.b16 %v1238
        %v4458 = vunpack.c.l.b16 %v1239
        %v4459 = vunpack.c.h.b16 %v1239
        %v4460 = vunpack.c.l.b16 %v1240
        %v4461 = vunpack.c.h.b16 %v1240
        %v4462 = vunpack.c.l.b16 %v1241
        %v4463 = vunpack.c.h.b16 %v1241
        %v4464 = vunpack.c.l.b16 %v1242
        %v4465 = vunpack.c.h.b16 %v1242
        %v4466 = vunpack.c.l.b16 %v1243
        %v4467 = vunpack.c.h.b16 %v1243
        %v4468 = vunpack.c.l.b16 %v1244
        %v4469 = vunpack.c.l.b16 %v1245
        %v4470 = vunpack.c.h.b16 %v1245
        %v4471 = vunpack.c.l.b16 %v1246
        %v4472 = vunpack.c.h.b16 %v1246
        %v4473 = vunpack.c.l.b16 %v1247
        %v4474 = vunpack.c.h.b16 %v1247
        %v4475 = vunpack.c.l.b16 %v1248
        %v4476 = vunpack.c.h.b16 %v1248
        %v4477 = vunpack.c.l.b16 %v1249
        %v4478 = vunpack.c.h.b16 %v1249
        %v4479 = vunpack.c.l.b16 %v1250
        %v4480 = vunpack.c.h.b16 %v1250
        %v4481 = vunpack.c.l.b16 %v1251
        %v4482 = vunpack.c.h.b16 %v1251
        %v4483 = vunpack.c.l.b16 %v1252
        %v4484 = vunpack.c.h.b16 %v1252
        %v4485 = vunpack.c.l.b16 %v1253
        %v4486 = vunpack.c.h.b16 %v1253
        %v4487 = vunpack.c.l.b16 %v1254
        %v4488 = vunpack.c.h.b16 %v1254
        %v4489 = vunpack.c.l.b16 %v1255
        %v4490 = vunpack.c.h.b16 %v1255
        %v4491 = vunpack.c.l.b16 %v1256
        %v4492 = vunpack.c.h.b16 %v1256
        %v4493 = vunpack.c.l.b16 %v1257
        %v4494 = vunpack.c.h.b16 %v1257
        %v4495 = vunpack.c.l.b16 %v1258
        %v4496 = vunpack.c.h.b16 %v1258
        %v4497 = vunpack.c.l.b16 %v1259
        %v4498 = vunpack.c.h.b16 %v1259
        %v4499 = vunpack.c.l.b16 %v1260
        %v4500 = vunpack.c.h.b16 %v1260
        %v4501 = vunpack.c.l.b16 %v1261
        %v4502 = vunpack.c.h.b16 %v1261
        %v4503 = vunpack.c.l.b16 %v1262
        %v4504 = vunpack.c.l.b16 %v1263
        %v4505 = vunpack.c.h.b16 %v1263
        %v4506 = vunpack.c.l.b16 %v1264
        %v4507 = vunpack.c.h.b16 %v1264
        %v4508 = vunpack.c.l.b16 %v1265
        %v4509 = vunpack.c.h.b16 %v1265
        %v4510 = vunpack.c.l.b16 %v1266
        %v4511 = vunpack.c.h.b16 %v1266
        %v4512 = vunpack.c.l.b16 %v1267
        %v4513 = vunpack.c.h.b16 %v1267
        %v4514 = vunpack.c.l.b16 %v1268
        %v4515 = vunpack.c.h.b16 %v1268
        %v4516 = vunpack.c.l.b16 %v1269
        %v4517 = vunpack.c.h.b16 %v1269
        %v4518 = vunpack.c.l.b16 %v1270
        %v4519 = vunpack.c.h.b16 %v1270
        %v4520 = vunpack.c.l.b16 %v1271
        %v4521 = vunpack.c.h.b16 %v1271
        %v4522 = vunpack.c.l.b16 %v1272
        %v4523 = vunpack.c.h.b16 %v1272
        %v4524 = vunpack.c.l.b16 %v1273
        %v4525 = vunpack.c.h.b16 %v1273
        %v4526 = vunpack.c.l.b16 %v1274
        %v4527 = vunpack.c.h.b16 %v1274
        %v4528 = vunpack.c.l.b16 %v1275
        %v4529 = vunpack.c.h.b16 %v1275
        %v4530 = vunpack.c.l.b16 %v1276
        %v4531 = vunpack.c.h.b16 %v1276
        %v4532 = vunpack.c.l.b16 %v1277
        %v4533 = vunpack.c.h.b16 %v1277
        %v4534 = vunpack.c.l.b16 %v1278
        %v4535 = vunpack.c.h.b16 %v1278
        %v4536 = vunpack.c.l.b16 %v1279
        %v4537 = vunpack.c.h.b16 %v1279
        %v4538 = vunpack.c.l.b16 %v1280
        %v4539 = vunpack.c.l.b16 %v1281
        %v4540 = vunpack.c.h.b16 %v1281
        %v4541 = vunpack.c.l.b16 %v1282
        %v4542 = vunpack.c.h.b16 %v1282
        %v4543 = vunpack.c.l.b16 %v1283
        %v4544 = vunpack.c.h.b16 %v1283
        %v4545 = vunpack.c.l.b16 %v1284
        %v4546 = vunpack.c.h.b16 %v1284
        %v4547 = vunpack.c.l.b16 %v1285
        %v4548 = vunpack.c.h.b16 %v1285
        %v4549 = vunpack.c.l.b16 %v1286
        %v4550 = vunpack.c.h.b16 %v1286
        %v4551 = vunpack.c.l.b16 %v1287
        %v4552 = vunpack.c.h.b16 %v1287
        %v4553 = vunpack.c.l.b16 %v1288
        %v4554 = vunpack.c.h.b16 %v1288
        %v4555 = vunpack.c.l.b16 %v1289
        %v4556 = vunpack.c.h.b16 %v1289
        %v4557 = vunpack.c.l.b16 %v1290
        %v4558 = vunpack.c.h.b16 %v1290
        %v4559 = vunpack.c.l.b16 %v1291
        %v4560 = vunpack.c.h.b16 %v1291
        %v4561 = vunpack.c.l.b16 %v1292
        %v4562 = vunpack.c.h.b16 %v1292
        %v4563 = vunpack.c.l.b16 %v1293
        %v4564 = vunpack.c.h.b16 %v1293
        %v4565 = vunpack.c.l.b16 %v1294
        %v4566 = vunpack.c.h.b16 %v1294
        %v4567 = vunpack.c.l.b16 %v1295
        %v4568 = vunpack.c.h.b16 %v1295
        %v4569 = vunpack.c.l.b16 %v1296
        %v4570 = vunpack.c.h.b16 %v1296
        %v4571 = vunpack.c.l.b16 %v1297
        %v4572 = vunpack.c.h.b16 %v1297
        %v4573 = vunpack.c.l.b16 %v1298
        %v4574 = vunpack.c.l.b16 %v1299
        %v4575 = vunpack.c.h.b16 %v1299
        %v4576 = vunpack.c.l.b16 %v1300
        %v4577 = vunpack.c.h.b16 %v1300
        %v4578 = vunpack.c.l.b16 %v1301
        %v4579 = vunpack.c.h.b16 %v1301
        %v4580 = vunpack.c.l.b16 %v1302
        %v4581 = vunpack.c.h.b16 %v1302
        %v4582 = vunpack.c.l.b16 %v1303
        %v4583 = vunpack.c.h.b16 %v1303
        %v4584 = vunpack.c.l.b16 %v1304
        %v4585 = vunpack.c.h.b16 %v1304
        %v4586 = vunpack.c.l.b16 %v1305
        %v4587 = vunpack.c.h.b16 %v1305
        %v4588 = vunpack.c.l.b16 %v1306
        %v4589 = vunpack.c.h.b16 %v1306
        %v4590 = vunpack.c.l.b16 %v1307
        %v4591 = vunpack.c.h.b16 %v1307
        %v4592 = vunpack.c.l.b16 %v1308
        %v4593 = vunpack.c.h.b16 %v1308
        %v4594 = vunpack.c.l.b16 %v1309
        %v4595 = vunpack.c.h.b16 %v1309
        %v4596 = vunpack.c.l.b16 %v1310
        %v4597 = vunpack.c.h.b16 %v1310
        %v4598 = vunpack.c.l.b16 %v1311
        %v4599 = vunpack.c.h.b16 %v1311
        %v4600 = vunpack.c.l.b16 %v1312
        %v4601 = vunpack.c.h.b16 %v1312
        %v4602 = vunpack.c.l.b16 %v1313
        %v4603 = vunpack.c.h.b16 %v1313
        %v4604 = vunpack.c.l.b16 %v1314
        %v4605 = vunpack.c.h.b16 %v1314
        %v4606 = vunpack.c.l.b16 %v1315
        %v4607 = vunpack.c.h.b16 %v1315
        %v4608 = vunpack.c.l.b16 %v1316
        %v4609 = vunpack.c.l.b16 %v1317
        %v4610 = vunpack.c.h.b16 %v1317
        %v4611 = vunpack.c.l.b16 %v1318
        %v4612 = vunpack.c.h.b16 %v1318
        %v4613 = vunpack.c.l.b16 %v1319
        %v4614 = vunpack.c.h.b16 %v1319
        %v4615 = vunpack.c.l.b16 %v1320
        %v4616 = vunpack.c.h.b16 %v1320
        %v4617 = vunpack.c.l.b16 %v1321
        %v4618 = vunpack.c.h.b16 %v1321
        %v4619 = vunpack.c.l.b16 %v1322
        %v4620 = vunpack.c.h.b16 %v1322
        %v4621 = vunpack.c.l.b16 %v1323
        %v4622 = vunpack.c.h.b16 %v1323
        %v4623 = vunpack.c.l.b16 %v1324
        %v4624 = vunpack.c.h.b16 %v1324
        %v4625 = vunpack.c.l.b16 %v1325
        %v4626 = vunpack.c.h.b16 %v1325
        %v4627 = vunpack.c.l.b16 %v1326
        %v4628 = vunpack.c.h.b16 %v1326
        %v4629 = vunpack.c.l.b16 %v1327
        %v4630 = vunpack.c.h.b16 %v1327
        %v4631 = vunpack.c.l.b16 %v1328
        %v4632 = vunpack.c.h.b16 %v1328
        %v4633 = vunpack.c.l.b16 %v1329
        %v4634 = vunpack.c.h.b16 %v1329
        %v4635 = vunpack.c.l.b16 %v1330
        %v4636 = vunpack.c.h.b16 %v1330
        %v4637 = vunpack.c.l.b16 %v1331
        %v4638 = vunpack.c.h.b16 %v1331
        %v4639 = vunpack.c.l.b16 %v1332
        %v4640 = vunpack.c.h.b16 %v1332
        %v4641 = vunpack.c.l.b16 %v1333
        %v4642 = vunpack.c.h.b16 %v1333
        %v4643 = vunpack.c.l.b16 %v1334
        %v4644 = vunpack.c.l.b16 %v1335
        %v4645 = vunpack.c.h.b16 %v1335
        %v4646 = vunpack.c.l.b16 %v1336
        %v4647 = vunpack.c.h.b16 %v1336
        %v4648 = vunpack.c.l.b16 %v1337
        %v4649 = vunpack.c.h.b16 %v1337
        %v4650 = vunpack.c.l.b16 %v1338
        %v4651 = vunpack.c.h.b16 %v1338
        %v4652 = vunpack.c.l.b16 %v1339
        %v4653 = vunpack.c.h.b16 %v1339
        %v4654 = vunpack.c.l.b16 %v1340
        %v4655 = vunpack.c.h.b16 %v1340
        %v4656 = vunpack.c.l.b16 %v1341
        %v4657 = vunpack.c.h.b16 %v1341
        %v4658 = vunpack.c.l.b16 %v1342
        %v4659 = vunpack.c.h.b16 %v1342
        %v4660 = vunpack.c.l.b16 %v1343
        %v4661 = vunpack.c.h.b16 %v1343
        %v4662 = vunpack.c.l.b16 %v1344
        %v4663 = vunpack.c.h.b16 %v1344
        %v4664 = vunpack.c.l.b16 %v1345
        %v4665 = vunpack.c.h.b16 %v1345
        %v4666 = vunpack.c.l.b16 %v1346
        %v4667 = vunpack.c.h.b16 %v1346
        %v4668 = vunpack.c.l.b16 %v1347
        %v4669 = vunpack.c.h.b16 %v1347
        %v4670 = vunpack.c.l.b16 %v1348
        %v4671 = vunpack.c.h.b16 %v1348
        %v4672 = vunpack.c.l.b16 %v1349
        %v4673 = vunpack.c.h.b16 %v1349
        %v4674 = vunpack.c.l.b16 %v1350
        %v4675 = vunpack.c.h.b16 %v1350
        %v4676 = vunpack.c.l.b16 %v1351
        %v4677 = vunpack.c.h.b16 %v1351
        %v4678 = vunpack.c.l.b16 %v1352
        %v4679 = vunpack.c.l.b16 %v1353
        %v4680 = vunpack.c.h.b16 %v1353
        %v4681 = vunpack.c.l.b16 %v1354
        %v4682 = vunpack.c.h.b16 %v1354
        %v4683 = vunpack.c.l.b16 %v1355
        %v4684 = vunpack.c.h.b16 %v1355
        %v4685 = vunpack.c.l.b16 %v1356
        %v4686 = vunpack.c.h.b16 %v1356
        %v4687 = vunpack.c.l.b16 %v1357
        %v4688 = vunpack.c.h.b16 %v1357
        %v4689 = vunpack.c.l.b16 %v1358
        %v4690 = vunpack.c.h.b16 %v1358
        %v4691 = vunpack.c.l.b16 %v1359
        %v4692 = vunpack.c.h.b16 %v1359
        %v4693 = vunpack.c.l.b16 %v1360
        %v4694 = vunpack.c.h.b16 %v1360
        %v4695 = vunpack.c.l.b16 %v1361
        %v4696 = vunpack.c.h.b16 %v1361
        %v4697 = vunpack.c.l.b16 %v1362
        %v4698 = vunpack.c.h.b16 %v1362
        %v4699 = vunpack.c.l.b16 %v1363
        %v4700 = vunpack.c.h.b16 %v1363
        %v4701 = vunpack.c.l.b16 %v1364
        %v4702 = vunpack.c.h.b16 %v1364
        %v4703 = vunpack.c.l.b16 %v1365
        %v4704 = vunpack.c.h.b16 %v1365
        %v4705 = vunpack.c.l.b16 %v1366
        %v4706 = vunpack.c.h.b16 %v1366
        %v4707 = vunpack.c.l.b16 %v1367
        %v4708 = vunpack.c.h.b16 %v1367
        %v4709 = vunpack.c.l.b16 %v1368
        %v4710 = vunpack.c.h.b16 %v1368
        %v4711 = vunpack.c.l.b16 %v1369
        %v4712 = vunpack.c.h.b16 %v1369
        %v4713 = vunpack.c.l.b16 %v1370
        %v4714 = vunpack.c.l.b16 %v1371
        %v4715 = vunpack.c.h.b16 %v1371
        %v4716 = vunpack.c.l.b16 %v1372
        %v4717 = vunpack.c.h.b16 %v1372
        %v4718 = vunpack.c.l.b16 %v1373
        %v4719 = vunpack.c.h.b16 %v1373
        %v4720 = vunpack.c.l.b16 %v1374
        %v4721 = vunpack.c.h.b16 %v1374
        %v4722 = vunpack.c.l.b16 %v1375
        %v4723 = vunpack.c.h.b16 %v1375
        %v4724 = vunpack.c.l.b16 %v1376
        %v4725 = vunpack.c.h.b16 %v1376
        %v4726 = vunpack.c.l.b16 %v1377
        %v4727 = vunpack.c.h.b16 %v1377
        %v4728 = vunpack.c.l.b16 %v1378
        %v4729 = vunpack.c.h.b16 %v1378
        %v4730 = vunpack.c.l.b16 %v1379
        %v4731 = vunpack.c.h.b16 %v1379
        %v4732 = vunpack.c.l.b16 %v1380
        %v4733 = vunpack.c.h.b16 %v1380
        %v4734 = vunpack.c.l.b16 %v1381
        %v4735 = vunpack.c.h.b16 %v1381
        %v4736 = vunpack.c.l.b16 %v1382
        %v4737 = vunpack.c.h.b16 %v1382
        %v4738 = vunpack.c.l.b16 %v1383
        %v4739 = vunpack.c.h.b16 %v1383
        %v4740 = vunpack.c.l.b16 %v1384
        %v4741 = vunpack.c.h.b16 %v1384
        %v4742 = vunpack.c.l.b16 %v1385
        %v4743 = vunpack.c.h.b16 %v1385
        %v4744 = vunpack.c.l.b16 %v1386
        %v4745 = vunpack.c.h.b16 %v1386
        %v4746 = vunpack.c.l.b16 %v1387
        %v4747 = vunpack.c.h.b16 %v1387
        %v4748 = vunpack.c.l.b16 %v1388
        %v4749 = vunpack.c.l.b16 %v1389
        %v4750 = vunpack.c.h.b16 %v1389
        %v4751 = vunpack.c.l.b16 %v1390
        %v4752 = vunpack.c.h.b16 %v1390
        %v4753 = vunpack.c.l.b16 %v1391
        %v4754 = vunpack.c.h.b16 %v1391
        %v4755 = vunpack.c.l.b16 %v1392
        %v4756 = vunpack.c.h.b16 %v1392
        %v4757 = vunpack.c.l.b16 %v1393
        %v4758 = vunpack.c.h.b16 %v1393
        %v4759 = vunpack.c.l.b16 %v1394
        %v4760 = vunpack.c.h.b16 %v1394
        %v4761 = vunpack.c.l.b16 %v1395
        %v4762 = vunpack.c.h.b16 %v1395
        %v4763 = vunpack.c.l.b16 %v1396
        %v4764 = vunpack.c.h.b16 %v1396
        %v4765 = vunpack.c.l.b16 %v1397
        %v4766 = vunpack.c.h.b16 %v1397
        %v4767 = vunpack.c.l.b16 %v1398
        %v4768 = vunpack.c.h.b16 %v1398
        %v4769 = vunpack.c.l.b16 %v1399
        %v4770 = vunpack.c.h.b16 %v1399
        %v4771 = vunpack.c.l.b16 %v1400
        %v4772 = vunpack.c.h.b16 %v1400
        %v4773 = vunpack.c.l.b16 %v1401
        %v4774 = vunpack.c.h.b16 %v1401
        %v4775 = vunpack.c.l.b16 %v1402
        %v4776 = vunpack.c.h.b16 %v1402
        %v4777 = vunpack.c.l.b16 %v1403
        %v4778 = vunpack.c.h.b16 %v1403
        %v4779 = vunpack.c.l.b16 %v1404
        %v4780 = vunpack.c.h.b16 %v1404
        %v4781 = vunpack.c.l.b16 %v1405
        %v4782 = vunpack.c.h.b16 %v1405
        %v4783 = vunpack.c.l.b16 %v1406
        %v4784 = vunpack.c.l.b16 %v1407
        %v4785 = vunpack.c.h.b16 %v1407
        %v4786 = vunpack.c.l.b16 %v1408
        %v4787 = vunpack.c.h.b16 %v1408
        %v4788 = vunpack.c.l.b16 %v1409
        %v4789 = vunpack.c.h.b16 %v1409
        %v4790 = vunpack.c.l.b16 %v1410
        %v4791 = vunpack.c.h.b16 %v1410
        %v4792 = vunpack.c.l.b16 %v1411
        %v4793 = vunpack.c.h.b16 %v1411
        %v4794 = vunpack.c.l.b16 %v1412
        %v4795 = vunpack.c.h.b16 %v1412
        %v4796 = vunpack.c.l.b16 %v1413
        %v4797 = vunpack.c.h.b16 %v1413
        %v4798 = vunpack.c.l.b16 %v1414
        %v4799 = vunpack.c.h.b16 %v1414
        %v4800 = vunpack.c.l.b16 %v1415
        %v4801 = vunpack.c.h.b16 %v1415
        %v4802 = vunpack.c.l.b16 %v1416
        %v4803 = vunpack.c.h.b16 %v1416
        %v4804 = vunpack.c.l.b16 %v1417
        %v4805 = vunpack.c.h.b16 %v1417
        %v4806 = vunpack.c.l.b16 %v1418
        %v4807 = vunpack.c.h.b16 %v1418
        %v4808 = vunpack.c.l.b16 %v1419
        %v4809 = vunpack.c.h.b16 %v1419
        %v4810 = vunpack.c.l.b16 %v1420
        %v4811 = vunpack.c.h.b16 %v1420
        %v4812 = vunpack.c.l.b16 %v1421
        %v4813 = vunpack.c.h.b16 %v1421
        %v4814 = vunpack.c.l.b16 %v1422
        %v4815 = vunpack.c.h.b16 %v1422
        %v4816 = vunpack.c.l.b16 %v1423
        %v4817 = vunpack.c.h.b16 %v1423
        %v4818 = vunpack.c.l.b16 %v1424
        %v4819 = vunpack.c.l.b16 %v1425
        %v4820 = vunpack.c.h.b16 %v1425
        %v4821 = vunpack.c.l.b16 %v1426
        %v4822 = vunpack.c.h.b16 %v1426
        %v4823 = vunpack.c.l.b16 %v1427
        %v4824 = vunpack.c.h.b16 %v1427
        %v4825 = vunpack.c.l.b16 %v1428
        %v4826 = vunpack.c.h.b16 %v1428
        %v4827 = vunpack.c.l.b16 %v1429
        %v4828 = vunpack.c.h.b16 %v1429
        %v4829 = vunpack.c.l.b16 %v1430
        %v4830 = vunpack.c.h.b16 %v1430
        %v4831 = vunpack.c.l.b16 %v1431
        %v4832 = vunpack.c.h.b16 %v1431
        %v4833 = vunpack.c.l.b16 %v1432
        %v4834 = vunpack.c.h.b16 %v1432
        %v4835 = vunpack.c.l.b16 %v1433
        %v4836 = vunpack.c.h.b16 %v1433
        %v4837 = vunpack.c.l.b16 %v1434
        %v4838 = vunpack.c.h.b16 %v1434
        %v4839 = vunpack.c.l.b16 %v1435
        %v4840 = vunpack.c.h.b16 %v1435
        %v4841 = vunpack.c.l.b16 %v1436
        %v4842 = vunpack.c.h.b16 %v1436
        %v4843 = vunpack.c.l.b16 %v1437
        %v4844 = vunpack.c.h.b16 %v1437
        %v4845 = vunpack.c.l.b16 %v1438
        %v4846 = vunpack.c.h.b16 %v1438
        %v4847 = vunpack.c.l.b16 %v1439
        %v4848 = vunpack.c.h.b16 %v1439
        %v4849 = vunpack.c.l.b16 %v1440
        %v4850 = vunpack.c.h.b16 %v1440
        %v4851 = vunpack.c.l.b16 %v1441
        %v4852 = vunpack.c.h.b16 %v1441
        %v4853 = vunpack.c.l.b16 %v1442
        %v4854 = vunpack.c.l.b16 %v1443
        %v4855 = vunpack.c.h.b16 %v1443
        %v4856 = vunpack.c.l.b16 %v1444
        %v4857 = vunpack.c.h.b16 %v1444
        %v4858 = vunpack.c.l.b16 %v1445
        %v4859 = vunpack.c.h.b16 %v1445
        %v4860 = vunpack.c.l.b16 %v1446
        %v4861 = vunpack.c.h.b16 %v1446
        %v4862 = vunpack.c.l.b16 %v1447
        %v4863 = vunpack.c.h.b16 %v1447
        %v4864 = vunpack.c.l.b16 %v1448
        %v4865 = vunpack.c.h.b16 %v1448
        %v4866 = vunpack.c.l.b16 %v1449
        %v4867 = vunpack.c.h.b16 %v1449
        %v4868 = vunpack.c.l.b16 %v1450
        %v4869 = vunpack.c.h.b16 %v1450
        %v4870 = vunpack.c.l.b16 %v1451
        %v4871 = vunpack.c.h.b16 %v1451
        %v4872 = vunpack.c.l.b16 %v1452
        %v4873 = vunpack.c.h.b16 %v1452
        %v4874 = vunpack.c.l.b16 %v1453
        %v4875 = vunpack.c.h.b16 %v1453
        %v4876 = vunpack.c.l.b16 %v1454
        %v4877 = vunpack.c.h.b16 %v1454
        %v4878 = vunpack.c.l.b16 %v1455
        %v4879 = vunpack.c.h.b16 %v1455
        %v4880 = vunpack.c.l.b16 %v1456
        %v4881 = vunpack.c.h.b16 %v1456
        %v4882 = vunpack.c.l.b16 %v1457
        %v4883 = vunpack.c.h.b16 %v1457
        %v4884 = vunpack.c.l.b16 %v1458
        %v4885 = vunpack.c.h.b16 %v1458
        %v4886 = vunpack.c.l.b16 %v1459
        %v4887 = vunpack.c.h.b16 %v1459
        %v4888 = vunpack.c.l.b16 %v1460
        %v4889 = vunpack.c.l.b16 %v1461
        %v4890 = vunpack.c.h.b16 %v1461
        %v4891 = vunpack.c.l.b16 %v1462
        %v4892 = vunpack.c.h.b16 %v1462
        %v4893 = vunpack.c.l.b16 %v1463
        %v4894 = vunpack.c.h.b16 %v1463
        %v4895 = vunpack.c.l.b16 %v1464
        %v4896 = vunpack.c.h.b16 %v1464
        %v4897 = vunpack.c.l.b16 %v1465
        %v4898 = vunpack.c.h.b16 %v1465
        %v4899 = vunpack.c.l.b16 %v1466
        %v4900 = vunpack.c.h.b16 %v1466
        %v4901 = vunpack.c.l.b16 %v1467
        %v4902 = vunpack.c.h.b16 %v1467
        %v4903 = vunpack.c.l.b16 %v1468
        %v4904 = vunpack.c.h.b16 %v1468
        %v4905 = vunpack.c.l.b16 %v1469
        %v4906 = vunpack.c.h.b16 %v1469
        %v4907 = vunpack.c.l.b16 %v1470
        %v4908 = vunpack.c.h.b16 %v1470
        %v4909 = vunpack.c.l.b16 %v1471
        %v4910 = vunpack.c.h.b16 %v1471
        %v4911 = vunpack.c.l.b16 %v1472
        %v4912 = vunpack.c.h.b16 %v1472
        %v4913 = vunpack.c.l.b16 %v1473
        %v4914 = vunpack.c.h.b16 %v1473
        %v4915 = vunpack.c.l.b16 %v1474
        %v4916 = vunpack.c.h.b16 %v1474
        %v4917 = vunpack.c.l.b16 %v1475
        %v4918 = vunpack.c.h.b16 %v1475
        %v4919 = vunpack.c.l.b16 %v1476
        %v4920 = vunpack.c.h.b16 %v1476
        %v4921 = vunpack.c.l.b16 %v1477
        %v4922 = vunpack.c.h.b16 %v1477
        %v4923 = vunpack.c.l.b16 %v1478
        %v4924 = vunpack.c.l.b16 %v1479
        %v4925 = vunpack.c.h.b16 %v1479
        %v4926 = vunpack.c.l.b16 %v1480
        %v4927 = vunpack.c.h.b16 %v1480
        %v4928 = vunpack.c.l.b16 %v1481
        %v4929 = vunpack.c.h.b16 %v1481
        %v4930 = vunpack.c.l.b16 %v1482
        %v4931 = vunpack.c.h.b16 %v1482
        %v4932 = vunpack.c.l.b16 %v1483
        %v4933 = vunpack.c.h.b16 %v1483
        %v4934 = vunpack.c.l.b16 %v1484
        %v4935 = vunpack.c.h.b16 %v1484
        %v4936 = vunpack.c.l.b16 %v1485
        %v4937 = vunpack.c.h.b16 %v1485
        %v4938 = vunpack.c.l.b16 %v1486
        %v4939 = vunpack.c.h.b16 %v1486
        %v4940 = vunpack.c.l.b16 %v1487
        %v4941 = vunpack.c.h.b16 %v1487
        %v4942 = vunpack.c.l.b16 %v1488
        %v4943 = vunpack.c.h.b16 %v1488
        %v4944 = vunpack.c.l.b16 %v1489
        %v4945 = vunpack.c.h.b16 %v1489
        %v4946 = vunpack.c.l.b16 %v1490
        %v4947 = vunpack.c.h.b16 %v1490
        %v4948 = vunpack.c.l.b16 %v1491
        %v4949 = vunpack.c.h.b16 %v1491
        %v4950 = vunpack.c.l.b16 %v1492
        %v4951 = vunpack.c.h.b16 %v1492
        %v4952 = vunpack.c.l.b16 %v1493
        %v4953 = vunpack.c.h.b16 %v1493
        %v4954 = vunpack.c.l.b16 %v1494
        %v4955 = vunpack.c.h.b16 %v1494
        %v4956 = vunpack.c.l.b16 %v1495
        %v4957 = vunpack.c.h.b16 %v1495
        %v4958 = vunpack.c.l.b16 %v1496
        %v4959 = vunpack.c.l.b16 %v1497
        %v4960 = vunpack.c.h.b16 %v1497
        %v4961 = vunpack.c.l.b16 %v1498
        %v4962 = vunpack.c.h.b16 %v1498
        %v4963 = vunpack.c.l.b16 %v1499
        %v4964 = vunpack.c.h.b16 %v1499
        %v4965 = vunpack.c.l.b16 %v1500
        %v4966 = vunpack.c.h.b16 %v1500
        %v4967 = vunpack.c.l.b16 %v1501
        %v4968 = vunpack.c.h.b16 %v1501
        %v4969 = vunpack.c.l.b16 %v1502
        %v4970 = vunpack.c.h.b16 %v1502
        %v4971 = vunpack.c.l.b16 %v1503
        %v4972 = vunpack.c.h.b16 %v1503
        %v4973 = vunpack.c.l.b16 %v1504
        %v4974 = vunpack.c.h.b16 %v1504
        %v4975 = vunpack.c.l.b16 %v1505
        %v4976 = vunpack.c.h.b16 %v1505
        %v4977 = vunpack.c.l.b16 %v1506
        %v4978 = vunpack.c.h.b16 %v1506
        %v4979 = vunpack.c.l.b16 %v1507
        %v4980 = vunpack.c.h.b16 %v1507
        %v4981 = vunpack.c.l.b16 %v1508
        %v4982 = vunpack.c.h.b16 %v1508
        %v4983 = vunpack.c.l.b16 %v1509
        %v4984 = vunpack.c.h.b16 %v1509
        %v4985 = vunpack.c.l.b16 %v1510
        %v4986 = vunpack.c.h.b16 %v1510
        %v4987 = vunpack.c.l.b16 %v1511
        %v4988 = vunpack.c.h.b16 %v1511
        %v4989 = vunpack.c.l.b16 %v1512
        %v4990 = vunpack.c.h.b16 %v1512
        %v4991 = vunpack.c.l.b16 %v1513
        %v4992 = vunpack.c.h.b16 %v1513
        %v4993 = vunpack.c.l.b16 %v1514
        %v4994 = vunpack.c.l.b16 %v1515
        %v4995 = vunpack.c.h.b16 %v1515
        %v4996 = vunpack.c.l.b16 %v1516
        %v4997 = vunpack.c.h.b16 %v1516
        %v4998 = vunpack.c.l.b16 %v1517
        %v4999 = vunpack.c.h.b16 %v1517
        %v5000 = vunpack.c.l.b16 %v1518
        %v5001 = vunpack.c.h.b16 %v1518
        %v5002 = vunpack.c.l.b16 %v1519
        %v5003 = vunpack.c.h.b16 %v1519
        %v5004 = vunpack.c.l.b16 %v1520
        %v5005 = vunpack.c.h.b16 %v1520
        %v5006 = vunpack.c.l.b16 %v1521
        %v5007 = vunpack.c.h.b16 %v1521
        %v5008 = vunpack.c.l.b16 %v1522
        %v5009 = vunpack.c.h.b16 %v1522
        %v5010 = vunpack.c.l.b16 %v1523
        %v5011 = vunpack.c.h.b16 %v1523
        %v5012 = vunpack.c.l.b16 %v1524
        %v5013 = vunpack.c.h.b16 %v1524
        %v5014 = vunpack.c.l.b16 %v1525
        %v5015 = vunpack.c.h.b16 %v1525
        %v5016 = vunpack.c.l.b16 %v1526
        %v5017 = vunpack.c.h.b16 %v1526
        %v5018 = vunpack.c.l.b16 %v1527
        %v5019 = vunpack.c.h.b16 %v1527
        %v5020 = vunpack.c.l.b16 %v1528
        %v5021 = vunpack.c.h.b16 %v1528
        %v5022 = vunpack.c.l.b16 %v1529
        %v5023 = vunpack.c.h.b16 %v1529
        %v5024 = vunpack.c.l.b16 %v1530
        %v5025 = vunpack.c.h.b16 %v1530
        %v5026 = vunpack.c.l.b16 %v1531
        %v5027 = vunpack.c.h.b16 %v1531
        %v5028 = vunpack.c.l.b16 %v1532
        %v5029 = vunpack.c.l.b16 %v1533
        %v5030 = vunpack.c.h.b16 %v1533
        %v5031 = vunpack.c.l.b16 %v1534
        %v5032 = vunpack.c.h.b16 %v1534
        %v5033 = vunpack.c.l.b16 %v1535
        %v5034 = vunpack.c.h.b16 %v1535
        %v5035 = vunpack.c.l.b16 %v1536
        %v5036 = vunpack.c.h.b16 %v1536
        %v5037 = vunpack.c.l.b16 %v1537
        %v5038 = vunpack.c.h.b16 %v1537
        %v5039 = vunpack.c.l.b16 %v1538
        %v5040 = vunpack.c.h.b16 %v1538
        %v5041 = vunpack.c.l.b16 %v1539
        %v5042 = vunpack.c.h.b16 %v1539
        %v5043 = vunpack.c.l.b16 %v1540
        %v5044 = vunpack.c.h.b16 %v1540
        %v5045 = vunpack.c.l.b16 %v1541
        %v5046 = vunpack.c.h.b16 %v1541
        %v5047 = vunpack.c.l.b16 %v1542
        %v5048 = vunpack.c.h.b16 %v1542
        %v5049 = vunpack.c.l.b16 %v1543
        %v5050 = vunpack.c.h.b16 %v1543
        %v5051 = vunpack.c.l.b16 %v1544
        %v5052 = vunpack.c.h.b16 %v1544
        %v5053 = vunpack.c.l.b16 %v1545
        %v5054 = vunpack.c.h.b16 %v1545
        %v5055 = vunpack.c.l.b16 %v1546
        %v5056 = vunpack.c.h.b16 %v1546
        %v5057 = vunpack.c.l.b16 %v1547
        %v5058 = vunpack.c.h.b16 %v1547
        %v5059 = vunpack.c.l.b16 %v1548
        %v5060 = vunpack.c.h.b16 %v1548
        %v5061 = vunpack.c.l.b16 %v1549
        %v5062 = vunpack.c.h.b16 %v1549
        %v5063 = vunpack.c.l.b16 %v1550
        %v5064 = vunpack.c.l.b16 %v1551
        %v5065 = vunpack.c.h.b16 %v1551
        %v5066 = vunpack.c.l.b16 %v1552
        %v5067 = vunpack.c.h.b16 %v1552
        %v5068 = vunpack.c.l.b16 %v1553
        %v5069 = vunpack.c.h.b16 %v1553
        %v5070 = vunpack.c.l.b16 %v1554
        %v5071 = vunpack.c.h.b16 %v1554
        %v5072 = vunpack.c.l.b16 %v1555
        %v5073 = vunpack.c.h.b16 %v1555
        %v5074 = vunpack.c.l.b16 %v1556
        %v5075 = vunpack.c.h.b16 %v1556
        %v5076 = vunpack.c.l.b16 %v1557
        %v5077 = vunpack.c.h.b16 %v1557
        %v5078 = vunpack.c.l.b16 %v1558
        %v5079 = vunpack.c.h.b16 %v1558
        %v5080 = vunpack.c.l.b16 %v1559
        %v5081 = vunpack.c.h.b16 %v1559
        %v5082 = vunpack.c.l.b16 %v1560
        %v5083 = vunpack.c.h.b16 %v1560
        %v5084 = vunpack.c.l.b16 %v1561
        %v5085 = vunpack.c.h.b16 %v1561
        %v5086 = vunpack.c.l.b16 %v1562
        %v5087 = vunpack.c.h.b16 %v1562
        %v5088 = vunpack.c.l.b16 %v1563
        %v5089 = vunpack.c.h.b16 %v1563
        %v5090 = vunpack.c.l.b16 %v1564
        %v5091 = vunpack.c.h.b16 %v1564
        %v5092 = vunpack.c.l.b16 %v1565
        %v5093 = vunpack.c.h.b16 %v1565
        %v5094 = vunpack.c.l.b16 %v1566
        %v5095 = vunpack.c.h.b16 %v1566
        %v5096 = vunpack.c.l.b16 %v1567
        %v5097 = vunpack.c.h.b16 %v1567
        %v5098 = vunpack.c.l.b16 %v1568
        %v5099 = vunpack.c.l.b16 %v1569
        %v5100 = vunpack.c.h.b16 %v1569
        %v5101 = vunpack.c.l.b16 %v1570
        %v5102 = vunpack.c.h.b16 %v1570
        %v5103 = vunpack.c.l.b16 %v1571
        %v5104 = vunpack.c.h.b16 %v1571
        %v5105 = vunpack.c.l.b16 %v1572
        %v5106 = vunpack.c.h.b16 %v1572
        %v5107 = vunpack.c.l.b16 %v1573
        %v5108 = vunpack.c.h.b16 %v1573
        %v5109 = vunpack.c.l.b16 %v1574
        %v5110 = vunpack.c.h.b16 %v1574
        %v5111 = vunpack.c.l.b16 %v1575
        %v5112 = vunpack.c.h.b16 %v1575
        %v5113 = vunpack.c.l.b16 %v1576
        %v5114 = vunpack.c.h.b16 %v1576
        %v5115 = vunpack.c.l.b16 %v1577
        %v5116 = vunpack.c.h.b16 %v1577
        %v5117 = vunpack.c.l.b16 %v1578
        %v5118 = vunpack.c.h.b16 %v1578
        %v5119 = vunpack.c.l.b16 %v1579
        %v5120 = vunpack.c.h.b16 %v1579
        %v5121 = vunpack.c.l.b16 %v1580
        %v5122 = vunpack.c.h.b16 %v1580
        %v5123 = vunpack.c.l.b16 %v1581
        %v5124 = vunpack.c.h.b16 %v1581
        %v5125 = vunpack.c.l.b16 %v1582
        %v5126 = vunpack.c.h.b16 %v1582
        %v5127 = vunpack.c.l.b16 %v1583
        %v5128 = vunpack.c.h.b16 %v1583
        %v5129 = vunpack.c.l.b16 %v1584
        %v5130 = vunpack.c.h.b16 %v1584
        %v5131 = vunpack.c.l.b16 %v1585
        %v5132 = vunpack.c.h.b16 %v1585
        %v5133 = vunpack.c.l.b16 %v1586
        %v5134 = vunpack.c.l.b16 %v1587
        %v5135 = vunpack.c.h.b16 %v1587
        %v5136 = vunpack.c.l.b16 %v1588
        %v5137 = vunpack.c.h.b16 %v1588
        %v5138 = vunpack.c.l.b16 %v1589
        %v5139 = vunpack.c.h.b16 %v1589
        %v5140 = vunpack.c.l.b16 %v1590
        %v5141 = vunpack.c.h.b16 %v1590
        %v5142 = vunpack.c.l.b16 %v1591
        %v5143 = vunpack.c.h.b16 %v1591
        %v5144 = vunpack.c.l.b16 %v1592
        %v5145 = vunpack.c.h.b16 %v1592
        %v5146 = vunpack.c.l.b16 %v1593
        %v5147 = vunpack.c.h.b16 %v1593
        %v5148 = vunpack.c.l.b16 %v1594
        %v5149 = vunpack.c.h.b16 %v1594
        %v5150 = vunpack.c.l.b16 %v1595
        %v5151 = vunpack.c.h.b16 %v1595
        %v5152 = vunpack.c.l.b16 %v1596
        %v5153 = vunpack.c.h.b16 %v1596
        %v5154 = vunpack.c.l.b16 %v1597
        %v5155 = vunpack.c.h.b16 %v1597
        %v5156 = vunpack.c.l.b16 %v1598
        %v5157 = vunpack.c.h.b16 %v1598
        %v5158 = vunpack.c.l.b16 %v1599
        %v5159 = vunpack.c.h.b16 %v1599
        %v5160 = vunpack.c.l.b16 %v1600
        %v5161 = vunpack.c.h.b16 %v1600
        %v5162 = vunpack.c.l.b16 %v1601
        %v5163 = vunpack.c.h.b16 %v1601
        %v5164 = vunpack.c.l.b16 %v1602
        %v5165 = vunpack.c.h.b16 %v1602
        %v5166 = vunpack.c.l.b16 %v1603
        %v5167 = vunpack.c.h.b16 %v1603
        %v5168 = vunpack.c.l.b16 %v1604
        %v5169 = vunpack.c.l.b16 %v1605
        %v5170 = vunpack.c.h.b16 %v1605
        %v5171 = vunpack.c.l.b16 %v1606
        %v5172 = vunpack.c.h.b16 %v1606
        %v5173 = vunpack.c.l.b16 %v1607
        %v5174 = vunpack.c.h.b16 %v1607
        %v5175 = vunpack.c.l.b16 %v1608
        %v5176 = vunpack.c.h.b16 %v1608
        %v5177 = vunpack.c.l.b16 %v1609
        %v5178 = vunpack.c.h.b16 %v1609
        %v5179 = vunpack.c.l.b16 %v1610
        %v5180 = vunpack.c.h.b16 %v1610
        %v5181 = vunpack.c.l.b16 %v1611
        %v5182 = vunpack.c.h.b16 %v1611
        %v5183 = vunpack.c.l.b16 %v1612
        %v5184 = vunpack.c.h.b16 %v1612
        %v5185 = vunpack.c.l.b16 %v1613
        %v5186 = vunpack.c.h.b16 %v1613
        %v5187 = vunpack.c.l.b16 %v1614
        %v5188 = vunpack.c.h.b16 %v1614
        %v5189 = vunpack.c.l.b16 %v1615
        %v5190 = vunpack.c.h.b16 %v1615
        %v5191 = vunpack.c.l.b16 %v1616
        %v5192 = vunpack.c.h.b16 %v1616
        %v5193 = vunpack.c.l.b16 %v1617
        %v5194 = vunpack.c.h.b16 %v1617
        %v5195 = vunpack.c.l.b16 %v1618
        %v5196 = vunpack.c.h.b16 %v1618
        %v5197 = vunpack.c.l.b16 %v1619
        %v5198 = vunpack.c.h.b16 %v1619
        %v5199 = vunpack.c.l.b16 %v1620
        %v5200 = vunpack.c.h.b16 %v1620
        %v5201 = vunpack.c.l.b16 %v1621
        %v5202 = vunpack.c.h.b16 %v1621
        %v5203 = vunpack.c.l.b16 %v1622
        %v5204 = vpack.c.b16 %v2999, %v2964
        %v5205 = vpack.c.b16 %v3000, %v2965
        %v5206 = vpack.c.b16 %v3001, %v2966
        %v5207 = vpack.c.b16 %v3002, %v2967
        %v5208 = vpack.c.b16 %v3003, %v2968
        %v5209 = vpack.c.b16 %v3004, %v2969
        %v5210 = vpack.c.b16 %v3005, %v2970
        %v5211 = vpack.c.b16 %v3006, %v2971
        %v5212 = vpack.c.b16 %v3007, %v2972
        %v5213 = vpack.c.b16 %v3008, %v2973
        %v5214 = vpack.c.b16 %v3009, %v2974
        %v5215 = vpack.c.b16 %v3010, %v2975
        %v5216 = vpack.c.b16 %v3011, %v2976
        %v5217 = vpack.c.b16 %v3012, %v2977
        %v5218 = vpack.c.b16 %v3013, %v2978
        %v5219 = vpack.c.b16 %v3014, %v2979
        %v5220 = vpack.c.b16 %v3015, %v2980
        %v5221 = vpack.c.b16 %v3016, %v2981
        %v5222 = vpack.c.b16 %v3017, %v2982
        %v5223 = vpack.c.b16 %v3018, %v2983
        %v5224 = vpack.c.b16 %v3019, %v2984
        %v5225 = vpack.c.b16 %v3020, %v2985
        %v5226 = vpack.c.b16 %v3021, %v2986
        %v5227 = vpack.c.b16 %v3022, %v2987
        %v5228 = vpack.c.b16 %v3023, %v2988
        %v5229 = vpack.c.b16 %v3024, %v2989
        %v5230 = vpack.c.b16 %v3025, %v2990
        %v5231 = vpack.c.b16 %v3026, %v2991
        %v5232 = vpack.c.b16 %v3027, %v2992
        %v5233 = vpack.c.b16 %v3028, %v2993
        %v5234 = vpack.c.b16 %v3029, %v2994
        %v5235 = vpack.c.b16 %v3030, %v2995
        %v5236 = vpack.c.b16 %v3031, %v2996
        %v5237 = vpack.c.b16 %v3032, %v2997
        %v5238 = vpack.c.b16 %v3033, %v2998
        %v5239 = vpack.c.b16 %v3069, %v3034
        %v5240 = vpack.c.b16 %v3070, %v3035
        %v5241 = vpack.c.b16 %v3071, %v3036
        %v5242 = vpack.c.b16 %v3072, %v3037
        %v5243 = vpack.c.b16 %v3073, %v3038
        %v5244 = vpack.c.b16 %v3074, %v3039
        %v5245 = vpack.c.b16 %v3075, %v3040
        %v5246 = vpack.c.b16 %v3076, %v3041
        %v5247 = vpack.c.b16 %v3077, %v3042
        %v5248 = vpack.c.b16 %v3078, %v3043
        %v5249 = vpack.c.b16 %v3079, %v3044
        %v5250 = vpack.c.b16 %v3080, %v3045
        %v5251 = vpack.c.b16 %v3081, %v3046
        %v5252 = vpack.c.b16 %v3082, %v3047
        %v5253 = vpack.c.b16 %v3083, %v3048
        %v5254 = vpack.c.b16 %v3084, %v3049
        %v5255 = vpack.c.b16 %v3085, %v3050
        %v5256 = vpack.c.b16 %v3086, %v3051
        %v5257 = vpack.c.b16 %v3087, %v3052
        %v5258 = vpack.c.b16 %v3088, %v3053
        %v5259 = vpack.c.b16 %v3089, %v3054
        %v5260 = vpack.c.b16 %v3090, %v3055
        %v5261 = vpack.c.b16 %v3091, %v3056
        %v5262 = vpack.c.b16 %v3092, %v3057
        %v5263 = vpack.c.b16 %v3093, %v3058
        %v5264 = vpack.c.b16 %v3094, %v3059
        %v5265 = vpack.c.b16 %v3095, %v3060
        %v5266 = vpack.c.b16 %v3096, %v3061
        %v5267 = vpack.c.b16 %v3097, %v3062
        %v5268 = vpack.c.b16 %v3098, %v3063
        %v5269 = vpack.c.b16 %v3099, %v3064
        %v5270 = vpack.c.b16 %v3100, %v3065
        %v5271 = vpack.c.b16 %v3101, %v3066
        %v5272 = vpack.c.b16 %v3102, %v3067
        %v5273 = vpack.c.b16 %v3103, %v3068
        %v5274 = vpack.c.b16 %v3139, %v3104
        %v5275 = vpack.c.b16 %v3140, %v3105
        %v5276 = vpack.c.b16 %v3141, %v3106
        %v5277 = vpack.c.b16 %v3142, %v3107
        %v5278 = vpack.c.b16 %v3143, %v3108
        %v5279 = vpack.c.b16 %v3144, %v3109
        %v5280 = vpack.c.b16 %v3145, %v3110
        %v5281 = vpack.c.b16 %v3146, %v3111
        %v5282 = vpack.c.b16 %v3147, %v3112
        %v5283 = vpack.c.b16 %v3148, %v3113
        %v5284 = vpack.c.b16 %v3149, %v3114
        %v5285 = vpack.c.b16 %v3150, %v3115
        %v5286 = vpack.c.b16 %v3151, %v3116
        %v5287 = vpack.c.b16 %v3152, %v3117
        %v5288 = vpack.c.b16 %v3153, %v3118
        %v5289 = vpack.c.b16 %v3154, %v3119
        %v5290 = vpack.c.b16 %v3155, %v3120
        %v5291 = vpack.c.b16 %v3156, %v3121
        %v5292 = vpack.c.b16 %v3157, %v3122
        %v5293 = vpack.c.b16 %v3158, %v3123
        %v5294 = vpack.c.b16 %v3159, %v3124
        %v5295 = vpack.c.b16 %v3160, %v3125
        %v5296 = vpack.c.b16 %v3161, %v3126
        %v5297 = vpack.c.b16 %v3162, %v3127
        %v5298 = vpack.c.b16 %v3163, %v3128
        %v5299 = vpack.c.b16 %v3164, %v3129
        %v5300 = vpack.c.b16 %v3165, %v3130
        %v5301 = vpack.c.b16 %v3166, %v3131
        %v5302 = vpack.c.b16 %v3167, %v3132
        %v5303 = vpack.c.b16 %v3168, %v3133
        %v5304 = vpack.c.b16 %v3169, %v3134
        %v5305 = vpack.c.b16 %v3170, %v3135
        %v5306 = vpack.c.b16 %v3171, %v3136
        %v5307 = vpack.c.b16 %v3172, %v3137
        %v5308 = vpack.c.b16 %v3173, %v3138
        %v5309 = vpack.c.b16 %v3209, %v3174
        %v5310 = vpack.c.b16 %v3210, %v3175
        %v5311 = vpack.c.b16 %v3211, %v3176
        %v5312 = vpack.c.b16 %v3212, %v3177
        %v5313 = vpack.c.b16 %v3213, %v3178
        %v5314 = vpack.c.b16 %v3214, %v3179
        %v5315 = vpack.c.b16 %v3215, %v3180
        %v5316 = vpack.c.b16 %v3216, %v3181
        %v5317 = vpack.c.b16 %v3217, %v3182
        %v5318 = vpack.c.b16 %v3218, %v3183
        %v5319 = vpack.c.b16 %v3219, %v3184
        %v5320 = vpack.c.b16 %v3220, %v3185
        %v5321 = vpack.c.b16 %v3221, %v3186
        %v5322 = vpack.c.b16 %v3222, %v3187
        %v5323 = vpack.c.b16 %v3223, %v3188
        %v5324 = vpack.c.b16 %v3224, %v3189
        %v5325 = vpack.c.b16 %v3225, %v3190
        %v5326 = vpack.c.b16 %v3226, %v3191
        %v5327 = vpack.c.b16 %v3227, %v3192
        %v5328 = vpack.c.b16 %v3228, %v3193
        %v5329 = vpack.c.b16 %v3229, %v3194
        %v5330 = vpack.c.b16 %v3230, %v3195
        %v5331 = vpack.c.b16 %v3231, %v3196
        %v5332 = vpack.c.b16 %v3232, %v3197
        %v5333 = vpack.c.b16 %v3233, %v3198
        %v5334 = vpack.c.b16 %v3234, %v3199
        %v5335 = vpack.c.b16 %v3235, %v3200
        %v5336 = vpack.c.b16 %v3236, %v3201
        %v5337 = vpack.c.b16 %v3237, %v3202
        %v5338 = vpack.c.b16 %v3238, %v3203
        %v5339 = vpack.c.b16 %v3239, %v3204
        %v5340 = vpack.c.b16 %v3240, %v3205
        %v5341 = vpack.c.b16 %v3241, %v3206
        %v5342 = vpack.c.b16 %v3242, %v3207
        %v5343 = vpack.c.b16 %v3243, %v3208
        %v5344 = vpack.c.b16 %v3279, %v3244
        %v5345 = vpack.c.b16 %v3280, %v3245
        %v5346 = vpack.c.b16 %v3281, %v3246
        %v5347 = vpack.c.b16 %v3282, %v3247
        %v5348 = vpack.c.b16 %v3283, %v3248
        %v5349 = vpack.c.b16 %v3284, %v3249
        %v5350 = vpack.c.b16 %v3285, %v3250
        %v5351 = vpack.c.b16 %v3286, %v3251
        %v5352 = vpack.c.b16 %v3287, %v3252
        %v5353 = vpack.c.b16 %v3288, %v3253
        %v5354 = vpack.c.b16 %v3289, %v3254
        %v5355 = vpack.c.b16 %v3290, %v3255
        %v5356 = vpack.c.b16 %v3291, %v3256
        %v5357 = vpack.c.b16 %v3292, %v3257
        %v5358 = vpack.c.b16 %v3293, %v3258
        %v5359 = vpack.c.b16 %v3294, %v3259
        %v5360 = vpack.c.b16 %v3295, %v3260
        %v5361 = vpack.c.b16 %v3296, %v3261
        %v5362 = vpack.c.b16 %v3297, %v3262
        %v5363 = vpack.c.b16 %v3298, %v3263
        %v5364 = vpack.c.b16 %v3299, %v3264
        %v5365 = vpack.c.b16 %v3300, %v3265
        %v5366 = vpack.c.b16 %v3301, %v3266
        %v5367 = vpack.c.b16 %v3302, %v3267
        %v5368 = vpack.c.b16 %v3303, %v3268
        %v5369 = vpack.c.b16 %v3304, %v3269
        %v5370 = vpack.c.b16 %v3305, %v3270
        %v5371 = vpack.c.b16 %v3306, %v3271
        %v5372 = vpack.c.b16 %v3307, %v3272
        %v5373 = vpack.c.b16 %v3308, %v3273
        %v5374 = vpack.c.b16 %v3309, %v3274
        %v5375 = vpack.c.b16 %v3310, %v3275
        %v5376 = vpack.c.b16 %v3311, %v3276
        %v5377 = vpack.c.b16 %v3312, %v3277
        %v5378 = vpack.c.b16 %v3313, %v3278
        %v5379 = vpack.c.b16 %v3349, %v3314
        %v5380 = vpack.c.b16 %v3350, %v3315
        %v5381 = vpack.c.b16 %v3351, %v3316
        %v5382 = vpack.c.b16 %v3352, %v3317
        %v5383 = vpack.c.b16 %v3353, %v3318
        %v5384 = vpack.c.b16 %v3354, %v3319
        %v5385 = vpack.c.b16 %v3355, %v3320
        %v5386 = vpack.c.b16 %v3356, %v3321
        %v5387 = vpack.c.b16 %v3357, %v3322
        %v5388 = vpack.c.b16 %v3358, %v3323
        %v5389 = vpack.c.b16 %v3359, %v3324
        %v5390 = vpack.c.b16 %v3360, %v3325
        %v5391 = vpack.c.b16 %v3361, %v3326
        %v5392 = vpack.c.b16 %v3362, %v3327
        %v5393 = vpack.c.b16 %v3363, %v3328
        %v5394 = vpack.c.b16 %v3364, %v3329
        %v5395 = vpack.c.b16 %v3365, %v3330
        %v5396 = vpack.c.b16 %v3366, %v3331
        %v5397 = vpack.c.b16 %v3367, %v3332
        %v5398 = vpack.c.b16 %v3368, %v3333
        %v5399 = vpack.c.b16 %v3369, %v3334
        %v5400 = vpack.c.b16 %v3370, %v3335
        %v5401 = vpack.c.b16 %v3371, %v3336
        %v5402 = vpack.c.b16 %v3372, %v3337
        %v5403 = vpack.c.b16 %v3373, %v3338
        %v5404 = vpack.c.b16 %v3374, %v3339
        %v5405 = vpack.c.b16 %v3375, %v3340
        %v5406 = vpack.c.b16 %v3376, %v3341
        %v5407 = vpack.c.b16 %v3377, %v3342
        %v5408 = vpack.c.b16 %v3378, %v3343
        %v5409 = vpack.c.b16 %v3379, %v3344
        %v5410 = vpack.c.b16 %v3380, %v3345
        %v5411 = vpack.c.b16 %v3381, %v3346
        %v5412 = vpack.c.b16 %v3382, %v3347
        %v5413 = vpack.c.b16 %v3383, %v3348
        %v5414 = vpack.c.b16 %v3419, %v3384
        %v5415 = vpack.c.b16 %v3420, %v3385
        %v5416 = vpack.c.b16 %v3421, %v3386
        %v5417 = vpack.c.b16 %v3422, %v3387
        %v5418 = vpack.c.b16 %v3423, %v3388
        %v5419 = vpack.c.b16 %v3424, %v3389
        %v5420 = vpack.c.b16 %v3425, %v3390
        %v5421 = vpack.c.b16 %v3426, %v3391
        %v5422 = vpack.c.b16 %v3427, %v3392
        %v5423 = vpack.c.b16 %v3428, %v3393
        %v5424 = vpack.c.b16 %v3429, %v3394
        %v5425 = vpack.c.b16 %v3430, %v3395
        %v5426 = vpack.c.b16 %v3431, %v3396
        %v5427 = vpack.c.b16 %v3432, %v3397
        %v5428 = vpack.c.b16 %v3433, %v3398
        %v5429 = vpack.c.b16 %v3434, %v3399
        %v5430 = vpack.c.b16 %v3435, %v3400
        %v5431 = vpack.c.b16 %v3436, %v3401
        %v5432 = vpack.c.b16 %v3437, %v3402
        %v5433 = vpack.c.b16 %v3438, %v3403
        %v5434 = vpack.c.b16 %v3439, %v3404
        %v5435 = vpack.c.b16 %v3440, %v3405
        %v5436 = vpack.c.b16 %v3441, %v3406
        %v5437 = vpack.c.b16 %v3442, %v3407
        %v5438 = vpack.c.b16 %v3443, %v3408
        %v5439 = vpack.c.b16 %v3444, %v3409
        %v5440 = vpack.c.b16 %v3445, %v3410
        %v5441 = vpack.c.b16 %v3446, %v3411
        %v5442 = vpack.c.b16 %v3447, %v3412
        %v5443 = vpack.c.b16 %v3448, %v3413
        %v5444 = vpack.c.b16 %v3449, %v3414
        %v5445 = vpack.c.b16 %v3450, %v3415
        %v5446 = vpack.c.b16 %v3451, %v3416
        %v5447 = vpack.c.b16 %v3452, %v3417
        %v5448 = vpack.c.b16 %v3453, %v3418
        %v5449 = vpack.c.b16 %v3489, %v3454
        %v5450 = vpack.c.b16 %v3490, %v3455
        %v5451 = vpack.c.b16 %v3491, %v3456
        %v5452 = vpack.c.b16 %v3492, %v3457
        %v5453 = vpack.c.b16 %v3493, %v3458
        %v5454 = vpack.c.b16 %v3494, %v3459
        %v5455 = vpack.c.b16 %v3495, %v3460
        %v5456 = vpack.c.b16 %v3496, %v3461
        %v5457 = vpack.c.b16 %v3497, %v3462
        %v5458 = vpack.c.b16 %v3498, %v3463
        %v5459 = vpack.c.b16 %v3499, %v3464
        %v5460 = vpack.c.b16 %v3500, %v3465
        %v5461 = vpack.c.b16 %v3501, %v3466
        %v5462 = vpack.c.b16 %v3502, %v3467
        %v5463 = vpack.c.b16 %v3503, %v3468
        %v5464 = vpack.c.b16 %v3504, %v3469
        %v5465 = vpack.c.b16 %v3505, %v3470
        %v5466 = vpack.c.b16 %v3506, %v3471
        %v5467 = vpack.c.b16 %v3507, %v3472
        %v5468 = vpack.c.b16 %v3508, %v3473
        %v5469 = vpack.c.b16 %v3509, %v3474
        %v5470 = vpack.c.b16 %v3510, %v3475
        %v5471 = vpack.c.b16 %v3511, %v3476
        %v5472 = vpack.c.b16 %v3512, %v3477
        %v5473 = vpack.c.b16 %v3513, %v3478
        %v5474 = vpack.c.b16 %v3514, %v3479
        %v5475 = vpack.c.b16 %v3515, %v3480
        %v5476 = vpack.c.b16 %v3516, %v3481
        %v5477 = vpack.c.b16 %v3517, %v3482
        %v5478 = vpack.c.b16 %v3518, %v3483
        %v5479 = vpack.c.b16 %v3519, %v3484
        %v5480 = vpack.c.b16 %v3520, %v3485
        %v5481 = vpack.c.b16 %v3521, %v3486
        %v5482 = vpack.c.b16 %v3522, %v3487
        %v5483 = vpack.c.b16 %v3523, %v3488
        %v5484 = vpack.c.b16 %v3559, %v3524
        %v5485 = vpack.c.b16 %v3560, %v3525
        %v5486 = vpack.c.b16 %v3561, %v3526
        %v5487 = vpack.c.b16 %v3562, %v3527
        %v5488 = vpack.c.b16 %v3563, %v3528
        %v5489 = vpack.c.b16 %v3564, %v3529
        %v5490 = vpack.c.b16 %v3565, %v3530
        %v5491 = vpack.c.b16 %v3566, %v3531
        %v5492 = vpack.c.b16 %v3567, %v3532
        %v5493 = vpack.c.b16 %v3568, %v3533
        %v5494 = vpack.c.b16 %v3569, %v3534
        %v5495 = vpack.c.b16 %v3570, %v3535
        %v5496 = vpack.c.b16 %v3571, %v3536
        %v5497 = vpack.c.b16 %v3572, %v3537
        %v5498 = vpack.c.b16 %v3573, %v3538
        %v5499 = vpack.c.b16 %v3574, %v3539
        %v5500 = vpack.c.b16 %v3575, %v3540
        %v5501 = vpack.c.b16 %v3576, %v3541
        %v5502 = vpack.c.b16 %v3577, %v3542
        %v5503 = vpack.c.b16 %v3578, %v3543
        %v5504 = vpack.c.b16 %v3579, %v3544
        %v5505 = vpack.c.b16 %v3580, %v3545
        %v5506 = vpack.c.b16 %v3581, %v3546
        %v5507 = vpack.c.b16 %v3582, %v3547
        %v5508 = vpack.c.b16 %v3583, %v3548
        %v5509 = vpack.c.b16 %v3584, %v3549
        %v5510 = vpack.c.b16 %v3585, %v3550
        %v5511 = vpack.c.b16 %v3586, %v3551
        %v5512 = vpack.c.b16 %v3587, %v3552
        %v5513 = vpack.c.b16 %v3588, %v3553
        %v5514 = vpack.c.b16 %v3589, %v3554
        %v5515 = vpack.c.b16 %v3590, %v3555
        %v5516 = vpack.c.b16 %v3591, %v3556
        %v5517 = vpack.c.b16 %v3592, %v3557
        %v5518 = vpack.c.b16 %v3593, %v3558
        %v5519 = vpack.c.b16 %v3629, %v3594
        %v5520 = vpack.c.b16 %v3630, %v3595
        %v5521 = vpack.c.b16 %v3631, %v3596
        %v5522 = vpack.c.b16 %v3632, %v3597
        %v5523 = vpack.c.b16 %v3633, %v3598
        %v5524 = vpack.c.b16 %v3634, %v3599
        %v5525 = vpack.c.b16 %v3635, %v3600
        %v5526 = vpack.c.b16 %v3636, %v3601
        %v5527 = vpack.c.b16 %v3637, %v3602
        %v5528 = vpack.c.b16 %v3638, %v3603
        %v5529 = vpack.c.b16 %v3639, %v3604
        %v5530 = vpack.c.b16 %v3640, %v3605
        %v5531 = vpack.c.b16 %v3641, %v3606
        %v5532 = vpack.c.b16 %v3642, %v3607
        %v5533 = vpack.c.b16 %v3643, %v3608
        %v5534 = vpack.c.b16 %v3644, %v3609
        %v5535 = vpack.c.b16 %v3645, %v3610
        %v5536 = vpack.c.b16 %v3646, %v3611
        %v5537 = vpack.c.b16 %v3647, %v3612
        %v5538 = vpack.c.b16 %v3648, %v3613
        %v5539 = vpack.c.b16 %v3649, %v3614
        %v5540 = vpack.c.b16 %v3650, %v3615
        %v5541 = vpack.c.b16 %v3651, %v3616
        %v5542 = vpack.c.b16 %v3652, %v3617
        %v5543 = vpack.c.b16 %v3653, %v3618
        %v5544 = vpack.c.b16 %v3654, %v3619
        %v5545 = vpack.c.b16 %v3655, %v3620
        %v5546 = vpack.c.b16 %v3656, %v3621
        %v5547 = vpack.c.b16 %v3657, %v3622
        %v5548 = vpack.c.b16 %v3658, %v3623
        %v5549 = vpack.c.b16 %v3659, %v3624
        %v5550 = vpack.c.b16 %v3660, %v3625
        %v5551 = vpack.c.b16 %v3661, %v3626
        %v5552 = vpack.c.b16 %v3662, %v3627
        %v5553 = vpack.c.b16 %v3663, %v3628
        %v5554 = vpack.c.b16 %v3699, %v3664
        %v5555 = vpack.c.b16 %v3700, %v3665
        %v5556 = vpack.c.b16 %v3701, %v3666
        %v5557 = vpack.c.b16 %v3702, %v3667
        %v5558 = vpack.c.b16 %v3703, %v3668
        %v5559 = vpack.c.b16 %v3704, %v3669
        %v5560 = vpack.c.b16 %v3705, %v3670
        %v5561 = vpack.c.b16 %v3706, %v3671
        %v5562 = vpack.c.b16 %v3707, %v3672
        %v5563 = vpack.c.b16 %v3708, %v3673
        %v5564 = vpack.c.b16 %v3709, %v3674
        %v5565 = vpack.c.b16 %v3710, %v3675
        %v5566 = vpack.c.b16 %v3711, %v3676
        %v5567 = vpack.c.b16 %v3712, %v3677
        %v5568 = vpack.c.b16 %v3713, %v3678
        %v5569 = vpack.c.b16 %v3714, %v3679
        %v5570 = vpack.c.b16 %v3715, %v3680
        %v5571 = vpack.c.b16 %v3716, %v3681
        %v5572 = vpack.c.b16 %v3717, %v3682
        %v5573 = vpack.c.b16 %v3718, %v3683
        %v5574 = vpack.c.b16 %v3719, %v3684
        %v5575 = vpack.c.b16 %v3720, %v3685
        %v5576 = vpack.c.b16 %v3721, %v3686
        %v5577 = vpack.c.b16 %v3722, %v3687
        %v5578 = vpack.c.b16 %v3723, %v3688
        %v5579 = vpack.c.b16 %v3724, %v3689
        %v5580 = vpack.c.b16 %v3725, %v3690
        %v5581 = vpack.c.b16 %v3726, %v3691
        %v5582 = vpack.c.b16 %v3727, %v3692
        %v5583 = vpack.c.b16 %v3728, %v3693
        %v5584 = vpack.c.b16 %v3729, %v3694
        %v5585 = vpack.c.b16 %v3730, %v3695
        %v5586 = vpack.c.b16 %v3731, %v3696
        %v5587 = vpack.c.b16 %v3732, %v3697
        %v5588 = vpack.c.b16 %v3733, %v3698
        %v5589 = vpack.c.b16 %v3769, %v3734
        %v5590 = vpack.c.b16 %v3770, %v3735
        %v5591 = vpack.c.b16 %v3771, %v3736
        %v5592 = vpack.c.b16 %v3772, %v3737
        %v5593 = vpack.c.b16 %v3773, %v3738
        %v5594 = vpack.c.b16 %v3774, %v3739
        %v5595 = vpack.c.b16 %v3775, %v3740
        %v5596 = vpack.c.b16 %v3776, %v3741
        %v5597 = vpack.c.b16 %v3777, %v3742
        %v5598 = vpack.c.b16 %v3778, %v3743
        %v5599 = vpack.c.b16 %v3779, %v3744
        %v5600 = vpack.c.b16 %v3780, %v3745
        %v5601 = vpack.c.b16 %v3781, %v3746
        %v5602 = vpack.c.b16 %v3782, %v3747
        %v5603 = vpack.c.b16 %v3783, %v3748
        %v5604 = vpack.c.b16 %v3784, %v3749
        %v5605 = vpack.c.b16 %v3785, %v3750
        %v5606 = vpack.c.b16 %v3786, %v3751
        %v5607 = vpack.c.b16 %v3787, %v3752
        %v5608 = vpack.c.b16 %v3788, %v3753
        %v5609 = vpack.c.b16 %v3789, %v3754
        %v5610 = vpack.c.b16 %v3790, %v3755
        %v5611 = vpack.c.b16 %v3791, %v3756
        %v5612 = vpack.c.b16 %v3792, %v3757
        %v5613 = vpack.c.b16 %v3793, %v3758
        %v5614 = vpack.c.b16 %v3794, %v3759
        %v5615 = vpack.c.b16 %v3795, %v3760
        %v5616 = vpack.c.b16 %v3796, %v3761
        %v5617 = vpack.c.b16 %v3797, %v3762
        %v5618 = vpack.c.b16 %v3798, %v3763
        %v5619 = vpack.c.b16 %v3799, %v3764
        %v5620 = vpack.c.b16 %v3800, %v3765
        %v5621 = vpack.c.b16 %v3801, %v3766
        %v5622 = vpack.c.b16 %v3802, %v3767
        %v5623 = vpack.c.b16 %v3803, %v3768
        %v5624 = vpack.c.b16 %v3839, %v3804
        %v5625 = vpack.c.b16 %v3840, %v3805
        %v5626 = vpack.c.b16 %v3841, %v3806
        %v5627 = vpack.c.b16 %v3842, %v3807
        %v5628 = vpack.c.b16 %v3843, %v3808
        %v5629 = vpack.c.b16 %v3844, %v3809
        %v5630 = vpack.c.b16 %v3845, %v3810
        %v5631 = vpack.c.b16 %v3846, %v3811
        %v5632 = vpack.c.b16 %v3847, %v3812
        %v5633 = vpack.c.b16 %v3848, %v3813
        %v5634 = vpack.c.b16 %v3849, %v3814
        %v5635 = vpack.c.b16 %v3850, %v3815
        %v5636 = vpack.c.b16 %v3851, %v3816
        %v5637 = vpack.c.b16 %v3852, %v3817
        %v5638 = vpack.c.b16 %v3853, %v3818
        %v5639 = vpack.c.b16 %v3854, %v3819
        %v5640 = vpack.c.b16 %v3855, %v3820
        %v5641 = vpack.c.b16 %v3856, %v3821
        %v5642 = vpack.c.b16 %v3857, %v3822
        %v5643 = vpack.c.b16 %v3858, %v3823
        %v5644 = vpack.c.b16 %v3859, %v3824
        %v5645 = vpack.c.b16 %v3860, %v3825
        %v5646 = vpack.c.b16 %v3861, %v3826
        %v5647 = vpack.c.b16 %v3862, %v3827
        %v5648 = vpack.c.b16 %v3863, %v3828
        %v5649 = vpack.c.b16 %v3864, %v3829
        %v5650 = vpack.c.b16 %v3865, %v3830
        %v5651 = vpack.c.b16 %v3866, %v3831
        %v5652 = vpack.c.b16 %v3867, %v3832
        %v5653 = vpack.c.b16 %v3868, %v3833
        %v5654 = vpack.c.b16 %v3869, %v3834
        %v5655 = vpack.c.b16 %v3870, %v3835
        %v5656 = vpack.c.b16 %v3871, %v3836
        %v5657 = vpack.c.b16 %v3872, %v3837
        %v5658 = vpack.c.b16 %v3873, %v3838
        %v5659 = vpack.c.b16 %v3909, %v3874
        %v5660 = vpack.c.b16 %v3910, %v3875
        %v5661 = vpack.c.b16 %v3911, %v3876
        %v5662 = vpack.c.b16 %v3912, %v3877
        %v5663 = vpack.c.b16 %v3913, %v3878
        %v5664 = vpack.c.b16 %v3914, %v3879
        %v5665 = vpack.c.b16 %v3915, %v3880
        %v5666 = vpack.c.b16 %v3916, %v3881
        %v5667 = vpack.c.b16 %v3917, %v3882
        %v5668 = vpack.c.b16 %v3918, %v3883
        %v5669 = vpack.c.b16 %v3919, %v3884
        %v5670 = vpack.c.b16 %v3920, %v3885
        %v5671 = vpack.c.b16 %v3921, %v3886
        %v5672 = vpack.c.b16 %v3922, %v3887
        %v5673 = vpack.c.b16 %v3923, %v3888
        %v5674 = vpack.c.b16 %v3924, %v3889
        %v5675 = vpack.c.b16 %v3925, %v3890
        %v5676 = vpack.c.b16 %v3926, %v3891
        %v5677 = vpack.c.b16 %v3927, %v3892
        %v5678 = vpack.c.b16 %v3928, %v3893
        %v5679 = vpack.c.b16 %v3929, %v3894
        %v5680 = vpack.c.b16 %v3930, %v3895
        %v5681 = vpack.c.b16 %v3931, %v3896
        %v5682 = vpack.c.b16 %v3932, %v3897
        %v5683 = vpack.c.b16 %v3933, %v3898
        %v5684 = vpack.c.b16 %v3934, %v3899
        %v5685 = vpack.c.b16 %v3935, %v3900
        %v5686 = vpack.c.b16 %v3936, %v3901
        %v5687 = vpack.c.b16 %v3937, %v3902
        %v5688 = vpack.c.b16 %v3938, %v3903
        %v5689 = vpack.c.b16 %v3939, %v3904
        %v5690 = vpack.c.b16 %v3940, %v3905
        %v5691 = vpack.c.b16 %v3941, %v3906
        %v5692 = vpack.c.b16 %v3942, %v3907
        %v5693 = vpack.c.b16 %v3943, %v3908
        %v5694 = vpack.c.b16 %v3979, %v3944
        %v5695 = vpack.c.b16 %v3980, %v3945
        %v5696 = vpack.c.b16 %v3981, %v3946
        %v5697 = vpack.c.b16 %v3982, %v3947
        %v5698 = vpack.c.b16 %v3983, %v3948
        %v5699 = vpack.c.b16 %v3984, %v3949
        %v5700 = vpack.c.b16 %v3985, %v3950
        %v5701 = vpack.c.b16 %v3986, %v3951
        %v5702 = vpack.c.b16 %v3987, %v3952
        %v5703 = vpack.c.b16 %v3988, %v3953
        %v5704 = vpack.c.b16 %v3989, %v3954
        %v5705 = vpack.c.b16 %v3990, %v3955
        %v5706 = vpack.c.b16 %v3991, %v3956
        %v5707 = vpack.c.b16 %v3992, %v3957
        %v5708 = vpack.c.b16 %v3993, %v3958
        %v5709 = vpack.c.b16 %v3994, %v3959
        %v5710 = vpack.c.b16 %v3995, %v3960
        %v5711 = vpack.c.b16 %v3996, %v3961
        %v5712 = vpack.c.b16 %v3997, %v3962
        %v5713 = vpack.c.b16 %v3998, %v3963
        %v5714 = vpack.c.b16 %v3999, %v3964
        %v5715 = vpack.c.b16 %v4000, %v3965
        %v5716 = vpack.c.b16 %v4001, %v3966
        %v5717 = vpack.c.b16 %v4002, %v3967
        %v5718 = vpack.c.b16 %v4003, %v3968
        %v5719 = vpack.c.b16 %v4004, %v3969
        %v5720 = vpack.c.b16 %v4005, %v3970
        %v5721 = vpack.c.b16 %v4006, %v3971
        %v5722 = vpack.c.b16 %v4007, %v3972
        %v5723 = vpack.c.b16 %v4008, %v3973
        %v5724 = vpack.c.b16 %v4009, %v3974
        %v5725 = vpack.c.b16 %v4010, %v3975
        %v5726 = vpack.c.b16 %v4011, %v3976
        %v5727 = vpack.c.b16 %v4012, %v3977
        %v5728 = vpack.c.b16 %v4013, %v3978
        %v5729 = vpack.c.b16 %v4049, %v4014
        %v5730 = vpack.c.b16 %v4050, %v4015
        %v5731 = vpack.c.b16 %v4051, %v4016
        %v5732 = vpack.c.b16 %v4052, %v4017
        %v5733 = vpack.c.b16 %v4053, %v4018
        %v5734 = vpack.c.b16 %v4054, %v4019
        %v5735 = vpack.c.b16 %v4055, %v4020
        %v5736 = vpack.c.b16 %v4056, %v4021
        %v5737 = vpack.c.b16 %v4057, %v4022
        %v5738 = vpack.c.b16 %v4058, %v4023
        %v5739 = vpack.c.b16 %v4059, %v4024
        %v5740 = vpack.c.b16 %v4060, %v4025
        %v5741 = vpack.c.b16 %v4061, %v4026
        %v5742 = vpack.c.b16 %v4062, %v4027
        %v5743 = vpack.c.b16 %v4063, %v4028
        %v5744 = vpack.c.b16 %v4064, %v4029
        %v5745 = vpack.c.b16 %v4065, %v4030
        %v5746 = vpack.c.b16 %v4066, %v4031
        %v5747 = vpack.c.b16 %v4067, %v4032
        %v5748 = vpack.c.b16 %v4068, %v4033
        %v5749 = vpack.c.b16 %v4069, %v4034
        %v5750 = vpack.c.b16 %v4070, %v4035
        %v5751 = vpack.c.b16 %v4071, %v4036
        %v5752 = vpack.c.b16 %v4072, %v4037
        %v5753 = vpack.c.b16 %v4073, %v4038
        %v5754 = vpack.c.b16 %v4074, %v4039
        %v5755 = vpack.c.b16 %v4075, %v4040
        %v5756 = vpack.c.b16 %v4076, %v4041
        %v5757 = vpack.c.b16 %v4077, %v4042
        %v5758 = vpack.c.b16 %v4078, %v4043
        %v5759 = vpack.c.b16 %v4079, %v4044
        %v5760 = vpack.c.b16 %v4080, %v4045
        %v5761 = vpack.c.b16 %v4081, %v4046
        %v5762 = vpack.c.b16 %v4082, %v4047
        %v5763 = vpack.c.b16 %v4083, %v4048
        %v5764 = vpack.c.b16 %v4119, %v4084
        %v5765 = vpack.c.b16 %v4120, %v4085
        %v5766 = vpack.c.b16 %v4121, %v4086
        %v5767 = vpack.c.b16 %v4122, %v4087
        %v5768 = vpack.c.b16 %v4123, %v4088
        %v5769 = vpack.c.b16 %v4124, %v4089
        %v5770 = vpack.c.b16 %v4125, %v4090
        %v5771 = vpack.c.b16 %v4126, %v4091
        %v5772 = vpack.c.b16 %v4127, %v4092
        %v5773 = vpack.c.b16 %v4128, %v4093
        %v5774 = vpack.c.b16 %v4129, %v4094
        %v5775 = vpack.c.b16 %v4130, %v4095
        %v5776 = vpack.c.b16 %v4131, %v4096
        %v5777 = vpack.c.b16 %v4132, %v4097
        %v5778 = vpack.c.b16 %v4133, %v4098
        %v5779 = vpack.c.b16 %v4134, %v4099
        %v5780 = vpack.c.b16 %v4135, %v4100
        %v5781 = vpack.c.b16 %v4136, %v4101
        %v5782 = vpack.c.b16 %v4137, %v4102
        %v5783 = vpack.c.b16 %v4138, %v4103
        %v5784 = vpack.c.b16 %v4139, %v4104
        %v5785 = vpack.c.b16 %v4140, %v4105
        %v5786 = vpack.c.b16 %v4141, %v4106
        %v5787 = vpack.c.b16 %v4142, %v4107
        %v5788 = vpack.c.b16 %v4143, %v4108
        %v5789 = vpack.c.b16 %v4144, %v4109
        %v5790 = vpack.c.b16 %v4145, %v4110
        %v5791 = vpack.c.b16 %v4146, %v4111
        %v5792 = vpack.c.b16 %v4147, %v4112
        %v5793 = vpack.c.b16 %v4148, %v4113
        %v5794 = vpack.c.b16 %v4149, %v4114
        %v5795 = vpack.c.b16 %v4150, %v4115
        %v5796 = vpack.c.b16 %v4151, %v4116
        %v5797 = vpack.c.b16 %v4152, %v4117
        %v5798 = vpack.c.b16 %v4153, %v4118
        %v5799 = vpack.c.b16 %v4189, %v4154
        %v5800 = vpack.c.b16 %v4190, %v4155
        %v5801 = vpack.c.b16 %v4191, %v4156
        %v5802 = vpack.c.b16 %v4192, %v4157
        %v5803 = vpack.c.b16 %v4193, %v4158
        %v5804 = vpack.c.b16 %v4194, %v4159
        %v5805 = vpack.c.b16 %v4195, %v4160
        %v5806 = vpack.c.b16 %v4196, %v4161
        %v5807 = vpack.c.b16 %v4197, %v4162
        %v5808 = vpack.c.b16 %v4198, %v4163
        %v5809 = vpack.c.b16 %v4199, %v4164
        %v5810 = vpack.c.b16 %v4200, %v4165
        %v5811 = vpack.c.b16 %v4201, %v4166
        %v5812 = vpack.c.b16 %v4202, %v4167
        %v5813 = vpack.c.b16 %v4203, %v4168
        %v5814 = vpack.c.b16 %v4204, %v4169
        %v5815 = vpack.c.b16 %v4205, %v4170
        %v5816 = vpack.c.b16 %v4206, %v4171
        %v5817 = vpack.c.b16 %v4207, %v4172
        %v5818 = vpack.c.b16 %v4208, %v4173
        %v5819 = vpack.c.b16 %v4209, %v4174
        %v5820 = vpack.c.b16 %v4210, %v4175
        %v5821 = vpack.c.b16 %v4211, %v4176
        %v5822 = vpack.c.b16 %v4212, %v4177
        %v5823 = vpack.c.b16 %v4213, %v4178
        %v5824 = vpack.c.b16 %v4214, %v4179
        %v5825 = vpack.c.b16 %v4215, %v4180
        %v5826 = vpack.c.b16 %v4216, %v4181
        %v5827 = vpack.c.b16 %v4217, %v4182
        %v5828 = vpack.c.b16 %v4218, %v4183
        %v5829 = vpack.c.b16 %v4219, %v4184
        %v5830 = vpack.c.b16 %v4220, %v4185
        %v5831 = vpack.c.b16 %v4221, %v4186
        %v5832 = vpack.c.b16 %v4222, %v4187
        %v5833 = vpack.c.b16 %v4223, %v4188
        %v5834 = vpack.c.b16 %v4259, %v4224
        %v5835 = vpack.c.b16 %v4260, %v4225
        %v5836 = vpack.c.b16 %v4261, %v4226
        %v5837 = vpack.c.b16 %v4262, %v4227
        %v5838 = vpack.c.b16 %v4263, %v4228
        %v5839 = vpack.c.b16 %v4264, %v4229
        %v5840 = vpack.c.b16 %v4265, %v4230
        %v5841 = vpack.c.b16 %v4266, %v4231
        %v5842 = vpack.c.b16 %v4267, %v4232
        %v5843 = vpack.c.b16 %v4268, %v4233
        %v5844 = vpack.c.b16 %v4269, %v4234
        %v5845 = vpack.c.b16 %v4270, %v4235
        %v5846 = vpack.c.b16 %v4271, %v4236
        %v5847 = vpack.c.b16 %v4272, %v4237
        %v5848 = vpack.c.b16 %v4273, %v4238
        %v5849 = vpack.c.b16 %v4274, %v4239
        %v5850 = vpack.c.b16 %v4275, %v4240
        %v5851 = vpack.c.b16 %v4276, %v4241
        %v5852 = vpack.c.b16 %v4277, %v4242
        %v5853 = vpack.c.b16 %v4278, %v4243
        %v5854 = vpack.c.b16 %v4279, %v4244
        %v5855 = vpack.c.b16 %v4280, %v4245
        %v5856 = vpack.c.b16 %v4281, %v4246
        %v5857 = vpack.c.b16 %v4282, %v4247
        %v5858 = vpack.c.b16 %v4283, %v4248
        %v5859 = vpack.c.b16 %v4284, %v4249
        %v5860 = vpack.c.b16 %v4285, %v4250
        %v5861 = vpack.c.b16 %v4286, %v4251
        %v5862 = vpack.c.b16 %v4287, %v4252
        %v5863 = vpack.c.b16 %v4288, %v4253
        %v5864 = vpack.c.b16 %v4289, %v4254
        %v5865 = vpack.c.b16 %v4290, %v4255
        %v5866 = vpack.c.b16 %v4291, %v4256
        %v5867 = vpack.c.b16 %v4292, %v4257
        %v5868 = vpack.c.b16 %v4293, %v4258
        %v5869 = vpack.c.b16 %v4329, %v4294
        %v5870 = vpack.c.b16 %v4330, %v4295
        %v5871 = vpack.c.b16 %v4331, %v4296
        %v5872 = vpack.c.b16 %v4332, %v4297
        %v5873 = vpack.c.b16 %v4333, %v4298
        %v5874 = vpack.c.b16 %v4334, %v4299
        %v5875 = vpack.c.b16 %v4335, %v4300
        %v5876 = vpack.c.b16 %v4336, %v4301
        %v5877 = vpack.c.b16 %v4337, %v4302
        %v5878 = vpack.c.b16 %v4338, %v4303
        %v5879 = vpack.c.b16 %v4339, %v4304
        %v5880 = vpack.c.b16 %v4340, %v4305
        %v5881 = vpack.c.b16 %v4341, %v4306
        %v5882 = vpack.c.b16 %v4342, %v4307
        %v5883 = vpack.c.b16 %v4343, %v4308
        %v5884 = vpack.c.b16 %v4344, %v4309
        %v5885 = vpack.c.b16 %v4345, %v4310
        %v5886 = vpack.c.b16 %v4346, %v4311
        %v5887 = vpack.c.b16 %v4347, %v4312
        %v5888 = vpack.c.b16 %v4348, %v4313
        %v5889 = vpack.c.b16 %v4349, %v4314
        %v5890 = vpack.c.b16 %v4350, %v4315
        %v5891 = vpack.c.b16 %v4351, %v4316
        %v5892 = vpack.c.b16 %v4352, %v4317
        %v5893 = vpack.c.b16 %v4353, %v4318
        %v5894 = vpack.c.b16 %v4354, %v4319
        %v5895 = vpack.c.b16 %v4355, %v4320
        %v5896 = vpack.c.b16 %v4356, %v4321
        %v5897 = vpack.c.b16 %v4357, %v4322
        %v5898 = vpack.c.b16 %v4358, %v4323
        %v5899 = vpack.c.b16 %v4359, %v4324
        %v5900 = vpack.c.b16 %v4360, %v4325
        %v5901 = vpack.c.b16 %v4361, %v4326
        %v5902 = vpack.c.b16 %v4362, %v4327
        %v5903 = vpack.c.b16 %v4363, %v4328
        %v5904 = vpack.c.b16 %v4399, %v4364
        %v5905 = vpack.c.b16 %v4400, %v4365
        %v5906 = vpack.c.b16 %v4401, %v4366
        %v5907 = vpack.c.b16 %v4402, %v4367
        %v5908 = vpack.c.b16 %v4403, %v4368
        %v5909 = vpack.c.b16 %v4404, %v4369
        %v5910 = vpack.c.b16 %v4405, %v4370
        %v5911 = vpack.c.b16 %v4406, %v4371
        %v5912 = vpack.c.b16 %v4407, %v4372
        %v5913 = vpack.c.b16 %v4408, %v4373
        %v5914 = vpack.c.b16 %v4409, %v4374
        %v5915 = vpack.c.b16 %v4410, %v4375
        %v5916 = vpack.c.b16 %v4411, %v4376
        %v5917 = vpack.c.b16 %v4412, %v4377
        %v5918 = vpack.c.b16 %v4413, %v4378
        %v5919 = vpack.c.b16 %v4414, %v4379
        %v5920 = vpack.c.b16 %v4415, %v4380
        %v5921 = vpack.c.b16 %v4416, %v4381
        %v5922 = vpack.c.b16 %v4417, %v4382
        %v5923 = vpack.c.b16 %v4418, %v4383
        %v5924 = vpack.c.b16 %v4419, %v4384
        %v5925 = vpack.c.b16 %v4420, %v4385
        %v5926 = vpack.c.b16 %v4421, %v4386
        %v5927 = vpack.c.b16 %v4422, %v4387
        %v5928 = vpack.c.b16 %v4423, %v4388
        %v5929 = vpack.c.b16 %v4424, %v4389
        %v5930 = vpack.c.b16 %v4425, %v4390
        %v5931 = vpack.c.b16 %v4426, %v4391
        %v5932 = vpack.c.b16 %v4427, %v4392
        %v5933 = vpack.c.b16 %v4428, %v4393
        %v5934 = vpack.c.b16 %v4429, %v4394
        %v5935 = vpack.c.b16 %v4430, %v4395
        %v5936 = vpack.c.b16 %v4431, %v4396
        %v5937 = vpack.c.b16 %v4432, %v4397
        %v5938 = vpack.c.b16 %v4433, %v4398
        %v5939 = vpack.c.b16 %v4469, %v4434
        %v5940 = vpack.c.b16 %v4470, %v4435
        %v5941 = vpack.c.b16 %v4471, %v4436
        %v5942 = vpack.c.b16 %v4472, %v4437
        %v5943 = vpack.c.b16 %v4473, %v4438
        %v5944 = vpack.c.b16 %v4474, %v4439
        %v5945 = vpack.c.b16 %v4475, %v4440
        %v5946 = vpack.c.b16 %v4476, %v4441
        %v5947 = vpack.c.b16 %v4477, %v4442
        %v5948 = vpack.c.b16 %v4478, %v4443
        %v5949 = vpack.c.b16 %v4479, %v4444
        %v5950 = vpack.c.b16 %v4480, %v4445
        %v5951 = vpack.c.b16 %v4481, %v4446
        %v5952 = vpack.c.b16 %v4482, %v4447
        %v5953 = vpack.c.b16 %v4483, %v4448
        %v5954 = vpack.c.b16 %v4484, %v4449
        %v5955 = vpack.c.b16 %v4485, %v4450
        %v5956 = vpack.c.b16 %v4486, %v4451
        %v5957 = vpack.c.b16 %v4487, %v4452
        %v5958 = vpack.c.b16 %v4488, %v4453
        %v5959 = vpack.c.b16 %v4489, %v4454
        %v5960 = vpack.c.b16 %v4490, %v4455
        %v5961 = vpack.c.b16 %v4491, %v4456
        %v5962 = vpack.c.b16 %v4492, %v4457
        %v5963 = vpack.c.b16 %v4493, %v4458
        %v5964 = vpack.c.b16 %v4494, %v4459
        %v5965 = vpack.c.b16 %v4495, %v4460
        %v5966 = vpack.c.b16 %v4496, %v4461
        %v5967 = vpack.c.b16 %v4497, %v4462
        %v5968 = vpack.c.b16 %v4498, %v4463
        %v5969 = vpack.c.b16 %v4499, %v4464
        %v5970 = vpack.c.b16 %v4500, %v4465
        %v5971 = vpack.c.b16 %v4501, %v4466
        %v5972 = vpack.c.b16 %v4502, %v4467
        %v5973 = vpack.c.b16 %v4503, %v4468
        %v5974 = vpack.c.b16 %v4539, %v4504
        %v5975 = vpack.c.b16 %v4540, %v4505
        %v5976 = vpack.c.b16 %v4541, %v4506
        %v5977 = vpack.c.b16 %v4542, %v4507
        %v5978 = vpack.c.b16 %v4543, %v4508
        %v5979 = vpack.c.b16 %v4544, %v4509
        %v5980 = vpack.c.b16 %v4545, %v4510
        %v5981 = vpack.c.b16 %v4546, %v4511
        %v5982 = vpack.c.b16 %v4547, %v4512
        %v5983 = vpack.c.b16 %v4548, %v4513
        %v5984 = vpack.c.b16 %v4549, %v4514
        %v5985 = vpack.c.b16 %v4550, %v4515
        %v5986 = vpack.c.b16 %v4551, %v4516
        %v5987 = vpack.c.b16 %v4552, %v4517
        %v5988 = vpack.c.b16 %v4553, %v4518
        %v5989 = vpack.c.b16 %v4554, %v4519
        %v5990 = vpack.c.b16 %v4555, %v4520
        %v5991 = vpack.c.b16 %v4556, %v4521
        %v5992 = vpack.c.b16 %v4557, %v4522
        %v5993 = vpack.c.b16 %v4558, %v4523
        %v5994 = vpack.c.b16 %v4559, %v4524
        %v5995 = vpack.c.b16 %v4560, %v4525
        %v5996 = vpack.c.b16 %v4561, %v4526
        %v5997 = vpack.c.b16 %v4562, %v4527
        %v5998 = vpack.c.b16 %v4563, %v4528
        %v5999 = vpack.c.b16 %v4564, %v4529
        %v6000 = vpack.c.b16 %v4565, %v4530
        %v6001 = vpack.c.b16 %v4566, %v4531
        %v6002 = vpack.c.b16 %v4567, %v4532
        %v6003 = vpack.c.b16 %v4568, %v4533
        %v6004 = vpack.c.b16 %v4569, %v4534
        %v6005 = vpack.c.b16 %v4570, %v4535
        %v6006 = vpack.c.b16 %v4571, %v4536
        %v6007 = vpack.c.b16 %v4572, %v4537
        %v6008 = vpack.c.b16 %v4573, %v4538
        %v6009 = vpack.c.b16 %v4609, %v4574
        %v6010 = vpack.c.b16 %v4610, %v4575
        %v6011 = vpack.c.b16 %v4611, %v4576
        %v6012 = vpack.c.b16 %v4612, %v4577
        %v6013 = vpack.c.b16 %v4613, %v4578
        %v6014 = vpack.c.b16 %v4614, %v4579
        %v6015 = vpack.c.b16 %v4615, %v4580
        %v6016 = vpack.c.b16 %v4616, %v4581
        %v6017 = vpack.c.b16 %v4617, %v4582
        %v6018 = vpack.c.b16 %v4618, %v4583
        %v6019 = vpack.c.b16 %v4619, %v4584
        %v6020 = vpack.c.b16 %v4620, %v4585
        %v6021 = vpack.c.b16 %v4621, %v4586
        %v6022 = vpack.c.b16 %v4622, %v4587
        %v6023 = vpack.c.b16 %v4623, %v4588
        %v6024 = vpack.c.b16 %v4624, %v4589
        %v6025 = vpack.c.b16 %v4625, %v4590
        %v6026 = vpack.c.b16 %v4626, %v4591
        %v6027 = vpack.c.b16 %v4627, %v4592
        %v6028 = vpack.c.b16 %v4628, %v4593
        %v6029 = vpack.c.b16 %v4629, %v4594
        %v6030 = vpack.c.b16 %v4630, %v4595
        %v6031 = vpack.c.b16 %v4631, %v4596
        %v6032 = vpack.c.b16 %v4632, %v4597
        %v6033 = vpack.c.b16 %v4633, %v4598
        %v6034 = vpack.c.b16 %v4634, %v4599
        %v6035 = vpack.c.b16 %v4635, %v4600
        %v6036 = vpack.c.b16 %v4636, %v4601
        %v6037 = vpack.c.b16 %v4637, %v4602
        %v6038 = vpack.c.b16 %v4638, %v4603
        %v6039 = vpack.c.b16 %v4639, %v4604
        %v6040 = vpack.c.b16 %v4640, %v4605
        %v6041 = vpack.c.b16 %v4641, %v4606
        %v6042 = vpack.c.b16 %v4642, %v4607
        %v6043 = vpack.c.b16 %v4643, %v4608
        %v6044 = vpack.c.b16 %v4679, %v4644
        %v6045 = vpack.c.b16 %v4680, %v4645
        %v6046 = vpack.c.b16 %v4681, %v4646
        %v6047 = vpack.c.b16 %v4682, %v4647
        %v6048 = vpack.c.b16 %v4683, %v4648
        %v6049 = vpack.c.b16 %v4684, %v4649
        %v6050 = vpack.c.b16 %v4685, %v4650
        %v6051 = vpack.c.b16 %v4686, %v4651
        %v6052 = vpack.c.b16 %v4687, %v4652
        %v6053 = vpack.c.b16 %v4688, %v4653
        %v6054 = vpack.c.b16 %v4689, %v4654
        %v6055 = vpack.c.b16 %v4690, %v4655
        %v6056 = vpack.c.b16 %v4691, %v4656
        %v6057 = vpack.c.b16 %v4692, %v4657
        %v6058 = vpack.c.b16 %v4693, %v4658
        %v6059 = vpack.c.b16 %v4694, %v4659
        %v6060 = vpack.c.b16 %v4695, %v4660
        %v6061 = vpack.c.b16 %v4696, %v4661
        %v6062 = vpack.c.b16 %v4697, %v4662
        %v6063 = vpack.c.b16 %v4698, %v4663
        %v6064 = vpack.c.b16 %v4699, %v4664
        %v6065 = vpack.c.b16 %v4700, %v4665
        %v6066 = vpack.c.b16 %v4701, %v4666
        %v6067 = vpack.c.b16 %v4702, %v4667
        %v6068 = vpack.c.b16 %v4703, %v4668
        %v6069 = vpack.c.b16 %v4704, %v4669
        %v6070 = vpack.c.b16 %v4705, %v4670
        %v6071 = vpack.c.b16 %v4706, %v4671
        %v6072 = vpack.c.b16 %v4707, %v4672
        %v6073 = vpack.c.b16 %v4708, %v4673
        %v6074 = vpack.c.b16 %v4709, %v4674
        %v6075 = vpack.c.b16 %v4710, %v4675
        %v6076 = vpack.c.b16 %v4711, %v4676
        %v6077 = vpack.c.b16 %v4712, %v4677
        %v6078 = vpack.c.b16 %v4713, %v4678
        %v6079 = vpack.c.b16 %v4749, %v4714
        %v6080 = vpack.c.b16 %v4750, %v4715
        %v6081 = vpack.c.b16 %v4751, %v4716
        %v6082 = vpack.c.b16 %v4752, %v4717
        %v6083 = vpack.c.b16 %v4753, %v4718
        %v6084 = vpack.c.b16 %v4754, %v4719
        %v6085 = vpack.c.b16 %v4755, %v4720
        %v6086 = vpack.c.b16 %v4756, %v4721
        %v6087 = vpack.c.b16 %v4757, %v4722
        %v6088 = vpack.c.b16 %v4758, %v4723
        %v6089 = vpack.c.b16 %v4759, %v4724
        %v6090 = vpack.c.b16 %v4760, %v4725
        %v6091 = vpack.c.b16 %v4761, %v4726
        %v6092 = vpack.c.b16 %v4762, %v4727
        %v6093 = vpack.c.b16 %v4763, %v4728
        %v6094 = vpack.c.b16 %v4764, %v4729
        %v6095 = vpack.c.b16 %v4765, %v4730
        %v6096 = vpack.c.b16 %v4766, %v4731
        %v6097 = vpack.c.b16 %v4767, %v4732
        %v6098 = vpack.c.b16 %v4768, %v4733
        %v6099 = vpack.c.b16 %v4769, %v4734
        %v6100 = vpack.c.b16 %v4770, %v4735
        %v6101 = vpack.c.b16 %v4771, %v4736
        %v6102 = vpack.c.b16 %v4772, %v4737
        %v6103 = vpack.c.b16 %v4773, %v4738
        %v6104 = vpack.c.b16 %v4774, %v4739
        %v6105 = vpack.c.b16 %v4775, %v4740
        %v6106 = vpack.c.b16 %v4776, %v4741
        %v6107 = vpack.c.b16 %v4777, %v4742
        %v6108 = vpack.c.b16 %v4778, %v4743
        %v6109 = vpack.c.b16 %v4779, %v4744
        %v6110 = vpack.c.b16 %v4780, %v4745
        %v6111 = vpack.c.b16 %v4781, %v4746
        %v6112 = vpack.c.b16 %v4782, %v4747
        %v6113 = vpack.c.b16 %v4783, %v4748
        %v6114 = vpack.c.b16 %v4819, %v4784
        %v6115 = vpack.c.b16 %v4820, %v4785
        %v6116 = vpack.c.b16 %v4821, %v4786
        %v6117 = vpack.c.b16 %v4822, %v4787
        %v6118 = vpack.c.b16 %v4823, %v4788
        %v6119 = vpack.c.b16 %v4824, %v4789
        %v6120 = vpack.c.b16 %v4825, %v4790
        %v6121 = vpack.c.b16 %v4826, %v4791
        %v6122 = vpack.c.b16 %v4827, %v4792
        %v6123 = vpack.c.b16 %v4828, %v4793
        %v6124 = vpack.c.b16 %v4829, %v4794
        %v6125 = vpack.c.b16 %v4830, %v4795
        %v6126 = vpack.c.b16 %v4831, %v4796
        %v6127 = vpack.c.b16 %v4832, %v4797
        %v6128 = vpack.c.b16 %v4833, %v4798
        %v6129 = vpack.c.b16 %v4834, %v4799
        %v6130 = vpack.c.b16 %v4835, %v4800
        %v6131 = vpack.c.b16 %v4836, %v4801
        %v6132 = vpack.c.b16 %v4837, %v4802
        %v6133 = vpack.c.b16 %v4838, %v4803
        %v6134 = vpack.c.b16 %v4839, %v4804
        %v6135 = vpack.c.b16 %v4840, %v4805
        %v6136 = vpack.c.b16 %v4841, %v4806
        %v6137 = vpack.c.b16 %v4842, %v4807
        %v6138 = vpack.c.b16 %v4843, %v4808
        %v6139 = vpack.c.b16 %v4844, %v4809
        %v6140 = vpack.c.b16 %v4845, %v4810
        %v6141 = vpack.c.b16 %v4846, %v4811
        %v6142 = vpack.c.b16 %v4847, %v4812
        %v6143 = vpack.c.b16 %v4848, %v4813
        %v6144 = vpack.c.b16 %v4849, %v4814
        %v6145 = vpack.c.b16 %v4850, %v4815
        %v6146 = vpack.c.b16 %v4851, %v4816
        %v6147 = vpack.c.b16 %v4852, %v4817
        %v6148 = vpack.c.b16 %v4853, %v4818
        %v6149 = vpack.c.b16 %v4889, %v4854
        %v6150 = vpack.c.b16 %v4890, %v4855
        %v6151 = vpack.c.b16 %v4891, %v4856
        %v6152 = vpack.c.b16 %v4892, %v4857
        %v6153 = vpack.c.b16 %v4893, %v4858
        %v6154 = vpack.c.b16 %v4894, %v4859
        %v6155 = vpack.c.b16 %v4895, %v4860
        %v6156 = vpack.c.b16 %v4896, %v4861
        %v6157 = vpack.c.b16 %v4897, %v4862
        %v6158 = vpack.c.b16 %v4898, %v4863
        %v6159 = vpack.c.b16 %v4899, %v4864
        %v6160 = vpack.c.b16 %v4900, %v4865
        %v6161 = vpack.c.b16 %v4901, %v4866
        %v6162 = vpack.c.b16 %v4902, %v4867
        %v6163 = vpack.c.b16 %v4903, %v4868
        %v6164 = vpack.c.b16 %v4904, %v4869
        %v6165 = vpack.c.b16 %v4905, %v4870
        %v6166 = vpack.c.b16 %v4906, %v4871
        %v6167 = vpack.c.b16 %v4907, %v4872
        %v6168 = vpack.c.b16 %v4908, %v4873
        %v6169 = vpack.c.b16 %v4909, %v4874
        %v6170 = vpack.c.b16 %v4910, %v4875
        %v6171 = vpack.c.b16 %v4911, %v4876
        %v6172 = vpack.c.b16 %v4912, %v4877
        %v6173 = vpack.c.b16 %v4913, %v4878
        %v6174 = vpack.c.b16 %v4914, %v4879
        %v6175 = vpack.c.b16 %v4915, %v4880
        %v6176 = vpack.c.b16 %v4916, %v4881
        %v6177 = vpack.c.b16 %v4917, %v4882
        %v6178 = vpack.c.b16 %v4918, %v4883
        %v6179 = vpack.c.b16 %v4919, %v4884
        %v6180 = vpack.c.b16 %v4920, %v4885
        %v6181 = vpack.c.b16 %v4921, %v4886
        %v6182 = vpack.c.b16 %v4922, %v4887
        %v6183 = vpack.c.b16 %v4923, %v4888
        %v6184 = vpack.c.b16 %v4959, %v4924
        %v6185 = vpack.c.b16 %v4960, %v4925
        %v6186 = vpack.c.b16 %v4961, %v4926
        %v6187 = vpack.c.b16 %v4962, %v4927
        %v6188 = vpack.c.b16 %v4963, %v4928
        %v6189 = vpack.c.b16 %v4964, %v4929
        %v6190 = vpack.c.b16 %v4965, %v4930
        %v6191 = vpack.c.b16 %v4966, %v4931
        %v6192 = vpack.c.b16 %v4967, %v4932
        %v6193 = vpack.c.b16 %v4968, %v4933
        %v6194 = vpack.c.b16 %v4969, %v4934
        %v6195 = vpack.c.b16 %v4970, %v4935
        %v6196 = vpack.c.b16 %v4971, %v4936
        %v6197 = vpack.c.b16 %v4972, %v4937
        %v6198 = vpack.c.b16 %v4973, %v4938
        %v6199 = vpack.c.b16 %v4974, %v4939
        %v6200 = vpack.c.b16 %v4975, %v4940
        %v6201 = vpack.c.b16 %v4976, %v4941
        %v6202 = vpack.c.b16 %v4977, %v4942
        %v6203 = vpack.c.b16 %v4978, %v4943
        %v6204 = vpack.c.b16 %v4979, %v4944
        %v6205 = vpack.c.b16 %v4980, %v4945
        %v6206 = vpack.c.b16 %v4981, %v4946
        %v6207 = vpack.c.b16 %v4982, %v4947
        %v6208 = vpack.c.b16 %v4983, %v4948
        %v6209 = vpack.c.b16 %v4984, %v4949
        %v6210 = vpack.c.b16 %v4985, %v4950
        %v6211 = vpack.c.b16 %v4986, %v4951
        %v6212 = vpack.c.b16 %v4987, %v4952
        %v6213 = vpack.c.b16 %v4988, %v4953
        %v6214 = vpack.c.b16 %v4989, %v4954
        %v6215 = vpack.c.b16 %v4990, %v4955
        %v6216 = vpack.c.b16 %v4991, %v4956
        %v6217 = vpack.c.b16 %v4992, %v4957
        %v6218 = vpack.c.b16 %v4993, %v4958
        %v6219 = vpack.c.b16 %v5029, %v4994
        %v6220 = vpack.c.b16 %v5030, %v4995
        %v6221 = vpack.c.b16 %v5031, %v4996
        %v6222 = vpack.c.b16 %v5032, %v4997
        %v6223 = vpack.c.b16 %v5033, %v4998
        %v6224 = vpack.c.b16 %v5034, %v4999
        %v6225 = vpack.c.b16 %v5035, %v5000
        %v6226 = vpack.c.b16 %v5036, %v5001
        %v6227 = vpack.c.b16 %v5037, %v5002
        %v6228 = vpack.c.b16 %v5038, %v5003
        %v6229 = vpack.c.b16 %v5039, %v5004
        %v6230 = vpack.c.b16 %v5040, %v5005
        %v6231 = vpack.c.b16 %v5041, %v5006
        %v6232 = vpack.c.b16 %v5042, %v5007
        %v6233 = vpack.c.b16 %v5043, %v5008
        %v6234 = vpack.c.b16 %v5044, %v5009
        %v6235 = vpack.c.b16 %v5045, %v5010
        %v6236 = vpack.c.b16 %v5046, %v5011
        %v6237 = vpack.c.b16 %v5047, %v5012
        %v6238 = vpack.c.b16 %v5048, %v5013
        %v6239 = vpack.c.b16 %v5049, %v5014
        %v6240 = vpack.c.b16 %v5050, %v5015
        %v6241 = vpack.c.b16 %v5051, %v5016
        %v6242 = vpack.c.b16 %v5052, %v5017
        %v6243 = vpack.c.b16 %v5053, %v5018
        %v6244 = vpack.c.b16 %v5054, %v5019
        %v6245 = vpack.c.b16 %v5055, %v5020
        %v6246 = vpack.c.b16 %v5056, %v5021
        %v6247 = vpack.c.b16 %v5057, %v5022
        %v6248 = vpack.c.b16 %v5058, %v5023
        %v6249 = vpack.c.b16 %v5059, %v5024
        %v6250 = vpack.c.b16 %v5060, %v5025
        %v6251 = vpack.c.b16 %v5061, %v5026
        %v6252 = vpack.c.b16 %v5062, %v5027
        %v6253 = vpack.c.b16 %v5063, %v5028
        %v6254 = vpack.c.b16 %v5099, %v5064
        %v6255 = vpack.c.b16 %v5100, %v5065
        %v6256 = vpack.c.b16 %v5101, %v5066
        %v6257 = vpack.c.b16 %v5102, %v5067
        %v6258 = vpack.c.b16 %v5103, %v5068
        %v6259 = vpack.c.b16 %v5104, %v5069
        %v6260 = vpack.c.b16 %v5105, %v5070
        %v6261 = vpack.c.b16 %v5106, %v5071
        %v6262 = vpack.c.b16 %v5107, %v5072
        %v6263 = vpack.c.b16 %v5108, %v5073
        %v6264 = vpack.c.b16 %v5109, %v5074
        %v6265 = vpack.c.b16 %v5110, %v5075
        %v6266 = vpack.c.b16 %v5111, %v5076
        %v6267 = vpack.c.b16 %v5112, %v5077
        %v6268 = vpack.c.b16 %v5113, %v5078
        %v6269 = vpack.c.b16 %v5114, %v5079
        %v6270 = vpack.c.b16 %v5115, %v5080
        %v6271 = vpack.c.b16 %v5116, %v5081
        %v6272 = vpack.c.b16 %v5117, %v5082
        %v6273 = vpack.c.b16 %v5118, %v5083
        %v6274 = vpack.c.b16 %v5119, %v5084
        %v6275 = vpack.c.b16 %v5120, %v5085
        %v6276 = vpack.c.b16 %v5121, %v5086
        %v6277 = vpack.c.b16 %v5122, %v5087
        %v6278 = vpack.c.b16 %v5123, %v5088
        %v6279 = vpack.c.b16 %v5124, %v5089
        %v6280 = vpack.c.b16 %v5125, %v5090
        %v6281 = vpack.c.b16 %v5126, %v5091
        %v6282 = vpack.c.b16 %v5127, %v5092
        %v6283 = vpack.c.b16 %v5128, %v5093
        %v6284 = vpack.c.b16 %v5129, %v5094
        %v6285 = vpack.c.b16 %v5130, %v5095
        %v6286 = vpack.c.b16 %v5131, %v5096
        %v6287 = vpack.c.b16 %v5132, %v5097
        %v6288 = vpack.c.b16 %v5133, %v5098
        %v6289 = vpack.c.b16 %v5169, %v5134
        %v6290 = vpack.c.b16 %v5170, %v5135
        %v6291 = vpack.c.b16 %v5171, %v5136
        %v6292 = vpack.c.b16 %v5172, %v5137
        %v6293 = vpack.c.b16 %v5173, %v5138
        %v6294 = vpack.c.b16 %v5174, %v5139
        %v6295 = vpack.c.b16 %v5175, %v5140
        %v6296 = vpack.c.b16 %v5176, %v5141
        %v6297 = vpack.c.b16 %v5177, %v5142
        %v6298 = vpack.c.b16 %v5178, %v5143
        %v6299 = vpack.c.b16 %v5179, %v5144
        %v6300 = vpack.c.b16 %v5180, %v5145
        %v6301 = vpack.c.b16 %v5181, %v5146
        %v6302 = vpack.c.b16 %v5182, %v5147
        %v6303 = vpack.c.b16 %v5183, %v5148
        %v6304 = vpack.c.b16 %v5184, %v5149
        %v6305 = vpack.c.b16 %v5185, %v5150
        %v6306 = vpack.c.b16 %v5186, %v5151
        %v6307 = vpack.c.b16 %v5187, %v5152
        %v6308 = vpack.c.b16 %v5188, %v5153
        %v6309 = vpack.c.b16 %v5189, %v5154
        %v6310 = vpack.c.b16 %v5190, %v5155
        %v6311 = vpack.c.b16 %v5191, %v5156
        %v6312 = vpack.c.b16 %v5192, %v5157
        %v6313 = vpack.c.b16 %v5193, %v5158
        %v6314 = vpack.c.b16 %v5194, %v5159
        %v6315 = vpack.c.b16 %v5195, %v5160
        %v6316 = vpack.c.b16 %v5196, %v5161
        %v6317 = vpack.c.b16 %v5197, %v5162
        %v6318 = vpack.c.b16 %v5198, %v5163
        %v6319 = vpack.c.b16 %v5199, %v5164
        %v6320 = vpack.c.b16 %v5200, %v5165
        %v6321 = vpack.c.b16 %v5201, %v5166
        %v6322 = vpack.c.b16 %v5202, %v5167
        %v6323 = vpack.c.b16 %v5203, %v5168
        %7444 = vmatprep.subr.bf16.mxu0 %v5205
        %7445 = vmatpush1.bf16.msra.mxu0 %v5204
        %7446 = vmatprep.subr.bf16.mxu0 %v5240
        %7447 = vmatpush1.bf16.msra.mxu0 %v5239
        %7448 = vmatprep.subr.bf16.mxu0 %v5275
        %7449 = vmatpush1.bf16.msra.mxu0 %v5274
        %7450 = vmatprep.subr.bf16.mxu0 %v5310
        %7451 = vmatpush1.bf16.msra.mxu0 %v5309
        %7452 = vmatprep.subr.bf16.mxu0 %v5345
        %7453 = vmatpush1.bf16.msra.mxu0 %v5344
        %7454 = vmatprep.subr.bf16.mxu0 %v5380
        %7455 = vmatpush1.bf16.msra.mxu0 %v5379
        %7456 = vmatprep.subr.bf16.mxu0 %v5415
        %7457 = vmatpush1.bf16.msra.mxu0 %v5414
        %7458 = vmatprep.subr.bf16.mxu0 %v5450
        %7459 = vmatpush1.bf16.msra.mxu0 %v5449
        %7460 = vmatprep.subr.bf16.mxu0 %v5485
        %7461 = vmatpush1.bf16.msra.mxu0 %v5484
        %7462 = vmatprep.subr.bf16.mxu0 %v5520
        %7463 = vmatpush1.bf16.msra.mxu0 %v5519
        %7464 = vmatprep.subr.bf16.mxu0 %v5555
        %7465 = vmatpush1.bf16.msra.mxu0 %v5554
        %7466 = vmatprep.subr.bf16.mxu0 %v5590
        %7467 = vmatpush1.bf16.msra.mxu0 %v5589
        %7468 = vmatprep.subr.bf16.mxu0 %v5625
        %7469 = vmatpush1.bf16.msra.mxu0 %v5624
        %7470 = vmatprep.subr.bf16.mxu0 %v5660
        %7471 = vmatpush1.bf16.msra.mxu0 %v5659
        %7472 = vmatprep.subr.bf16.mxu0 %v5695
        %7473 = vmatpush1.bf16.msra.mxu0 %v5694
        %7474 = vmatprep.subr.bf16.mxu0 %v5730
        %7475 = vmatpush1.bf16.msra.mxu0 %v5729
        %7476 = vmatprep.mubr.bf16.mxu0 %v468
        %7477 = vmatmul.mubr.bf16.gmra.mrb[0].mxu0 %v467
        %v7478 = vpop.f32.mrb[0].mxu0
        %v7479 = vadd.f32 %v1640, %v7478
        %v7480 = vpop.f32.mrb[0].mxu0
        %v7481 = vadd.f32 %v1644, %v7480
        %v7482 = vpop.f32.mrb[0].mxu0
        %v7483 = vpop.f32.mrb[0].mxu0
        %7484 = vdwg.mxu0
        %7485 = vmatprep.subr.bf16.mxu0 %v5765
        %7486 = vmatpush1.bf16.msra.mxu0 %v5764
        %7487 = vmatprep.subr.bf16.mxu0 %v5800
        %7488 = vmatpush1.bf16.msra.mxu0 %v5799
        %7489 = vmatprep.subr.bf16.mxu0 %v5835
        %7490 = vmatpush1.bf16.msra.mxu0 %v5834
        %7491 = vmatprep.subr.bf16.mxu0 %v5870
        %7492 = vmatpush1.bf16.msra.mxu0 %v5869
        %7493 = vmatprep.subr.bf16.mxu0 %v5905
        %7494 = vmatpush1.bf16.msra.mxu0 %v5904
        %7495 = vmatprep.subr.bf16.mxu0 %v5940
        %7496 = vmatpush1.bf16.msra.mxu0 %v5939
        %7497 = vmatprep.subr.bf16.mxu0 %v5975
        %7498 = vmatpush1.bf16.msra.mxu0 %v5974
        %7499 = vmatprep.subr.bf16.mxu0 %v6010
        %7500 = vmatpush1.bf16.msra.mxu0 %v6009
        %7501 = vmatprep.subr.bf16.mxu0 %v6045
        %7502 = vmatpush1.bf16.msra.mxu0 %v6044
        %7503 = vmatprep.subr.bf16.mxu0 %v6080
        %7504 = vmatpush1.bf16.msra.mxu0 %v6079
        %7505 = vmatprep.subr.bf16.mxu0 %v6115
        %7506 = vmatpush1.bf16.msra.mxu0 %v6114
        %7507 = vmatprep.subr.bf16.mxu0 %v6150
        %7508 = vmatpush1.bf16.msra.mxu0 %v6149
        %7509 = vmatprep.subr.bf16.mxu0 %v6185
        %7510 = vmatpush1.bf16.msra.mxu0 %v6184
        %7511 = vmatprep.subr.bf16.mxu0 %v6220
        %7512 = vmatpush1.bf16.msra.mxu0 %v6219
        %7513 = vmatprep.subr.bf16.mxu0 %v6255
        %7514 = vmatpush1.bf16.msra.mxu0 %v6254
        %7515 = vmatprep.subr.bf16.mxu0 %v6290
        %7516 = vmatpush1.bf16.msra.mxu0 %v6289
        %7517 = vmatprep.mubr.bf16.mxu0 %v470
        %7518 = vmatmul.mubr.bf16.gmra.mrb[0].mxu0 %v469
        %v7519 = vpop.f32.mrb[0].mxu0
        %v7520 = vadd.f32 %v7479, %v7519
        %v7521 = vpop.f32.mrb[0].mxu0
        %v7522 = vadd.f32 %v7481, %v7521
        %v7523 = vpop.f32.mrb[0].mxu0
        %v7524 = vpop.f32.mrb[0].mxu0
        %7525 = vdwg.mxu0
        %7526 = vmatprep.subr.bf16.mxu0 %v5207
        %7527 = vmatpush1.bf16.msra.mxu0 %v5206
        %7528 = vmatprep.subr.bf16.mxu0 %v5242
        %7529 = vmatpush1.bf16.msra.mxu0 %v5241
        %7530 = vmatprep.subr.bf16.mxu0 %v5277
        %7531 = vmatpush1.bf16.msra.mxu0 %v5276
        %7532 = vmatprep.subr.bf16.mxu0 %v5312
        %7533 = vmatpush1.bf16.msra.mxu0 %v5311
        %7534 = vmatprep.subr.bf16.mxu0 %v5347
        %7535 = vmatpush1.bf16.msra.mxu0 %v5346
        %7536 = vmatprep.subr.bf16.mxu0 %v5382
        %7537 = vmatpush1.bf16.msra.mxu0 %v5381
        %7538 = vmatprep.subr.bf16.mxu0 %v5417
        %7539 = vmatpush1.bf16.msra.mxu0 %v5416
        %7540 = vmatprep.subr.bf16.mxu0 %v5452
        %7541 = vmatpush1.bf16.msra.mxu0 %v5451
        %7542 = vmatprep.subr.bf16.mxu0 %v5487
        %7543 = vmatpush1.bf16.msra.mxu0 %v5486
        %7544 = vmatprep.subr.bf16.mxu0 %v5522
        %7545 = vmatpush1.bf16.msra.mxu0 %v5521
        %7546 = vmatprep.subr.bf16.mxu0 %v5557
        %7547 = vmatpush1.bf16.msra.mxu0 %v5556
        %7548 = vmatprep.subr.bf16.mxu0 %v5592
        %7549 = vmatpush1.bf16.msra.mxu0 %v5591
        %7550 = vmatprep.subr.bf16.mxu0 %v5627
        %7551 = vmatpush1.bf16.msra.mxu0 %v5626
        %7552 = vmatprep.subr.bf16.mxu0 %v5662
        %7553 = vmatpush1.bf16.msra.mxu0 %v5661
        %7554 = vmatprep.subr.bf16.mxu0 %v5697
        %7555 = vmatpush1.bf16.msra.mxu0 %v5696
        %7556 = vmatprep.subr.bf16.mxu0 %v5732
        %7557 = vmatpush1.bf16.msra.mxu0 %v5731
        %7558 = vmatprep.mubr.bf16.mxu0 %v468
        %7559 = vmatmul.mubr.bf16.gmra.mrb[0].mxu0 %v467
        %v7560 = vpop.f32.mrb[0].mxu0
        %v7561 = vadd.f32 %v1648, %v7560
        %v7562 = vpop.f32.mrb[0].mxu0
        %v7563 = vadd.f32 %v1652, %v7562
        %v7564 = vpop.f32.mrb[0].mxu0
        %v7565 = vpop.f32.mrb[0].mxu0
        %7566 = vdwg.mxu0
        %7567 = vmatprep.subr.bf16.mxu0 %v5767
        %7568 = vmatpush1.bf16.msra.mxu0 %v5766
        %7569 = vmatprep.subr.bf16.mxu0 %v5802
        %7570 = vmatpush1.bf16.msra.mxu0 %v5801
        %7571 = vmatprep.subr.bf16.mxu0 %v5837
        %7572 = vmatpush1.bf16.msra.mxu0 %v5836
        %7573 = vmatprep.subr.bf16.mxu0 %v5872
        %7574 = vmatpush1.bf16.msra.mxu0 %v5871
        %7575 = vmatprep.subr.bf16.mxu0 %v5907
        %7576 = vmatpush1.bf16.msra.mxu0 %v5906
        %7577 = vmatprep.subr.bf16.mxu0 %v5942
        %7578 = vmatpush1.bf16.msra.mxu0 %v5941
        %7579 = vmatprep.subr.bf16.mxu0 %v5977
        %7580 = vmatpush1.bf16.msra.mxu0 %v5976
        %7581 = vmatprep.subr.bf16.mxu0 %v6012
        %7582 = vmatpush1.bf16.msra.mxu0 %v6011
        %7583 = vmatprep.subr.bf16.mxu0 %v6047
        %7584 = vmatpush1.bf16.msra.mxu0 %v6046
        %7585 = vmatprep.subr.bf16.mxu0 %v6082
        %7586 = vmatpush1.bf16.msra.mxu0 %v6081
        %7587 = vmatprep.subr.bf16.mxu0 %v6117
        %7588 = vmatpush1.bf16.msra.mxu0 %v6116
        %7589 = vmatprep.subr.bf16.mxu0 %v6152
        %7590 = vmatpush1.bf16.msra.mxu0 %v6151
        %7591 = vmatprep.subr.bf16.mxu0 %v6187
        %7592 = vmatpush1.bf16.msra.mxu0 %v6186
        %7593 = vmatprep.subr.bf16.mxu0 %v6222
        %7594 = vmatpush1.bf16.msra.mxu0 %v6221
        %7595 = vmatprep.subr.bf16.mxu0 %v6257
        %7596 = vmatpush1.bf16.msra.mxu0 %v6256
        %7597 = vmatprep.subr.bf16.mxu0 %v6292
        %7598 = vmatpush1.bf16.msra.mxu0 %v6291
        %7599 = vmatprep.mubr.bf16.mxu0 %v470
        %7600 = vmatmul.mubr.bf16.gmra.mrb[0].mxu0 %v469
        %v7601 = vpop.f32.mrb[0].mxu0
        %v7602 = vadd.f32 %v7561, %v7601
        %v7603 = vpop.f32.mrb[0].mxu0
        %v7604 = vadd.f32 %v7563, %v7603
        %v7605 = vpop.f32.mrb[0].mxu0
        %v7606 = vpop.f32.mrb[0].mxu0
        %7607 = vdwg.mxu0
        %7608 = vmatprep.subr.bf16.mxu0 %v5209
        %7609 = vmatpush1.bf16.msra.mxu0 %v5208
        %7610 = vmatprep.subr.bf16.mxu0 %v5244
        %7611 = vmatpush1.bf16.msra.mxu0 %v5243
        %7612 = vmatprep.subr.bf16.mxu0 %v5279
        %7613 = vmatpush1.bf16.msra.mxu0 %v5278
        %7614 = vmatprep.subr.bf16.mxu0 %v5314
        %7615 = vmatpush1.bf16.msra.mxu0 %v5313
        %7616 = vmatprep.subr.bf16.mxu0 %v5349
        %7617 = vmatpush1.bf16.msra.mxu0 %v5348
        %7618 = vmatprep.subr.bf16.mxu0 %v5384
        %7619 = vmatpush1.bf16.msra.mxu0 %v5383
        %7620 = vmatprep.subr.bf16.mxu0 %v5419
        %7621 = vmatpush1.bf16.msra.mxu0 %v5418
        %7622 = vmatprep.subr.bf16.mxu0 %v5454
        %7623 = vmatpush1.bf16.msra.mxu0 %v5453
        %7624 = vmatprep.subr.bf16.mxu0 %v5489
        %7625 = vmatpush1.bf16.msra.mxu0 %v5488
        %7626 = vmatprep.subr.bf16.mxu0 %v5524
        %7627 = vmatpush1.bf16.msra.mxu0 %v5523
        %7628 = vmatprep.subr.bf16.mxu0 %v5559
        %7629 = vmatpush1.bf16.msra.mxu0 %v5558
        %7630 = vmatprep.subr.bf16.mxu0 %v5594
        %7631 = vmatpush1.bf16.msra.mxu0 %v5593
        %7632 = vmatprep.subr.bf16.mxu0 %v5629
        %7633 = vmatpush1.bf16.msra.mxu0 %v5628
        %7634 = vmatprep.subr.bf16.mxu0 %v5664
        %7635 = vmatpush1.bf16.msra.mxu0 %v5663
        %7636 = vmatprep.subr.bf16.mxu0 %v5699
        %7637 = vmatpush1.bf16.msra.mxu0 %v5698
        %7638 = vmatprep.subr.bf16.mxu0 %v5734
        %7639 = vmatpush1.bf16.msra.mxu0 %v5733
        %7640 = vmatprep.mubr.bf16.mxu0 %v468
        %7641 = vmatmul.mubr.bf16.gmra.mrb[0].mxu0 %v467
        %v7642 = vpop.f32.mrb[0].mxu0
        %v7643 = vadd.f32 %v1656, %v7642
        %v7644 = vpop.f32.mrb[0].mxu0
        %v7645 = vadd.f32 %v1660, %v7644
        %v7646 = vpop.f32.mrb[0].mxu0
        %v7647 = vpop.f32.mrb[0].mxu0
        %7648 = vdwg.mxu0
        %7649 = vmatprep.subr.bf16.mxu0 %v5769
        %7650 = vmatpush1.bf16.msra.mxu0 %v5768
        %7651 = vmatprep.subr.bf16.mxu0 %v5804
        %7652 = vmatpush1.bf16.msra.mxu0 %v5803
        %7653 = vmatprep.subr.bf16.mxu0 %v5839
        %7654 = vmatpush1.bf16.msra.mxu0 %v5838
        %7655 = vmatprep.subr.bf16.mxu0 %v5874
        %7656 = vmatpush1.bf16.msra.mxu0 %v5873
        %7657 = vmatprep.subr.bf16.mxu0 %v5909
        %7658 = vmatpush1.bf16.msra.mxu0 %v5908
        %7659 = vmatprep.subr.bf16.mxu0 %v5944
        %7660 = vmatpush1.bf16.msra.mxu0 %v5943
        %7661 = vmatprep.subr.bf16.mxu0 %v5979
        %7662 = vmatpush1.bf16.msra.mxu0 %v5978
        %7663 = vmatprep.subr.bf16.mxu0 %v6014
        %7664 = vmatpush1.bf16.msra.mxu0 %v6013
        %7665 = vmatprep.subr.bf16.mxu0 %v6049
        %7666 = vmatpush1.bf16.msra.mxu0 %v6048
        %7667 = vmatprep.subr.bf16.mxu0 %v6084
        %7668 = vmatpush1.bf16.msra.mxu0 %v6083
        %7669 = vmatprep.subr.bf16.mxu0 %v6119
        %7670 = vmatpush1.bf16.msra.mxu0 %v6118
        %7671 = vmatprep.subr.bf16.mxu0 %v6154
        %7672 = vmatpush1.bf16.msra.mxu0 %v6153
        %7673 = vmatprep.subr.bf16.mxu0 %v6189
        %7674 = vmatpush1.bf16.msra.mxu0 %v6188
        %7675 = vmatprep.subr.bf16.mxu0 %v6224
        %7676 = vmatpush1.bf16.msra.mxu0 %v6223
        %7677 = vmatprep.subr.bf16.mxu0 %v6259
        %7678 = vmatpush1.bf16.msra.mxu0 %v6258
        %7679 = vmatprep.subr.bf16.mxu0 %v6294
        %7680 = vmatpush1.bf16.msra.mxu0 %v6293
        %7681 = vmatprep.mubr.bf16.mxu0 %v470
        %7682 = vmatmul.mubr.bf16.gmra.mrb[0].mxu0 %v469
        %v7683 = vpop.f32.mrb[0].mxu0
        %v7684 = vadd.f32 %v7643, %v7683
        %v7685 = vpop.f32.mrb[0].mxu0
        %v7686 = vadd.f32 %v7645, %v7685
        %v7687 = vpop.f32.mrb[0].mxu0
        %v7688 = vpop.f32.mrb[0].mxu0
        %7689 = vdwg.mxu0
        %7690 = vmatprep.subr.bf16.mxu0 %v5211
        %7691 = vmatpush1.bf16.msra.mxu0 %v5210
        %7692 = vmatprep.subr.bf16.mxu0 %v5246
        %7693 = vmatpush1.bf16.msra.mxu0 %v5245
        %7694 = vmatprep.subr.bf16.mxu0 %v5281
        %7695 = vmatpush1.bf16.msra.mxu0 %v5280
        %7696 = vmatprep.subr.bf16.mxu0 %v5316
        %7697 = vmatpush1.bf16.msra.mxu0 %v5315
        %7698 = vmatprep.subr.bf16.mxu0 %v5351
        %7699 = vmatpush1.bf16.msra.mxu0 %v5350
        %7700 = vmatprep.subr.bf16.mxu0 %v5386
        %7701 = vmatpush1.bf16.msra.mxu0 %v5385
        %7702 = vmatprep.subr.bf16.mxu0 %v5421
        %7703 = vmatpush1.bf16.msra.mxu0 %v5420
        %7704 = vmatprep.subr.bf16.mxu0 %v5456
        %7705 = vmatpush1.bf16.msra.mxu0 %v5455
        %7706 = vmatprep.subr.bf16.mxu0 %v5491
        %7707 = vmatpush1.bf16.msra.mxu0 %v5490
        %7708 = vmatprep.subr.bf16.mxu0 %v5526
        %7709 = vmatpush1.bf16.msra.mxu0 %v5525
        %7710 = vmatprep.subr.bf16.mxu0 %v5561
        %7711 = vmatpush1.bf16.msra.mxu0 %v5560
        %7712 = vmatprep.subr.bf16.mxu0 %v5596
        %7713 = vmatpush1.bf16.msra.mxu0 %v5595
        %7714 = vmatprep.subr.bf16.mxu0 %v5631
        %7715 = vmatpush1.bf16.msra.mxu0 %v5630
        %7716 = vmatprep.subr.bf16.mxu0 %v5666
        %7717 = vmatpush1.bf16.msra.mxu0 %v5665
        %7718 = vmatprep.subr.bf16.mxu0 %v5701
        %7719 = vmatpush1.bf16.msra.mxu0 %v5700
        %7720 = vmatprep.subr.bf16.mxu0 %v5736
        %7721 = vmatpush1.bf16.msra.mxu0 %v5735
        %7722 = vmatprep.mubr.bf16.mxu0 %v468
        %7723 = vmatmul.mubr.bf16.gmra.mrb[0].mxu0 %v467
        %v7724 = vpop.f32.mrb[0].mxu0
        %v7725 = vadd.f32 %v1664, %v7724
        %v7726 = vpop.f32.mrb[0].mxu0
        %v7727 = vadd.f32 %v1668, %v7726
        %v7728 = vpop.f32.mrb[0].mxu0
        %v7729 = vpop.f32.mrb[0].mxu0
        %7730 = vdwg.mxu0
        %7731 = vmatprep.subr.bf16.mxu0 %v5771
        %7732 = vmatpush1.bf16.msra.mxu0 %v5770
        %7733 = vmatprep.subr.bf16.mxu0 %v5806
        %7734 = vmatpush1.bf16.msra.mxu0 %v5805
        %7735 = vmatprep.subr.bf16.mxu0 %v5841
        %7736 = vmatpush1.bf16.msra.mxu0 %v5840
        %7737 = vmatprep.subr.bf16.mxu0 %v5876
        %7738 = vmatpush1.bf16.msra.mxu0 %v5875
        %7739 = vmatprep.subr.bf16.mxu0 %v5911
        %7740 = vmatpush1.bf16.msra.mxu0 %v5910
        %7741 = vmatprep.subr.bf16.mxu0 %v5946
        %7742 = vmatpush1.bf16.msra.mxu0 %v5945
        %7743 = vmatprep.subr.bf16.mxu0 %v5981
        %7744 = vmatpush1.bf16.msra.mxu0 %v5980
        %7745 = vmatprep.subr.bf16.mxu0 %v6016
        %7746 = vmatpush1.bf16.msra.mxu0 %v6015
        %7747 = vmatprep.subr.bf16.mxu0 %v6051
        %7748 = vmatpush1.bf16.msra.mxu0 %v6050
        %7749 = vmatprep.subr.bf16.mxu0 %v6086
        %7750 = vmatpush1.bf16.msra.mxu0 %v6085
        %7751 = vmatprep.subr.bf16.mxu0 %v6121
        %7752 = vmatpush1.bf16.msra.mxu0 %v6120
        %7753 = vmatprep.subr.bf16.mxu0 %v6156
        %7754 = vmatpush1.bf16.msra.mxu0 %v6155
        %7755 = vmatprep.subr.bf16.mxu0 %v6191
        %7756 = vmatpush1.bf16.msra.mxu0 %v6190
        %7757 = vmatprep.subr.bf16.mxu0 %v6226
        %7758 = vmatpush1.bf16.msra.mxu0 %v6225
        %7759 = vmatprep.subr.bf16.mxu0 %v6261
        %7760 = vmatpush1.bf16.msra.mxu0 %v6260
        %7761 = vmatprep.subr.bf16.mxu0 %v6296
        %7762 = vmatpush1.bf16.msra.mxu0 %v6295
        %7763 = vmatprep.mubr.bf16.mxu0 %v470
        %7764 = vmatmul.mubr.bf16.gmra.mrb[0].mxu0 %v469
        %v7765 = vpop.f32.mrb[0].mxu0
        %v7766 = vadd.f32 %v7725, %v7765
        %v7767 = vpop.f32.mrb[0].mxu0
        %v7768 = vadd.f32 %v7727, %v7767
        %v7769 = vpop.f32.mrb[0].mxu0
        %v7770 = vpop.f32.mrb[0].mxu0
        %7771 = vdwg.mxu0
        %7772 = vmatprep.subr.bf16.mxu0 %v5213
        %7773 = vmatpush1.bf16.msra.mxu0 %v5212
        %7774 = vmatprep.subr.bf16.mxu0 %v5248
        %7775 = vmatpush1.bf16.msra.mxu0 %v5247
        %7776 = vmatprep.subr.bf16.mxu0 %v5283
        %7777 = vmatpush1.bf16.msra.mxu0 %v5282
        %7778 = vmatprep.subr.bf16.mxu0 %v5318
        %7779 = vmatpush1.bf16.msra.mxu0 %v5317
        %7780 = vmatprep.subr.bf16.mxu0 %v5353
        %7781 = vmatpush1.bf16.msra.mxu0 %v5352
        %7782 = vmatprep.subr.bf16.mxu0 %v5388
        %7783 = vmatpush1.bf16.msra.mxu0 %v5387
        %7784 = vmatprep.subr.bf16.mxu0 %v5423
        %7785 = vmatpush1.bf16.msra.mxu0 %v5422
        %7786 = vmatprep.subr.bf16.mxu0 %v5458
        %7787 = vmatpush1.bf16.msra.mxu0 %v5457
        %7788 = vmatprep.subr.bf16.mxu0 %v5493
        %7789 = vmatpush1.bf16.msra.mxu0 %v5492
        %7790 = vmatprep.subr.bf16.mxu0 %v5528
        %7791 = vmatpush1.bf16.msra.mxu0 %v5527
        %7792 = vmatprep.subr.bf16.mxu0 %v5563
        %7793 = vmatpush1.bf16.msra.mxu0 %v5562
        %7794 = vmatprep.subr.bf16.mxu0 %v5598
        %7795 = vmatpush1.bf16.msra.mxu0 %v5597
        %7796 = vmatprep.subr.bf16.mxu0 %v5633
        %7797 = vmatpush1.bf16.msra.mxu0 %v5632
        %7798 = vmatprep.subr.bf16.mxu0 %v5668
        %7799 = vmatpush1.bf16.msra.mxu0 %v5667
        %7800 = vmatprep.subr.bf16.mxu0 %v5703
        %7801 = vmatpush1.bf16.msra.mxu0 %v5702
        %7802 = vmatprep.subr.bf16.mxu0 %v5738
        %7803 = vmatpush1.bf16.msra.mxu0 %v5737
        %7804 = vmatprep.mubr.bf16.mxu0 %v468
        %7805 = vmatmul.mubr.bf16.gmra.mrb[0].mxu0 %v467
        %v7806 = vpop.f32.mrb[0].mxu0
        %v7807 = vadd.f32 %v1672, %v7806
        %v7808 = vpop.f32.mrb[0].mxu0
        %v7809 = vadd.f32 %v1676, %v7808
        %v7810 = vpop.f32.mrb[0].mxu0
        %v7811 = vpop.f32.mrb[0].mxu0
        %7812 = vdwg.mxu0
        %7813 = vmatprep.subr.bf16.mxu0 %v5773
        %7814 = vmatpush1.bf16.msra.mxu0 %v5772
        %7815 = vmatprep.subr.bf16.mxu0 %v5808
        %7816 = vmatpush1.bf16.msra.mxu0 %v5807
        %7817 = vmatprep.subr.bf16.mxu0 %v5843
        %7818 = vmatpush1.bf16.msra.mxu0 %v5842
        %7819 = vmatprep.subr.bf16.mxu0 %v5878
        %7820 = vmatpush1.bf16.msra.mxu0 %v5877
        %7821 = vmatprep.subr.bf16.mxu0 %v5913
        %7822 = vmatpush1.bf16.msra.mxu0 %v5912
        %7823 = vmatprep.subr.bf16.mxu0 %v5948
        %7824 = vmatpush1.bf16.msra.mxu0 %v5947
        %7825 = vmatprep.subr.bf16.mxu0 %v5983
        %7826 = vmatpush1.bf16.msra.mxu0 %v5982
        %7827 = vmatprep.subr.bf16.mxu0 %v6018
        %7828 = vmatpush1.bf16.msra.mxu0 %v6017
        %7829 = vmatprep.subr.bf16.mxu0 %v6053
        %7830 = vmatpush1.bf16.msra.mxu0 %v6052
        %7831 = vmatprep.subr.bf16.mxu0 %v6088
        %7832 = vmatpush1.bf16.msra.mxu0 %v6087
        %7833 = vmatprep.subr.bf16.mxu0 %v6123
        %7834 = vmatpush1.bf16.msra.mxu0 %v6122
        %7835 = vmatprep.subr.bf16.mxu0 %v6158
        %7836 = vmatpush1.bf16.msra.mxu0 %v6157
        %7837 = vmatprep.subr.bf16.mxu0 %v6193
        %7838 = vmatpush1.bf16.msra.mxu0 %v6192
        %7839 = vmatprep.subr.bf16.mxu0 %v6228
        %7840 = vmatpush1.bf16.msra.mxu0 %v6227
        %7841 = vmatprep.subr.bf16.mxu0 %v6263
        %7842 = vmatpush1.bf16.msra.mxu0 %v6262
        %7843 = vmatprep.subr.bf16.mxu0 %v6298
        %7844 = vmatpush1.bf16.msra.mxu0 %v6297
        %7845 = vmatprep.mubr.bf16.mxu0 %v470
        %7846 = vmatmul.mubr.bf16.gmra.mrb[0].mxu0 %v469
        %v7847 = vpop.f32.mrb[0].mxu0
        %v7848 = vadd.f32 %v7807, %v7847
        %v7849 = vpop.f32.mrb[0].mxu0
        %v7850 = vadd.f32 %v7809, %v7849
        %v7851 = vpop.f32.mrb[0].mxu0
        %v7852 = vpop.f32.mrb[0].mxu0
        %7853 = vdwg.mxu0
        %7854 = vmatprep.subr.bf16.mxu0 %v5215
        %7855 = vmatpush1.bf16.msra.mxu0 %v5214
        %7856 = vmatprep.subr.bf16.mxu0 %v5250
        %7857 = vmatpush1.bf16.msra.mxu0 %v5249
        %7858 = vmatprep.subr.bf16.mxu0 %v5285
        %7859 = vmatpush1.bf16.msra.mxu0 %v5284
        %7860 = vmatprep.subr.bf16.mxu0 %v5320
        %7861 = vmatpush1.bf16.msra.mxu0 %v5319
        %7862 = vmatprep.subr.bf16.mxu0 %v5355
        %7863 = vmatpush1.bf16.msra.mxu0 %v5354
        %7864 = vmatprep.subr.bf16.mxu0 %v5390
        %7865 = vmatpush1.bf16.msra.mxu0 %v5389
        %7866 = vmatprep.subr.bf16.mxu0 %v5425
        %7867 = vmatpush1.bf16.msra.mxu0 %v5424
        %7868 = vmatprep.subr.bf16.mxu0 %v5460
        %7869 = vmatpush1.bf16.msra.mxu0 %v5459
        %7870 = vmatprep.subr.bf16.mxu0 %v5495
        %7871 = vmatpush1.bf16.msra.mxu0 %v5494
        %7872 = vmatprep.subr.bf16.mxu0 %v5530
        %7873 = vmatpush1.bf16.msra.mxu0 %v5529
        %7874 = vmatprep.subr.bf16.mxu0 %v5565
        %7875 = vmatpush1.bf16.msra.mxu0 %v5564
        %7876 = vmatprep.subr.bf16.mxu0 %v5600
        %7877 = vmatpush1.bf16.msra.mxu0 %v5599
        %7878 = vmatprep.subr.bf16.mxu0 %v5635
        %7879 = vmatpush1.bf16.msra.mxu0 %v5634
        %7880 = vmatprep.subr.bf16.mxu0 %v5670
        %7881 = vmatpush1.bf16.msra.mxu0 %v5669
        %7882 = vmatprep.subr.bf16.mxu0 %v5705
        %7883 = vmatpush1.bf16.msra.mxu0 %v5704
        %7884 = vmatprep.subr.bf16.mxu0 %v5740
        %7885 = vmatpush1.bf16.msra.mxu0 %v5739
        %7886 = vmatprep.mubr.bf16.mxu0 %v468
        %7887 = vmatmul.mubr.bf16.gmra.mrb[0].mxu0 %v467
        %v7888 = vpop.f32.mrb[0].mxu0
        %v7889 = vadd.f32 %v1680, %v7888
        %v7890 = vpop.f32.mrb[0].mxu0
        %v7891 = vadd.f32 %v1684, %v7890
        %v7892 = vpop.f32.mrb[0].mxu0
        %v7893 = vpop.f32.mrb[0].mxu0
        %7894 = vdwg.mxu0
        %7895 = vmatprep.subr.bf16.mxu0 %v5775
        %7896 = vmatpush1.bf16.msra.mxu0 %v5774
        %7897 = vmatprep.subr.bf16.mxu0 %v5810
        %7898 = vmatpush1.bf16.msra.mxu0 %v5809
        %7899 = vmatprep.subr.bf16.mxu0 %v5845
        %7900 = vmatpush1.bf16.msra.mxu0 %v5844
        %7901 = vmatprep.subr.bf16.mxu0 %v5880
        %7902 = vmatpush1.bf16.msra.mxu0 %v5879
        %7903 = vmatprep.subr.bf16.mxu0 %v5915
        %7904 = vmatpush1.bf16.msra.mxu0 %v5914
        %7905 = vmatprep.subr.bf16.mxu0 %v5950
        %7906 = vmatpush1.bf16.msra.mxu0 %v5949
        %7907 = vmatprep.subr.bf16.mxu0 %v5985
        %7908 = vmatpush1.bf16.msra.mxu0 %v5984
        %7909 = vmatprep.subr.bf16.mxu0 %v6020
        %7910 = vmatpush1.bf16.msra.mxu0 %v6019
        %7911 = vmatprep.subr.bf16.mxu0 %v6055
        %7912 = vmatpush1.bf16.msra.mxu0 %v6054
        %7913 = vmatprep.subr.bf16.mxu0 %v6090
        %7914 = vmatpush1.bf16.msra.mxu0 %v6089
        %7915 = vmatprep.subr.bf16.mxu0 %v6125
        %7916 = vmatpush1.bf16.msra.mxu0 %v6124
        %7917 = vmatprep.subr.bf16.mxu0 %v6160
        %7918 = vmatpush1.bf16.msra.mxu0 %v6159
        %7919 = vmatprep.subr.bf16.mxu0 %v6195
        %7920 = vmatpush1.bf16.msra.mxu0 %v6194
        %7921 = vmatprep.subr.bf16.mxu0 %v6230
        %7922 = vmatpush1.bf16.msra.mxu0 %v6229
        %7923 = vmatprep.subr.bf16.mxu0 %v6265
        %7924 = vmatpush1.bf16.msra.mxu0 %v6264
        %7925 = vmatprep.subr.bf16.mxu0 %v6300
        %7926 = vmatpush1.bf16.msra.mxu0 %v6299
        %7927 = vmatprep.mubr.bf16.mxu0 %v470
        %7928 = vmatmul.mubr.bf16.gmra.mrb[0].mxu0 %v469
        %v7929 = vpop.f32.mrb[0].mxu0
        %v7930 = vadd.f32 %v7889, %v7929
        %v7931 = vpop.f32.mrb[0].mxu0
        %v7932 = vadd.f32 %v7891, %v7931
        %v7933 = vpop.f32.mrb[0].mxu0
        %v7934 = vpop.f32.mrb[0].mxu0
        %7935 = vdwg.mxu0
        %7936 = vmatprep.subr.bf16.mxu0 %v5217
        %7937 = vmatpush1.bf16.msra.mxu0 %v5216
        %7938 = vmatprep.subr.bf16.mxu0 %v5252
        %7939 = vmatpush1.bf16.msra.mxu0 %v5251
        %7940 = vmatprep.subr.bf16.mxu0 %v5287
        %7941 = vmatpush1.bf16.msra.mxu0 %v5286
        %7942 = vmatprep.subr.bf16.mxu0 %v5322
        %7943 = vmatpush1.bf16.msra.mxu0 %v5321
        %7944 = vmatprep.subr.bf16.mxu0 %v5357
        %7945 = vmatpush1.bf16.msra.mxu0 %v5356
        %7946 = vmatprep.subr.bf16.mxu0 %v5392
        %7947 = vmatpush1.bf16.msra.mxu0 %v5391
        %7948 = vmatprep.subr.bf16.mxu0 %v5427
        %7949 = vmatpush1.bf16.msra.mxu0 %v5426
        %7950 = vmatprep.subr.bf16.mxu0 %v5462
        %7951 = vmatpush1.bf16.msra.mxu0 %v5461
        %7952 = vmatprep.subr.bf16.mxu0 %v5497
        %7953 = vmatpush1.bf16.msra.mxu0 %v5496
        %7954 = vmatprep.subr.bf16.mxu0 %v5532
        %7955 = vmatpush1.bf16.msra.mxu0 %v5531
        %7956 = vmatprep.subr.bf16.mxu0 %v5567
        %7957 = vmatpush1.bf16.msra.mxu0 %v5566
        %7958 = vmatprep.subr.bf16.mxu0 %v5602
        %7959 = vmatpush1.bf16.msra.mxu0 %v5601
        %7960 = vmatprep.subr.bf16.mxu0 %v5637
        %7961 = vmatpush1.bf16.msra.mxu0 %v5636
        %7962 = vmatprep.subr.bf16.mxu0 %v5672
        %7963 = vmatpush1.bf16.msra.mxu0 %v5671
        %7964 = vmatprep.subr.bf16.mxu0 %v5707
        %7965 = vmatpush1.bf16.msra.mxu0 %v5706
        %7966 = vmatprep.subr.bf16.mxu0 %v5742
        %7967 = vmatpush1.bf16.msra.mxu0 %v5741
        %7968 = vmatprep.mubr.bf16.mxu0 %v468
        %7969 = vmatmul.mubr.bf16.gmra.mrb[0].mxu0 %v467
        %v7970 = vpop.f32.mrb[0].mxu0
        %v7971 = vadd.f32 %v1688, %v7970
        %v7972 = vpop.f32.mrb[0].mxu0
        %v7973 = vadd.f32 %v1692, %v7972
        %v7974 = vpop.f32.mrb[0].mxu0
        %v7975 = vpop.f32.mrb[0].mxu0
        %7976 = vdwg.mxu0
        %7977 = vmatprep.subr.bf16.mxu0 %v5777
        %7978 = vmatpush1.bf16.msra.mxu0 %v5776
        %7979 = vmatprep.subr.bf16.mxu0 %v5812
        %7980 = vmatpush1.bf16.msra.mxu0 %v5811
        %7981 = vmatprep.subr.bf16.mxu0 %v5847
        %7982 = vmatpush1.bf16.msra.mxu0 %v5846
        %7983 = vmatprep.subr.bf16.mxu0 %v5882
        %7984 = vmatpush1.bf16.msra.mxu0 %v5881
        %7985 = vmatprep.subr.bf16.mxu0 %v5917
        %7986 = vmatpush1.bf16.msra.mxu0 %v5916
        %7987 = vmatprep.subr.bf16.mxu0 %v5952
        %7988 = vmatpush1.bf16.msra.mxu0 %v5951
        %7989 = vmatprep.subr.bf16.mxu0 %v5987
        %7990 = vmatpush1.bf16.msra.mxu0 %v5986
        %7991 = vmatprep.subr.bf16.mxu0 %v6022
        %7992 = vmatpush1.bf16.msra.mxu0 %v6021
        %7993 = vmatprep.subr.bf16.mxu0 %v6057
        %7994 = vmatpush1.bf16.msra.mxu0 %v6056
        %7995 = vmatprep.subr.bf16.mxu0 %v6092
        %7996 = vmatpush1.bf16.msra.mxu0 %v6091
        %7997 = vmatprep.subr.bf16.mxu0 %v6127
        %7998 = vmatpush1.bf16.msra.mxu0 %v6126
        %7999 = vmatprep.subr.bf16.mxu0 %v6162
        %8000 = vmatpush1.bf16.msra.mxu0 %v6161
        %8001 = vmatprep.subr.bf16.mxu0 %v6197
        %8002 = vmatpush1.bf16.msra.mxu0 %v6196
        %8003 = vmatprep.subr.bf16.mxu0 %v6232
        %8004 = vmatpush1.bf16.msra.mxu0 %v6231
        %8005 = vmatprep.subr.bf16.mxu0 %v6267
        %8006 = vmatpush1.bf16.msra.mxu0 %v6266
        %8007 = vmatprep.subr.bf16.mxu0 %v6302
        %8008 = vmatpush1.bf16.msra.mxu0 %v6301
        %8009 = vmatprep.mubr.bf16.mxu0 %v470
        %8010 = vmatmul.mubr.bf16.gmra.mrb[0].mxu0 %v469
        %v8011 = vpop.f32.mrb[0].mxu0
        %v8012 = vadd.f32 %v7971, %v8011
        %v8013 = vpop.f32.mrb[0].mxu0
        %v8014 = vadd.f32 %v7973, %v8013
        %v8015 = vpop.f32.mrb[0].mxu0
        %v8016 = vpop.f32.mrb[0].mxu0
        %8017 = vdwg.mxu0
        %8018 = vmatprep.subr.bf16.mxu0 %v5219
        %8019 = vmatpush1.bf16.msra.mxu0 %v5218
        %8020 = vmatprep.subr.bf16.mxu0 %v5254
        %8021 = vmatpush1.bf16.msra.mxu0 %v5253
        %8022 = vmatprep.subr.bf16.mxu0 %v5289
        %8023 = vmatpush1.bf16.msra.mxu0 %v5288
        %8024 = vmatprep.subr.bf16.mxu0 %v5324
        %8025 = vmatpush1.bf16.msra.mxu0 %v5323
        %8026 = vmatprep.subr.bf16.mxu0 %v5359
        %8027 = vmatpush1.bf16.msra.mxu0 %v5358
        %8028 = vmatprep.subr.bf16.mxu0 %v5394
        %8029 = vmatpush1.bf16.msra.mxu0 %v5393
        %8030 = vmatprep.subr.bf16.mxu0 %v5429
        %8031 = vmatpush1.bf16.msra.mxu0 %v5428
        %8032 = vmatprep.subr.bf16.mxu0 %v5464
        %8033 = vmatpush1.bf16.msra.mxu0 %v5463
        %8034 = vmatprep.subr.bf16.mxu0 %v5499
        %8035 = vmatpush1.bf16.msra.mxu0 %v5498
        %8036 = vmatprep.subr.bf16.mxu0 %v5534
        %8037 = vmatpush1.bf16.msra.mxu0 %v5533
        %8038 = vmatprep.subr.bf16.mxu0 %v5569
        %8039 = vmatpush1.bf16.msra.mxu0 %v5568
        %8040 = vmatprep.subr.bf16.mxu0 %v5604
        %8041 = vmatpush1.bf16.msra.mxu0 %v5603
        %8042 = vmatprep.subr.bf16.mxu0 %v5639
        %8043 = vmatpush1.bf16.msra.mxu0 %v5638
        %8044 = vmatprep.subr.bf16.mxu0 %v5674
        %8045 = vmatpush1.bf16.msra.mxu0 %v5673
        %8046 = vmatprep.subr.bf16.mxu0 %v5709
        %8047 = vmatpush1.bf16.msra.mxu0 %v5708
        %8048 = vmatprep.subr.bf16.mxu0 %v5744
        %8049 = vmatpush1.bf16.msra.mxu0 %v5743
        %8050 = vmatprep.mubr.bf16.mxu0 %v468
        %8051 = vmatmul.mubr.bf16.gmra.mrb[0].mxu0 %v467
        %v8052 = vpop.f32.mrb[0].mxu0
        %v8053 = vadd.f32 %v1696, %v8052
        %v8054 = vpop.f32.mrb[0].mxu0
        %v8055 = vadd.f32 %v1700, %v8054
        %v8056 = vpop.f32.mrb[0].mxu0
        %v8057 = vpop.f32.mrb[0].mxu0
        %8058 = vdwg.mxu0
        %8059 = vmatprep.subr.bf16.mxu0 %v5779
        %8060 = vmatpush1.bf16.msra.mxu0 %v5778
        %8061 = vmatprep.subr.bf16.mxu0 %v5814
        %8062 = vmatpush1.bf16.msra.mxu0 %v5813
        %8063 = vmatprep.subr.bf16.mxu0 %v5849
        %8064 = vmatpush1.bf16.msra.mxu0 %v5848
        %8065 = vmatprep.subr.bf16.mxu0 %v5884
        %8066 = vmatpush1.bf16.msra.mxu0 %v5883
        %8067 = vmatprep.subr.bf16.mxu0 %v5919
        %8068 = vmatpush1.bf16.msra.mxu0 %v5918
        %8069 = vmatprep.subr.bf16.mxu0 %v5954
        %8070 = vmatpush1.bf16.msra.mxu0 %v5953
        %8071 = vmatprep.subr.bf16.mxu0 %v5989
        %8072 = vmatpush1.bf16.msra.mxu0 %v5988
        %8073 = vmatprep.subr.bf16.mxu0 %v6024
        %8074 = vmatpush1.bf16.msra.mxu0 %v6023
        %8075 = vmatprep.subr.bf16.mxu0 %v6059
        %8076 = vmatpush1.bf16.msra.mxu0 %v6058
        %8077 = vmatprep.subr.bf16.mxu0 %v6094
        %8078 = vmatpush1.bf16.msra.mxu0 %v6093
        %8079 = vmatprep.subr.bf16.mxu0 %v6129
        %8080 = vmatpush1.bf16.msra.mxu0 %v6128
        %8081 = vmatprep.subr.bf16.mxu0 %v6164
        %8082 = vmatpush1.bf16.msra.mxu0 %v6163
        %8083 = vmatprep.subr.bf16.mxu0 %v6199
        %8084 = vmatpush1.bf16.msra.mxu0 %v6198
        %8085 = vmatprep.subr.bf16.mxu0 %v6234
        %8086 = vmatpush1.bf16.msra.mxu0 %v6233
        %8087 = vmatprep.subr.bf16.mxu0 %v6269
        %8088 = vmatpush1.bf16.msra.mxu0 %v6268
        %8089 = vmatprep.subr.bf16.mxu0 %v6304
        %8090 = vmatpush1.bf16.msra.mxu0 %v6303
        %8091 = vmatprep.mubr.bf16.mxu0 %v470
        %8092 = vmatmul.mubr.bf16.gmra.mrb[0].mxu0 %v469
        %v8093 = vpop.f32.mrb[0].mxu0
        %v8094 = vadd.f32 %v8053, %v8093
        %v8095 = vpop.f32.mrb[0].mxu0
        %v8096 = vadd.f32 %v8055, %v8095
        %v8097 = vpop.f32.mrb[0].mxu0
        %v8098 = vpop.f32.mrb[0].mxu0
        %8099 = vdwg.mxu0
        %8100 = vmatprep.subr.bf16.mxu0 %v5221
        %8101 = vmatpush1.bf16.msra.mxu0 %v5220
        %8102 = vmatprep.subr.bf16.mxu0 %v5256
        %8103 = vmatpush1.bf16.msra.mxu0 %v5255
        %8104 = vmatprep.subr.bf16.mxu0 %v5291
        %8105 = vmatpush1.bf16.msra.mxu0 %v5290
        %8106 = vmatprep.subr.bf16.mxu0 %v5326
        %8107 = vmatpush1.bf16.msra.mxu0 %v5325
        %8108 = vmatprep.subr.bf16.mxu0 %v5361
        %8109 = vmatpush1.bf16.msra.mxu0 %v5360
        %8110 = vmatprep.subr.bf16.mxu0 %v5396
        %8111 = vmatpush1.bf16.msra.mxu0 %v5395
        %8112 = vmatprep.subr.bf16.mxu0 %v5431
        %8113 = vmatpush1.bf16.msra.mxu0 %v5430
        %8114 = vmatprep.subr.bf16.mxu0 %v5466
        %8115 = vmatpush1.bf16.msra.mxu0 %v5465
        %8116 = vmatprep.subr.bf16.mxu0 %v5501
        %8117 = vmatpush1.bf16.msra.mxu0 %v5500
        %8118 = vmatprep.subr.bf16.mxu0 %v5536
        %8119 = vmatpush1.bf16.msra.mxu0 %v5535
        %8120 = vmatprep.subr.bf16.mxu0 %v5571
        %8121 = vmatpush1.bf16.msra.mxu0 %v5570
        %8122 = vmatprep.subr.bf16.mxu0 %v5606
        %8123 = vmatpush1.bf16.msra.mxu0 %v5605
        %8124 = vmatprep.subr.bf16.mxu0 %v5641
        %8125 = vmatpush1.bf16.msra.mxu0 %v5640
        %8126 = vmatprep.subr.bf16.mxu0 %v5676
        %8127 = vmatpush1.bf16.msra.mxu0 %v5675
        %8128 = vmatprep.subr.bf16.mxu0 %v5711
        %8129 = vmatpush1.bf16.msra.mxu0 %v5710
        %8130 = vmatprep.subr.bf16.mxu0 %v5746
        %8131 = vmatpush1.bf16.msra.mxu0 %v5745
        %8132 = vmatprep.mubr.bf16.mxu0 %v468
        %8133 = vmatmul.mubr.bf16.gmra.mrb[0].mxu0 %v467
        %v8134 = vpop.f32.mrb[0].mxu0
        %v8135 = vadd.f32 %v1704, %v8134
        %v8136 = vpop.f32.mrb[0].mxu0
        %v8137 = vadd.f32 %v1708, %v8136
        %v8138 = vpop.f32.mrb[0].mxu0
        %v8139 = vpop.f32.mrb[0].mxu0
        %8140 = vdwg.mxu0
        %8141 = vmatprep.subr.bf16.mxu0 %v5781
        %8142 = vmatpush1.bf16.msra.mxu0 %v5780
        %8143 = vmatprep.subr.bf16.mxu0 %v5816
        %8144 = vmatpush1.bf16.msra.mxu0 %v5815
        %8145 = vmatprep.subr.bf16.mxu0 %v5851
        %8146 = vmatpush1.bf16.msra.mxu0 %v5850
        %8147 = vmatprep.subr.bf16.mxu0 %v5886
        %8148 = vmatpush1.bf16.msra.mxu0 %v5885
        %8149 = vmatprep.subr.bf16.mxu0 %v5921
        %8150 = vmatpush1.bf16.msra.mxu0 %v5920
        %8151 = vmatprep.subr.bf16.mxu0 %v5956
        %8152 = vmatpush1.bf16.msra.mxu0 %v5955
        %8153 = vmatprep.subr.bf16.mxu0 %v5991
        %8154 = vmatpush1.bf16.msra.mxu0 %v5990
        %8155 = vmatprep.subr.bf16.mxu0 %v6026
        %8156 = vmatpush1.bf16.msra.mxu0 %v6025
        %8157 = vmatprep.subr.bf16.mxu0 %v6061
        %8158 = vmatpush1.bf16.msra.mxu0 %v6060
        %8159 = vmatprep.subr.bf16.mxu0 %v6096
        %8160 = vmatpush1.bf16.msra.mxu0 %v6095
        %8161 = vmatprep.subr.bf16.mxu0 %v6131
        %8162 = vmatpush1.bf16.msra.mxu0 %v6130
        %8163 = vmatprep.subr.bf16.mxu0 %v6166
        %8164 = vmatpush1.bf16.msra.mxu0 %v6165
        %8165 = vmatprep.subr.bf16.mxu0 %v6201
        %8166 = vmatpush1.bf16.msra.mxu0 %v6200
        %8167 = vmatprep.subr.bf16.mxu0 %v6236
        %8168 = vmatpush1.bf16.msra.mxu0 %v6235
        %8169 = vmatprep.subr.bf16.mxu0 %v6271
        %8170 = vmatpush1.bf16.msra.mxu0 %v6270
        %8171 = vmatprep.subr.bf16.mxu0 %v6306
        %8172 = vmatpush1.bf16.msra.mxu0 %v6305
        %8173 = vmatprep.mubr.bf16.mxu0 %v470
        %8174 = vmatmul.mubr.bf16.gmra.mrb[0].mxu0 %v469
        %v8175 = vpop.f32.mrb[0].mxu0
        %v8176 = vadd.f32 %v8135, %v8175
        %v8177 = vpop.f32.mrb[0].mxu0
        %v8178 = vadd.f32 %v8137, %v8177
        %v8179 = vpop.f32.mrb[0].mxu0
        %v8180 = vpop.f32.mrb[0].mxu0
        %8181 = vdwg.mxu0
        %8182 = vmatprep.subr.bf16.mxu0 %v5223
        %8183 = vmatpush1.bf16.msra.mxu0 %v5222
        %8184 = vmatprep.subr.bf16.mxu0 %v5258
        %8185 = vmatpush1.bf16.msra.mxu0 %v5257
        %8186 = vmatprep.subr.bf16.mxu0 %v5293
        %8187 = vmatpush1.bf16.msra.mxu0 %v5292
        %8188 = vmatprep.subr.bf16.mxu0 %v5328
        %8189 = vmatpush1.bf16.msra.mxu0 %v5327
        %8190 = vmatprep.subr.bf16.mxu0 %v5363
        %8191 = vmatpush1.bf16.msra.mxu0 %v5362
        %8192 = vmatprep.subr.bf16.mxu0 %v5398
        %8193 = vmatpush1.bf16.msra.mxu0 %v5397
        %8194 = vmatprep.subr.bf16.mxu0 %v5433
        %8195 = vmatpush1.bf16.msra.mxu0 %v5432
        %8196 = vmatprep.subr.bf16.mxu0 %v5468
        %8197 = vmatpush1.bf16.msra.mxu0 %v5467
        %8198 = vmatprep.subr.bf16.mxu0 %v5503
        %8199 = vmatpush1.bf16.msra.mxu0 %v5502
        %8200 = vmatprep.subr.bf16.mxu0 %v5538
        %8201 = vmatpush1.bf16.msra.mxu0 %v5537
        %8202 = vmatprep.subr.bf16.mxu0 %v5573
        %8203 = vmatpush1.bf16.msra.mxu0 %v5572
        %8204 = vmatprep.subr.bf16.mxu0 %v5608
        %8205 = vmatpush1.bf16.msra.mxu0 %v5607
        %8206 = vmatprep.subr.bf16.mxu0 %v5643
        %8207 = vmatpush1.bf16.msra.mxu0 %v5642
        %8208 = vmatprep.subr.bf16.mxu0 %v5678
        %8209 = vmatpush1.bf16.msra.mxu0 %v5677
        %8210 = vmatprep.subr.bf16.mxu0 %v5713
        %8211 = vmatpush1.bf16.msra.mxu0 %v5712
        %8212 = vmatprep.subr.bf16.mxu0 %v5748
        %8213 = vmatpush1.bf16.msra.mxu0 %v5747
        %8214 = vmatprep.mubr.bf16.mxu0 %v468
        %8215 = vmatmul.mubr.bf16.gmra.mrb[0].mxu0 %v467
        %v8216 = vpop.f32.mrb[0].mxu0
        %v8217 = vadd.f32 %v1712, %v8216
        %v8218 = vpop.f32.mrb[0].mxu0
        %v8219 = vadd.f32 %v1716, %v8218
        %v8220 = vpop.f32.mrb[0].mxu0
        %v8221 = vpop.f32.mrb[0].mxu0
        %8222 = vdwg.mxu0
        %8223 = vmatprep.subr.bf16.mxu0 %v5783
        %8224 = vmatpush1.bf16.msra.mxu0 %v5782
        %8225 = vmatprep.subr.bf16.mxu0 %v5818
        %8226 = vmatpush1.bf16.msra.mxu0 %v5817
        %8227 = vmatprep.subr.bf16.mxu0 %v5853
        %8228 = vmatpush1.bf16.msra.mxu0 %v5852
        %8229 = vmatprep.subr.bf16.mxu0 %v5888
        %8230 = vmatpush1.bf16.msra.mxu0 %v5887
        %8231 = vmatprep.subr.bf16.mxu0 %v5923
        %8232 = vmatpush1.bf16.msra.mxu0 %v5922
        %8233 = vmatprep.subr.bf16.mxu0 %v5958
        %8234 = vmatpush1.bf16.msra.mxu0 %v5957
        %8235 = vmatprep.subr.bf16.mxu0 %v5993
        %8236 = vmatpush1.bf16.msra.mxu0 %v5992
        %8237 = vmatprep.subr.bf16.mxu0 %v6028
        %8238 = vmatpush1.bf16.msra.mxu0 %v6027
        %8239 = vmatprep.subr.bf16.mxu0 %v6063
        %8240 = vmatpush1.bf16.msra.mxu0 %v6062
        %8241 = vmatprep.subr.bf16.mxu0 %v6098
        %8242 = vmatpush1.bf16.msra.mxu0 %v6097
        %8243 = vmatprep.subr.bf16.mxu0 %v6133
        %8244 = vmatpush1.bf16.msra.mxu0 %v6132
        %8245 = vmatprep.subr.bf16.mxu0 %v6168
        %8246 = vmatpush1.bf16.msra.mxu0 %v6167
        %8247 = vmatprep.subr.bf16.mxu0 %v6203
        %8248 = vmatpush1.bf16.msra.mxu0 %v6202
        %8249 = vmatprep.subr.bf16.mxu0 %v6238
        %8250 = vmatpush1.bf16.msra.mxu0 %v6237
        %8251 = vmatprep.subr.bf16.mxu0 %v6273
        %8252 = vmatpush1.bf16.msra.mxu0 %v6272
        %8253 = vmatprep.subr.bf16.mxu0 %v6308
        %8254 = vmatpush1.bf16.msra.mxu0 %v6307
        %8255 = vmatprep.mubr.bf16.mxu0 %v470
        %8256 = vmatmul.mubr.bf16.gmra.mrb[0].mxu0 %v469
        %v8257 = vpop.f32.mrb[0].mxu0
        %v8258 = vadd.f32 %v8217, %v8257
        %v8259 = vpop.f32.mrb[0].mxu0
        %v8260 = vadd.f32 %v8219, %v8259
        %v8261 = vpop.f32.mrb[0].mxu0
        %v8262 = vpop.f32.mrb[0].mxu0
        %8263 = vdwg.mxu0
        %8264 = vmatprep.subr.bf16.mxu0 %v5225
        %8265 = vmatpush1.bf16.msra.mxu0 %v5224
        %8266 = vmatprep.subr.bf16.mxu0 %v5260
        %8267 = vmatpush1.bf16.msra.mxu0 %v5259
        %8268 = vmatprep.subr.bf16.mxu0 %v5295
        %8269 = vmatpush1.bf16.msra.mxu0 %v5294
        %8270 = vmatprep.subr.bf16.mxu0 %v5330
        %8271 = vmatpush1.bf16.msra.mxu0 %v5329
        %8272 = vmatprep.subr.bf16.mxu0 %v5365
        %8273 = vmatpush1.bf16.msra.mxu0 %v5364
        %8274 = vmatprep.subr.bf16.mxu0 %v5400
        %8275 = vmatpush1.bf16.msra.mxu0 %v5399
        %8276 = vmatprep.subr.bf16.mxu0 %v5435
        %8277 = vmatpush1.bf16.msra.mxu0 %v5434
        %8278 = vmatprep.subr.bf16.mxu0 %v5470
        %8279 = vmatpush1.bf16.msra.mxu0 %v5469
        %8280 = vmatprep.subr.bf16.mxu0 %v5505
        %8281 = vmatpush1.bf16.msra.mxu0 %v5504
        %8282 = vmatprep.subr.bf16.mxu0 %v5540
        %8283 = vmatpush1.bf16.msra.mxu0 %v5539
        %8284 = vmatprep.subr.bf16.mxu0 %v5575
        %8285 = vmatpush1.bf16.msra.mxu0 %v5574
        %8286 = vmatprep.subr.bf16.mxu0 %v5610
        %8287 = vmatpush1.bf16.msra.mxu0 %v5609
        %8288 = vmatprep.subr.bf16.mxu0 %v5645
        %8289 = vmatpush1.bf16.msra.mxu0 %v5644
        %8290 = vmatprep.subr.bf16.mxu0 %v5680
        %8291 = vmatpush1.bf16.msra.mxu0 %v5679
        %8292 = vmatprep.subr.bf16.mxu0 %v5715
        %8293 = vmatpush1.bf16.msra.mxu0 %v5714
        %8294 = vmatprep.subr.bf16.mxu0 %v5750
        %8295 = vmatpush1.bf16.msra.mxu0 %v5749
        %8296 = vmatprep.mubr.bf16.mxu0 %v468
        %8297 = vmatmul.mubr.bf16.gmra.mrb[0].mxu0 %v467
        %v8298 = vpop.f32.mrb[0].mxu0
        %v8299 = vadd.f32 %v1720, %v8298
        %v8300 = vpop.f32.mrb[0].mxu0
        %v8301 = vadd.f32 %v1724, %v8300
        %v8302 = vpop.f32.mrb[0].mxu0
        %v8303 = vpop.f32.mrb[0].mxu0
        %8304 = vdwg.mxu0
        %8305 = vmatprep.subr.bf16.mxu0 %v5785
        %8306 = vmatpush1.bf16.msra.mxu0 %v5784
        %8307 = vmatprep.subr.bf16.mxu0 %v5820
        %8308 = vmatpush1.bf16.msra.mxu0 %v5819
        %8309 = vmatprep.subr.bf16.mxu0 %v5855
        %8310 = vmatpush1.bf16.msra.mxu0 %v5854
        %8311 = vmatprep.subr.bf16.mxu0 %v5890
        %8312 = vmatpush1.bf16.msra.mxu0 %v5889
        %8313 = vmatprep.subr.bf16.mxu0 %v5925
        %8314 = vmatpush1.bf16.msra.mxu0 %v5924
        %8315 = vmatprep.subr.bf16.mxu0 %v5960
        %8316 = vmatpush1.bf16.msra.mxu0 %v5959
        %8317 = vmatprep.subr.bf16.mxu0 %v5995
        %8318 = vmatpush1.bf16.msra.mxu0 %v5994
        %8319 = vmatprep.subr.bf16.mxu0 %v6030
        %8320 = vmatpush1.bf16.msra.mxu0 %v6029
        %8321 = vmatprep.subr.bf16.mxu0 %v6065
        %8322 = vmatpush1.bf16.msra.mxu0 %v6064
        %8323 = vmatprep.subr.bf16.mxu0 %v6100
        %8324 = vmatpush1.bf16.msra.mxu0 %v6099
        %8325 = vmatprep.subr.bf16.mxu0 %v6135
        %8326 = vmatpush1.bf16.msra.mxu0 %v6134
        %8327 = vmatprep.subr.bf16.mxu0 %v6170
        %8328 = vmatpush1.bf16.msra.mxu0 %v6169
        %8329 = vmatprep.subr.bf16.mxu0 %v6205
        %8330 = vmatpush1.bf16.msra.mxu0 %v6204
        %8331 = vmatprep.subr.bf16.mxu0 %v6240
        %8332 = vmatpush1.bf16.msra.mxu0 %v6239
        %8333 = vmatprep.subr.bf16.mxu0 %v6275
        %8334 = vmatpush1.bf16.msra.mxu0 %v6274
        %8335 = vmatprep.subr.bf16.mxu0 %v6310
        %8336 = vmatpush1.bf16.msra.mxu0 %v6309
        %8337 = vmatprep.mubr.bf16.mxu0 %v470
        %8338 = vmatmul.mubr.bf16.gmra.mrb[0].mxu0 %v469
        %v8339 = vpop.f32.mrb[0].mxu0
        %v8340 = vadd.f32 %v8299, %v8339
        %v8341 = vpop.f32.mrb[0].mxu0
        %v8342 = vadd.f32 %v8301, %v8341
        %v8343 = vpop.f32.mrb[0].mxu0
        %v8344 = vpop.f32.mrb[0].mxu0
        %8345 = vdwg.mxu0
        %8346 = vmatprep.subr.bf16.mxu0 %v5227
        %8347 = vmatpush1.bf16.msra.mxu0 %v5226
        %8348 = vmatprep.subr.bf16.mxu0 %v5262
        %8349 = vmatpush1.bf16.msra.mxu0 %v5261
        %8350 = vmatprep.subr.bf16.mxu0 %v5297
        %8351 = vmatpush1.bf16.msra.mxu0 %v5296
        %8352 = vmatprep.subr.bf16.mxu0 %v5332
        %8353 = vmatpush1.bf16.msra.mxu0 %v5331
        %8354 = vmatprep.subr.bf16.mxu0 %v5367
        %8355 = vmatpush1.bf16.msra.mxu0 %v5366
        %8356 = vmatprep.subr.bf16.mxu0 %v5402
        %8357 = vmatpush1.bf16.msra.mxu0 %v5401
        %8358 = vmatprep.subr.bf16.mxu0 %v5437
        %8359 = vmatpush1.bf16.msra.mxu0 %v5436
        %8360 = vmatprep.subr.bf16.mxu0 %v5472
        %8361 = vmatpush1.bf16.msra.mxu0 %v5471
        %8362 = vmatprep.subr.bf16.mxu0 %v5507
        %8363 = vmatpush1.bf16.msra.mxu0 %v5506
        %8364 = vmatprep.subr.bf16.mxu0 %v5542
        %8365 = vmatpush1.bf16.msra.mxu0 %v5541
        %8366 = vmatprep.subr.bf16.mxu0 %v5577
        %8367 = vmatpush1.bf16.msra.mxu0 %v5576
        %8368 = vmatprep.subr.bf16.mxu0 %v5612
        %8369 = vmatpush1.bf16.msra.mxu0 %v5611
        %8370 = vmatprep.subr.bf16.mxu0 %v5647
        %8371 = vmatpush1.bf16.msra.mxu0 %v5646
        %8372 = vmatprep.subr.bf16.mxu0 %v5682
        %8373 = vmatpush1.bf16.msra.mxu0 %v5681
        %8374 = vmatprep.subr.bf16.mxu0 %v5717
        %8375 = vmatpush1.bf16.msra.mxu0 %v5716
        %8376 = vmatprep.subr.bf16.mxu0 %v5752
        %8377 = vmatpush1.bf16.msra.mxu0 %v5751
        %8378 = vmatprep.mubr.bf16.mxu0 %v468
        %8379 = vmatmul.mubr.bf16.gmra.mrb[0].mxu0 %v467
        %v8380 = vpop.f32.mrb[0].mxu0
        %v8381 = vadd.f32 %v1728, %v8380
        %v8382 = vpop.f32.mrb[0].mxu0
        %v8383 = vadd.f32 %v1732, %v8382
        %v8384 = vpop.f32.mrb[0].mxu0
        %v8385 = vpop.f32.mrb[0].mxu0
        %8386 = vdwg.mxu0
        %8387 = vmatprep.subr.bf16.mxu0 %v5787
        %8388 = vmatpush1.bf16.msra.mxu0 %v5786
        %8389 = vmatprep.subr.bf16.mxu0 %v5822
        %8390 = vmatpush1.bf16.msra.mxu0 %v5821
        %8391 = vmatprep.subr.bf16.mxu0 %v5857
        %8392 = vmatpush1.bf16.msra.mxu0 %v5856
        %8393 = vmatprep.subr.bf16.mxu0 %v5892
        %8394 = vmatpush1.bf16.msra.mxu0 %v5891
        %8395 = vmatprep.subr.bf16.mxu0 %v5927
        %8396 = vmatpush1.bf16.msra.mxu0 %v5926
        %8397 = vmatprep.subr.bf16.mxu0 %v5962
        %8398 = vmatpush1.bf16.msra.mxu0 %v5961
        %8399 = vmatprep.subr.bf16.mxu0 %v5997
        %8400 = vmatpush1.bf16.msra.mxu0 %v5996
        %8401 = vmatprep.subr.bf16.mxu0 %v6032
        %8402 = vmatpush1.bf16.msra.mxu0 %v6031
        %8403 = vmatprep.subr.bf16.mxu0 %v6067
        %8404 = vmatpush1.bf16.msra.mxu0 %v6066
        %8405 = vmatprep.subr.bf16.mxu0 %v6102
        %8406 = vmatpush1.bf16.msra.mxu0 %v6101
        %8407 = vmatprep.subr.bf16.mxu0 %v6137
        %8408 = vmatpush1.bf16.msra.mxu0 %v6136
        %8409 = vmatprep.subr.bf16.mxu0 %v6172
        %8410 = vmatpush1.bf16.msra.mxu0 %v6171
        %8411 = vmatprep.subr.bf16.mxu0 %v6207
        %8412 = vmatpush1.bf16.msra.mxu0 %v6206
        %8413 = vmatprep.subr.bf16.mxu0 %v6242
        %8414 = vmatpush1.bf16.msra.mxu0 %v6241
        %8415 = vmatprep.subr.bf16.mxu0 %v6277
        %8416 = vmatpush1.bf16.msra.mxu0 %v6276
        %8417 = vmatprep.subr.bf16.mxu0 %v6312
        %8418 = vmatpush1.bf16.msra.mxu0 %v6311
        %8419 = vmatprep.mubr.bf16.mxu0 %v470
        %8420 = vmatmul.mubr.bf16.gmra.mrb[0].mxu0 %v469
        %v8421 = vpop.f32.mrb[0].mxu0
        %v8422 = vadd.f32 %v8381, %v8421
        %v8423 = vpop.f32.mrb[0].mxu0
        %v8424 = vadd.f32 %v8383, %v8423
        %v8425 = vpop.f32.mrb[0].mxu0
        %v8426 = vpop.f32.mrb[0].mxu0
        %8427 = vdwg.mxu0
        %8428 = vmatprep.subr.bf16.mxu0 %v5229
        %8429 = vmatpush1.bf16.msra.mxu0 %v5228
        %8430 = vmatprep.subr.bf16.mxu0 %v5264
        %8431 = vmatpush1.bf16.msra.mxu0 %v5263
        %8432 = vmatprep.subr.bf16.mxu0 %v5299
        %8433 = vmatpush1.bf16.msra.mxu0 %v5298
        %8434 = vmatprep.subr.bf16.mxu0 %v5334
        %8435 = vmatpush1.bf16.msra.mxu0 %v5333
        %8436 = vmatprep.subr.bf16.mxu0 %v5369
        %8437 = vmatpush1.bf16.msra.mxu0 %v5368
        %8438 = vmatprep.subr.bf16.mxu0 %v5404
        %8439 = vmatpush1.bf16.msra.mxu0 %v5403
        %8440 = vmatprep.subr.bf16.mxu0 %v5439
        %8441 = vmatpush1.bf16.msra.mxu0 %v5438
        %8442 = vmatprep.subr.bf16.mxu0 %v5474
        %8443 = vmatpush1.bf16.msra.mxu0 %v5473
        %8444 = vmatprep.subr.bf16.mxu0 %v5509
        %8445 = vmatpush1.bf16.msra.mxu0 %v5508
        %8446 = vmatprep.subr.bf16.mxu0 %v5544
        %8447 = vmatpush1.bf16.msra.mxu0 %v5543
        %8448 = vmatprep.subr.bf16.mxu0 %v5579
        %8449 = vmatpush1.bf16.msra.mxu0 %v5578
        %8450 = vmatprep.subr.bf16.mxu0 %v5614
        %8451 = vmatpush1.bf16.msra.mxu0 %v5613
        %8452 = vmatprep.subr.bf16.mxu0 %v5649
        %8453 = vmatpush1.bf16.msra.mxu0 %v5648
        %8454 = vmatprep.subr.bf16.mxu0 %v5684
        %8455 = vmatpush1.bf16.msra.mxu0 %v5683
        %8456 = vmatprep.subr.bf16.mxu0 %v5719
        %8457 = vmatpush1.bf16.msra.mxu0 %v5718
        %8458 = vmatprep.subr.bf16.mxu0 %v5754
        %8459 = vmatpush1.bf16.msra.mxu0 %v5753
        %8460 = vmatprep.mubr.bf16.mxu0 %v468
        %8461 = vmatmul.mubr.bf16.gmra.mrb[0].mxu0 %v467
        %v8462 = vpop.f32.mrb[0].mxu0
        %v8463 = vadd.f32 %v1736, %v8462
        %v8464 = vpop.f32.mrb[0].mxu0
        %v8465 = vadd.f32 %v1740, %v8464
        %v8466 = vpop.f32.mrb[0].mxu0
        %v8467 = vpop.f32.mrb[0].mxu0
        %8468 = vdwg.mxu0
        %8469 = vmatprep.subr.bf16.mxu0 %v5789
        %8470 = vmatpush1.bf16.msra.mxu0 %v5788
        %8471 = vmatprep.subr.bf16.mxu0 %v5824
        %8472 = vmatpush1.bf16.msra.mxu0 %v5823
        %8473 = vmatprep.subr.bf16.mxu0 %v5859
        %8474 = vmatpush1.bf16.msra.mxu0 %v5858
        %8475 = vmatprep.subr.bf16.mxu0 %v5894
        %8476 = vmatpush1.bf16.msra.mxu0 %v5893
        %8477 = vmatprep.subr.bf16.mxu0 %v5929
        %8478 = vmatpush1.bf16.msra.mxu0 %v5928
        %8479 = vmatprep.subr.bf16.mxu0 %v5964
        %8480 = vmatpush1.bf16.msra.mxu0 %v5963
        %8481 = vmatprep.subr.bf16.mxu0 %v5999
        %8482 = vmatpush1.bf16.msra.mxu0 %v5998
        %8483 = vmatprep.subr.bf16.mxu0 %v6034
        %8484 = vmatpush1.bf16.msra.mxu0 %v6033
        %8485 = vmatprep.subr.bf16.mxu0 %v6069
        %8486 = vmatpush1.bf16.msra.mxu0 %v6068
        %8487 = vmatprep.subr.bf16.mxu0 %v6104
        %8488 = vmatpush1.bf16.msra.mxu0 %v6103
        %8489 = vmatprep.subr.bf16.mxu0 %v6139
        %8490 = vmatpush1.bf16.msra.mxu0 %v6138
        %8491 = vmatprep.subr.bf16.mxu0 %v6174
        %8492 = vmatpush1.bf16.msra.mxu0 %v6173
        %8493 = vmatprep.subr.bf16.mxu0 %v6209
        %8494 = vmatpush1.bf16.msra.mxu0 %v6208
        %8495 = vmatprep.subr.bf16.mxu0 %v6244
        %8496 = vmatpush1.bf16.msra.mxu0 %v6243
        %8497 = vmatprep.subr.bf16.mxu0 %v6279
        %8498 = vmatpush1.bf16.msra.mxu0 %v6278
        %8499 = vmatprep.subr.bf16.mxu0 %v6314
        %8500 = vmatpush1.bf16.msra.mxu0 %v6313
        %8501 = vmatprep.mubr.bf16.mxu0 %v470
        %8502 = vmatmul.mubr.bf16.gmra.mrb[0].mxu0 %v469
        %v8503 = vpop.f32.mrb[0].mxu0
        %v8504 = vadd.f32 %v8463, %v8503
        %v8505 = vpop.f32.mrb[0].mxu0
        %v8506 = vadd.f32 %v8465, %v8505
        %v8507 = vpop.f32.mrb[0].mxu0
        %v8508 = vpop.f32.mrb[0].mxu0
        %8509 = vdwg.mxu0
        %8510 = vmatprep.subr.bf16.mxu0 %v5231
        %8511 = vmatpush1.bf16.msra.mxu0 %v5230
        %8512 = vmatprep.subr.bf16.mxu0 %v5266
        %8513 = vmatpush1.bf16.msra.mxu0 %v5265
        %8514 = vmatprep.subr.bf16.mxu0 %v5301
        %8515 = vmatpush1.bf16.msra.mxu0 %v5300
        %8516 = vmatprep.subr.bf16.mxu0 %v5336
        %8517 = vmatpush1.bf16.msra.mxu0 %v5335
        %8518 = vmatprep.subr.bf16.mxu0 %v5371
        %8519 = vmatpush1.bf16.msra.mxu0 %v5370
        %8520 = vmatprep.subr.bf16.mxu0 %v5406
        %8521 = vmatpush1.bf16.msra.mxu0 %v5405
        %8522 = vmatprep.subr.bf16.mxu0 %v5441
        %8523 = vmatpush1.bf16.msra.mxu0 %v5440
        %8524 = vmatprep.subr.bf16.mxu0 %v5476
        %8525 = vmatpush1.bf16.msra.mxu0 %v5475
        %8526 = vmatprep.subr.bf16.mxu0 %v5511
        %8527 = vmatpush1.bf16.msra.mxu0 %v5510
        %8528 = vmatprep.subr.bf16.mxu0 %v5546
        %8529 = vmatpush1.bf16.msra.mxu0 %v5545
        %8530 = vmatprep.subr.bf16.mxu0 %v5581
        %8531 = vmatpush1.bf16.msra.mxu0 %v5580
        %8532 = vmatprep.subr.bf16.mxu0 %v5616
        %8533 = vmatpush1.bf16.msra.mxu0 %v5615
        %8534 = vmatprep.subr.bf16.mxu0 %v5651
        %8535 = vmatpush1.bf16.msra.mxu0 %v5650
        %8536 = vmatprep.subr.bf16.mxu0 %v5686
        %8537 = vmatpush1.bf16.msra.mxu0 %v5685
        %8538 = vmatprep.subr.bf16.mxu0 %v5721
        %8539 = vmatpush1.bf16.msra.mxu0 %v5720
        %8540 = vmatprep.subr.bf16.mxu0 %v5756
        %8541 = vmatpush1.bf16.msra.mxu0 %v5755
        %8542 = vmatprep.mubr.bf16.mxu0 %v468
        %8543 = vmatmul.mubr.bf16.gmra.mrb[0].mxu0 %v467
        %v8544 = vpop.f32.mrb[0].mxu0
        %v8545 = vadd.f32 %v1744, %v8544
        %v8546 = vpop.f32.mrb[0].mxu0
        %v8547 = vadd.f32 %v1748, %v8546
        %v8548 = vpop.f32.mrb[0].mxu0
        %v8549 = vpop.f32.mrb[0].mxu0
        %8550 = vdwg.mxu0
        %8551 = vmatprep.subr.bf16.mxu0 %v5791
        %8552 = vmatpush1.bf16.msra.mxu0 %v5790
        %8553 = vmatprep.subr.bf16.mxu0 %v5826
        %8554 = vmatpush1.bf16.msra.mxu0 %v5825
        %8555 = vmatprep.subr.bf16.mxu0 %v5861
        %8556 = vmatpush1.bf16.msra.mxu0 %v5860
        %8557 = vmatprep.subr.bf16.mxu0 %v5896
        %8558 = vmatpush1.bf16.msra.mxu0 %v5895
        %8559 = vmatprep.subr.bf16.mxu0 %v5931
        %8560 = vmatpush1.bf16.msra.mxu0 %v5930
        %8561 = vmatprep.subr.bf16.mxu0 %v5966
        %8562 = vmatpush1.bf16.msra.mxu0 %v5965
        %8563 = vmatprep.subr.bf16.mxu0 %v6001
        %8564 = vmatpush1.bf16.msra.mxu0 %v6000
        %8565 = vmatprep.subr.bf16.mxu0 %v6036
        %8566 = vmatpush1.bf16.msra.mxu0 %v6035
        %8567 = vmatprep.subr.bf16.mxu0 %v6071
        %8568 = vmatpush1.bf16.msra.mxu0 %v6070
        %8569 = vmatprep.subr.bf16.mxu0 %v6106
        %8570 = vmatpush1.bf16.msra.mxu0 %v6105
        %8571 = vmatprep.subr.bf16.mxu0 %v6141
        %8572 = vmatpush1.bf16.msra.mxu0 %v6140
        %8573 = vmatprep.subr.bf16.mxu0 %v6176
        %8574 = vmatpush1.bf16.msra.mxu0 %v6175
        %8575 = vmatprep.subr.bf16.mxu0 %v6211
        %8576 = vmatpush1.bf16.msra.mxu0 %v6210
        %8577 = vmatprep.subr.bf16.mxu0 %v6246
        %8578 = vmatpush1.bf16.msra.mxu0 %v6245
        %8579 = vmatprep.subr.bf16.mxu0 %v6281
        %8580 = vmatpush1.bf16.msra.mxu0 %v6280
        %8581 = vmatprep.subr.bf16.mxu0 %v6316
        %8582 = vmatpush1.bf16.msra.mxu0 %v6315
        %8583 = vmatprep.mubr.bf16.mxu0 %v470
        %8584 = vmatmul.mubr.bf16.gmra.mrb[0].mxu0 %v469
        %v8585 = vpop.f32.mrb[0].mxu0
        %v8586 = vadd.f32 %v8545, %v8585
        %v8587 = vpop.f32.mrb[0].mxu0
        %v8588 = vadd.f32 %v8547, %v8587
        %v8589 = vpop.f32.mrb[0].mxu0
        %v8590 = vpop.f32.mrb[0].mxu0
        %8591 = vdwg.mxu0
        %8592 = vmatprep.subr.bf16.mxu0 %v5233
        %8593 = vmatpush1.bf16.msra.mxu0 %v5232
        %8594 = vmatprep.subr.bf16.mxu0 %v5268
        %8595 = vmatpush1.bf16.msra.mxu0 %v5267
        %8596 = vmatprep.subr.bf16.mxu0 %v5303
        %8597 = vmatpush1.bf16.msra.mxu0 %v5302
        %8598 = vmatprep.subr.bf16.mxu0 %v5338
        %8599 = vmatpush1.bf16.msra.mxu0 %v5337
        %8600 = vmatprep.subr.bf16.mxu0 %v5373
        %8601 = vmatpush1.bf16.msra.mxu0 %v5372
        %8602 = vmatprep.subr.bf16.mxu0 %v5408
        %8603 = vmatpush1.bf16.msra.mxu0 %v5407
        %8604 = vmatprep.subr.bf16.mxu0 %v5443
        %8605 = vmatpush1.bf16.msra.mxu0 %v5442
        %8606 = vmatprep.subr.bf16.mxu0 %v5478
        %8607 = vmatpush1.bf16.msra.mxu0 %v5477
        %8608 = vmatprep.subr.bf16.mxu0 %v5513
        %8609 = vmatpush1.bf16.msra.mxu0 %v5512
        %8610 = vmatprep.subr.bf16.mxu0 %v5548
        %8611 = vmatpush1.bf16.msra.mxu0 %v5547
        %8612 = vmatprep.subr.bf16.mxu0 %v5583
        %8613 = vmatpush1.bf16.msra.mxu0 %v5582
        %8614 = vmatprep.subr.bf16.mxu0 %v5618
        %8615 = vmatpush1.bf16.msra.mxu0 %v5617
        %8616 = vmatprep.subr.bf16.mxu0 %v5653
        %8617 = vmatpush1.bf16.msra.mxu0 %v5652
        %8618 = vmatprep.subr.bf16.mxu0 %v5688
        %8619 = vmatpush1.bf16.msra.mxu0 %v5687
        %8620 = vmatprep.subr.bf16.mxu0 %v5723
        %8621 = vmatpush1.bf16.msra.mxu0 %v5722
        %8622 = vmatprep.subr.bf16.mxu0 %v5758
        %8623 = vmatpush1.bf16.msra.mxu0 %v5757
        %8624 = vmatprep.mubr.bf16.mxu0 %v468
        %8625 = vmatmul.mubr.bf16.gmra.mrb[0].mxu0 %v467
        %v8626 = vpop.f32.mrb[0].mxu0
        %v8627 = vadd.f32 %v1752, %v8626
        %v8628 = vpop.f32.mrb[0].mxu0
        %v8629 = vadd.f32 %v1756, %v8628
        %v8630 = vpop.f32.mrb[0].mxu0
        %v8631 = vpop.f32.mrb[0].mxu0
        %8632 = vdwg.mxu0
        %8633 = vmatprep.subr.bf16.mxu0 %v5793
        %8634 = vmatpush1.bf16.msra.mxu0 %v5792
        %8635 = vmatprep.subr.bf16.mxu0 %v5828
        %8636 = vmatpush1.bf16.msra.mxu0 %v5827
        %8637 = vmatprep.subr.bf16.mxu0 %v5863
        %8638 = vmatpush1.bf16.msra.mxu0 %v5862
        %8639 = vmatprep.subr.bf16.mxu0 %v5898
        %8640 = vmatpush1.bf16.msra.mxu0 %v5897
        %8641 = vmatprep.subr.bf16.mxu0 %v5933
        %8642 = vmatpush1.bf16.msra.mxu0 %v5932
        %8643 = vmatprep.subr.bf16.mxu0 %v5968
        %8644 = vmatpush1.bf16.msra.mxu0 %v5967
        %8645 = vmatprep.subr.bf16.mxu0 %v6003
        %8646 = vmatpush1.bf16.msra.mxu0 %v6002
        %8647 = vmatprep.subr.bf16.mxu0 %v6038
        %8648 = vmatpush1.bf16.msra.mxu0 %v6037
        %8649 = vmatprep.subr.bf16.mxu0 %v6073
        %8650 = vmatpush1.bf16.msra.mxu0 %v6072
        %8651 = vmatprep.subr.bf16.mxu0 %v6108
        %8652 = vmatpush1.bf16.msra.mxu0 %v6107
        %8653 = vmatprep.subr.bf16.mxu0 %v6143
        %8654 = vmatpush1.bf16.msra.mxu0 %v6142
        %8655 = vmatprep.subr.bf16.mxu0 %v6178
        %8656 = vmatpush1.bf16.msra.mxu0 %v6177
        %8657 = vmatprep.subr.bf16.mxu0 %v6213
        %8658 = vmatpush1.bf16.msra.mxu0 %v6212
        %8659 = vmatprep.subr.bf16.mxu0 %v6248
        %8660 = vmatpush1.bf16.msra.mxu0 %v6247
        %8661 = vmatprep.subr.bf16.mxu0 %v6283
        %8662 = vmatpush1.bf16.msra.mxu0 %v6282
        %8663 = vmatprep.subr.bf16.mxu0 %v6318
        %8664 = vmatpush1.bf16.msra.mxu0 %v6317
        %8665 = vmatprep.mubr.bf16.mxu0 %v470
        %8666 = vmatmul.mubr.bf16.gmra.mrb[0].mxu0 %v469
        %v8667 = vpop.f32.mrb[0].mxu0
        %v8668 = vadd.f32 %v8627, %v8667
        %v8669 = vpop.f32.mrb[0].mxu0
        %v8670 = vadd.f32 %v8629, %v8669
        %v8671 = vpop.f32.mrb[0].mxu0
        %v8672 = vpop.f32.mrb[0].mxu0
        %8673 = vdwg.mxu0
        %8674 = vmatprep.subr.bf16.mxu0 %v5235
        %8675 = vmatpush1.bf16.msra.mxu0 %v5234
        %8676 = vmatprep.subr.bf16.mxu0 %v5270
        %8677 = vmatpush1.bf16.msra.mxu0 %v5269
        %8678 = vmatprep.subr.bf16.mxu0 %v5305
        %8679 = vmatpush1.bf16.msra.mxu0 %v5304
        %8680 = vmatprep.subr.bf16.mxu0 %v5340
        %8681 = vmatpush1.bf16.msra.mxu0 %v5339
        %8682 = vmatprep.subr.bf16.mxu0 %v5375
        %8683 = vmatpush1.bf16.msra.mxu0 %v5374
        %8684 = vmatprep.subr.bf16.mxu0 %v5410
        %8685 = vmatpush1.bf16.msra.mxu0 %v5409
        %8686 = vmatprep.subr.bf16.mxu0 %v5445
        %8687 = vmatpush1.bf16.msra.mxu0 %v5444
        %8688 = vmatprep.subr.bf16.mxu0 %v5480
        %8689 = vmatpush1.bf16.msra.mxu0 %v5479
        %8690 = vmatprep.subr.bf16.mxu0 %v5515
        %8691 = vmatpush1.bf16.msra.mxu0 %v5514
        %8692 = vmatprep.subr.bf16.mxu0 %v5550
        %8693 = vmatpush1.bf16.msra.mxu0 %v5549
        %8694 = vmatprep.subr.bf16.mxu0 %v5585
        %8695 = vmatpush1.bf16.msra.mxu0 %v5584
        %8696 = vmatprep.subr.bf16.mxu0 %v5620
        %8697 = vmatpush1.bf16.msra.mxu0 %v5619
        %8698 = vmatprep.subr.bf16.mxu0 %v5655
        %8699 = vmatpush1.bf16.msra.mxu0 %v5654
        %8700 = vmatprep.subr.bf16.mxu0 %v5690
        %8701 = vmatpush1.bf16.msra.mxu0 %v5689
        %8702 = vmatprep.subr.bf16.mxu0 %v5725
        %8703 = vmatpush1.bf16.msra.mxu0 %v5724
        %8704 = vmatprep.subr.bf16.mxu0 %v5760
        %8705 = vmatpush1.bf16.msra.mxu0 %v5759
        %8706 = vmatprep.mubr.bf16.mxu0 %v468
        %8707 = vmatmul.mubr.bf16.gmra.mrb[0].mxu0 %v467
        %v8708 = vpop.f32.mrb[0].mxu0
        %v8709 = vadd.f32 %v1760, %v8708
        %v8710 = vpop.f32.mrb[0].mxu0
        %v8711 = vadd.f32 %v1764, %v8710
        %v8712 = vpop.f32.mrb[0].mxu0
        %v8713 = vpop.f32.mrb[0].mxu0
        %8714 = vdwg.mxu0
        %8715 = vmatprep.subr.bf16.mxu0 %v5795
        %8716 = vmatpush1.bf16.msra.mxu0 %v5794
        %8717 = vmatprep.subr.bf16.mxu0 %v5830
        %8718 = vmatpush1.bf16.msra.mxu0 %v5829
        %8719 = vmatprep.subr.bf16.mxu0 %v5865
        %8720 = vmatpush1.bf16.msra.mxu0 %v5864
        %8721 = vmatprep.subr.bf16.mxu0 %v5900
        %8722 = vmatpush1.bf16.msra.mxu0 %v5899
        %8723 = vmatprep.subr.bf16.mxu0 %v5935
        %8724 = vmatpush1.bf16.msra.mxu0 %v5934
        %8725 = vmatprep.subr.bf16.mxu0 %v5970
        %8726 = vmatpush1.bf16.msra.mxu0 %v5969
        %8727 = vmatprep.subr.bf16.mxu0 %v6005
        %8728 = vmatpush1.bf16.msra.mxu0 %v6004
        %8729 = vmatprep.subr.bf16.mxu0 %v6040
        %8730 = vmatpush1.bf16.msra.mxu0 %v6039
        %8731 = vmatprep.subr.bf16.mxu0 %v6075
        %8732 = vmatpush1.bf16.msra.mxu0 %v6074
        %8733 = vmatprep.subr.bf16.mxu0 %v6110
        %8734 = vmatpush1.bf16.msra.mxu0 %v6109
        %8735 = vmatprep.subr.bf16.mxu0 %v6145
        %8736 = vmatpush1.bf16.msra.mxu0 %v6144
        %8737 = vmatprep.subr.bf16.mxu0 %v6180
        %8738 = vmatpush1.bf16.msra.mxu0 %v6179
        %8739 = vmatprep.subr.bf16.mxu0 %v6215
        %8740 = vmatpush1.bf16.msra.mxu0 %v6214
        %8741 = vmatprep.subr.bf16.mxu0 %v6250
        %8742 = vmatpush1.bf16.msra.mxu0 %v6249
        %8743 = vmatprep.subr.bf16.mxu0 %v6285
        %8744 = vmatpush1.bf16.msra.mxu0 %v6284
        %8745 = vmatprep.subr.bf16.mxu0 %v6320
        %8746 = vmatpush1.bf16.msra.mxu0 %v6319
        %8747 = vmatprep.mubr.bf16.mxu0 %v470
        %8748 = vmatmul.mubr.bf16.gmra.mrb[0].mxu0 %v469
        %v8749 = vpop.f32.mrb[0].mxu0
        %v8750 = vadd.f32 %v8709, %v8749
        %v8751 = vpop.f32.mrb[0].mxu0
        %v8752 = vadd.f32 %v8711, %v8751
        %v8753 = vpop.f32.mrb[0].mxu0
        %v8754 = vpop.f32.mrb[0].mxu0
        %8755 = vdwg.mxu0
        %8756 = vmatprep.subr.bf16.mxu0 %v5237
        %8757 = vmatpush1.bf16.msra.mxu0 %v5236
        %8758 = vmatprep.subr.bf16.mxu0 %v5272
        %8759 = vmatpush1.bf16.msra.mxu0 %v5271
        %8760 = vmatprep.subr.bf16.mxu0 %v5307
        %8761 = vmatpush1.bf16.msra.mxu0 %v5306
        %8762 = vmatprep.subr.bf16.mxu0 %v5342
        %8763 = vmatpush1.bf16.msra.mxu0 %v5341
        %8764 = vmatprep.subr.bf16.mxu0 %v5377
        %8765 = vmatpush1.bf16.msra.mxu0 %v5376
        %8766 = vmatprep.subr.bf16.mxu0 %v5412
        %8767 = vmatpush1.bf16.msra.mxu0 %v5411
        %8768 = vmatprep.subr.bf16.mxu0 %v5447
        %8769 = vmatpush1.bf16.msra.mxu0 %v5446
        %8770 = vmatprep.subr.bf16.mxu0 %v5482
        %8771 = vmatpush1.bf16.msra.mxu0 %v5481
        %8772 = vmatprep.subr.bf16.mxu0 %v5517
        %8773 = vmatpush1.bf16.msra.mxu0 %v5516
        %8774 = vmatprep.subr.bf16.mxu0 %v5552
        %8775 = vmatpush1.bf16.msra.mxu0 %v5551
        %8776 = vmatprep.subr.bf16.mxu0 %v5587
        %8777 = vmatpush1.bf16.msra.mxu0 %v5586
        %8778 = vmatprep.subr.bf16.mxu0 %v5622
        %8779 = vmatpush1.bf16.msra.mxu0 %v5621
        %8780 = vmatprep.subr.bf16.mxu0 %v5657
        %8781 = vmatpush1.bf16.msra.mxu0 %v5656
        %8782 = vmatprep.subr.bf16.mxu0 %v5692
        %8783 = vmatpush1.bf16.msra.mxu0 %v5691
        %8784 = vmatprep.subr.bf16.mxu0 %v5727
        %8785 = vmatpush1.bf16.msra.mxu0 %v5726
        %8786 = vmatprep.subr.bf16.mxu0 %v5762
        %8787 = vmatpush1.bf16.msra.mxu0 %v5761
        %8788 = vmatprep.mubr.bf16.mxu0 %v468
        %8789 = vmatmul.mubr.bf16.gmra.mrb[0].mxu0 %v467
        %v8790 = vpop.f32.mrb[0].mxu0
        %v8791 = vadd.f32 %v1768, %v8790
        %v8792 = vpop.f32.mrb[0].mxu0
        %v8793 = vadd.f32 %v1772, %v8792
        %v8794 = vpop.f32.mrb[0].mxu0
        %v8795 = vpop.f32.mrb[0].mxu0
        %8796 = vdwg.mxu0
        %8797 = vmatprep.subr.bf16.mxu0 %v5797
        %8798 = vmatpush1.bf16.msra.mxu0 %v5796
        %8799 = vmatprep.subr.bf16.mxu0 %v5832
        %8800 = vmatpush1.bf16.msra.mxu0 %v5831
        %8801 = vmatprep.subr.bf16.mxu0 %v5867
        %8802 = vmatpush1.bf16.msra.mxu0 %v5866
        %8803 = vmatprep.subr.bf16.mxu0 %v5902
        %8804 = vmatpush1.bf16.msra.mxu0 %v5901
        %8805 = vmatprep.subr.bf16.mxu0 %v5937
        %8806 = vmatpush1.bf16.msra.mxu0 %v5936
        %8807 = vmatprep.subr.bf16.mxu0 %v5972
        %8808 = vmatpush1.bf16.msra.mxu0 %v5971
        %8809 = vmatprep.subr.bf16.mxu0 %v6007
        %8810 = vmatpush1.bf16.msra.mxu0 %v6006
        %8811 = vmatprep.subr.bf16.mxu0 %v6042
        %8812 = vmatpush1.bf16.msra.mxu0 %v6041
        %8813 = vmatprep.subr.bf16.mxu0 %v6077
        %8814 = vmatpush1.bf16.msra.mxu0 %v6076
        %8815 = vmatprep.subr.bf16.mxu0 %v6112
        %8816 = vmatpush1.bf16.msra.mxu0 %v6111
        %8817 = vmatprep.subr.bf16.mxu0 %v6147
        %8818 = vmatpush1.bf16.msra.mxu0 %v6146
        %8819 = vmatprep.subr.bf16.mxu0 %v6182
        %8820 = vmatpush1.bf16.msra.mxu0 %v6181
        %8821 = vmatprep.subr.bf16.mxu0 %v6217
        %8822 = vmatpush1.bf16.msra.mxu0 %v6216
        %8823 = vmatprep.subr.bf16.mxu0 %v6252
        %8824 = vmatpush1.bf16.msra.mxu0 %v6251
        %8825 = vmatprep.subr.bf16.mxu0 %v6287
        %8826 = vmatpush1.bf16.msra.mxu0 %v6286
        %8827 = vmatprep.subr.bf16.mxu0 %v6322
        %8828 = vmatpush1.bf16.msra.mxu0 %v6321
        %8829 = vmatprep.mubr.bf16.mxu0 %v470
        %8830 = vmatmul.mubr.bf16.gmra.mrb[0].mxu0 %v469
        %v8831 = vpop.f32.mrb[0].mxu0
        %v8832 = vadd.f32 %v8791, %v8831
        %v8833 = vpop.f32.mrb[0].mxu0
        %v8834 = vadd.f32 %v8793, %v8833
        %v8835 = vpop.f32.mrb[0].mxu0
        %v8836 = vpop.f32.mrb[0].mxu0
        %8837 = vdwg.mxu0
        %8838 = vmatprep.subr.bf16.mxu0 0
        %8839 = vmatpush1.bf16.msra.mxu0 %v5238
        %8840 = vmatprep.subr.bf16.mxu0 0
        %8841 = vmatpush1.bf16.msra.mxu0 %v5273
        %8842 = vmatprep.subr.bf16.mxu0 0
        %8843 = vmatpush1.bf16.msra.mxu0 %v5308
        %8844 = vmatprep.subr.bf16.mxu0 0
        %8845 = vmatpush1.bf16.msra.mxu0 %v5343
        %8846 = vmatprep.subr.bf16.mxu0 0
        %8847 = vmatpush1.bf16.msra.mxu0 %v5378
        %8848 = vmatprep.subr.bf16.mxu0 0
        %8849 = vmatpush1.bf16.msra.mxu0 %v5413
        %8850 = vmatprep.subr.bf16.mxu0 0
        %8851 = vmatpush1.bf16.msra.mxu0 %v5448
        %8852 = vmatprep.subr.bf16.mxu0 0
        %8853 = vmatpush1.bf16.msra.mxu0 %v5483
        %8854 = vmatprep.subr.bf16.mxu0 0
        %8855 = vmatpush1.bf16.msra.mxu0 %v5518
        %8856 = vmatprep.subr.bf16.mxu0 0
        %8857 = vmatpush1.bf16.msra.mxu0 %v5553
        %8858 = vmatprep.subr.bf16.mxu0 0
        %8859 = vmatpush1.bf16.msra.mxu0 %v5588
        %8860 = vmatprep.subr.bf16.mxu0 0
        %8861 = vmatpush1.bf16.msra.mxu0 %v5623
        %8862 = vmatprep.subr.bf16.mxu0 0
        %8863 = vmatpush1.bf16.msra.mxu0 %v5658
        %8864 = vmatprep.subr.bf16.mxu0 0
        %8865 = vmatpush1.bf16.msra.mxu0 %v5693
        %8866 = vmatprep.subr.bf16.mxu0 0
        %8867 = vmatpush1.bf16.msra.mxu0 %v5728
        %8868 = vmatprep.subr.bf16.mxu0 0
        %8869 = vmatpush1.bf16.msra.mxu0 %v5763
        %8870 = vmatprep.mubr.bf16.mxu0 %v468
        %8871 = vmatmul.mubr.bf16.gmra.mrb[0].mxu0 %v467
        %v8872 = vpop.f32.mrb[0].mxu0
        %v8873 = vadd.f32 %v1776, %v8872
        %v8874 = vpop.f32.mrb[0].mxu0
        %v8875 = vpop.f32.mrb[0].mxu0
        %v8876 = vpop.f32.mrb[0].mxu0
        %8877 = vdwg.mxu0
        %8878 = vmatprep.subr.bf16.mxu0 0
        %8879 = vmatpush1.bf16.msra.mxu0 %v5798
        %8880 = vmatprep.subr.bf16.mxu0 0
        %8881 = vmatpush1.bf16.msra.mxu0 %v5833
        %8882 = vmatprep.subr.bf16.mxu0 0
        %8883 = vmatpush1.bf16.msra.mxu0 %v5868
        %8884 = vmatprep.subr.bf16.mxu0 0
        %8885 = vmatpush1.bf16.msra.mxu0 %v5903
        %8886 = vmatprep.subr.bf16.mxu0 0
        %8887 = vmatpush1.bf16.msra.mxu0 %v5938
        %8888 = vmatprep.subr.bf16.mxu0 0
        %8889 = vmatpush1.bf16.msra.mxu0 %v5973
        %8890 = vmatprep.subr.bf16.mxu0 0
        %8891 = vmatpush1.bf16.msra.mxu0 %v6008
        %8892 = vmatprep.subr.bf16.mxu0 0
        %8893 = vmatpush1.bf16.msra.mxu0 %v6043
        %8894 = vmatprep.subr.bf16.mxu0 0
        %8895 = vmatpush1.bf16.msra.mxu0 %v6078
        %8896 = vmatprep.subr.bf16.mxu0 0
        %8897 = vmatpush1.bf16.msra.mxu0 %v6113
        %8898 = vmatprep.subr.bf16.mxu0 0
        %8899 = vmatpush1.bf16.msra.mxu0 %v6148
        %8900 = vmatprep.subr.bf16.mxu0 0
        %8901 = vmatpush1.bf16.msra.mxu0 %v6183
        %8902 = vmatprep.subr.bf16.mxu0 0
        %8903 = vmatpush1.bf16.msra.mxu0 %v6218
        %8904 = vmatprep.subr.bf16.mxu0 0
        %8905 = vmatpush1.bf16.msra.mxu0 %v6253
        %8906 = vmatprep.subr.bf16.mxu0 0
        %8907 = vmatpush1.bf16.msra.mxu0 %v6288
        %8908 = vmatprep.subr.bf16.mxu0 0
        %8909 = vmatpush1.bf16.msra.mxu0 %v6323
        %8910 = vmatprep.mubr.bf16.mxu0 %v470
        %8911 = vmatmul.mubr.bf16.gmra.mrb[0].mxu0 %v469
        %v8912 = vpop.f32.mrb[0].mxu0
        %v8913 = vadd.f32 %v8873, %v8912
        %v8914 = vpop.f32.mrb[0].mxu0
        %v8915 = vpop.f32.mrb[0].mxu0
        %v8916 = vpop.f32.mrb[0].mxu0
        %8917 = vdwg.mxu0
        %v8918 = vxor.u32 %v7520, 2147483648
        %v8919 = vxor.u32 %v7522, 2147483648
        %v8920 = vxor.u32 %v7602, 2147483648
        %v8921 = vxor.u32 %v7604, 2147483648
        %v8922 = vxor.u32 %v7684, 2147483648
        %v8923 = vxor.u32 %v7686, 2147483648
        %v8924 = vxor.u32 %v7766, 2147483648
        %v8925 = vxor.u32 %v7768, 2147483648
        %v8926 = vxor.u32 %v7848, 2147483648
        %v8927 = vxor.u32 %v7850, 2147483648
        %v8928 = vxor.u32 %v7930, 2147483648
        %v8929 = vxor.u32 %v7932, 2147483648
        %v8930 = vxor.u32 %v8012, 2147483648
        %v8931 = vxor.u32 %v8014, 2147483648
        %v8932 = vxor.u32 %v8094, 2147483648
        %v8933 = vxor.u32 %v8096, 2147483648
        %v8934 = vxor.u32 %v8176, 2147483648
        %v8935 = vxor.u32 %v8178, 2147483648
        %v8936 = vxor.u32 %v8258, 2147483648
        %v8937 = vxor.u32 %v8260, 2147483648
        %v8938 = vxor.u32 %v8340, 2147483648
        %v8939 = vxor.u32 %v8342, 2147483648
        %v8940 = vxor.u32 %v8422, 2147483648
        %v8941 = vxor.u32 %v8424, 2147483648
        %v8942 = vxor.u32 %v8504, 2147483648
        %v8943 = vxor.u32 %v8506, 2147483648
        %v8944 = vxor.u32 %v8586, 2147483648
        %v8945 = vxor.u32 %v8588, 2147483648
        %v8946 = vxor.u32 %v8668, 2147483648
        %v8947 = vxor.u32 %v8670, 2147483648
        %v8948 = vxor.u32 %v8750, 2147483648
        %v8949 = vxor.u32 %v8752, 2147483648
        %v8950 = vxor.u32 %v8832, 2147483648
        %v8951 = vxor.u32 %v8834, 2147483648
        %v8952 = vxor.u32 %v8913, 2147483648
        %v8953 = vmul.f32 %v8918, 1.442695
        %v8954 = vpow.pop %v8953
        %v8955 = vmul.f32 %v8919, 1.442695
        %v8956 = vpow.pop %v8955
        %v8957 = vmul.f32 %v8920, 1.442695
        %v8958 = vpow.pop %v8957
        %v8959 = vmul.f32 %v8921, 1.442695
        %v8960 = vpow.pop %v8959
        %v8961 = vmul.f32 %v8922, 1.442695
        %v8962 = vpow.pop %v8961
        %v8963 = vmul.f32 %v8923, 1.442695
        %v8964 = vpow.pop %v8963
        %v8965 = vmul.f32 %v8924, 1.442695
        %v8966 = vpow.pop %v8965
        %v8967 = vmul.f32 %v8925, 1.442695
        %v8968 = vpow.pop %v8967
        %v8969 = vmul.f32 %v8926, 1.442695
        %v8970 = vpow.pop %v8969
        %v8971 = vmul.f32 %v8927, 1.442695
        %v8972 = vpow.pop %v8971
        %v8973 = vmul.f32 %v8928, 1.442695
        %v8974 = vpow.pop %v8973
        %v8975 = vmul.f32 %v8929, 1.442695
        %v8976 = vpow.pop %v8975
        %v8977 = vmul.f32 %v8930, 1.442695
        %v8978 = vpow.pop %v8977
        %v8979 = vmul.f32 %v8931, 1.442695
        %v8980 = vpow.pop %v8979
        %v8981 = vmul.f32 %v8932, 1.442695
        %v8982 = vpow.pop %v8981
        %v8983 = vmul.f32 %v8933, 1.442695
        %v8984 = vpow.pop %v8983
        %v8985 = vmul.f32 %v8934, 1.442695
        %v8986 = vpow.pop %v8985
        %v8987 = vmul.f32 %v8935, 1.442695
        %v8988 = vpow.pop %v8987
        %v8989 = vmul.f32 %v8936, 1.442695
        %v8990 = vpow.pop %v8989
        %v8991 = vmul.f32 %v8937, 1.442695
        %v8992 = vpow.pop %v8991
        %v8993 = vmul.f32 %v8938, 1.442695
        %v8994 = vpow.pop %v8993
        %v8995 = vmul.f32 %v8939, 1.442695
        %v8996 = vpow.pop %v8995
        %v8997 = vmul.f32 %v8940, 1.442695
        %v8998 = vpow.pop %v8997
        %v8999 = vmul.f32 %v8941, 1.442695
        %v9000 = vpow.pop %v8999
        %v9001 = vmul.f32 %v8942, 1.442695
        %v9002 = vpow.pop %v9001
        %v9003 = vmul.f32 %v8943, 1.442695
        %v9004 = vpow.pop %v9003
        %v9005 = vmul.f32 %v8944, 1.442695
        %v9006 = vpow.pop %v9005
        %v9007 = vmul.f32 %v8945, 1.442695
        %v9008 = vpow.pop %v9007
        %v9009 = vmul.f32 %v8946, 1.442695
        %v9010 = vpow.pop %v9009
        %v9011 = vmul.f32 %v8947, 1.442695
        %v9012 = vpow.pop %v9011
        %v9013 = vmul.f32 %v8948, 1.442695
        %v9014 = vpow.pop %v9013
        %v9015 = vmul.f32 %v8949, 1.442695
        %v9016 = vpow.pop %v9015
        %v9017 = vmul.f32 %v8950, 1.442695
        %v9018 = vpow.pop %v9017
        %v9019 = vmul.f32 %v8951, 1.442695
        %v9020 = vpow.pop %v9019
        %v9021 = vmul.f32 %v8952, 1.442695
        %v9022 = vpow.pop %v9021
        %v9023 = vadd.f32 %v8954, 1.0
        %v9024 = vadd.f32 %v8956, 1.0
        %v9025 = vadd.f32 %v8958, 1.0
        %v9026 = vadd.f32 %v8960, 1.0
        %v9027 = vadd.f32 %v8962, 1.0
        %v9028 = vadd.f32 %v8964, 1.0
        %v9029 = vadd.f32 %v8966, 1.0
        %v9030 = vadd.f32 %v8968, 1.0
        %v9031 = vadd.f32 %v8970, 1.0
        %v9032 = vadd.f32 %v8972, 1.0
        %v9033 = vadd.f32 %v8974, 1.0
        %v9034 = vadd.f32 %v8976, 1.0
        %v9035 = vadd.f32 %v8978, 1.0
        %v9036 = vadd.f32 %v8980, 1.0
        %v9037 = vadd.f32 %v8982, 1.0
        %v9038 = vadd.f32 %v8984, 1.0
        %v9039 = vadd.f32 %v8986, 1.0
        %v9040 = vadd.f32 %v8988, 1.0
        %v9041 = vadd.f32 %v8990, 1.0
        %v9042 = vadd.f32 %v8992, 1.0
        %v9043 = vadd.f32 %v8994, 1.0
        %v9044 = vadd.f32 %v8996, 1.0
        %v9045 = vadd.f32 %v8998, 1.0
        %v9046 = vadd.f32 %v9000, 1.0
        %v9047 = vadd.f32 %v9002, 1.0
        %v9048 = vadd.f32 %v9004, 1.0
        %v9049 = vadd.f32 %v9006, 1.0
        %v9050 = vadd.f32 %v9008, 1.0
        %v9051 = vadd.f32 %v9010, 1.0
        %v9052 = vadd.f32 %v9012, 1.0
        %v9053 = vadd.f32 %v9014, 1.0
        %v9054 = vadd.f32 %v9016, 1.0
        %v9055 = vadd.f32 %v9018, 1.0
        %v9056 = vadd.f32 %v9020, 1.0
        %v9057 = vadd.f32 %v9022, 1.0
        %v9058 = vrcp.pop %v9023
        %v9059 = vmul.f32 1.0, %v9058
        %v9060 = vrcp.pop %v9024
        %v9061 = vmul.f32 1.0, %v9060
        %v9062 = vrcp.pop %v9025
        %v9063 = vmul.f32 1.0, %v9062
        %v9064 = vrcp.pop %v9026
        %v9065 = vmul.f32 1.0, %v9064
        %v9066 = vrcp.pop %v9027
        %v9067 = vmul.f32 1.0, %v9066
        %v9068 = vrcp.pop %v9028
        %v9069 = vmul.f32 1.0, %v9068
        %v9070 = vrcp.pop %v9029
        %v9071 = vmul.f32 1.0, %v9070
        %v9072 = vrcp.pop %v9030
        %v9073 = vmul.f32 1.0, %v9072
        %v9074 = vrcp.pop %v9031
        %v9075 = vmul.f32 1.0, %v9074
        %v9076 = vrcp.pop %v9032
        %v9077 = vmul.f32 1.0, %v9076
        %v9078 = vrcp.pop %v9033
        %v9079 = vmul.f32 1.0, %v9078
        %v9080 = vrcp.pop %v9034
        %v9081 = vmul.f32 1.0, %v9080
        %v9082 = vrcp.pop %v9035
        %v9083 = vmul.f32 1.0, %v9082
        %v9084 = vrcp.pop %v9036
        %v9085 = vmul.f32 1.0, %v9084
        %v9086 = vrcp.pop %v9037
        %v9087 = vmul.f32 1.0, %v9086
        %v9088 = vrcp.pop %v9038
        %v9089 = vmul.f32 1.0, %v9088
        %v9090 = vrcp.pop %v9039
        %v9091 = vmul.f32 1.0, %v9090
        %v9092 = vrcp.pop %v9040
        %v9093 = vmul.f32 1.0, %v9092
        %v9094 = vrcp.pop %v9041
        %v9095 = vmul.f32 1.0, %v9094
        %v9096 = vrcp.pop %v9042
        %v9097 = vmul.f32 1.0, %v9096
        %v9098 = vrcp.pop %v9043
        %v9099 = vmul.f32 1.0, %v9098
        %v9100 = vrcp.pop %v9044
        %v9101 = vmul.f32 1.0, %v9100
        %v9102 = vrcp.pop %v9045
        %v9103 = vmul.f32 1.0, %v9102
        %v9104 = vrcp.pop %v9046
        %v9105 = vmul.f32 1.0, %v9104
        %v9106 = vrcp.pop %v9047
        %v9107 = vmul.f32 1.0, %v9106
        %v9108 = vrcp.pop %v9048
        %v9109 = vmul.f32 1.0, %v9108
        %v9110 = vrcp.pop %v9049
        %v9111 = vmul.f32 1.0, %v9110
        %v9112 = vrcp.pop %v9050
        %v9113 = vmul.f32 1.0, %v9112
        %v9114 = vrcp.pop %v9051
        %v9115 = vmul.f32 1.0, %v9114
        %v9116 = vrcp.pop %v9052
        %v9117 = vmul.f32 1.0, %v9116
        %v9118 = vrcp.pop %v9053
        %v9119 = vmul.f32 1.0, %v9118
        %v9120 = vrcp.pop %v9054
        %v9121 = vmul.f32 1.0, %v9120
        %v9122 = vrcp.pop %v9055
        %v9123 = vmul.f32 1.0, %v9122
        %v9124 = vrcp.pop %v9056
        %v9125 = vmul.f32 1.0, %v9124
        %v9126 = vrcp.pop %v9057
        %v9127 = vmul.f32 1.0, %v9126
        %v9163 = vcombine.low %v9059, %v9061
        %v9164 = vcombine.low %v9063, %v9065
        %v9166 = vunpack.c.l.s4 1983009808
        %v9167 = vunpack.c.0.s8 %v9166
        %v9168 = vlaneseq
        %v9169 = vshrl.u32 %v9168, 7
        %v9170 = vsub.s32 %v9167, %v9169
        %v9171 = vrot.slane %v9163, %v9170
        %v9173 = vunpack.c.l.s4 1983009808
        %v9174 = vunpack.c.0.s8 %v9173
        %v9175 = vlaneseq
        %v9176 = vshrl.u32 %v9175, 7
        %v9177 = vsub.s32 %v9174, %v9176
        %v9178 = vrot.slane %v9164, %v9177
        %v9179 = vcombine.low %v9171, %v9178
        %v9180 = vcombine.low %v9067, %v9069
        %v9181 = vcombine.low %v9071, %v9073
        %v9183 = vunpack.c.l.s4 1983009808
        %v9184 = vunpack.c.0.s8 %v9183
        %v9185 = vlaneseq
        %v9186 = vshrl.u32 %v9185, 7
        %v9187 = vsub.s32 %v9184, %v9186
        %v9188 = vrot.slane %v9180, %v9187
        %v9190 = vunpack.c.l.s4 1983009808
        %v9191 = vunpack.c.0.s8 %v9190
        %v9192 = vlaneseq
        %v9193 = vshrl.u32 %v9192, 7
        %v9194 = vsub.s32 %v9191, %v9193
        %v9195 = vrot.slane %v9181, %v9194
        %v9196 = vcombine.low %v9188, %v9195
        %v9197 = vcombine.low %v9075, %v9077
        %v9198 = vcombine.low %v9079, %v9081
        %v9200 = vunpack.c.l.s4 1983009808
        %v9201 = vunpack.c.0.s8 %v9200
        %v9202 = vlaneseq
        %v9203 = vshrl.u32 %v9202, 7
        %v9204 = vsub.s32 %v9201, %v9203
        %v9205 = vrot.slane %v9197, %v9204
        %v9207 = vunpack.c.l.s4 1983009808
        %v9208 = vunpack.c.0.s8 %v9207
        %v9209 = vlaneseq
        %v9210 = vshrl.u32 %v9209, 7
        %v9211 = vsub.s32 %v9208, %v9210
        %v9212 = vrot.slane %v9198, %v9211
        %v9213 = vcombine.low %v9205, %v9212
        %v9214 = vcombine.low %v9083, %v9085
        %v9215 = vcombine.low %v9087, %v9089
        %v9217 = vunpack.c.l.s4 1983009808
        %v9218 = vunpack.c.0.s8 %v9217
        %v9219 = vlaneseq
        %v9220 = vshrl.u32 %v9219, 7
        %v9221 = vsub.s32 %v9218, %v9220
        %v9222 = vrot.slane %v9214, %v9221
        %v9224 = vunpack.c.l.s4 1983009808
        %v9225 = vunpack.c.0.s8 %v9224
        %v9226 = vlaneseq
        %v9227 = vshrl.u32 %v9226, 7
        %v9228 = vsub.s32 %v9225, %v9227
        %v9229 = vrot.slane %v9215, %v9228
        %v9230 = vcombine.low %v9222, %v9229
        %v9231 = vcombine.low %v9091, %v9093
        %v9232 = vcombine.low %v9095, %v9097
        %v9234 = vunpack.c.l.s4 1983009808
        %v9235 = vunpack.c.0.s8 %v9234
        %v9236 = vlaneseq
        %v9237 = vshrl.u32 %v9236, 7
        %v9238 = vsub.s32 %v9235, %v9237
        %v9239 = vrot.slane %v9231, %v9238
        %v9241 = vunpack.c.l.s4 1983009808
        %v9242 = vunpack.c.0.s8 %v9241
        %v9243 = vlaneseq
        %v9244 = vshrl.u32 %v9243, 7
        %v9245 = vsub.s32 %v9242, %v9244
        %v9246 = vrot.slane %v9232, %v9245
        %v9247 = vcombine.low %v9239, %v9246
        %v9248 = vcombine.low %v9099, %v9101
        %v9249 = vcombine.low %v9103, %v9105
        %v9251 = vunpack.c.l.s4 1983009808
        %v9252 = vunpack.c.0.s8 %v9251
        %v9253 = vlaneseq
        %v9254 = vshrl.u32 %v9253, 7
        %v9255 = vsub.s32 %v9252, %v9254
        %v9256 = vrot.slane %v9248, %v9255
        %v9258 = vunpack.c.l.s4 1983009808
        %v9259 = vunpack.c.0.s8 %v9258
        %v9260 = vlaneseq
        %v9261 = vshrl.u32 %v9260, 7
        %v9262 = vsub.s32 %v9259, %v9261
        %v9263 = vrot.slane %v9249, %v9262
        %v9264 = vcombine.low %v9256, %v9263
        %v9265 = vcombine.low %v9107, %v9109
        %v9266 = vcombine.low %v9111, %v9113
        %v9268 = vunpack.c.l.s4 1983009808
        %v9269 = vunpack.c.0.s8 %v9268
        %v9270 = vlaneseq
        %v9271 = vshrl.u32 %v9270, 7
        %v9272 = vsub.s32 %v9269, %v9271
        %v9273 = vrot.slane %v9265, %v9272
        %v9275 = vunpack.c.l.s4 1983009808
        %v9276 = vunpack.c.0.s8 %v9275
        %v9277 = vlaneseq
        %v9278 = vshrl.u32 %v9277, 7
        %v9279 = vsub.s32 %v9276, %v9278
        %v9280 = vrot.slane %v9266, %v9279
        %v9281 = vcombine.low %v9273, %v9280
        %v9282 = vcombine.low %v9115, %v9117
        %v9283 = vcombine.low %v9119, %v9121
        %v9285 = vunpack.c.l.s4 1983009808
        %v9286 = vunpack.c.0.s8 %v9285
        %v9287 = vlaneseq
        %v9288 = vshrl.u32 %v9287, 7
        %v9289 = vsub.s32 %v9286, %v9288
        %v9290 = vrot.slane %v9282, %v9289
        %v9292 = vunpack.c.l.s4 1983009808
        %v9293 = vunpack.c.0.s8 %v9292
        %v9294 = vlaneseq
        %v9295 = vshrl.u32 %v9294, 7
        %v9296 = vsub.s32 %v9293, %v9295
        %v9297 = vrot.slane %v9283, %v9296
        %v9298 = vcombine.low %v9290, %v9297
        %v9299 = vcombine.low %v9123, %v9125
        %v9301 = vunpack.c.l.s4 1983009808
        %v9302 = vunpack.c.0.s8 %v9301
        %v9303 = vlaneseq
        %v9304 = vshrl.u32 %v9303, 7
        %v9305 = vsub.s32 %v9302, %v9304
        %v9306 = vrot.slane %v9299, %v9305
        %v9308 = vunpack.c.l.s4 1983009808
        %v9309 = vunpack.c.0.s8 %v9308
        %v9310 = vlaneseq
        %v9311 = vshrl.u32 %v9310, 7
        %v9312 = vsub.s32 %v9309, %v9311
        %v9313 = vrot.slane %v9127, %v9312
        %v9314 = vcombine.low %v9306, %v9313
        %9324 = vst [vmem:[%s294] sm:$0xff] %v9179
        %9325 = vst [vmem:[%s294 + $0x8] sm:$0xff] %v9196
        %9326 = vst [vmem:[%s294 + $0x10] sm:$0xff] %v9213
        %9327 = vst [vmem:[%s294 + $0x18] sm:$0xff] %v9230
        %9328 = vst [vmem:[%s294 + $0x20] sm:$0xff] %v9247
        %9329 = vst [vmem:[%s294 + $0x28] sm:$0xff] %v9264
        %9330 = vst [vmem:[%s294 + $0x30] sm:$0xff] %v9281
        %9331 = vst [vmem:[%s294 + $0x38] sm:$0xff] %v9298
        %9332 = vst [vmem:[%s294 + $0x40] sm:$0x3f] %v9314
        %s9333 = sand.u32 %s142, 1
        %s9334 = scalar_lea.sflag [#allocation4], %s9333
        %s9335 = sand.u32 %s142, 1
        %s9336 = smul.addr %s9335, 70
        %s9337 = scalar_lea.vmem [#allocation11], %s9336
        // Predicated region
        $region61: #{tpu_custom_call.1} parent=39 // pred_check
          %p9338 = pneg %p152
        $region62: #{tpu_custom_call.1} parent=39 // pred_check_branch
          %9340 = sbr.rel (%p9338) target = $region64
        $region63: #{tpu_custom_call.1} parent=39 // pred_region
          %s9341 = smul.u32 35, %s24
          %s9343 = ssub.s32 1120, 1120
          %9344 = vsyncadd %s9334, %s9343
          %s9345 = smul.addr %s9341, 32
          %s9346 = scalar_lea.hbm %s5, %s9345
          %s9348 = sshll.u32 %s9337, 4
          %s9349 = int_to_ptr.vmem [resolvable:$true] %s9348
          %9351 = dma.vmem_to_hbm [thread:$0]  %s9349, 1120, %s9346, %s9334
        $region64: #{tpu_custom_call.1} parent=39 // pred_fallthru
          _
      $region40: #{tpu_custom_call.1} parent=5 // pred_fallthru
        _
      %p9352 = scmp.le.s32.totalorder 2, %s19
      // Predicated region
      $region65: #{tpu_custom_call.1} parent=5 // pred_check
        %p9353 = pneg %p9352
      $region66: #{tpu_custom_call.1} parent=5 // pred_check_branch
        %9355 = sbr.rel (%p9353) target = $region68
      $region67: #{tpu_custom_call.1} parent=5 // pred_region
        %s9356 = ssub.s32 %s19, 2
        // Predicated region
        $region69: #{tpu_custom_call.1} parent=67 // pred_check
          %p9357 = pneg %p158
        $region70: #{tpu_custom_call.1} parent=67 // pred_check_branch
          %9359 = sbr.rel (%p9357) target = $region72
        $region71: #{tpu_custom_call.1} parent=67 // pred_region
          %s9360 = sand.u32 %s143, 1
          %s9361 = scalar_lea.sflag [#allocation4], %s9360
          %s9362 = sand.u32 %s143, 1
          %s9363 = smul.addr %s9362, 70
          %s9364 = scalar_lea.vmem [#allocation11], %s9363
          %9365 = dma.done %s9361, 1120
        $region72: #{tpu_custom_call.1} parent=67 // pred_fallthru
          _
      $region68: #{tpu_custom_call.1} parent=5 // pred_fallthru
        _
    $region6: #{tpu_custom_call.1} parent=1 // loop_footer
      %s23 = sadd.s32 1, %s19
    $region7: #{tpu_custom_call.1} parent=1 // loop_footer_branch
      %18 = sbr.rel target = $region3
    $region8: #{tpu_custom_call.1} parent=1 // loop_exit
      _
    %9366 = vsyncpa [#allocation3], 1
    %s9367 = scalar_lea.sflag [#allocation3], 1
    %9368 = vsyncpa %s9367, 1
    %9369 = vsyncpa [#allocation6], 1
    %9370 = vsyncpa [#allocation9], 1
    %s9371 = scalar_lea.sflag [#allocation9], 1
    %9372 = vsyncpa %s9371, 1
    %9373 = vsyncpa [#allocation4], 1
    %s9374 = scalar_lea.sflag [#allocation4], 1
    %9375 = vsyncpa %s9374, 1

</llo_original>
